<compile_context>
chip_gen: v7x
topology: tpu7x:2x2x1
jax: 0.10.0
libtpu: 0.0.40
codegen_flags: <defaults>
</compile_context>

<pallas_src>
import jax
import jax.numpy as jnp
from jax import lax
from jax.experimental import pallas as pl
from jax.experimental.pallas import tpu as pltpu


# ----------------------- pool-folded im2col (XLA glue) -----------------------

def _im2col_pooled_nchw(x):
    """x: (N, C, H, W) -> patches (N, 16*C, (H//2)*(W//2)), bf16.

    Column m = y2*W2 + x2 holds the 4x4xC padded-input window feeding the 2x2
    group of conv outputs pooled into output pixel (y2, x2).  Row order is
    (ty, tx, ci)."""
    N, C, H, W = x.shape
    H2, W2 = H // 2, W // 2
    xp = jnp.pad(x, ((0, 0), (0, 0), (1, 1), (1, 1)))
    taps = [xp[:, :, ty:ty + 2 * H2:2, tx:tx + 2 * W2:2]
            for ty in range(4) for tx in range(4)]
    p = jnp.concatenate(taps, axis=1)                   # (N, 16*C, H2, W2)
    return p.reshape(N, 16 * C, H2 * W2).astype(jnp.bfloat16)


# ----------------- fused Conv3x3 + bias + ReLU + MaxPool2 kernel --------------

def _conv_pool_kernel(p_ref, w_ref, b_ref, o_ref):
    # p: (1, 16*Cin, TM) bf16, w: (4*Cout, 16*Cin) bf16, b: (Cout, 1) f32,
    # o: (1, Cout, TM) bf16.  One MXU matmul; epilogue = 2x2 max-pool over the
    # four Cout-high sublane row blocks, then bias + ReLU (all f32).
    acc = jnp.dot(w_ref[...], p_ref[0], preferred_element_type=jnp.float32)
    c = o_ref.shape[1]
    pooled = jnp.maximum(jnp.maximum(acc[0 * c:1 * c], acc[1 * c:2 * c]),
                         jnp.maximum(acc[2 * c:3 * c], acc[3 * c:4 * c]))
    o_ref[0] = jnp.maximum(pooled + b_ref[...], 0.0).astype(o_ref.dtype)


def conv3x3_relu_pool(x_nchw, w_folded, bias_col, *, tile_m):
    """3x3 'same' conv + bias + ReLU + 2x2 maxpool, one Pallas kernel.

    Input/output are NCHW; output spatial dims are halved."""
    N, Cin, H, W = x_nchw.shape
    H2, W2 = H // 2, W // 2
    Cout = bias_col.shape[0]
    K = 16 * Cin
    M = H2 * W2
    assert M % tile_m == 0 and (tile_m % 128 == 0 or tile_m == M)

    patches = _im2col_pooled_nchw(x_nchw)               # (N, K, M) bf16

    out = pl.pallas_call(
        _conv_pool_kernel,
        out_shape=jax.ShapeDtypeStruct((N, Cout, M), jnp.bfloat16),
        grid_spec=pltpu.PrefetchScalarGridSpec(
            num_scalar_prefetch=0,
            grid=(N, M // tile_m),
            in_specs=[
                pl.BlockSpec((1, K, tile_m), lambda n, m: (n, 0, m)),
                pl.BlockSpec((4 * Cout, K), lambda n, m: (0, 0)),
                pl.BlockSpec((Cout, 1), lambda n, m: (0, 0)),
            ],
            out_specs=pl.BlockSpec((1, Cout, tile_m), lambda n, m: (n, 0, m)),
        ),
        compiler_params=pltpu.CompilerParams(
            dimension_semantics=("parallel", "parallel"),
            vmem_limit_bytes=32 * 1024 * 1024),
    )(patches, w_folded, bias_col)
    return out.reshape(N, Cout, H2, W2)


# ---------------------- FC head (Linear -> ReLU -> Linear) --------------------

def _fc_kernel(x_ref, w1_ref, b1_ref, w2_ref, b2_ref, o_ref, acc_ref):
    @pl.when(pl.program_id(0) == 0)
    def _():
        acc_ref[...] = jnp.zeros_like(acc_ref)

    acc_ref[...] += jnp.dot(x_ref[...], w1_ref[...],
                            preferred_element_type=jnp.float32)

    @pl.when(pl.program_id(0) == pl.num_programs(0) - 1)
    def _():
        h = jnp.maximum(acc_ref[...] + b1_ref[...], 0.0)
        o_ref[...] = (jnp.dot(h, w2_ref[...],
                              preferred_element_type=jnp.float32)
                      + b2_ref[...]).astype(o_ref.dtype)


def fc_head(x_flat, w1, b1, w2, b2, *, tile_k):
    N, K = x_flat.shape
    H1 = w1.shape[1]
    O = w2.shape[1]
    assert K % tile_k == 0 and tile_k % 128 == 0
    return pl.pallas_call(
        _fc_kernel,
        out_shape=jax.ShapeDtypeStruct((N, O), jnp.float32),
        grid_spec=pltpu.PrefetchScalarGridSpec(
            num_scalar_prefetch=0,
            grid=(K // tile_k,),
            in_specs=[
                pl.BlockSpec((N, tile_k), lambda k: (0, k)),
                pl.BlockSpec((tile_k, H1), lambda k: (k, 0)),
                pl.BlockSpec((1, H1), lambda k: (0, 0)),
                pl.BlockSpec((H1, O), lambda k: (0, 0)),
                pl.BlockSpec((1, O), lambda k: (0, 0)),
            ],
            out_specs=pl.BlockSpec((N, O), lambda k: (0, 0)),
            scratch_shapes=[pltpu.VMEM((N, H1), jnp.float32)],
        ),
        compiler_params=pltpu.CompilerParams(
            dimension_semantics=("arbitrary",),
            vmem_limit_bytes=32 * 1024 * 1024),
    )(x_flat, w1, b1, w2, b2)


# ------------------------------- full forward ---------------------------------

def simple_cnn_forward(x_nchw, pp):
    # Stay in NCHW (PyTorch layout) end-to-end; stream activations as bf16.
    x = x_nchw.astype(jnp.bfloat16)
    x = conv3x3_relu_pool(x, pp["cw1"], pp["cb1"], tile_m=1792)   # (N,16,112,112)
    x = conv3x3_relu_pool(x, pp["cw2"], pp["cb2"], tile_m=3136)   # (N,32, 56, 56)
    x = conv3x3_relu_pool(x, pp["cw3"], pp["cb3"], tile_m=784)    # (N,64, 28, 28)
    xf = x.reshape(x.shape[0], -1)         # NCHW flatten == torch .view(N,-1)
    return fc_head(xf, pp["fc1_w"], pp["fc1_b"], pp["fc2_w"], pp["fc2_b"],
                   tile_k=1792)                                   # (N, 2)


# --------------------------- parameter preparation ----------------------------

def _fold_conv_weight(w_hwio):
    """(3,3,Cin,Cout) -> pool-folded, transposed (4*Cout, 16*Cin) bf16.

    Wf[(qy,qx,co), (ty,tx,ci)] = w[ty-qy, tx-qx, ci, co] when both offsets lie
    in [0,3), else 0 -- so one (4*Cout,16*Cin)@(16*Cin,M) matmul yields all 4
    conv outputs of each 2x2 pool window from the shared 4x4 input patch."""
    Cin, Cout = w_hwio.shape[2], w_hwio.shape[3]
    w_ohwi = jnp.transpose(w_hwio, (3, 0, 1, 2))          # (Cout, 3, 3, Cin)
    wf = jnp.zeros((2, 2, Cout, 4, 4, Cin), jnp.float32)
    for qy in range(2):
        for qx in range(2):
            wf = wf.at[qy, qx, :, qy:qy + 3, qx:qx + 3, :].set(w_ohwi)
    return wf.reshape(4 * Cout, 16 * Cin).astype(jnp.bfloat16)


def prepare_params(params):
    """One-time (outside jit) transforms: pool-fold/transpose conv weights,
    cast streamed weights to bf16.  fc1 needs no permutation: the kernel path
    flattens NCHW just like PyTorch."""
    return {
        "cw1": _fold_conv_weight(params["w1"]), "cb1": params["b1"].reshape(-1, 1),
        "cw2": _fold_conv_weight(params["w2"]), "cb2": params["b2"].reshape(-1, 1),
        "cw3": _fold_conv_weight(params["w3"]), "cb3": params["b3"].reshape(-1, 1),
        "fc1_w": params["fc1_w"].astype(jnp.bfloat16),
        "fc1_b": params["fc1_b"].reshape(1, -1),
        "fc2_w": params["fc2_w"],                         # tiny -> keep f32
        "fc2_b": params["fc2_b"].reshape(1, -1),
    }


# -------------------------- deterministic parameters --------------------------

def init_params(key):
    ks = jax.random.split(key, 10)

    def conv_w(k, cin, cout):   # (3, 3, Cin, Cout) == torch (Cout,Cin,3,3) permuted
        scale = 1.0 / jnp.sqrt(9.0 * cin)
        return scale * jax.random.normal(k, (3, 3, cin, cout), jnp.float32)

    def lin_w(k, fin, fout):    # (in, out) == torch weight.T
        scale = 1.0 / jnp.sqrt(float(fin))
        return scale * jax.random.normal(k, (fin, fout), jnp.float32)

    return {
        "w1": conv_w(ks[0], 3, 16),
        "b1": 0.01 * jax.random.normal(ks[1], (16,), jnp.float32),
        "w2": conv_w(ks[2], 16, 32),
        "b2": 0.01 * jax.random.normal(ks[3], (32,), jnp.float32),
        "w3": conv_w(ks[4], 32, 64),
        "b3": 0.01 * jax.random.normal(ks[5], (64,), jnp.float32),
        "fc1_w": lin_w(ks[6], 64 * 28 * 28, 128),
        "fc1_b": 0.01 * jax.random.normal(ks[7], (128,), jnp.float32),
        "fc2_w": lin_w(ks[8], 128, 2),
        "fc2_b": 0.01 * jax.random.normal(ks[9], (2,), jnp.float32),
    }


# ------------------------- pure-JAX reference (f32) ---------------------------

def reference_forward(x_nchw, params):
    hp = lax.Precision.HIGHEST
    x = jnp.transpose(x_nchw, (0, 2, 3, 1))

    def block(x, w, b):
        y = lax.conv_general_dilated(
            x, w, (1, 1), ((1, 1), (1, 1)),
            dimension_numbers=("NHWC", "HWIO", "NHWC"), precision=hp)
        y = jnp.maximum(y + b, 0.0)
        return lax.reduce_window(y, -jnp.inf, lax.max,
                                 (1, 2, 2, 1), (1, 2, 2, 1), "VALID")

    x = block(x, params["w1"], params["b1"])
    x = block(x, params["w2"], params["b2"])
    x = block(x, params["w3"], params["b3"])
    x = jnp.transpose(x, (0, 3, 1, 2)).reshape(x.shape[0], -1)   # torch NCHW flatten
    h = jnp.maximum(jnp.dot(x, params["fc1_w"], precision=hp) + params["fc1_b"], 0.0)
    return jnp.dot(h, params["fc2_w"], precision=hp) + params["fc2_b"]


if __name__ == "__main__":
    key = jax.random.PRNGKey(0)
    pkey, xkey = jax.random.split(key)
    params = init_params(pkey)
    pp = prepare_params(params)

    # Spatial size 224 is dictated by Linear(64*28*28, 128); batch kept small.
    x = jax.random.normal(xkey, (2, 3, 224, 224), jnp.float32)

    fwd = jax.jit(simple_cnn_forward)
    out = jax.block_until_ready(fwd(x, pp))
    ref = jax.block_until_ready(jax.jit(reference_forward)(x, params))

    assert out.shape == (2, 2), out.shape
    assert out.dtype == jnp.float32
    assert bool(jnp.all(jnp.isfinite(out)))
    # Loose check vs f32 reference (kernel path streams bf16).
    err = float(jnp.max(jnp.abs(out - ref)))
    scale = 1.0 + float(jnp.max(jnp.abs(ref)))
    assert err <= 0.1 * scale, (err, scale, out, ref)
    print("KERNEL_OK")
</pallas_src>

<mosaic_0001>
module attributes {stable_mosaic.version = 11 : i64} {
  func.func @_conv_pool_kernel(%arg0: i32, %arg1: i32, %arg2: memref<1x48x1792xbf16, #tpu.memory_space<vmem>>, %arg3: memref<64x48xbf16, #tpu.memory_space<vmem>>, %arg4: memref<16x1xf32, #tpu.memory_space<vmem>>, %arg5: memref<1x16x1792xbf16, #tpu.memory_space<vmem>>) attributes {dimension_semantics = [#tpu.dimension_semantics<parallel>, #tpu.dimension_semantics<parallel>], iteration_bounds = array<i64: 2, 7>, scalar_prefetch = 0 : i64, scratch_operands = 0 : i64, tpu.core_type = #tpu.core_type<tc>, window_params = [{transform_indices = @transform_0, window_bounds = array<i64: 1, 48, 1792>}, {pipeline_mode = #tpu.pipeline_mode<synchronous>, transform_indices = @transform_1, window_bounds = array<i64: 64, 48>}, {pipeline_mode = #tpu.pipeline_mode<synchronous>, transform_indices = @transform_2, window_bounds = array<i64: 16, 1>}, {transform_indices = @transform_3, window_bounds = array<i64: 1, 16, 1792>}]} {
    %c0 = arith.constant 0 : index
    %c0_0 = arith.constant 0 : index
    %0 = vector.load %arg3[%c0, %c0_0] : memref<64x48xbf16, #tpu.memory_space<vmem>>, vector<64x48xbf16>
    %c0_1 = arith.constant 0 : index
    %c0_2 = arith.constant 0 : index
    %c0_3 = arith.constant 0 : index
    %1 = vector.load %arg2[%c0_1, %c0_2, %c0_3] : memref<1x48x1792xbf16, #tpu.memory_space<vmem>>, vector<1x48x1792xbf16>
    %2 = vector.shape_cast %1 : vector<1x48x1792xbf16> to vector<48x1792xbf16>
    %cst = arith.constant dense<0.000000e+00> : vector<64x1792xf32>
    %3 = tpu.matmul %0, %2, %cst {dimension_numbers = #tpu.dot_dimension_numbers<[1], [0], [0], [1], [0, 0, 1, 1], [], []>} : vector<64x48xbf16>, vector<48x1792xbf16>, vector<64x1792xf32> -> vector<64x1792xf32>
    %4 = vector.extract_strided_slice %3 {offsets = [0, 0], sizes = [16, 1792], strides = [1, 1]} : vector<64x1792xf32> to vector<16x1792xf32>
    %5 = vector.extract_strided_slice %3 {offsets = [16, 0], sizes = [16, 1792], strides = [1, 1]} : vector<64x1792xf32> to vector<16x1792xf32>
    %6 = arith.maximumf %4, %5 : vector<16x1792xf32>
    %7 = vector.extract_strided_slice %3 {offsets = [32, 0], sizes = [16, 1792], strides = [1, 1]} : vector<64x1792xf32> to vector<16x1792xf32>
    %8 = vector.extract_strided_slice %3 {offsets = [48, 0], sizes = [16, 1792], strides = [1, 1]} : vector<64x1792xf32> to vector<16x1792xf32>
    %9 = arith.maximumf %7, %8 : vector<16x1792xf32>
    %10 = arith.maximumf %6, %9 : vector<16x1792xf32>
    %c0_4 = arith.constant 0 : index
    %c0_5 = arith.constant 0 : index
    %11 = vector.load %arg4[%c0_4, %c0_5] : memref<16x1xf32, #tpu.memory_space<vmem>>, vector<16x1xf32>
    %12 = vector.broadcast %11 : vector<16x1xf32> to vector<16x1792xf32>
    %13 = arith.addf %10, %12 : vector<16x1792xf32>
    %cst_6 = arith.constant 0.000000e+00 : f32
    %14 = vector.broadcast %cst_6 : f32 to vector<16x1792xf32>
    %15 = arith.maximumf %13, %14 : vector<16x1792xf32>
    %16 = arith.truncf %15 : vector<16x1792xf32> to vector<16x1792xbf16>
    %c0_7 = arith.constant 0 : index
    %c0_8 = arith.constant 0 : index
    %c0_9 = arith.constant 0 : index
    %17 = vector.load %arg5[%c0_7, %c0_8, %c0_9] : memref<1x16x1792xbf16, #tpu.memory_space<vmem>>, vector<1x16x1792xbf16>
    %18 = vector.shape_cast %17 : vector<1x16x1792xbf16> to vector<16x1792xbf16>
    %19 = vector.shape_cast %16 : vector<16x1792xbf16> to vector<1x16x1792xbf16>
    tpu.vector_store %arg5[%c0_7, %c0_8, %c0_9], %19 {strides = array<i32>} : memref<1x16x1792xbf16, #tpu.memory_space<vmem>>, vector<1x16x1792xbf16>,
    return
  }
  func.func @transform_0(%arg0: i32, %arg1: i32) -> (i32, i32, i32) {
    %c0_i32 = arith.constant 0 : i32
    %c0_i32_0 = arith.constant 0 : i32
    return %arg0, %c0_i32, %arg1 : i32, i32, i32
  }
  func.func @transform_1(%arg0: i32, %arg1: i32) -> (i32, i32) {
    %c0_i32 = arith.constant 0 : i32
    %c0_i32_0 = arith.constant 0 : i32
    %c0_i32_1 = arith.constant 0 : i32
    return %c0_i32, %c0_i32_0 : i32, i32
  }
  func.func @transform_2(%arg0: i32, %arg1: i32) -> (i32, i32) {
    %c0_i32 = arith.constant 0 : i32
    %c0_i32_0 = arith.constant 0 : i32
    %c0_i32_1 = arith.constant 0 : i32
    return %c0_i32, %c0_i32_0 : i32, i32
  }
  func.func @transform_3(%arg0: i32, %arg1: i32) -> (i32, i32, i32) {
    %c0_i32 = arith.constant 0 : i32
    %c0_i32_0 = arith.constant 0 : i32
    return %arg0, %c0_i32, %arg1 : i32, i32, i32
  }
}

module attributes {stable_mosaic.version = 11 : i64} {
  func.func @_conv_pool_kernel(%arg0: i32, %arg1: i32, %arg2: memref<1x256x3136xbf16, #tpu.memory_space<vmem>>, %arg3: memref<128x256xbf16, #tpu.memory_space<vmem>>, %arg4: memref<32x1xf32, #tpu.memory_space<vmem>>, %arg5: memref<1x32x3136xbf16, #tpu.memory_space<vmem>>) attributes {dimension_semantics = [#tpu.dimension_semantics<parallel>, #tpu.dimension_semantics<parallel>], iteration_bounds = array<i64: 2, 1>, scalar_prefetch = 0 : i64, scratch_operands = 0 : i64, tpu.core_type = #tpu.core_type<tc>, window_params = [{transform_indices = @transform_0, window_bounds = array<i64: 1, 256, 3136>}, {pipeline_mode = #tpu.pipeline_mode<synchronous>, transform_indices = @transform_1, window_bounds = array<i64: 128, 256>}, {pipeline_mode = #tpu.pipeline_mode<synchronous>, transform_indices = @transform_2, window_bounds = array<i64: 32, 1>}, {transform_indices = @transform_3, window_bounds = array<i64: 1, 32, 3136>}]} {
    %c0 = arith.constant 0 : index
    %c0_0 = arith.constant 0 : index
    %0 = vector.load %arg3[%c0, %c0_0] : memref<128x256xbf16, #tpu.memory_space<vmem>>, vector<128x256xbf16>
    %c0_1 = arith.constant 0 : index
    %c0_2 = arith.constant 0 : index
    %c0_3 = arith.constant 0 : index
    %1 = vector.load %arg2[%c0_1, %c0_2, %c0_3] : memref<1x256x3136xbf16, #tpu.memory_space<vmem>>, vector<1x256x3136xbf16>
    %2 = vector.shape_cast %1 : vector<1x256x3136xbf16> to vector<256x3136xbf16>
    %cst = arith.constant dense<0.000000e+00> : vector<128x3136xf32>
    %3 = tpu.matmul %0, %2, %cst {dimension_numbers = #tpu.dot_dimension_numbers<[1], [0], [0], [1], [0, 0, 1, 1], [], []>} : vector<128x256xbf16>, vector<256x3136xbf16>, vector<128x3136xf32> -> vector<128x3136xf32>
    %4 = vector.extract_strided_slice %3 {offsets = [0, 0], sizes = [32, 3136], strides = [1, 1]} : vector<128x3136xf32> to vector<32x3136xf32>
    %5 = vector.extract_strided_slice %3 {offsets = [32, 0], sizes = [32, 3136], strides = [1, 1]} : vector<128x3136xf32> to vector<32x3136xf32>
    %6 = arith.maximumf %4, %5 : vector<32x3136xf32>
    %7 = vector.extract_strided_slice %3 {offsets = [64, 0], sizes = [32, 3136], strides = [1, 1]} : vector<128x3136xf32> to vector<32x3136xf32>
    %8 = vector.extract_strided_slice %3 {offsets = [96, 0], sizes = [32, 3136], strides = [1, 1]} : vector<128x3136xf32> to vector<32x3136xf32>
    %9 = arith.maximumf %7, %8 : vector<32x3136xf32>
    %10 = arith.maximumf %6, %9 : vector<32x3136xf32>
    %c0_4 = arith.constant 0 : index
    %c0_5 = arith.constant 0 : index
    %11 = vector.load %arg4[%c0_4, %c0_5] : memref<32x1xf32, #tpu.memory_space<vmem>>, vector<32x1xf32>
    %12 = vector.broadcast %11 : vector<32x1xf32> to vector<32x3136xf32>
    %13 = arith.addf %10, %12 : vector<32x3136xf32>
    %cst_6 = arith.constant 0.000000e+00 : f32
    %14 = vector.broadcast %cst_6 : f32 to vector<32x3136xf32>
    %15 = arith.maximumf %13, %14 : vector<32x3136xf32>
    %16 = arith.truncf %15 : vector<32x3136xf32> to vector<32x3136xbf16>
    %c0_7 = arith.constant 0 : index
    %c0_8 = arith.constant 0 : index
    %c0_9 = arith.constant 0 : index
    %17 = vector.load %arg5[%c0_7, %c0_8, %c0_9] : memref<1x32x3136xbf16, #tpu.memory_space<vmem>>, vector<1x32x3136xbf16>
    %18 = vector.shape_cast %17 : vector<1x32x3136xbf16> to vector<32x3136xbf16>
    %19 = vector.shape_cast %16 : vector<32x3136xbf16> to vector<1x32x3136xbf16>
    tpu.vector_store %arg5[%c0_7, %c0_8, %c0_9], %19 {strides = array<i32>} : memref<1x32x3136xbf16, #tpu.memory_space<vmem>>, vector<1x32x3136xbf16>,
    return
  }
  func.func @transform_0(%arg0: i32, %arg1: i32) -> (i32, i32, i32) {
    %c0_i32 = arith.constant 0 : i32
    %c0_i32_0 = arith.constant 0 : i32
    return %arg0, %c0_i32, %arg1 : i32, i32, i32
  }
  func.func @transform_1(%arg0: i32, %arg1: i32) -> (i32, i32) {
    %c0_i32 = arith.constant 0 : i32
    %c0_i32_0 = arith.constant 0 : i32
    %c0_i32_1 = arith.constant 0 : i32
    return %c0_i32, %c0_i32_0 : i32, i32
  }
  func.func @transform_2(%arg0: i32, %arg1: i32) -> (i32, i32) {
    %c0_i32 = arith.constant 0 : i32
    %c0_i32_0 = arith.constant 0 : i32
    %c0_i32_1 = arith.constant 0 : i32
    return %c0_i32, %c0_i32_0 : i32, i32
  }
  func.func @transform_3(%arg0: i32, %arg1: i32) -> (i32, i32, i32) {
    %c0_i32 = arith.constant 0 : i32
    %c0_i32_0 = arith.constant 0 : i32
    return %arg0, %c0_i32, %arg1 : i32, i32, i32
  }
}

module attributes {stable_mosaic.version = 11 : i64} {
  func.func @_conv_pool_kernel(%arg0: i32, %arg1: i32, %arg2: memref<1x512x784xbf16, #tpu.memory_space<vmem>>, %arg3: memref<256x512xbf16, #tpu.memory_space<vmem>>, %arg4: memref<64x1xf32, #tpu.memory_space<vmem>>, %arg5: memref<1x64x784xbf16, #tpu.memory_space<vmem>>) attributes {dimension_semantics = [#tpu.dimension_semantics<parallel>, #tpu.dimension_semantics<parallel>], iteration_bounds = array<i64: 2, 1>, scalar_prefetch = 0 : i64, scratch_operands = 0 : i64, tpu.core_type = #tpu.core_type<tc>, window_params = [{transform_indices = @transform_0, window_bounds = array<i64: 1, 512, 784>}, {pipeline_mode = #tpu.pipeline_mode<synchronous>, transform_indices = @transform_1, window_bounds = array<i64: 256, 512>}, {pipeline_mode = #tpu.pipeline_mode<synchronous>, transform_indices = @transform_2, window_bounds = array<i64: 64, 1>}, {transform_indices = @transform_3, window_bounds = array<i64: 1, 64, 784>}]} {
    %c0 = arith.constant 0 : index
    %c0_0 = arith.constant 0 : index
    %0 = vector.load %arg3[%c0, %c0_0] : memref<256x512xbf16, #tpu.memory_space<vmem>>, vector<256x512xbf16>
    %c0_1 = arith.constant 0 : index
    %c0_2 = arith.constant 0 : index
    %c0_3 = arith.constant 0 : index
    %1 = vector.load %arg2[%c0_1, %c0_2, %c0_3] : memref<1x512x784xbf16, #tpu.memory_space<vmem>>, vector<1x512x784xbf16>
    %2 = vector.shape_cast %1 : vector<1x512x784xbf16> to vector<512x784xbf16>
    %cst = arith.constant dense<0.000000e+00> : vector<256x784xf32>
    %3 = tpu.matmul %0, %2, %cst {dimension_numbers = #tpu.dot_dimension_numbers<[1], [0], [0], [1], [0, 0, 1, 1], [], []>} : vector<256x512xbf16>, vector<512x784xbf16>, vector<256x784xf32> -> vector<256x784xf32>
    %4 = vector.extract_strided_slice %3 {offsets = [0, 0], sizes = [64, 784], strides = [1, 1]} : vector<256x784xf32> to vector<64x784xf32>
    %5 = vector.extract_strided_slice %3 {offsets = [64, 0], sizes = [64, 784], strides = [1, 1]} : vector<256x784xf32> to vector<64x784xf32>
    %6 = arith.maximumf %4, %5 : vector<64x784xf32>
    %7 = vector.extract_strided_slice %3 {offsets = [128, 0], sizes = [64, 784], strides = [1, 1]} : vector<256x784xf32> to vector<64x784xf32>
    %8 = vector.extract_strided_slice %3 {offsets = [192, 0], sizes = [64, 784], strides = [1, 1]} : vector<256x784xf32> to vector<64x784xf32>
    %9 = arith.maximumf %7, %8 : vector<64x784xf32>
    %10 = arith.maximumf %6, %9 : vector<64x784xf32>
    %c0_4 = arith.constant 0 : index
    %c0_5 = arith.constant 0 : index
    %11 = vector.load %arg4[%c0_4, %c0_5] : memref<64x1xf32, #tpu.memory_space<vmem>>, vector<64x1xf32>
    %12 = vector.broadcast %11 : vector<64x1xf32> to vector<64x784xf32>
    %13 = arith.addf %10, %12 : vector<64x784xf32>
    %cst_6 = arith.constant 0.000000e+00 : f32
    %14 = vector.broadcast %cst_6 : f32 to vector<64x784xf32>
    %15 = arith.maximumf %13, %14 : vector<64x784xf32>
    %16 = arith.truncf %15 : vector<64x784xf32> to vector<64x784xbf16>
    %c0_7 = arith.constant 0 : index
    %c0_8 = arith.constant 0 : index
    %c0_9 = arith.constant 0 : index
    %17 = vector.load %arg5[%c0_7, %c0_8, %c0_9] : memref<1x64x784xbf16, #tpu.memory_space<vmem>>, vector<1x64x784xbf16>
    %18 = vector.shape_cast %17 : vector<1x64x784xbf16> to vector<64x784xbf16>
    %19 = vector.shape_cast %16 : vector<64x784xbf16> to vector<1x64x784xbf16>
    tpu.vector_store %arg5[%c0_7, %c0_8, %c0_9], %19 {strides = array<i32>} : memref<1x64x784xbf16, #tpu.memory_space<vmem>>, vector<1x64x784xbf16>,
    return
  }
  func.func @transform_0(%arg0: i32, %arg1: i32) -> (i32, i32, i32) {
    %c0_i32 = arith.constant 0 : i32
    %c0_i32_0 = arith.constant 0 : i32
    return %arg0, %c0_i32, %arg1 : i32, i32, i32
  }
  func.func @transform_1(%arg0: i32, %arg1: i32) -> (i32, i32) {
    %c0_i32 = arith.constant 0 : i32
    %c0_i32_0 = arith.constant 0 : i32
    %c0_i32_1 = arith.constant 0 : i32
    return %c0_i32, %c0_i32_0 : i32, i32
  }
  func.func @transform_2(%arg0: i32, %arg1: i32) -> (i32, i32) {
    %c0_i32 = arith.constant 0 : i32
    %c0_i32_0 = arith.constant 0 : i32
    %c0_i32_1 = arith.constant 0 : i32
    return %c0_i32, %c0_i32_0 : i32, i32
  }
  func.func @transform_3(%arg0: i32, %arg1: i32) -> (i32, i32, i32) {
    %c0_i32 = arith.constant 0 : i32
    %c0_i32_0 = arith.constant 0 : i32
    return %arg0, %c0_i32, %arg1 : i32, i32, i32
  }
}

module attributes {stable_mosaic.version = 11 : i64} {
  func.func @_fc_kernel(%arg0: i32, %arg1: memref<2x1792xbf16, #tpu.memory_space<vmem>>, %arg2: memref<1792x128xbf16, #tpu.memory_space<vmem>>, %arg3: memref<1x128xf32, #tpu.memory_space<vmem>>, %arg4: memref<128x2xf32, #tpu.memory_space<vmem>>, %arg5: memref<1x2xf32, #tpu.memory_space<vmem>>, %arg6: memref<2x2xf32, #tpu.memory_space<vmem>>, %arg7: memref<2x128xf32, #tpu.memory_space<vmem>>) attributes {dimension_semantics = [#tpu.dimension_semantics<arbitrary>], iteration_bounds = array<i64: 28>, scalar_prefetch = 0 : i64, scratch_operands = 1 : i64, tpu.core_type = #tpu.core_type<tc>, window_params = [{transform_indices = @transform_0, window_bounds = array<i64: 2, 1792>}, {transform_indices = @transform_1, window_bounds = array<i64: 1792, 128>}, {pipeline_mode = #tpu.pipeline_mode<synchronous>, transform_indices = @transform_2, window_bounds = array<i64: 1, 128>}, {pipeline_mode = #tpu.pipeline_mode<synchronous>, transform_indices = @transform_3, window_bounds = array<i64: 128, 2>}, {pipeline_mode = #tpu.pipeline_mode<synchronous>, transform_indices = @transform_4, window_bounds = array<i64: 1, 2>}, {pipeline_mode = #tpu.pipeline_mode<synchronous>, transform_indices = @transform_5, window_bounds = array<i64: 2, 2>}]} {
    %c0_i32 = arith.constant 0 : i32
    %0 = arith.cmpi eq, %arg0, %c0_i32 : i32
    %1 = arith.extui %0 : i1 to i32
    %c0_i32_0 = arith.constant 0 : i32
    %2 = arith.cmpi ne, %1, %c0_i32_0 : i32
    scf.if %2 {
      %cst_9 = arith.constant 0.000000e+00 : f32
      %12 = vector.broadcast %cst_9 : f32 to vector<2x128xf32>
      %c0_10 = arith.constant 0 : index
      %c0_11 = arith.constant 0 : index
      %13 = vector.load %arg7[%c0_10, %c0_11] : memref<2x128xf32, #tpu.memory_space<vmem>>, vector<2x128xf32>
      tpu.vector_store %arg7[%c0_10, %c0_11], %12 {strides = array<i32>} : memref<2x128xf32, #tpu.memory_space<vmem>>, vector<2x128xf32>,
    } else {
    }
    %c0 = arith.constant 0 : index
    %c0_1 = arith.constant 0 : index
    %3 = vector.load %arg7[%c0, %c0_1] : memref<2x128xf32, #tpu.memory_space<vmem>>, vector<2x128xf32>
    %c0_2 = arith.constant 0 : index
    %c0_3 = arith.constant 0 : index
    %4 = vector.load %arg1[%c0_2, %c0_3] : memref<2x1792xbf16, #tpu.memory_space<vmem>>, vector<2x1792xbf16>
    %c0_4 = arith.constant 0 : index
    %c0_5 = arith.constant 0 : index
    %5 = vector.load %arg2[%c0_4, %c0_5] : memref<1792x128xbf16, #tpu.memory_space<vmem>>, vector<1792x128xbf16>
    %cst = arith.constant dense<0.000000e+00> : vector<2x128xf32>
    %6 = tpu.matmul %4, %5, %cst {dimension_numbers = #tpu.dot_dimension_numbers<[1], [0], [0], [1], [0, 0, 1, 1], [], []>} : vector<2x1792xbf16>, vector<1792x128xbf16>, vector<2x128xf32> -> vector<2x128xf32>
    %7 = arith.addf %3, %6 : vector<2x128xf32>
    %c0_6 = arith.constant 0 : index
    %c0_7 = arith.constant 0 : index
    %8 = vector.load %arg7[%c0_6, %c0_7] : memref<2x128xf32, #tpu.memory_space<vmem>>, vector<2x128xf32>
    tpu.vector_store %arg7[%c0_6, %c0_7], %7 {strides = array<i32>} : memref<2x128xf32, #tpu.memory_space<vmem>>, vector<2x128xf32>,
    %c27_i32 = arith.constant 27 : i32
    %9 = arith.cmpi eq, %arg0, %c27_i32 : i32
    %10 = arith.extui %9 : i1 to i32
    %c0_i32_8 = arith.constant 0 : i32
    %11 = arith.cmpi ne, %10, %c0_i32_8 : i32
    scf.if %11 {
      %c0_9 = arith.constant 0 : index
      %c0_10 = arith.constant 0 : index
      %12 = vector.load %arg7[%c0_9, %c0_10] : memref<2x128xf32, #tpu.memory_space<vmem>>, vector<2x128xf32>
      %c0_11 = arith.constant 0 : index
      %c0_12 = arith.constant 0 : index
      %13 = vector.load %arg3[%c0_11, %c0_12] : memref<1x128xf32, #tpu.memory_space<vmem>>, vector<1x128xf32>
      %14 = vector.broadcast %13 : vector<1x128xf32> to vector<2x128xf32>
      %15 = arith.addf %12, %14 : vector<2x128xf32>
      %cst_13 = arith.constant 0.000000e+00 : f32
      %16 = vector.broadcast %cst_13 : f32 to vector<2x128xf32>
      %17 = arith.maximumf %15, %16 : vector<2x128xf32>
      %c0_14 = arith.constant 0 : index
      %c0_15 = arith.constant 0 : index
      %18 = vector.load %arg4[%c0_14, %c0_15] : memref<128x2xf32, #tpu.memory_space<vmem>>, vector<128x2xf32>
      %cst_16 = arith.constant dense<0.000000e+00> : vector<2x2xf32>
      %19 = tpu.matmul %17, %18, %cst_16 {dimension_numbers = #tpu.dot_dimension_numbers<[1], [0], [0], [1], [0, 0, 1, 1], [], []>} : vector<2x128xf32>, vector<128x2xf32>, vector<2x2xf32> -> vector<2x2xf32>
      %c0_17 = arith.constant 0 : index
      %c0_18 = arith.constant 0 : index
      %20 = vector.load %arg5[%c0_17, %c0_18] : memref<1x2xf32, #tpu.memory_space<vmem>>, vector<1x2xf32>
      %21 = vector.broadcast %20 : vector<1x2xf32> to vector<2x2xf32>
      %22 = arith.addf %19, %21 : vector<2x2xf32>
      %c0_19 = arith.constant 0 : index
      %c0_20 = arith.constant 0 : index
      %23 = vector.load %arg6[%c0_19, %c0_20] : memref<2x2xf32, #tpu.memory_space<vmem>>, vector<2x2xf32>
      tpu.vector_store %arg6[%c0_19, %c0_20], %22 {strides = array<i32>} : memref<2x2xf32, #tpu.memory_space<vmem>>, vector<2x2xf32>,
    } else {
    }
    return
  }
  func.func @transform_0(%arg0: i32) -> (i32, i32) {
    %c0_i32 = arith.constant 0 : i32
    %c0_i32_0 = arith.constant 0 : i32
    return %c0_i32, %arg0 : i32, i32
  }
  func.func @transform_1(%arg0: i32) -> (i32, i32) {
    %c0_i32 = arith.constant 0 : i32
    %c0_i32_0 = arith.constant 0 : i32
    return %arg0, %c0_i32 : i32, i32
  }
  func.func @transform_2(%arg0: i32) -> (i32, i32) {
    %c0_i32 = arith.constant 0 : i32
    %c0_i32_0 = arith.constant 0 : i32
    %c0_i32_1 = arith.constant 0 : i32
    return %c0_i32, %c0_i32_0 : i32, i32
  }
  func.func @transform_3(%arg0: i32) -> (i32, i32) {
    %c0_i32 = arith.constant 0 : i32
    %c0_i32_0 = arith.constant 0 : i32
    %c0_i32_1 = arith.constant 0 : i32
    return %c0_i32, %c0_i32_0 : i32, i32
  }
  func.func @transform_4(%arg0: i32) -> (i32, i32) {
    %c0_i32 = arith.constant 0 : i32
    %c0_i32_0 = arith.constant 0 : i32
    %c0_i32_1 = arith.constant 0 : i32
    return %c0_i32, %c0_i32_0 : i32, i32
  }
  func.func @transform_5(%arg0: i32) -> (i32, i32) {
    %c0_i32 = arith.constant 0 : i32
    %c0_i32_0 = arith.constant 0 : i32
    %c0_i32_1 = arith.constant 0 : i32
    return %c0_i32, %c0_i32_0 : i32, i32
  }
}

</mosaic_0001>

<llo_original>
// kernel: simple_cnn_forward.4
$region0: #{simple_cnn_forward.4}
  #allocation0 [shape = 'u32[]', space=smem, size = 0x4, offset = 0x4, fixed_abs, tag = 'smem constant byte address 0x4 - core index']
  #allocation1 [shape = 'u32[144,128]{1,0:T(1,128)}', space=vmem, size = 0x12000, scoped, tag = 'internal scratch']
  %s0 = inlined_call_operand.vmem [shape: bf16[2,48,12544], index: 0, kind: input, shape index: {}]
  %s1 = inlined_call_operand.vmem [shape: bf16[64,48], index: 1, kind: input, shape index: {}]
  %s2 = inlined_call_operand.vmem [shape: f32[16,1], index: 2, kind: input, shape index: {}]
  %s3 = inlined_call_operand.vmem [shape: bf16[2,16,12544], index: 3, kind: output, shape index: {}]
  %s4 = sld [smem:[#allocation0]]
  $region87: #{simple_cnn_forward.4} parent=0
    _
  %s6 = ssub.s32 1, %s4
  %s7 = scalar_select 0, %s6, %s4
  $region1: #{simple_cnn_forward.4} parent=0
    #allocation2 [shape = 'u8[344064]{0}', space=vmem, size = 0x54000, scoped, tag = 'input window, operand 0']
    #allocation3 [shape = 'u8[114688]{0}', space=vmem, size = 0x1c000, scoped, tag = 'output window, operand 0']
    loop: start=0, step=1, limit=16
    $region2: #{simple_cnn_forward.4} parent=1 // loop_pre_header
      _
    $region3: #{simple_cnn_forward.4} parent=1 // loop_header
      %s9 = sphi 0, %s13
      %p10 = scmp.ge.s32.totalorder %s9, 16
      %s16 = sphi 0, %s28
      %s17 = sphi 0, %s24
      %s18 = sphi 0, %s16
      %s19 = sphi 0, %s17
      %s20 = sphi 0, %s18
      %s21 = sphi 0, %s19
      %s33 = sphi 0, %s35
      %s36 = sphi 0, %s33
      %s37 = sphi 0, %s36
      %s53 = sphi 0, %s37
      %s57 = sphi 0, %s57
      %s59 = sphi 0, %s57
      %s60 = sphi 0, %s59
      %s74 = sphi 0, %s60
      %s78 = sphi 0, %s78
      %s80 = sphi 0, %s78
      %s81 = sphi 0, %s80
      %s95 = sphi 0, %s81
      %s103 = sphi 0, %s105
      %s106 = sphi 0, %s103
      %s107 = sphi 0, %s106
      %s123 = sphi 0, %s107
    $region4: #{simple_cnn_forward.4} parent=1 // loop_header_branch
      %12 = sbr.rel (%p10) target = $region8
    $region5: #{simple_cnn_forward.4} parent=1 // loop_body
      %s14 = ssub.s32 %s9, 1
      %s15 = ssub.s32 %s9, 2
      %s22 = sadd.s32 1, %s17
      %p23 = scmp.ge.s32.totalorder %s22, 7
      %s24 = scalar_select %p23, 0, %s22
      %s25 = sadd.s32 1, %s16
      %s26 = scalar_select %p23, %s25, %s16
      %p27 = scmp.ge.s32.totalorder %s26, 2
      %s28 = scalar_select %p27, 0, %s26
      %s29 = ssub.s32 %s16, %s28
      %s30 = ssub.s32 %s17, %s24
      %s31 = sor.u32 %s29, %s30
      %p32 = scmp.eq.s32.totalorder %s31, 0
      %s34 = sadd.s32 %s33, 1
      %s35 = scalar_select %p32, %s33, %s34
      %p38 = pneg %p32
      %p39 = scmp.eq.s32.totalorder %s9, 13
      %p40 = por %p38, %p39
      %p41 = scmp.ne.s32.totalorder %s33, %s36
      %p42 = scmp.eq.s32.totalorder %s9, 0
      %p43 = por %p41, %p42
      %p44 = scmp.ne.s32.totalorder %s33, %s36
      %p45 = scmp.eq.s32.totalorder %s14, 13
      %p46 = por %p44, %p45
      %p47 = scmp.ne.s32.totalorder %s36, %s37
      %p48 = scmp.eq.s32.totalorder %s14, 0
      %p49 = por %p47, %p48
      %p50 = scmp.ne.s32.totalorder %s36, %s37
      %p51 = scmp.eq.s32.totalorder %s15, 13
      %p52 = por %p50, %p51
      %p54 = scmp.ne.s32.totalorder %s37, %s53
      %p55 = scmp.eq.s32.totalorder %s15, 0
      %p56 = por %p54, %p55
      %s58 = sadd.s32 %s57, 1
      %p61 = scmp.eq.s32.totalorder %s9, 13
      %p62 = scmp.ne.s32.totalorder %s57, %s59
      %p63 = scmp.eq.s32.totalorder %s9, 0
      %p64 = por %p62, %p63
      %p65 = scmp.ne.s32.totalorder %s57, %s59
      %p66 = scmp.eq.s32.totalorder %s14, 13
      %p67 = por %p65, %p66
      %p68 = scmp.ne.s32.totalorder %s59, %s60
      %p69 = scmp.eq.s32.totalorder %s14, 0
      %p70 = por %p68, %p69
      %p71 = scmp.ne.s32.totalorder %s59, %s60
      %p72 = scmp.eq.s32.totalorder %s15, 13
      %p73 = por %p71, %p72
      %p75 = scmp.ne.s32.totalorder %s60, %s74
      %p76 = scmp.eq.s32.totalorder %s15, 0
      %p77 = por %p75, %p76
      %s79 = sadd.s32 %s78, 1
      %p82 = scmp.eq.s32.totalorder %s9, 13
      %p83 = scmp.ne.s32.totalorder %s78, %s80
      %p84 = scmp.eq.s32.totalorder %s9, 0
      %p85 = por %p83, %p84
      %p86 = scmp.ne.s32.totalorder %s78, %s80
      %p87 = scmp.eq.s32.totalorder %s14, 13
      %p88 = por %p86, %p87
      %p89 = scmp.ne.s32.totalorder %s80, %s81
      %p90 = scmp.eq.s32.totalorder %s14, 0
      %p91 = por %p89, %p90
      %p92 = scmp.ne.s32.totalorder %s80, %s81
      %p93 = scmp.eq.s32.totalorder %s15, 13
      %p94 = por %p92, %p93
      %p96 = scmp.ne.s32.totalorder %s81, %s95
      %p97 = scmp.eq.s32.totalorder %s15, 0
      %p98 = por %p96, %p97
      %s99 = ssub.s32 %s16, %s28
      %s100 = ssub.s32 %s17, %s24
      %s101 = sor.u32 %s99, %s100
      %p102 = scmp.eq.s32.totalorder %s101, 0
      %s104 = sadd.s32 %s103, 1
      %s105 = scalar_select %p102, %s103, %s104
      %p108 = pneg %p102
      %p109 = scmp.eq.s32.totalorder %s9, 13
      %p110 = por %p108, %p109
      %p111 = scmp.ne.s32.totalorder %s103, %s106
      %p112 = scmp.eq.s32.totalorder %s9, 0
      %p113 = por %p111, %p112
      %p114 = scmp.ne.s32.totalorder %s103, %s106
      %p115 = scmp.eq.s32.totalorder %s14, 13
      %p116 = por %p114, %p115
      %p117 = scmp.ne.s32.totalorder %s106, %s107
      %p118 = scmp.eq.s32.totalorder %s14, 0
      %p119 = por %p117, %p118
      %p120 = scmp.ne.s32.totalorder %s106, %s107
      %p121 = scmp.eq.s32.totalorder %s15, 13
      %p122 = por %p120, %p121
      %p124 = scmp.ne.s32.totalorder %s107, %s123
      %p125 = scmp.eq.s32.totalorder %s15, 0
      %p126 = por %p124, %p125
      %p127 = scmp.le.s32.totalorder 1, %s9
      %p128 = scmp.lt.s32.totalorder %s9, 15
      %p129 = pnand %p127, %p128
      %p130 = pneg %p129
      // Predicated region
      $region9: #{simple_cnn_forward.4} parent=5 // pred_check
        _
      $region10: #{simple_cnn_forward.4} parent=5 // pred_check_branch
        %132 = sbr.rel (%p129) target = $region12
      $region11: #{simple_cnn_forward.4} parent=5 // pred_region
        %s133 = ssub.s32 %s9, 1
        // Predicated region
        $region13: #{simple_cnn_forward.4} parent=11 // pred_check
          %p134 = pneg %p70
        $region14: #{simple_cnn_forward.4} parent=11 // pred_check_branch
          %136 = sbr.rel (%p134) target = $region16
        $region15: #{simple_cnn_forward.4} parent=11 // pred_region
          _
        $region16: #{simple_cnn_forward.4} parent=11 // pred_fallthru
          _
        // Predicated region
        $region17: #{simple_cnn_forward.4} parent=11 // pred_check
          %p137 = pneg %p91
        $region18: #{simple_cnn_forward.4} parent=11 // pred_check_branch
          %139 = sbr.rel (%p137) target = $region20
        $region19: #{simple_cnn_forward.4} parent=11 // pred_region
          _
        $region20: #{simple_cnn_forward.4} parent=11 // pred_fallthru
          _
      $region12: #{simple_cnn_forward.4} parent=5 // pred_fallthru
        _
      %p140 = scmp.lt.s32.totalorder %s9, 14
      // Predicated region
      $region21: #{simple_cnn_forward.4} parent=5 // pred_check
        %p141 = pneg %p140
      $region22: #{simple_cnn_forward.4} parent=5 // pred_check_branch
        %143 = sbr.rel (%p141) target = $region24
      $region23: #{simple_cnn_forward.4} parent=5 // pred_region
        // Predicated region
        $region25: #{simple_cnn_forward.4} parent=23 // pred_check
          %p144 = pneg %p43
        $region26: #{simple_cnn_forward.4} parent=23 // pred_check_branch
          %146 = sbr.rel (%p144) target = $region28
        $region27: #{simple_cnn_forward.4} parent=23 // pred_region
          %s147 = sand.u32 %s33, 1
          %s148 = sand.u32 %s33, 1
          %s149 = smul.addr %s148, 336
          %s150 = scalar_lea.vmem [#allocation2], %s149
          %s151 = smul.u32 14, %s17
          %s152 = smul.addr %s16, 588
          %s153 = sadd.s32 %s151, %s152
          %s154 = smul.addr %s153, 4
          %s155 = scalar_lea.vmem %s0, %s154
          // Predicated region
          $region29: #{simple_cnn_forward.4} parent=27 // pred_check
            _
          $region30: #{simple_cnn_forward.4} parent=27 // pred_check_branch
            %157 = sbr.rel (0) target = $region32
          $region31: #{simple_cnn_forward.4} parent=27 // pred_region
            // Predicated region
            $region33: #{simple_cnn_forward.4} parent=31 // pred_check
              _
            $region34: #{simple_cnn_forward.4} parent=31 // pred_check_branch
              %159 = sbr.rel (0) target = $region36
            $region35: #{simple_cnn_forward.4} parent=31 // pred_region
              loop: start=0, step=1, limit=1
              $region37: #{simple_cnn_forward.4} parent=35 // loop_pre_header
                _
              $region38: #{simple_cnn_forward.4} parent=35 // loop_header
                %s161 = sphi 0, %s165
                %p162 = scmp.ge.s32.totalorder %s161, 1
                %s166 = sphi %s155, %s155
                %s167 = sphi %s150, %s150
              $region39: #{simple_cnn_forward.4} parent=35 // loop_header_branch
                %164 = sbr.rel (%p162) target = $region43
              $region40: #{simple_cnn_forward.4} parent=35 // loop_body
                %v168 = vld [vmem:[%s166] sm:$0xff]
                %169 = vst [vmem:[%s167] sm:$0xff] %v168
                %v170 = vld [vmem:[%s166 + $0x8] sm:$0xff]
                %171 = vst [vmem:[%s167 + $0x8] sm:$0xff] %v170
                %v172 = vld [vmem:[%s166 + $0x10] sm:$0xff]
                %173 = vst [vmem:[%s167 + $0x10] sm:$0xff] %v172
                %v174 = vld [vmem:[%s166 + $0x18] sm:$0xff]
                %175 = vst [vmem:[%s167 + $0x18] sm:$0xff] %v174
                %v176 = vld [vmem:[%s166 + $0x20] sm:$0xff]
                %177 = vst [vmem:[%s167 + $0x20] sm:$0xff] %v176
                %v178 = vld [vmem:[%s166 + $0x28] sm:$0xff]
                %179 = vst [vmem:[%s167 + $0x28] sm:$0xff] %v178
                %v180 = vld [vmem:[%s166 + $0x30] sm:$0xff]
                %181 = vst [vmem:[%s167 + $0x30] sm:$0xff] %v180
                %v182 = vld [vmem:[%s166 + $0x188] sm:$0xff]
                %183 = vst [vmem:[%s167 + $0x38] sm:$0xff] %v182
                %v184 = vld [vmem:[%s166 + $0x190] sm:$0xff]
                %185 = vst [vmem:[%s167 + $0x40] sm:$0xff] %v184
                %v186 = vld [vmem:[%s166 + $0x198] sm:$0xff]
                %187 = vst [vmem:[%s167 + $0x48] sm:$0xff] %v186
                %v188 = vld [vmem:[%s166 + $0x1a0] sm:$0xff]
                %189 = vst [vmem:[%s167 + $0x50] sm:$0xff] %v188
                %v190 = vld [vmem:[%s166 + $0x1a8] sm:$0xff]
                %191 = vst [vmem:[%s167 + $0x58] sm:$0xff] %v190
                %v192 = vld [vmem:[%s166 + $0x1b0] sm:$0xff]
                %193 = vst [vmem:[%s167 + $0x60] sm:$0xff] %v192
                %v194 = vld [vmem:[%s166 + $0x1b8] sm:$0xff]
                %195 = vst [vmem:[%s167 + $0x68] sm:$0xff] %v194
                %v196 = vld [vmem:[%s166 + $0x310] sm:$0xff]
                %197 = vst [vmem:[%s167 + $0x70] sm:$0xff] %v196
                %v198 = vld [vmem:[%s166 + $0x318] sm:$0xff]
                %199 = vst [vmem:[%s167 + $0x78] sm:$0xff] %v198
                %v200 = vld [vmem:[%s166 + $0x320] sm:$0xff]
                %201 = vst [vmem:[%s167 + $0x80] sm:$0xff] %v200
                %v202 = vld [vmem:[%s166 + $0x328] sm:$0xff]
                %203 = vst [vmem:[%s167 + $0x88] sm:$0xff] %v202
                %v204 = vld [vmem:[%s166 + $0x330] sm:$0xff]
                %205 = vst [vmem:[%s167 + $0x90] sm:$0xff] %v204
                %v206 = vld [vmem:[%s166 + $0x338] sm:$0xff]
                %207 = vst [vmem:[%s167 + $0x98] sm:$0xff] %v206
                %v208 = vld [vmem:[%s166 + $0x340] sm:$0xff]
                %209 = vst [vmem:[%s167 + $0xa0] sm:$0xff] %v208
                %v210 = vld [vmem:[%s166 + $0x498] sm:$0xff]
                %211 = vst [vmem:[%s167 + $0xa8] sm:$0xff] %v210
                %v212 = vld [vmem:[%s166 + $0x4a0] sm:$0xff]
                %213 = vst [vmem:[%s167 + $0xb0] sm:$0xff] %v212
                %v214 = vld [vmem:[%s166 + $0x4a8] sm:$0xff]
                %215 = vst [vmem:[%s167 + $0xb8] sm:$0xff] %v214
                %v216 = vld [vmem:[%s166 + $0x4b0] sm:$0xff]
                %217 = vst [vmem:[%s167 + $0xc0] sm:$0xff] %v216
                %v218 = vld [vmem:[%s166 + $0x4b8] sm:$0xff]
                %219 = vst [vmem:[%s167 + $0xc8] sm:$0xff] %v218
                %v220 = vld [vmem:[%s166 + $0x4c0] sm:$0xff]
                %221 = vst [vmem:[%s167 + $0xd0] sm:$0xff] %v220
                %v222 = vld [vmem:[%s166 + $0x4c8] sm:$0xff]
                %223 = vst [vmem:[%s167 + $0xd8] sm:$0xff] %v222
                %v224 = vld [vmem:[%s166 + $0x620] sm:$0xff]
                %225 = vst [vmem:[%s167 + $0xe0] sm:$0xff] %v224
                %v226 = vld [vmem:[%s166 + $0x628] sm:$0xff]
                %227 = vst [vmem:[%s167 + $0xe8] sm:$0xff] %v226
                %v228 = vld [vmem:[%s166 + $0x630] sm:$0xff]
                %229 = vst [vmem:[%s167 + $0xf0] sm:$0xff] %v228
                %v230 = vld [vmem:[%s166 + $0x638] sm:$0xff]
                %231 = vst [vmem:[%s167 + $0xf8] sm:$0xff] %v230
                %v232 = vld [vmem:[%s166 + $0x640] sm:$0xff]
                %233 = vst [vmem:[%s167 + $0x100] sm:$0xff] %v232
                %v234 = vld [vmem:[%s166 + $0x648] sm:$0xff]
                %235 = vst [vmem:[%s167 + $0x108] sm:$0xff] %v234
                %v236 = vld [vmem:[%s166 + $0x650] sm:$0xff]
                %237 = vst [vmem:[%s167 + $0x110] sm:$0xff] %v236
                %v238 = vld [vmem:[%s166 + $0x7a8] sm:$0xff]
                %239 = vst [vmem:[%s167 + $0x118] sm:$0xff] %v238
                %v240 = vld [vmem:[%s166 + $0x7b0] sm:$0xff]
                %241 = vst [vmem:[%s167 + $0x120] sm:$0xff] %v240
                %v242 = vld [vmem:[%s166 + $0x7b8] sm:$0xff]
                %243 = vst [vmem:[%s167 + $0x128] sm:$0xff] %v242
                %v244 = vld [vmem:[%s166 + $0x7c0] sm:$0xff]
                %245 = vst [vmem:[%s167 + $0x130] sm:$0xff] %v244
                %v246 = vld [vmem:[%s166 + $0x7c8] sm:$0xff]
                %247 = vst [vmem:[%s167 + $0x138] sm:$0xff] %v246
                %v248 = vld [vmem:[%s166 + $0x7d0] sm:$0xff]
                %249 = vst [vmem:[%s167 + $0x140] sm:$0xff] %v248
                %v250 = vld [vmem:[%s166 + $0x7d8] sm:$0xff]
                %251 = vst [vmem:[%s167 + $0x148] sm:$0xff] %v250
              $region41: #{simple_cnn_forward.4} parent=35 // loop_footer
                %s165 = sadd.s32 1, %s161
              $region42: #{simple_cnn_forward.4} parent=35 // loop_footer_branch
                %160 = sbr.rel target = $region38
              $region43: #{simple_cnn_forward.4} parent=35 // loop_exit
                _
            $region36: #{simple_cnn_forward.4} parent=31 // pred_fallthru
              _
            // Predicated region
            $region44: #{simple_cnn_forward.4} parent=31 // pred_check
              _
            $region45: #{simple_cnn_forward.4} parent=31 // pred_check_branch
              %253 = sbr.rel target = $region47
            $region46: #{simple_cnn_forward.4} parent=31 // pred_region
              _
            $region47: #{simple_cnn_forward.4} parent=31 // pred_fallthru
              _
          $region32: #{simple_cnn_forward.4} parent=27 // pred_fallthru
            _
          %254 = vnop
        $region28: #{simple_cnn_forward.4} parent=23 // pred_fallthru
          _
      $region24: #{simple_cnn_forward.4} parent=5 // pred_fallthru
        _
      %p255 = scmp.le.s32.totalorder 1, %s9
      %p256 = scmp.lt.s32.totalorder %s9, 15
      %p257 = pnand %p255, %p256
      %p258 = pneg %p257
      // Predicated region
      $region48: #{simple_cnn_forward.4} parent=5 // pred_check
        _
      $region49: #{simple_cnn_forward.4} parent=5 // pred_check_branch
        %260 = sbr.rel (%p257) target = $region51
      $region50: #{simple_cnn_forward.4} parent=5 // pred_region
        %s261 = ssub.s32 %s9, 1
        %s262 = sand.u32 %s36, 1
        %s263 = sand.u32 %s36, 1
        %s264 = smul.addr %s263, 336
        %s265 = scalar_lea.vmem [#allocation2], %s264
        // Predicated region
        $region52: #{simple_cnn_forward.4} parent=50 // pred_check
          %p266 = pneg %p49
        $region53: #{simple_cnn_forward.4} parent=50 // pred_check_branch
          %268 = sbr.rel (%p266) target = $region55
        $region54: #{simple_cnn_forward.4} parent=50 // pred_region
          _
        $region55: #{simple_cnn_forward.4} parent=50 // pred_fallthru
          _
        %s269 = sand.u32 %s36, 1
        %s270 = sand.u32 %s36, 1
        %s271 = smul.addr %s270, 336
        %s272 = scalar_lea.vmem [#allocation2], %s271
        %p273 = pneg %p49
        %p274 = pneg %p46
        %p275 = pneg %p70
        %p276 = pneg %p67
        %p277 = pneg %p91
        %p278 = pneg %p88
        %p279 = pneg %p119
        %p280 = pneg %p116
        %s281 = sand.u32 %s106, 1
        %s282 = sand.u32 %s106, 1
        %s283 = smul.addr %s282, 112
        %s284 = scalar_lea.vmem [#allocation3], %s283
        %s285 = smul.u32 14, %s19
        %s286 = smul.u32 14, %s19
        %v288 = vld [vmem:[%s1] sm:$0xf]
        %v289 = vld [vmem:[%s1 + $0x4] sm:$0xf]
        %v290 = vld [vmem:[%s1 + $0x8] sm:$0xf]
        %v291 = vld [vmem:[%s1 + $0xc] sm:$0xf]
        %v292 = vld [vmem:[%s1 + $0x10] sm:$0xf]
        %v293 = vld [vmem:[%s1 + $0x14] sm:$0xf]
        %v294 = vld [vmem:[%s1 + $0x18] sm:$0xf]
        %v295 = vld [vmem:[%s1 + $0x1c] sm:$0xf]
        %v296 = vld [vmem:[%s265] sm:$0xff]
        %v297 = vld [vmem:[%s265 + $0x8] sm:$0xff]
        %v298 = vld [vmem:[%s265 + $0x10] sm:$0xff]
        %v299 = vld [vmem:[%s265 + $0x18] sm:$0xff]
        %v300 = vld [vmem:[%s265 + $0x20] sm:$0xff]
        %v301 = vld [vmem:[%s265 + $0x28] sm:$0xff]
        %v302 = vld [vmem:[%s265 + $0x30] sm:$0xff]
        %v303 = vld [vmem:[%s265 + $0x38] sm:$0xff]
        %v304 = vld [vmem:[%s265 + $0x40] sm:$0xff]
        %v305 = vld [vmem:[%s265 + $0x48] sm:$0xff]
        %v306 = vld [vmem:[%s265 + $0x50] sm:$0xff]
        %v307 = vld [vmem:[%s265 + $0x58] sm:$0xff]
        %v308 = vld [vmem:[%s265 + $0x60] sm:$0xff]
        %v309 = vld [vmem:[%s265 + $0x68] sm:$0xff]
        %v310 = vld [vmem:[%s265 + $0x70] sm:$0xff]
        %v311 = vld [vmem:[%s265 + $0x78] sm:$0xff]
        %v312 = vld [vmem:[%s265 + $0x80] sm:$0xff]
        %v313 = vld [vmem:[%s265 + $0x88] sm:$0xff]
        %v314 = vld [vmem:[%s265 + $0x90] sm:$0xff]
        %v315 = vld [vmem:[%s265 + $0x98] sm:$0xff]
        %v316 = vld [vmem:[%s265 + $0xa0] sm:$0xff]
        %v317 = vld [vmem:[%s265 + $0xa8] sm:$0xff]
        %v318 = vld [vmem:[%s265 + $0xb0] sm:$0xff]
        %v319 = vld [vmem:[%s265 + $0xb8] sm:$0xff]
        %v320 = vld [vmem:[%s265 + $0xc0] sm:$0xff]
        %v321 = vld [vmem:[%s265 + $0xc8] sm:$0xff]
        %v322 = vld [vmem:[%s265 + $0xd0] sm:$0xff]
        %v323 = vld [vmem:[%s265 + $0xd8] sm:$0xff]
        %v324 = vld [vmem:[%s265 + $0xe0] sm:$0xff]
        %v325 = vld [vmem:[%s265 + $0xe8] sm:$0xff]
        %v326 = vld [vmem:[%s265 + $0xf0] sm:$0xff]
        %v327 = vld [vmem:[%s265 + $0xf8] sm:$0xff]
        %v328 = vld [vmem:[%s265 + $0x100] sm:$0xff]
        %v329 = vld [vmem:[%s265 + $0x108] sm:$0xff]
        %v330 = vld [vmem:[%s265 + $0x110] sm:$0xff]
        %v331 = vld [vmem:[%s265 + $0x118] sm:$0xff]
        %v332 = vld [vmem:[%s265 + $0x120] sm:$0xff]
        %v333 = vld [vmem:[%s265 + $0x128] sm:$0xff]
        %v334 = vld [vmem:[%s265 + $0x130] sm:$0xff]
        %v335 = vld [vmem:[%s265 + $0x138] sm:$0xff]
        %v336 = vld [vmem:[%s265 + $0x140] sm:$0xff]
        %v337 = vld [vmem:[%s265 + $0x148] sm:$0xff]
        %v346 = vunpack.c.l.b16 %v288
        %v347 = vunpack.c.l.b16 %v289
        %v348 = vunpack.c.l.b16 %v290
        %v349 = vunpack.c.l.b16 %v291
        %v350 = vunpack.c.l.b16 %v292
        %v351 = vunpack.c.l.b16 %v293
        %v352 = vunpack.c.l.b16 %v294
        %v353 = vunpack.c.l.b16 %v295
        %v354 = vpack.c.b16 %v347, %v346
        %v355 = vpack.c.b16 %v349, %v348
        %v356 = vpack.c.b16 %v351, %v350
        %v357 = vpack.c.b16 %v353, %v352
        %v400 = vunpack.c.l.b16 %v296
        %v401 = vunpack.c.h.b16 %v296
        %v402 = vunpack.c.l.b16 %v297
        %v403 = vunpack.c.h.b16 %v297
        %v404 = vunpack.c.l.b16 %v298
        %v405 = vunpack.c.h.b16 %v298
        %v406 = vunpack.c.l.b16 %v299
        %v407 = vunpack.c.h.b16 %v299
        %v408 = vunpack.c.l.b16 %v300
        %v409 = vunpack.c.h.b16 %v300
        %v410 = vunpack.c.l.b16 %v301
        %v411 = vunpack.c.h.b16 %v301
        %v412 = vunpack.c.l.b16 %v302
        %v413 = vunpack.c.h.b16 %v302
        %v414 = vunpack.c.l.b16 %v303
        %v415 = vunpack.c.h.b16 %v303
        %v416 = vunpack.c.l.b16 %v304
        %v417 = vunpack.c.h.b16 %v304
        %v418 = vunpack.c.l.b16 %v305
        %v419 = vunpack.c.h.b16 %v305
        %v420 = vunpack.c.l.b16 %v306
        %v421 = vunpack.c.h.b16 %v306
        %v422 = vunpack.c.l.b16 %v307
        %v423 = vunpack.c.h.b16 %v307
        %v424 = vunpack.c.l.b16 %v308
        %v425 = vunpack.c.h.b16 %v308
        %v426 = vunpack.c.l.b16 %v309
        %v427 = vunpack.c.h.b16 %v309
        %v428 = vunpack.c.l.b16 %v310
        %v429 = vunpack.c.h.b16 %v310
        %v430 = vunpack.c.l.b16 %v311
        %v431 = vunpack.c.h.b16 %v311
        %v432 = vunpack.c.l.b16 %v312
        %v433 = vunpack.c.h.b16 %v312
        %v434 = vunpack.c.l.b16 %v313
        %v435 = vunpack.c.h.b16 %v313
        %v436 = vunpack.c.l.b16 %v314
        %v437 = vunpack.c.h.b16 %v314
        %v438 = vunpack.c.l.b16 %v315
        %v439 = vunpack.c.h.b16 %v315
        %v440 = vunpack.c.l.b16 %v316
        %v441 = vunpack.c.h.b16 %v316
        %v442 = vunpack.c.l.b16 %v317
        %v443 = vunpack.c.h.b16 %v317
        %v444 = vunpack.c.l.b16 %v318
        %v445 = vunpack.c.h.b16 %v318
        %v446 = vunpack.c.l.b16 %v319
        %v447 = vunpack.c.h.b16 %v319
        %v448 = vunpack.c.l.b16 %v320
        %v449 = vunpack.c.h.b16 %v320
        %v450 = vunpack.c.l.b16 %v321
        %v451 = vunpack.c.h.b16 %v321
        %v452 = vunpack.c.l.b16 %v322
        %v453 = vunpack.c.h.b16 %v322
        %v454 = vunpack.c.l.b16 %v323
        %v455 = vunpack.c.h.b16 %v323
        %v456 = vunpack.c.l.b16 %v324
        %v457 = vunpack.c.h.b16 %v324
        %v458 = vunpack.c.l.b16 %v325
        %v459 = vunpack.c.h.b16 %v325
        %v460 = vunpack.c.l.b16 %v326
        %v461 = vunpack.c.h.b16 %v326
        %v462 = vunpack.c.l.b16 %v327
        %v463 = vunpack.c.h.b16 %v327
        %v464 = vunpack.c.l.b16 %v328
        %v465 = vunpack.c.h.b16 %v328
        %v466 = vunpack.c.l.b16 %v329
        %v467 = vunpack.c.h.b16 %v329
        %v468 = vunpack.c.l.b16 %v330
        %v469 = vunpack.c.h.b16 %v330
        %v470 = vunpack.c.l.b16 %v331
        %v471 = vunpack.c.h.b16 %v331
        %v472 = vunpack.c.l.b16 %v332
        %v473 = vunpack.c.h.b16 %v332
        %v474 = vunpack.c.l.b16 %v333
        %v475 = vunpack.c.h.b16 %v333
        %v476 = vunpack.c.l.b16 %v334
        %v477 = vunpack.c.h.b16 %v334
        %v478 = vunpack.c.l.b16 %v335
        %v479 = vunpack.c.h.b16 %v335
        %v480 = vunpack.c.l.b16 %v336
        %v481 = vunpack.c.h.b16 %v336
        %v482 = vunpack.c.l.b16 %v337
        %v483 = vunpack.c.h.b16 %v337
        %v484 = vpack.c.b16 %v414, %v400
        %v485 = vpack.c.b16 %v415, %v401
        %v486 = vpack.c.b16 %v416, %v402
        %v487 = vpack.c.b16 %v417, %v403
        %v488 = vpack.c.b16 %v418, %v404
        %v489 = vpack.c.b16 %v419, %v405
        %v490 = vpack.c.b16 %v420, %v406
        %v491 = vpack.c.b16 %v421, %v407
        %v492 = vpack.c.b16 %v422, %v408
        %v493 = vpack.c.b16 %v423, %v409
        %v494 = vpack.c.b16 %v424, %v410
        %v495 = vpack.c.b16 %v425, %v411
        %v496 = vpack.c.b16 %v426, %v412
        %v497 = vpack.c.b16 %v427, %v413
        %v498 = vpack.c.b16 %v442, %v428
        %v499 = vpack.c.b16 %v443, %v429
        %v500 = vpack.c.b16 %v444, %v430
        %v501 = vpack.c.b16 %v445, %v431
        %v502 = vpack.c.b16 %v446, %v432
        %v503 = vpack.c.b16 %v447, %v433
        %v504 = vpack.c.b16 %v448, %v434
        %v505 = vpack.c.b16 %v449, %v435
        %v506 = vpack.c.b16 %v450, %v436
        %v507 = vpack.c.b16 %v451, %v437
        %v508 = vpack.c.b16 %v452, %v438
        %v509 = vpack.c.b16 %v453, %v439
        %v510 = vpack.c.b16 %v454, %v440
        %v511 = vpack.c.b16 %v455, %v441
        %v512 = vpack.c.b16 %v470, %v456
        %v513 = vpack.c.b16 %v471, %v457
        %v514 = vpack.c.b16 %v472, %v458
        %v515 = vpack.c.b16 %v473, %v459
        %v516 = vpack.c.b16 %v474, %v460
        %v517 = vpack.c.b16 %v475, %v461
        %v518 = vpack.c.b16 %v476, %v462
        %v519 = vpack.c.b16 %v477, %v463
        %v520 = vpack.c.b16 %v478, %v464
        %v521 = vpack.c.b16 %v479, %v465
        %v522 = vpack.c.b16 %v480, %v466
        %v523 = vpack.c.b16 %v481, %v467
        %v524 = vpack.c.b16 %v482, %v468
        %v525 = vpack.c.b16 %v483, %v469
        %vm568 = vcmask 392192
        %v570 = vsel %vm568, %v354, 0
        %v573 = vsel %vm568, %v355, 0
        %v576 = vsel %vm568, %v356, 0
        %v579 = vsel %vm568, %v357, 0
        %581 = vmatprep.subr.bf16.mxu0 %v485
        %582 = vmatpush1.bf16.msra.mxu0 %v484
        %583 = vmatprep.subr.bf16.mxu0 %v499
        %584 = vmatpush1.bf16.msra.mxu0 %v498
        %585 = vmatprep.subr.bf16.mxu0 %v513
        %586 = vmatpush1.bf16.msra.mxu0 %v512
        %587 = vmatprep.subr.bf16.mxu0 0
        %588 = vmatpush1.bf16.msra.mxu0 0
        %589 = vmatprep.subr.bf16.mxu0 0
        %590 = vmatpush1.bf16.msra.mxu0 0
        %591 = vmatprep.subr.bf16.mxu0 0
        %592 = vmatpush1.bf16.msra.mxu0 0
        %593 = vmatprep.subr.bf16.mxu0 0
        %594 = vmatpush1.bf16.msra.mxu0 0
        %595 = vmatprep.subr.bf16.mxu0 0
        %596 = vmatpush1.bf16.msra.mxu0 0
        %597 = vmatprep.subr.bf16.mxu0 0
        %598 = vmatpush1.bf16.msra.mxu0 0
        %599 = vmatprep.subr.bf16.mxu0 0
        %600 = vmatpush1.bf16.msra.mxu0 0
        %601 = vmatprep.subr.bf16.mxu0 0
        %602 = vmatpush1.bf16.msra.mxu0 0
        %603 = vmatprep.subr.bf16.mxu0 0
        %604 = vmatpush1.bf16.msra.mxu0 0
        %605 = vmatprep.subr.bf16.mxu0 0
        %606 = vmatpush1.bf16.msra.mxu0 0
        %607 = vmatprep.subr.bf16.mxu0 0
        %608 = vmatpush1.bf16.msra.mxu0 0
        %609 = vmatprep.subr.bf16.mxu0 0
        %610 = vmatpush1.bf16.msra.mxu0 0
        %611 = vmatprep.subr.bf16.mxu0 0
        %612 = vmatpush1.bf16.msra.mxu0 0
        %613 = vmatprep.mubr.bf16.mxu0 0
        %614 = vmatmul.mubr.bf16.gmra.mrb[0].mxu0 %v570
        %v615 = vpop.f32.mrb[0].mxu0
        %v616 = vadd.f32 0.0, %v615
        %v617 = vpop.f32.mrb[0].mxu0
        %v618 = vadd.f32 0.0, %v617
        %v619 = vpop.f32.mrb[0].mxu0
        %v620 = vadd.f32 0.0, %v619
        %v621 = vpop.f32.mrb[0].mxu0
        %v622 = vadd.f32 0.0, %v621
        %623 = vmatprep.mubr.bf16.mxu0 0
        %624 = vmatmul.mubr.bf16.gmra.mrb[0].mxu0 %v573
        %v625 = vpop.f32.mrb[0].mxu0
        %v626 = vadd.f32 0.0, %v625
        %v627 = vpop.f32.mrb[0].mxu0
        %v628 = vadd.f32 0.0, %v627
        %v629 = vpop.f32.mrb[0].mxu0
        %v630 = vadd.f32 0.0, %v629
        %v631 = vpop.f32.mrb[0].mxu0
        %v632 = vadd.f32 0.0, %v631
        %633 = vmatprep.mubr.bf16.mxu0 0
        %634 = vmatmul.mubr.bf16.gmra.mrb[0].mxu0 %v576
        %v635 = vpop.f32.mrb[0].mxu0
        %v636 = vadd.f32 0.0, %v635
        %v637 = vpop.f32.mrb[0].mxu0
        %v638 = vadd.f32 0.0, %v637
        %v639 = vpop.f32.mrb[0].mxu0
        %v640 = vadd.f32 0.0, %v639
        %v641 = vpop.f32.mrb[0].mxu0
        %v642 = vadd.f32 0.0, %v641
        %643 = vmatprep.mubr.bf16.mxu0 0
        %644 = vmatmul.mubr.bf16.gmra.mrb[0].mxu0 %v579
        %v645 = vpop.f32.mrb[0].mxu0
        %v646 = vadd.f32 0.0, %v645
        %v647 = vpop.f32.mrb[0].mxu0
        %v648 = vadd.f32 0.0, %v647
        %v649 = vpop.f32.mrb[0].mxu0
        %v650 = vadd.f32 0.0, %v649
        %v651 = vpop.f32.mrb[0].mxu0
        %v652 = vadd.f32 0.0, %v651
        %653 = vdwg.mxu0
        %654 = vmatprep.subr.bf16.mxu0 %v487
        %655 = vmatpush1.bf16.msra.mxu0 %v486
        %656 = vmatprep.subr.bf16.mxu0 %v501
        %657 = vmatpush1.bf16.msra.mxu0 %v500
        %658 = vmatprep.subr.bf16.mxu0 %v515
        %659 = vmatpush1.bf16.msra.mxu0 %v514
        %660 = vmatprep.subr.bf16.mxu0 0
        %661 = vmatpush1.bf16.msra.mxu0 0
        %662 = vmatprep.subr.bf16.mxu0 0
        %663 = vmatpush1.bf16.msra.mxu0 0
        %664 = vmatprep.subr.bf16.mxu0 0
        %665 = vmatpush1.bf16.msra.mxu0 0
        %666 = vmatprep.subr.bf16.mxu0 0
        %667 = vmatpush1.bf16.msra.mxu0 0
        %668 = vmatprep.subr.bf16.mxu0 0
        %669 = vmatpush1.bf16.msra.mxu0 0
        %670 = vmatprep.subr.bf16.mxu0 0
        %671 = vmatpush1.bf16.msra.mxu0 0
        %672 = vmatprep.subr.bf16.mxu0 0
        %673 = vmatpush1.bf16.msra.mxu0 0
        %674 = vmatprep.subr.bf16.mxu0 0
        %675 = vmatpush1.bf16.msra.mxu0 0
        %676 = vmatprep.subr.bf16.mxu0 0
        %677 = vmatpush1.bf16.msra.mxu0 0
        %678 = vmatprep.subr.bf16.mxu0 0
        %679 = vmatpush1.bf16.msra.mxu0 0
        %680 = vmatprep.subr.bf16.mxu0 0
        %681 = vmatpush1.bf16.msra.mxu0 0
        %682 = vmatprep.subr.bf16.mxu0 0
        %683 = vmatpush1.bf16.msra.mxu0 0
        %684 = vmatprep.subr.bf16.mxu0 0
        %685 = vmatpush1.bf16.msra.mxu0 0
        %686 = vmatprep.mubr.bf16.mxu0 0
        %687 = vmatmul.mubr.bf16.gmra.mrb[0].mxu0 %v570
        %v688 = vpop.f32.mrb[0].mxu0
        %v689 = vadd.f32 0.0, %v688
        %v690 = vpop.f32.mrb[0].mxu0
        %v691 = vadd.f32 0.0, %v690
        %v692 = vpop.f32.mrb[0].mxu0
        %v693 = vadd.f32 0.0, %v692
        %v694 = vpop.f32.mrb[0].mxu0
        %v695 = vadd.f32 0.0, %v694
        %696 = vmatprep.mubr.bf16.mxu0 0
        %697 = vmatmul.mubr.bf16.gmra.mrb[0].mxu0 %v573
        %v698 = vpop.f32.mrb[0].mxu0
        %v699 = vadd.f32 0.0, %v698
        %v700 = vpop.f32.mrb[0].mxu0
        %v701 = vadd.f32 0.0, %v700
        %v702 = vpop.f32.mrb[0].mxu0
        %v703 = vadd.f32 0.0, %v702
        %v704 = vpop.f32.mrb[0].mxu0
        %v705 = vadd.f32 0.0, %v704
        %706 = vmatprep.mubr.bf16.mxu0 0
        %707 = vmatmul.mubr.bf16.gmra.mrb[0].mxu0 %v576
        %v708 = vpop.f32.mrb[0].mxu0
        %v709 = vadd.f32 0.0, %v708
        %v710 = vpop.f32.mrb[0].mxu0
        %v711 = vadd.f32 0.0, %v710
        %v712 = vpop.f32.mrb[0].mxu0
        %v713 = vadd.f32 0.0, %v712
        %v714 = vpop.f32.mrb[0].mxu0
        %v715 = vadd.f32 0.0, %v714
        %716 = vmatprep.mubr.bf16.mxu0 0
        %717 = vmatmul.mubr.bf16.gmra.mrb[0].mxu0 %v579
        %v718 = vpop.f32.mrb[0].mxu0
        %v719 = vadd.f32 0.0, %v718
        %v720 = vpop.f32.mrb[0].mxu0
        %v721 = vadd.f32 0.0, %v720
        %v722 = vpop.f32.mrb[0].mxu0
        %v723 = vadd.f32 0.0, %v722
        %v724 = vpop.f32.mrb[0].mxu0
        %v725 = vadd.f32 0.0, %v724
        %726 = vdwg.mxu0
        %727 = vmatprep.subr.bf16.mxu0 %v489
        %728 = vmatpush1.bf16.msra.mxu0 %v488
        %729 = vmatprep.subr.bf16.mxu0 %v503
        %730 = vmatpush1.bf16.msra.mxu0 %v502
        %731 = vmatprep.subr.bf16.mxu0 %v517
        %732 = vmatpush1.bf16.msra.mxu0 %v516
        %733 = vmatprep.subr.bf16.mxu0 0
        %734 = vmatpush1.bf16.msra.mxu0 0
        %735 = vmatprep.subr.bf16.mxu0 0
        %736 = vmatpush1.bf16.msra.mxu0 0
        %737 = vmatprep.subr.bf16.mxu0 0
        %738 = vmatpush1.bf16.msra.mxu0 0
        %739 = vmatprep.subr.bf16.mxu0 0
        %740 = vmatpush1.bf16.msra.mxu0 0
        %741 = vmatprep.subr.bf16.mxu0 0
        %742 = vmatpush1.bf16.msra.mxu0 0
        %743 = vmatprep.subr.bf16.mxu0 0
        %744 = vmatpush1.bf16.msra.mxu0 0
        %745 = vmatprep.subr.bf16.mxu0 0
        %746 = vmatpush1.bf16.msra.mxu0 0
        %747 = vmatprep.subr.bf16.mxu0 0
        %748 = vmatpush1.bf16.msra.mxu0 0
        %749 = vmatprep.subr.bf16.mxu0 0
        %750 = vmatpush1.bf16.msra.mxu0 0
        %751 = vmatprep.subr.bf16.mxu0 0
        %752 = vmatpush1.bf16.msra.mxu0 0
        %753 = vmatprep.subr.bf16.mxu0 0
        %754 = vmatpush1.bf16.msra.mxu0 0
        %755 = vmatprep.subr.bf16.mxu0 0
        %756 = vmatpush1.bf16.msra.mxu0 0
        %757 = vmatprep.subr.bf16.mxu0 0
        %758 = vmatpush1.bf16.msra.mxu0 0
        %759 = vmatprep.mubr.bf16.mxu0 0
        %760 = vmatmul.mubr.bf16.gmra.mrb[0].mxu0 %v570
        %v761 = vpop.f32.mrb[0].mxu0
        %v762 = vadd.f32 0.0, %v761
        %v763 = vpop.f32.mrb[0].mxu0
        %v764 = vadd.f32 0.0, %v763
        %v765 = vpop.f32.mrb[0].mxu0
        %v766 = vadd.f32 0.0, %v765
        %v767 = vpop.f32.mrb[0].mxu0
        %v768 = vadd.f32 0.0, %v767
        %769 = vmatprep.mubr.bf16.mxu0 0
        %770 = vmatmul.mubr.bf16.gmra.mrb[0].mxu0 %v573
        %v771 = vpop.f32.mrb[0].mxu0
        %v772 = vadd.f32 0.0, %v771
        %v773 = vpop.f32.mrb[0].mxu0
        %v774 = vadd.f32 0.0, %v773
        %v775 = vpop.f32.mrb[0].mxu0
        %v776 = vadd.f32 0.0, %v775
        %v777 = vpop.f32.mrb[0].mxu0
        %v778 = vadd.f32 0.0, %v777
        %779 = vmatprep.mubr.bf16.mxu0 0
        %780 = vmatmul.mubr.bf16.gmra.mrb[0].mxu0 %v576
        %v781 = vpop.f32.mrb[0].mxu0
        %v782 = vadd.f32 0.0, %v781
        %v783 = vpop.f32.mrb[0].mxu0
        %v784 = vadd.f32 0.0, %v783
        %v785 = vpop.f32.mrb[0].mxu0
        %v786 = vadd.f32 0.0, %v785
        %v787 = vpop.f32.mrb[0].mxu0
        %v788 = vadd.f32 0.0, %v787
        %789 = vmatprep.mubr.bf16.mxu0 0
        %790 = vmatmul.mubr.bf16.gmra.mrb[0].mxu0 %v579
        %v791 = vpop.f32.mrb[0].mxu0
        %v792 = vadd.f32 0.0, %v791
        %v793 = vpop.f32.mrb[0].mxu0
        %v794 = vadd.f32 0.0, %v793
        %v795 = vpop.f32.mrb[0].mxu0
        %v796 = vadd.f32 0.0, %v795
        %v797 = vpop.f32.mrb[0].mxu0
        %v798 = vadd.f32 0.0, %v797
        %799 = vdwg.mxu0
        %800 = vmatprep.subr.bf16.mxu0 %v491
        %801 = vmatpush1.bf16.msra.mxu0 %v490
        %802 = vmatprep.subr.bf16.mxu0 %v505
        %803 = vmatpush1.bf16.msra.mxu0 %v504
        %804 = vmatprep.subr.bf16.mxu0 %v519
        %805 = vmatpush1.bf16.msra.mxu0 %v518
        %806 = vmatprep.subr.bf16.mxu0 0
        %807 = vmatpush1.bf16.msra.mxu0 0
        %808 = vmatprep.subr.bf16.mxu0 0
        %809 = vmatpush1.bf16.msra.mxu0 0
        %810 = vmatprep.subr.bf16.mxu0 0
        %811 = vmatpush1.bf16.msra.mxu0 0
        %812 = vmatprep.subr.bf16.mxu0 0
        %813 = vmatpush1.bf16.msra.mxu0 0
        %814 = vmatprep.subr.bf16.mxu0 0
        %815 = vmatpush1.bf16.msra.mxu0 0
        %816 = vmatprep.subr.bf16.mxu0 0
        %817 = vmatpush1.bf16.msra.mxu0 0
        %818 = vmatprep.subr.bf16.mxu0 0
        %819 = vmatpush1.bf16.msra.mxu0 0
        %820 = vmatprep.subr.bf16.mxu0 0
        %821 = vmatpush1.bf16.msra.mxu0 0
        %822 = vmatprep.subr.bf16.mxu0 0
        %823 = vmatpush1.bf16.msra.mxu0 0
        %824 = vmatprep.subr.bf16.mxu0 0
        %825 = vmatpush1.bf16.msra.mxu0 0
        %826 = vmatprep.subr.bf16.mxu0 0
        %827 = vmatpush1.bf16.msra.mxu0 0
        %828 = vmatprep.subr.bf16.mxu0 0
        %829 = vmatpush1.bf16.msra.mxu0 0
        %830 = vmatprep.subr.bf16.mxu0 0
        %831 = vmatpush1.bf16.msra.mxu0 0
        %832 = vmatprep.mubr.bf16.mxu0 0
        %833 = vmatmul.mubr.bf16.gmra.mrb[0].mxu0 %v570
        %v834 = vpop.f32.mrb[0].mxu0
        %v835 = vadd.f32 0.0, %v834
        %v836 = vpop.f32.mrb[0].mxu0
        %v837 = vadd.f32 0.0, %v836
        %v838 = vpop.f32.mrb[0].mxu0
        %v839 = vadd.f32 0.0, %v838
        %v840 = vpop.f32.mrb[0].mxu0
        %v841 = vadd.f32 0.0, %v840
        %842 = vmatprep.mubr.bf16.mxu0 0
        %843 = vmatmul.mubr.bf16.gmra.mrb[0].mxu0 %v573
        %v844 = vpop.f32.mrb[0].mxu0
        %v845 = vadd.f32 0.0, %v844
        %v846 = vpop.f32.mrb[0].mxu0
        %v847 = vadd.f32 0.0, %v846
        %v848 = vpop.f32.mrb[0].mxu0
        %v849 = vadd.f32 0.0, %v848
        %v850 = vpop.f32.mrb[0].mxu0
        %v851 = vadd.f32 0.0, %v850
        %852 = vmatprep.mubr.bf16.mxu0 0
        %853 = vmatmul.mubr.bf16.gmra.mrb[0].mxu0 %v576
        %v854 = vpop.f32.mrb[0].mxu0
        %v855 = vadd.f32 0.0, %v854
        %v856 = vpop.f32.mrb[0].mxu0
        %v857 = vadd.f32 0.0, %v856
        %v858 = vpop.f32.mrb[0].mxu0
        %v859 = vadd.f32 0.0, %v858
        %v860 = vpop.f32.mrb[0].mxu0
        %v861 = vadd.f32 0.0, %v860
        %862 = vmatprep.mubr.bf16.mxu0 0
        %863 = vmatmul.mubr.bf16.gmra.mrb[0].mxu0 %v579
        %v864 = vpop.f32.mrb[0].mxu0
        %v865 = vadd.f32 0.0, %v864
        %v866 = vpop.f32.mrb[0].mxu0
        %v867 = vadd.f32 0.0, %v866
        %v868 = vpop.f32.mrb[0].mxu0
        %v869 = vadd.f32 0.0, %v868
        %v870 = vpop.f32.mrb[0].mxu0
        %v871 = vadd.f32 0.0, %v870
        %872 = vdwg.mxu0
        %873 = vmatprep.subr.bf16.mxu0 %v493
        %874 = vmatpush1.bf16.msra.mxu0 %v492
        %875 = vmatprep.subr.bf16.mxu0 %v507
        %876 = vmatpush1.bf16.msra.mxu0 %v506
        %877 = vmatprep.subr.bf16.mxu0 %v521
        %878 = vmatpush1.bf16.msra.mxu0 %v520
        %879 = vmatprep.subr.bf16.mxu0 0
        %880 = vmatpush1.bf16.msra.mxu0 0
        %881 = vmatprep.subr.bf16.mxu0 0
        %882 = vmatpush1.bf16.msra.mxu0 0
        %883 = vmatprep.subr.bf16.mxu0 0
        %884 = vmatpush1.bf16.msra.mxu0 0
        %885 = vmatprep.subr.bf16.mxu0 0
        %886 = vmatpush1.bf16.msra.mxu0 0
        %887 = vmatprep.subr.bf16.mxu0 0
        %888 = vmatpush1.bf16.msra.mxu0 0
        %889 = vmatprep.subr.bf16.mxu0 0
        %890 = vmatpush1.bf16.msra.mxu0 0
        %891 = vmatprep.subr.bf16.mxu0 0
        %892 = vmatpush1.bf16.msra.mxu0 0
        %893 = vmatprep.subr.bf16.mxu0 0
        %894 = vmatpush1.bf16.msra.mxu0 0
        %895 = vmatprep.subr.bf16.mxu0 0
        %896 = vmatpush1.bf16.msra.mxu0 0
        %897 = vmatprep.subr.bf16.mxu0 0
        %898 = vmatpush1.bf16.msra.mxu0 0
        %899 = vmatprep.subr.bf16.mxu0 0
        %900 = vmatpush1.bf16.msra.mxu0 0
        %901 = vmatprep.subr.bf16.mxu0 0
        %902 = vmatpush1.bf16.msra.mxu0 0
        %903 = vmatprep.subr.bf16.mxu0 0
        %904 = vmatpush1.bf16.msra.mxu0 0
        %905 = vmatprep.mubr.bf16.mxu0 0
        %906 = vmatmul.mubr.bf16.gmra.mrb[0].mxu0 %v570
        %v907 = vpop.f32.mrb[0].mxu0
        %v908 = vadd.f32 0.0, %v907
        %v909 = vpop.f32.mrb[0].mxu0
        %v910 = vadd.f32 0.0, %v909
        %v911 = vpop.f32.mrb[0].mxu0
        %v912 = vadd.f32 0.0, %v911
        %v913 = vpop.f32.mrb[0].mxu0
        %v914 = vadd.f32 0.0, %v913
        %915 = vmatprep.mubr.bf16.mxu0 0
        %916 = vmatmul.mubr.bf16.gmra.mrb[0].mxu0 %v573
        %v917 = vpop.f32.mrb[0].mxu0
        %v918 = vadd.f32 0.0, %v917
        %v919 = vpop.f32.mrb[0].mxu0
        %v920 = vadd.f32 0.0, %v919
        %v921 = vpop.f32.mrb[0].mxu0
        %v922 = vadd.f32 0.0, %v921
        %v923 = vpop.f32.mrb[0].mxu0
        %v924 = vadd.f32 0.0, %v923
        %925 = vmatprep.mubr.bf16.mxu0 0
        %926 = vmatmul.mubr.bf16.gmra.mrb[0].mxu0 %v576
        %v927 = vpop.f32.mrb[0].mxu0
        %v928 = vadd.f32 0.0, %v927
        %v929 = vpop.f32.mrb[0].mxu0
        %v930 = vadd.f32 0.0, %v929
        %v931 = vpop.f32.mrb[0].mxu0
        %v932 = vadd.f32 0.0, %v931
        %v933 = vpop.f32.mrb[0].mxu0
        %v934 = vadd.f32 0.0, %v933
        %935 = vmatprep.mubr.bf16.mxu0 0
        %936 = vmatmul.mubr.bf16.gmra.mrb[0].mxu0 %v579
        %v937 = vpop.f32.mrb[0].mxu0
        %v938 = vadd.f32 0.0, %v937
        %v939 = vpop.f32.mrb[0].mxu0
        %v940 = vadd.f32 0.0, %v939
        %v941 = vpop.f32.mrb[0].mxu0
        %v942 = vadd.f32 0.0, %v941
        %v943 = vpop.f32.mrb[0].mxu0
        %v944 = vadd.f32 0.0, %v943
        %945 = vdwg.mxu0
        %946 = vmatprep.subr.bf16.mxu0 %v495
        %947 = vmatpush1.bf16.msra.mxu0 %v494
        %948 = vmatprep.subr.bf16.mxu0 %v509
        %949 = vmatpush1.bf16.msra.mxu0 %v508
        %950 = vmatprep.subr.bf16.mxu0 %v523
        %951 = vmatpush1.bf16.msra.mxu0 %v522
        %952 = vmatprep.subr.bf16.mxu0 0
        %953 = vmatpush1.bf16.msra.mxu0 0
        %954 = vmatprep.subr.bf16.mxu0 0
        %955 = vmatpush1.bf16.msra.mxu0 0
        %956 = vmatprep.subr.bf16.mxu0 0
        %957 = vmatpush1.bf16.msra.mxu0 0
        %958 = vmatprep.subr.bf16.mxu0 0
        %959 = vmatpush1.bf16.msra.mxu0 0
        %960 = vmatprep.subr.bf16.mxu0 0
        %961 = vmatpush1.bf16.msra.mxu0 0
        %962 = vmatprep.subr.bf16.mxu0 0
        %963 = vmatpush1.bf16.msra.mxu0 0
        %964 = vmatprep.subr.bf16.mxu0 0
        %965 = vmatpush1.bf16.msra.mxu0 0
        %966 = vmatprep.subr.bf16.mxu0 0
        %967 = vmatpush1.bf16.msra.mxu0 0
        %968 = vmatprep.subr.bf16.mxu0 0
        %969 = vmatpush1.bf16.msra.mxu0 0
        %970 = vmatprep.subr.bf16.mxu0 0
        %971 = vmatpush1.bf16.msra.mxu0 0
        %972 = vmatprep.subr.bf16.mxu0 0
        %973 = vmatpush1.bf16.msra.mxu0 0
        %974 = vmatprep.subr.bf16.mxu0 0
        %975 = vmatpush1.bf16.msra.mxu0 0
        %976 = vmatprep.subr.bf16.mxu0 0
        %977 = vmatpush1.bf16.msra.mxu0 0
        %978 = vmatprep.mubr.bf16.mxu0 0
        %979 = vmatmul.mubr.bf16.gmra.mrb[0].mxu0 %v570
        %v980 = vpop.f32.mrb[0].mxu0
        %v981 = vadd.f32 0.0, %v980
        %v982 = vpop.f32.mrb[0].mxu0
        %v983 = vadd.f32 0.0, %v982
        %v984 = vpop.f32.mrb[0].mxu0
        %v985 = vadd.f32 0.0, %v984
        %v986 = vpop.f32.mrb[0].mxu0
        %v987 = vadd.f32 0.0, %v986
        %988 = vmatprep.mubr.bf16.mxu0 0
        %989 = vmatmul.mubr.bf16.gmra.mrb[0].mxu0 %v573
        %v990 = vpop.f32.mrb[0].mxu0
        %v991 = vadd.f32 0.0, %v990
        %v992 = vpop.f32.mrb[0].mxu0
        %v993 = vadd.f32 0.0, %v992
        %v994 = vpop.f32.mrb[0].mxu0
        %v995 = vadd.f32 0.0, %v994
        %v996 = vpop.f32.mrb[0].mxu0
        %v997 = vadd.f32 0.0, %v996
        %998 = vmatprep.mubr.bf16.mxu0 0
        %999 = vmatmul.mubr.bf16.gmra.mrb[0].mxu0 %v576
        %v1000 = vpop.f32.mrb[0].mxu0
        %v1001 = vadd.f32 0.0, %v1000
        %v1002 = vpop.f32.mrb[0].mxu0
        %v1003 = vadd.f32 0.0, %v1002
        %v1004 = vpop.f32.mrb[0].mxu0
        %v1005 = vadd.f32 0.0, %v1004
        %v1006 = vpop.f32.mrb[0].mxu0
        %v1007 = vadd.f32 0.0, %v1006
        %1008 = vmatprep.mubr.bf16.mxu0 0
        %1009 = vmatmul.mubr.bf16.gmra.mrb[0].mxu0 %v579
        %v1010 = vpop.f32.mrb[0].mxu0
        %v1011 = vadd.f32 0.0, %v1010
        %v1012 = vpop.f32.mrb[0].mxu0
        %v1013 = vadd.f32 0.0, %v1012
        %v1014 = vpop.f32.mrb[0].mxu0
        %v1015 = vadd.f32 0.0, %v1014
        %v1016 = vpop.f32.mrb[0].mxu0
        %v1017 = vadd.f32 0.0, %v1016
        %1018 = vdwg.mxu0
        %1019 = vmatprep.subr.bf16.mxu0 %v497
        %1020 = vmatpush1.bf16.msra.mxu0 %v496
        %1021 = vmatprep.subr.bf16.mxu0 %v511
        %1022 = vmatpush1.bf16.msra.mxu0 %v510
        %1023 = vmatprep.subr.bf16.mxu0 %v525
        %1024 = vmatpush1.bf16.msra.mxu0 %v524
        %1025 = vmatprep.subr.bf16.mxu0 0
        %1026 = vmatpush1.bf16.msra.mxu0 0
        %1027 = vmatprep.subr.bf16.mxu0 0
        %1028 = vmatpush1.bf16.msra.mxu0 0
        %1029 = vmatprep.subr.bf16.mxu0 0
        %1030 = vmatpush1.bf16.msra.mxu0 0
        %1031 = vmatprep.subr.bf16.mxu0 0
        %1032 = vmatpush1.bf16.msra.mxu0 0
        %1033 = vmatprep.subr.bf16.mxu0 0
        %1034 = vmatpush1.bf16.msra.mxu0 0
        %1035 = vmatprep.subr.bf16.mxu0 0
        %1036 = vmatpush1.bf16.msra.mxu0 0
        %1037 = vmatprep.subr.bf16.mxu0 0
        %1038 = vmatpush1.bf16.msra.mxu0 0
        %1039 = vmatprep.subr.bf16.mxu0 0
        %1040 = vmatpush1.bf16.msra.mxu0 0
        %1041 = vmatprep.subr.bf16.mxu0 0
        %1042 = vmatpush1.bf16.msra.mxu0 0
        %1043 = vmatprep.subr.bf16.mxu0 0
        %1044 = vmatpush1.bf16.msra.mxu0 0
        %1045 = vmatprep.subr.bf16.mxu0 0
        %1046 = vmatpush1.bf16.msra.mxu0 0
        %1047 = vmatprep.subr.bf16.mxu0 0
        %1048 = vmatpush1.bf16.msra.mxu0 0
        %1049 = vmatprep.subr.bf16.mxu0 0
        %1050 = vmatpush1.bf16.msra.mxu0 0
        %1051 = vmatprep.mubr.bf16.mxu0 0
        %1052 = vmatmul.mubr.bf16.gmra.mrb[0].mxu0 %v570
        %v1053 = vpop.f32.mrb[0].mxu0
        %v1054 = vadd.f32 0.0, %v1053
        %v1055 = vpop.f32.mrb[0].mxu0
        %v1056 = vadd.f32 0.0, %v1055
        %v1057 = vpop.f32.mrb[0].mxu0
        %v1058 = vadd.f32 0.0, %v1057
        %v1059 = vpop.f32.mrb[0].mxu0
        %v1060 = vadd.f32 0.0, %v1059
        %1061 = vmatprep.mubr.bf16.mxu0 0
        %1062 = vmatmul.mubr.bf16.gmra.mrb[0].mxu0 %v573
        %v1063 = vpop.f32.mrb[0].mxu0
        %v1064 = vadd.f32 0.0, %v1063
        %v1065 = vpop.f32.mrb[0].mxu0
        %v1066 = vadd.f32 0.0, %v1065
        %v1067 = vpop.f32.mrb[0].mxu0
        %v1068 = vadd.f32 0.0, %v1067
        %v1069 = vpop.f32.mrb[0].mxu0
        %v1070 = vadd.f32 0.0, %v1069
        %1071 = vmatprep.mubr.bf16.mxu0 0
        %1072 = vmatmul.mubr.bf16.gmra.mrb[0].mxu0 %v576
        %v1073 = vpop.f32.mrb[0].mxu0
        %v1074 = vadd.f32 0.0, %v1073
        %v1075 = vpop.f32.mrb[0].mxu0
        %v1076 = vadd.f32 0.0, %v1075
        %v1077 = vpop.f32.mrb[0].mxu0
        %v1078 = vadd.f32 0.0, %v1077
        %v1079 = vpop.f32.mrb[0].mxu0
        %v1080 = vadd.f32 0.0, %v1079
        %1081 = vmatprep.mubr.bf16.mxu0 0
        %1082 = vmatmul.mubr.bf16.gmra.mrb[0].mxu0 %v579
        %v1083 = vpop.f32.mrb[0].mxu0
        %v1084 = vadd.f32 0.0, %v1083
        %v1085 = vpop.f32.mrb[0].mxu0
        %v1086 = vadd.f32 0.0, %v1085
        %v1087 = vpop.f32.mrb[0].mxu0
        %v1088 = vadd.f32 0.0, %v1087
        %v1089 = vpop.f32.mrb[0].mxu0
        %v1090 = vadd.f32 0.0, %v1089
        %1091 = vdwg.mxu0
        %v1092 = vmax.f32 %v616, %v626
        %v1093 = vmax.f32 %v618, %v628
        %v1094 = vmax.f32 %v689, %v699
        %v1095 = vmax.f32 %v691, %v701
        %v1096 = vmax.f32 %v762, %v772
        %v1097 = vmax.f32 %v764, %v774
        %v1098 = vmax.f32 %v835, %v845
        %v1099 = vmax.f32 %v837, %v847
        %v1100 = vmax.f32 %v908, %v918
        %v1101 = vmax.f32 %v910, %v920
        %v1102 = vmax.f32 %v981, %v991
        %v1103 = vmax.f32 %v983, %v993
        %v1104 = vmax.f32 %v1054, %v1064
        %v1105 = vmax.f32 %v1056, %v1066
        %v1106 = vmax.f32 %v620, %v630
        %v1107 = vmax.f32 %v622, %v632
        %v1108 = vmax.f32 %v693, %v703
        %v1109 = vmax.f32 %v695, %v705
        %v1110 = vmax.f32 %v766, %v776
        %v1111 = vmax.f32 %v768, %v778
        %v1112 = vmax.f32 %v839, %v849
        %v1113 = vmax.f32 %v841, %v851
        %v1114 = vmax.f32 %v912, %v922
        %v1115 = vmax.f32 %v914, %v924
        %v1116 = vmax.f32 %v985, %v995
        %v1117 = vmax.f32 %v987, %v997
        %v1118 = vmax.f32 %v1058, %v1068
        %v1119 = vmax.f32 %v1060, %v1070
        %v1120 = vmax.f32 %v636, %v646
        %v1121 = vmax.f32 %v638, %v648
        %v1122 = vmax.f32 %v709, %v719
        %v1123 = vmax.f32 %v711, %v721
        %v1124 = vmax.f32 %v782, %v792
        %v1125 = vmax.f32 %v784, %v794
        %v1126 = vmax.f32 %v855, %v865
        %v1127 = vmax.f32 %v857, %v867
        %v1128 = vmax.f32 %v928, %v938
        %v1129 = vmax.f32 %v930, %v940
        %v1130 = vmax.f32 %v1001, %v1011
        %v1131 = vmax.f32 %v1003, %v1013
        %v1132 = vmax.f32 %v1074, %v1084
        %v1133 = vmax.f32 %v1076, %v1086
        %v1134 = vmax.f32 %v640, %v650
        %v1135 = vmax.f32 %v642, %v652
        %v1136 = vmax.f32 %v713, %v723
        %v1137 = vmax.f32 %v715, %v725
        %v1138 = vmax.f32 %v786, %v796
        %v1139 = vmax.f32 %v788, %v798
        %v1140 = vmax.f32 %v859, %v869
        %v1141 = vmax.f32 %v861, %v871
        %v1142 = vmax.f32 %v932, %v942
        %v1143 = vmax.f32 %v934, %v944
        %v1144 = vmax.f32 %v1005, %v1015
        %v1145 = vmax.f32 %v1007, %v1017
        %v1146 = vmax.f32 %v1078, %v1088
        %v1147 = vmax.f32 %v1080, %v1090
        %v1148 = vmax.f32 %v1092, %v1120
        %v1149 = vmax.f32 %v1093, %v1121
        %v1150 = vmax.f32 %v1094, %v1122
        %v1151 = vmax.f32 %v1095, %v1123
        %v1152 = vmax.f32 %v1096, %v1124
        %v1153 = vmax.f32 %v1097, %v1125
        %v1154 = vmax.f32 %v1098, %v1126
        %v1155 = vmax.f32 %v1099, %v1127
        %v1156 = vmax.f32 %v1100, %v1128
        %v1157 = vmax.f32 %v1101, %v1129
        %v1158 = vmax.f32 %v1102, %v1130
        %v1159 = vmax.f32 %v1103, %v1131
        %v1160 = vmax.f32 %v1104, %v1132
        %v1161 = vmax.f32 %v1105, %v1133
        %v1162 = vmax.f32 %v1106, %v1134
        %v1163 = vmax.f32 %v1107, %v1135
        %v1164 = vmax.f32 %v1108, %v1136
        %v1165 = vmax.f32 %v1109, %v1137
        %v1166 = vmax.f32 %v1110, %v1138
        %v1167 = vmax.f32 %v1111, %v1139
        %v1168 = vmax.f32 %v1112, %v1140
        %v1169 = vmax.f32 %v1113, %v1141
        %v1170 = vmax.f32 %v1114, %v1142
        %v1171 = vmax.f32 %v1115, %v1143
        %v1172 = vmax.f32 %v1116, %v1144
        %v1173 = vmax.f32 %v1117, %v1145
        %v1174 = vmax.f32 %v1118, %v1146
        %v1175 = vmax.f32 %v1119, %v1147
        %v1176 = vld [vmem:[%s2] sm:$0xff]
        %v1177 = vld [vmem:[%s2 + $0x8] sm:$0xff]
        %1179 = vset.pattern.permute.xlu0 0
        %1180 = vperm.xlu0 %1179, %v1176
        %v1181 = vpop.permute.xlu0 %1180
        %1184 = vset.pattern.permute.xlu0 0
        %1185 = vperm.xlu0 %1184, %v1177
        %v1186 = vpop.permute.xlu0 %1185
        %v1188 = vadd.f32 %v1148, %v1181
        %v1189 = vadd.f32 %v1149, %v1181
        %v1190 = vadd.f32 %v1150, %v1181
        %v1191 = vadd.f32 %v1151, %v1181
        %v1192 = vadd.f32 %v1152, %v1181
        %v1193 = vadd.f32 %v1153, %v1181
        %v1194 = vadd.f32 %v1154, %v1181
        %v1195 = vadd.f32 %v1155, %v1181
        %v1196 = vadd.f32 %v1156, %v1181
        %v1197 = vadd.f32 %v1157, %v1181
        %v1198 = vadd.f32 %v1158, %v1181
        %v1199 = vadd.f32 %v1159, %v1181
        %v1200 = vadd.f32 %v1160, %v1181
        %v1201 = vadd.f32 %v1161, %v1181
        %v1202 = vadd.f32 %v1162, %v1186
        %v1203 = vadd.f32 %v1163, %v1186
        %v1204 = vadd.f32 %v1164, %v1186
        %v1205 = vadd.f32 %v1165, %v1186
        %v1206 = vadd.f32 %v1166, %v1186
        %v1207 = vadd.f32 %v1167, %v1186
        %v1208 = vadd.f32 %v1168, %v1186
        %v1209 = vadd.f32 %v1169, %v1186
        %v1210 = vadd.f32 %v1170, %v1186
        %v1211 = vadd.f32 %v1171, %v1186
        %v1212 = vadd.f32 %v1172, %v1186
        %v1213 = vadd.f32 %v1173, %v1186
        %v1214 = vadd.f32 %v1174, %v1186
        %v1215 = vadd.f32 %v1175, %v1186
        %v1216 = vmax.f32 %v1188, 0.0
        %v1217 = vmax.f32 %v1189, 0.0
        %v1218 = vmax.f32 %v1190, 0.0
        %v1219 = vmax.f32 %v1191, 0.0
        %v1220 = vmax.f32 %v1192, 0.0
        %v1221 = vmax.f32 %v1193, 0.0
        %v1222 = vmax.f32 %v1194, 0.0
        %v1223 = vmax.f32 %v1195, 0.0
        %v1224 = vmax.f32 %v1196, 0.0
        %v1225 = vmax.f32 %v1197, 0.0
        %v1226 = vmax.f32 %v1198, 0.0
        %v1227 = vmax.f32 %v1199, 0.0
        %v1228 = vmax.f32 %v1200, 0.0
        %v1229 = vmax.f32 %v1201, 0.0
        %v1230 = vmax.f32 %v1202, 0.0
        %v1231 = vmax.f32 %v1203, 0.0
        %v1232 = vmax.f32 %v1204, 0.0
        %v1233 = vmax.f32 %v1205, 0.0
        %v1234 = vmax.f32 %v1206, 0.0
        %v1235 = vmax.f32 %v1207, 0.0
        %v1236 = vmax.f32 %v1208, 0.0
        %v1237 = vmax.f32 %v1209, 0.0
        %v1238 = vmax.f32 %v1210, 0.0
        %v1239 = vmax.f32 %v1211, 0.0
        %v1240 = vmax.f32 %v1212, 0.0
        %v1241 = vmax.f32 %v1213, 0.0
        %v1242 = vmax.f32 %v1214, 0.0
        %v1243 = vmax.f32 %v1215, 0.0
        %v1244 = vpack.c.bf16 %v1230, %v1216
        %v1245 = vpack.c.bf16 %v1231, %v1217
        %v1246 = vpack.c.bf16 %v1232, %v1218
        %v1247 = vpack.c.bf16 %v1233, %v1219
        %v1248 = vpack.c.bf16 %v1234, %v1220
        %v1249 = vpack.c.bf16 %v1235, %v1221
        %v1250 = vpack.c.bf16 %v1236, %v1222
        %v1251 = vpack.c.bf16 %v1237, %v1223
        %v1252 = vpack.c.bf16 %v1238, %v1224
        %v1253 = vpack.c.bf16 %v1239, %v1225
        %v1254 = vpack.c.bf16 %v1240, %v1226
        %v1255 = vpack.c.bf16 %v1241, %v1227
        %v1256 = vpack.c.bf16 %v1242, %v1228
        %v1257 = vpack.c.bf16 %v1243, %v1229
        %v1272 = vunpack.c.l.b16 %v1244
        %v1273 = vunpack.c.l.b16 %v1245
        %v1274 = vunpack.c.l.b16 %v1246
        %v1275 = vunpack.c.l.b16 %v1247
        %v1276 = vunpack.c.l.b16 %v1248
        %v1277 = vunpack.c.l.b16 %v1249
        %v1278 = vunpack.c.l.b16 %v1250
        %v1279 = vunpack.c.l.b16 %v1251
        %v1280 = vunpack.c.l.b16 %v1252
        %v1281 = vunpack.c.l.b16 %v1253
        %v1282 = vunpack.c.l.b16 %v1254
        %v1283 = vunpack.c.l.b16 %v1255
        %v1284 = vunpack.c.l.b16 %v1256
        %v1285 = vunpack.c.l.b16 %v1257
        %v1286 = vunpack.c.h.b16 %v1244
        %v1287 = vunpack.c.h.b16 %v1245
        %v1288 = vunpack.c.h.b16 %v1246
        %v1289 = vunpack.c.h.b16 %v1247
        %v1290 = vunpack.c.h.b16 %v1248
        %v1291 = vunpack.c.h.b16 %v1249
        %v1292 = vunpack.c.h.b16 %v1250
        %v1293 = vunpack.c.h.b16 %v1251
        %v1294 = vunpack.c.h.b16 %v1252
        %v1295 = vunpack.c.h.b16 %v1253
        %v1296 = vunpack.c.h.b16 %v1254
        %v1297 = vunpack.c.h.b16 %v1255
        %v1298 = vunpack.c.h.b16 %v1256
        %v1299 = vunpack.c.h.b16 %v1257
        %v1300 = vpack.c.b16 %v1273, %v1272
        %v1301 = vpack.c.b16 %v1275, %v1274
        %v1302 = vpack.c.b16 %v1277, %v1276
        %v1303 = vpack.c.b16 %v1279, %v1278
        %v1304 = vpack.c.b16 %v1281, %v1280
        %v1305 = vpack.c.b16 %v1283, %v1282
        %v1306 = vpack.c.b16 %v1285, %v1284
        %v1307 = vpack.c.b16 %v1287, %v1286
        %v1308 = vpack.c.b16 %v1289, %v1288
        %v1309 = vpack.c.b16 %v1291, %v1290
        %v1310 = vpack.c.b16 %v1293, %v1292
        %v1311 = vpack.c.b16 %v1295, %v1294
        %v1312 = vpack.c.b16 %v1297, %v1296
        %v1313 = vpack.c.b16 %v1299, %v1298
        %1328 = vst [vmem:[%s284] sm:$0xff] %v1300
        %1329 = vst [vmem:[%s284 + $0x8] sm:$0xff] %v1301
        %1330 = vst [vmem:[%s284 + $0x10] sm:$0xff] %v1302
        %1331 = vst [vmem:[%s284 + $0x18] sm:$0xff] %v1303
        %1332 = vst [vmem:[%s284 + $0x20] sm:$0xff] %v1304
        %1333 = vst [vmem:[%s284 + $0x28] sm:$0xff] %v1305
        %1334 = vst [vmem:[%s284 + $0x30] sm:$0xff] %v1306
        %1335 = vst [vmem:[%s284 + $0x38] sm:$0xff] %v1307
        %1336 = vst [vmem:[%s284 + $0x40] sm:$0xff] %v1308
        %1337 = vst [vmem:[%s284 + $0x48] sm:$0xff] %v1309
        %1338 = vst [vmem:[%s284 + $0x50] sm:$0xff] %v1310
        %1339 = vst [vmem:[%s284 + $0x58] sm:$0xff] %v1311
        %1340 = vst [vmem:[%s284 + $0x60] sm:$0xff] %v1312
        %1341 = vst [vmem:[%s284 + $0x68] sm:$0xff] %v1313
        %s1342 = sand.u32 %s106, 1
        %s1343 = sand.u32 %s106, 1
        %s1344 = smul.addr %s1343, 112
        %s1345 = scalar_lea.vmem [#allocation3], %s1344
        // Predicated region
        $region56: #{simple_cnn_forward.4} parent=50 // pred_check
          %p1346 = pneg %p116
        $region57: #{simple_cnn_forward.4} parent=50 // pred_check_branch
          %1348 = sbr.rel (%p1346) target = $region59
        $region58: #{simple_cnn_forward.4} parent=50 // pred_region
          %s1349 = smul.u32 14, %s19
          %s1350 = smul.addr %s18, 196
          %s1351 = sadd.s32 %s1349, %s1350
          %s1352 = smul.addr %s1351, 4
          %s1353 = scalar_lea.vmem %s3, %s1352
          // Predicated region
          $region60: #{simple_cnn_forward.4} parent=58 // pred_check
            _
          $region61: #{simple_cnn_forward.4} parent=58 // pred_check_branch
            %1355 = sbr.rel (0) target = $region63
          $region62: #{simple_cnn_forward.4} parent=58 // pred_region
            // Predicated region
            $region64: #{simple_cnn_forward.4} parent=62 // pred_check
              _
            $region65: #{simple_cnn_forward.4} parent=62 // pred_check_branch
              %1357 = sbr.rel (0) target = $region67
            $region66: #{simple_cnn_forward.4} parent=62 // pred_region
              loop: start=0, step=1, limit=1
              $region68: #{simple_cnn_forward.4} parent=66 // loop_pre_header
                _
              $region69: #{simple_cnn_forward.4} parent=66 // loop_header
                %s1359 = sphi 0, %s1363
                %p1360 = scmp.ge.s32.totalorder %s1359, 1
                %s1364 = sphi %s1345, %s1345
                %s1365 = sphi %s1353, %s1353
              $region70: #{simple_cnn_forward.4} parent=66 // loop_header_branch
                %1362 = sbr.rel (%p1360) target = $region74
              $region71: #{simple_cnn_forward.4} parent=66 // loop_body
                %v1366 = vld [vmem:[%s1364] sm:$0xff]
                %1367 = vst [vmem:[%s1365] sm:$0xff] %v1366
                %v1368 = vld [vmem:[%s1364 + $0x8] sm:$0xff]
                %1369 = vst [vmem:[%s1365 + $0x8] sm:$0xff] %v1368
                %v1370 = vld [vmem:[%s1364 + $0x10] sm:$0xff]
                %1371 = vst [vmem:[%s1365 + $0x10] sm:$0xff] %v1370
                %v1372 = vld [vmem:[%s1364 + $0x18] sm:$0xff]
                %1373 = vst [vmem:[%s1365 + $0x18] sm:$0xff] %v1372
                %v1374 = vld [vmem:[%s1364 + $0x20] sm:$0xff]
                %1375 = vst [vmem:[%s1365 + $0x20] sm:$0xff] %v1374
                %v1376 = vld [vmem:[%s1364 + $0x28] sm:$0xff]
                %1377 = vst [vmem:[%s1365 + $0x28] sm:$0xff] %v1376
                %v1378 = vld [vmem:[%s1364 + $0x30] sm:$0xff]
                %1379 = vst [vmem:[%s1365 + $0x30] sm:$0xff] %v1378
                %v1380 = vld [vmem:[%s1364 + $0x38] sm:$0xff]
                %1381 = vst [vmem:[%s1365 + $0x188] sm:$0xff] %v1380
                %v1382 = vld [vmem:[%s1364 + $0x40] sm:$0xff]
                %1383 = vst [vmem:[%s1365 + $0x190] sm:$0xff] %v1382
                %v1384 = vld [vmem:[%s1364 + $0x48] sm:$0xff]
                %1385 = vst [vmem:[%s1365 + $0x198] sm:$0xff] %v1384
                %v1386 = vld [vmem:[%s1364 + $0x50] sm:$0xff]
                %1387 = vst [vmem:[%s1365 + $0x1a0] sm:$0xff] %v1386
                %v1388 = vld [vmem:[%s1364 + $0x58] sm:$0xff]
                %1389 = vst [vmem:[%s1365 + $0x1a8] sm:$0xff] %v1388
                %v1390 = vld [vmem:[%s1364 + $0x60] sm:$0xff]
                %1391 = vst [vmem:[%s1365 + $0x1b0] sm:$0xff] %v1390
                %v1392 = vld [vmem:[%s1364 + $0x68] sm:$0xff]
                %1393 = vst [vmem:[%s1365 + $0x1b8] sm:$0xff] %v1392
              $region72: #{simple_cnn_forward.4} parent=66 // loop_footer
                %s1363 = sadd.s32 1, %s1359
              $region73: #{simple_cnn_forward.4} parent=66 // loop_footer_branch
                %1358 = sbr.rel target = $region69
              $region74: #{simple_cnn_forward.4} parent=66 // loop_exit
                _
            $region67: #{simple_cnn_forward.4} parent=62 // pred_fallthru
              _
            // Predicated region
            $region75: #{simple_cnn_forward.4} parent=62 // pred_check
              _
            $region76: #{simple_cnn_forward.4} parent=62 // pred_check_branch
              %1395 = sbr.rel target = $region78
            $region77: #{simple_cnn_forward.4} parent=62 // pred_region
              _
            $region78: #{simple_cnn_forward.4} parent=62 // pred_fallthru
              _
          $region63: #{simple_cnn_forward.4} parent=58 // pred_fallthru
            _
          %1396 = vnop
        $region59: #{simple_cnn_forward.4} parent=50 // pred_fallthru
          _
      $region51: #{simple_cnn_forward.4} parent=5 // pred_fallthru
        _
      %p1397 = scmp.le.s32.totalorder 2, %s9
      // Predicated region
      $region79: #{simple_cnn_forward.4} parent=5 // pred_check
        %p1398 = pneg %p1397
      $region80: #{simple_cnn_forward.4} parent=5 // pred_check_branch
        %1400 = sbr.rel (%p1398) target = $region82
      $region81: #{simple_cnn_forward.4} parent=5 // pred_region
        %s1401 = ssub.s32 %s9, 2
        // Predicated region
        $region83: #{simple_cnn_forward.4} parent=81 // pred_check
          %p1402 = pneg %p122
        $region84: #{simple_cnn_forward.4} parent=81 // pred_check_branch
          %1404 = sbr.rel (%p1402) target = $region86
        $region85: #{simple_cnn_forward.4} parent=81 // pred_region
          %s1405 = sand.u32 %s107, 1
          %s1406 = sand.u32 %s107, 1
          %s1407 = smul.addr %s1406, 112
          %s1408 = scalar_lea.vmem [#allocation3], %s1407
        $region86: #{simple_cnn_forward.4} parent=81 // pred_fallthru
          _
      $region82: #{simple_cnn_forward.4} parent=5 // pred_fallthru
        _
    $region6: #{simple_cnn_forward.4} parent=1 // loop_footer
      %s13 = sadd.s32 1, %s9
    $region7: #{simple_cnn_forward.4} parent=1 // loop_footer_branch
      %8 = sbr.rel target = $region3
    $region8: #{simple_cnn_forward.4} parent=1 // loop_exit
      _

// kernel: simple_cnn_forward.5
$region0: #{simple_cnn_forward.5}
  #allocation0 [shape = 'u32[]', space=smem, size = 0x4, offset = 0x4, fixed_abs, tag = 'smem constant byte address 0x4 - core index']
  #allocation1 [shape = 'u32[144,128]{1,0:T(1,128)}', space=vmem, size = 0x12000, scoped, tag = 'internal scratch']
  %s0 = inlined_call_operand.vmem [shape: bf16[2,256,3136], index: 0, kind: input, shape index: {}]
  %s1 = inlined_call_operand.vmem [shape: bf16[128,256], index: 1, kind: input, shape index: {}]
  %s2 = inlined_call_operand.vmem [shape: f32[32,1], index: 2, kind: input, shape index: {}]
  %s3 = inlined_call_operand.vmem [shape: bf16[2,32,3136], index: 3, kind: output, shape index: {}]
  %s4 = sld [smem:[#allocation0]]
  $region45: #{simple_cnn_forward.5} parent=0
    _
  %s6 = ssub.s32 1, %s4
  %s7 = scalar_select 0, %s6, %s4
  loop: start=0, step=1, limit=4
  $region2: #{simple_cnn_forward.5} parent=0 // loop_pre_header
    _
  $region3: #{simple_cnn_forward.5} parent=0 // loop_header
    %s9 = sphi 0, %s13
    %p10 = scmp.ge.s32.totalorder %s9, 4
    %s16 = sphi 0, %s28
    %s17 = sphi 0, %s24
    %s18 = sphi 0, %s16
    %s19 = sphi 0, %s17
    %s20 = sphi 0, %s18
    %s21 = sphi 0, %s19
    %s33 = sphi 0, %s35
    %s36 = sphi 0, %s33
    %s37 = sphi 0, %s36
    %s53 = sphi 0, %s37
    %s57 = sphi 0, %s57
    %s59 = sphi 0, %s57
    %s60 = sphi 0, %s59
    %s74 = sphi 0, %s60
    %s78 = sphi 0, %s78
    %s80 = sphi 0, %s78
    %s81 = sphi 0, %s80
    %s95 = sphi 0, %s81
    %s103 = sphi 0, %s105
    %s106 = sphi 0, %s103
    %s107 = sphi 0, %s106
    %s123 = sphi 0, %s107
  $region4: #{simple_cnn_forward.5} parent=0 // loop_header_branch
    %12 = sbr.rel (%p10) target = $region8
  $region5: #{simple_cnn_forward.5} parent=0 // loop_body
    %s14 = ssub.s32 %s9, 1
    %s15 = ssub.s32 %s9, 2
    %s22 = sadd.s32 1, %s17
    %p23 = scmp.ge.s32.totalorder %s22, 1
    %s24 = scalar_select %p23, 0, %s22
    %s25 = sadd.s32 1, %s16
    %s26 = scalar_select %p23, %s25, %s16
    %p27 = scmp.ge.s32.totalorder %s26, 2
    %s28 = scalar_select %p27, 0, %s26
    %s29 = ssub.s32 %s16, %s28
    %s30 = ssub.s32 %s17, %s24
    %s31 = sor.u32 %s29, %s30
    %p32 = scmp.eq.s32.totalorder %s31, 0
    %s34 = sadd.s32 %s33, 1
    %s35 = scalar_select %p32, %s33, %s34
    %p38 = pneg %p32
    %p39 = scmp.eq.s32.totalorder %s9, 1
    %p40 = por %p38, %p39
    %p41 = scmp.ne.s32.totalorder %s33, %s36
    %p42 = scmp.eq.s32.totalorder %s9, 0
    %p43 = por %p41, %p42
    %p44 = scmp.ne.s32.totalorder %s33, %s36
    %p45 = scmp.eq.s32.totalorder %s14, 1
    %p46 = por %p44, %p45
    %p47 = scmp.ne.s32.totalorder %s36, %s37
    %p48 = scmp.eq.s32.totalorder %s14, 0
    %p49 = por %p47, %p48
    %p50 = scmp.ne.s32.totalorder %s36, %s37
    %p51 = scmp.eq.s32.totalorder %s15, 1
    %p52 = por %p50, %p51
    %p54 = scmp.ne.s32.totalorder %s37, %s53
    %p55 = scmp.eq.s32.totalorder %s15, 0
    %p56 = por %p54, %p55
    %s58 = sadd.s32 %s57, 1
    %p61 = scmp.eq.s32.totalorder %s9, 1
    %p62 = scmp.ne.s32.totalorder %s57, %s59
    %p63 = scmp.eq.s32.totalorder %s9, 0
    %p64 = por %p62, %p63
    %p65 = scmp.ne.s32.totalorder %s57, %s59
    %p66 = scmp.eq.s32.totalorder %s14, 1
    %p67 = por %p65, %p66
    %p68 = scmp.ne.s32.totalorder %s59, %s60
    %p69 = scmp.eq.s32.totalorder %s14, 0
    %p70 = por %p68, %p69
    %p71 = scmp.ne.s32.totalorder %s59, %s60
    %p72 = scmp.eq.s32.totalorder %s15, 1
    %p73 = por %p71, %p72
    %p75 = scmp.ne.s32.totalorder %s60, %s74
    %p76 = scmp.eq.s32.totalorder %s15, 0
    %p77 = por %p75, %p76
    %s79 = sadd.s32 %s78, 1
    %p82 = scmp.eq.s32.totalorder %s9, 1
    %p83 = scmp.ne.s32.totalorder %s78, %s80
    %p84 = scmp.eq.s32.totalorder %s9, 0
    %p85 = por %p83, %p84
    %p86 = scmp.ne.s32.totalorder %s78, %s80
    %p87 = scmp.eq.s32.totalorder %s14, 1
    %p88 = por %p86, %p87
    %p89 = scmp.ne.s32.totalorder %s80, %s81
    %p90 = scmp.eq.s32.totalorder %s14, 0
    %p91 = por %p89, %p90
    %p92 = scmp.ne.s32.totalorder %s80, %s81
    %p93 = scmp.eq.s32.totalorder %s15, 1
    %p94 = por %p92, %p93
    %p96 = scmp.ne.s32.totalorder %s81, %s95
    %p97 = scmp.eq.s32.totalorder %s15, 0
    %p98 = por %p96, %p97
    %s99 = ssub.s32 %s16, %s28
    %s100 = ssub.s32 %s17, %s24
    %s101 = sor.u32 %s99, %s100
    %p102 = scmp.eq.s32.totalorder %s101, 0
    %s104 = sadd.s32 %s103, 1
    %s105 = scalar_select %p102, %s103, %s104
    %p108 = pneg %p102
    %p109 = scmp.eq.s32.totalorder %s9, 1
    %p110 = por %p108, %p109
    %p111 = scmp.ne.s32.totalorder %s103, %s106
    %p112 = scmp.eq.s32.totalorder %s9, 0
    %p113 = por %p111, %p112
    %p114 = scmp.ne.s32.totalorder %s103, %s106
    %p115 = scmp.eq.s32.totalorder %s14, 1
    %p116 = por %p114, %p115
    %p117 = scmp.ne.s32.totalorder %s106, %s107
    %p118 = scmp.eq.s32.totalorder %s14, 0
    %p119 = por %p117, %p118
    %p120 = scmp.ne.s32.totalorder %s106, %s107
    %p121 = scmp.eq.s32.totalorder %s15, 1
    %p122 = por %p120, %p121
    %p124 = scmp.ne.s32.totalorder %s107, %s123
    %p125 = scmp.eq.s32.totalorder %s15, 0
    %p126 = por %p124, %p125
    %p127 = scmp.le.s32.totalorder 1, %s9
    %p128 = scmp.lt.s32.totalorder %s9, 3
    %p129 = pnand %p127, %p128
    %p130 = pneg %p129
    // Predicated region
    $region9: #{simple_cnn_forward.5} parent=5 // pred_check
      _
    $region10: #{simple_cnn_forward.5} parent=5 // pred_check_branch
      %132 = sbr.rel (%p129) target = $region12
    $region11: #{simple_cnn_forward.5} parent=5 // pred_region
      %s133 = ssub.s32 %s9, 1
      // Predicated region
      $region13: #{simple_cnn_forward.5} parent=11 // pred_check
        %p134 = pneg %p70
      $region14: #{simple_cnn_forward.5} parent=11 // pred_check_branch
        %136 = sbr.rel (%p134) target = $region16
      $region15: #{simple_cnn_forward.5} parent=11 // pred_region
        _
      $region16: #{simple_cnn_forward.5} parent=11 // pred_fallthru
        _
      // Predicated region
      $region17: #{simple_cnn_forward.5} parent=11 // pred_check
        %p137 = pneg %p91
      $region18: #{simple_cnn_forward.5} parent=11 // pred_check_branch
        %139 = sbr.rel (%p137) target = $region20
      $region19: #{simple_cnn_forward.5} parent=11 // pred_region
        _
      $region20: #{simple_cnn_forward.5} parent=11 // pred_fallthru
        _
    $region12: #{simple_cnn_forward.5} parent=5 // pred_fallthru
      _
    %p140 = scmp.lt.s32.totalorder %s9, 2
    // Predicated region
    $region21: #{simple_cnn_forward.5} parent=5 // pred_check
      %p141 = pneg %p140
    $region22: #{simple_cnn_forward.5} parent=5 // pred_check_branch
      %143 = sbr.rel (%p141) target = $region24
    $region23: #{simple_cnn_forward.5} parent=5 // pred_region
      // Predicated region
      $region25: #{simple_cnn_forward.5} parent=23 // pred_check
        %p144 = pneg %p43
      $region26: #{simple_cnn_forward.5} parent=23 // pred_check_branch
        %146 = sbr.rel (%p144) target = $region28
      $region27: #{simple_cnn_forward.5} parent=23 // pred_region
        %s147 = smul.u32 25, %s17
        %p148 = scmp.lt.s32.totalorder %s16, 1
        %s149 = scalar_select %p148, %s16, 1
        %p150 = scmp.lt.s32.totalorder %s147, 24
        %s151 = scalar_select %p150, %s147, 24
        %s152 = smul.addr %s149, 800
        %s153 = sadd.s32 %s151, %s152
        %s154 = smul.addr %s153, 4
        %s155 = scalar_lea.vmem %s0, %s154
        %s156 = smul.u32 25, %s17
      $region28: #{simple_cnn_forward.5} parent=23 // pred_fallthru
        _
    $region24: #{simple_cnn_forward.5} parent=5 // pred_fallthru
      _
    %p157 = scmp.le.s32.totalorder 1, %s9
    %p158 = scmp.lt.s32.totalorder %s9, 3
    %p159 = pnand %p157, %p158
    %p160 = pneg %p159
    // Predicated region
    $region29: #{simple_cnn_forward.5} parent=5 // pred_check
      _
    $region30: #{simple_cnn_forward.5} parent=5 // pred_check_branch
      %162 = sbr.rel (%p159) target = $region32
    $region31: #{simple_cnn_forward.5} parent=5 // pred_region
      %s163 = ssub.s32 %s9, 1
      %s164 = smul.u32 25, %s19
      %p165 = scmp.lt.s32.totalorder %s18, 1
      %s166 = scalar_select %p165, %s18, 1
      %p167 = scmp.lt.s32.totalorder %s164, 24
      %s168 = scalar_select %p167, %s164, 24
      %s169 = smul.addr %s166, 800
      %s170 = sadd.s32 %s168, %s169
      %s171 = smul.addr %s170, 4
      %s172 = scalar_lea.vmem %s0, %s171
      %p173 = pneg %p49
      %p174 = pneg %p46
      %p175 = pneg %p70
      %p176 = pneg %p67
      %p177 = pneg %p91
      %p178 = pneg %p88
      %p179 = pneg %p119
      %p180 = pneg %p116
      %s181 = smul.u32 25, %s19
      %p182 = scmp.lt.s32.totalorder %s18, 1
      %s183 = scalar_select %p182, %s18, 1
      %p184 = scmp.lt.s32.totalorder %s181, 24
      %s185 = scalar_select %p184, %s181, 24
      %s186 = smul.addr %s183, 100
      %s187 = sadd.s32 %s185, %s186
      %s188 = smul.addr %s187, 4
      %s189 = scalar_lea.vmem %s3, %s188
      %s190 = smul.u32 25, %s19
      %p191 = scmp.lt.s32.totalorder %s18, 1
      %s192 = scalar_select %p191, %s18, 1
      %p193 = scmp.lt.s32.totalorder %s190, 24
      %s194 = scalar_select %p193, %s190, 24
      %s195 = smul.addr %s192, 800
      %s196 = sadd.s32 %s194, %s195
      %s197 = smul.addr %s196, 4
      %s198 = scalar_lea.vmem %s0, %s197
      %s199 = smul.u32 25, %s19
      %s200 = smul.u32 25, %s19
      %p201 = scmp.lt.s32.totalorder %s18, 1
      %s202 = scalar_select %p201, %s18, 1
      %p203 = scmp.lt.s32.totalorder %s200, 24
      %s204 = scalar_select %p203, %s200, 24
      %s205 = smul.addr %s202, 100
      %s206 = sadd.s32 %s204, %s205
      %s207 = smul.addr %s206, 4
      %s208 = scalar_lea.vmem %s3, %s207
      %s209 = smul.u32 25, %s19
      %v211 = vld [vmem:[%s1] sm:$0xff]
      %v212 = vld [vmem:[%s1 + $0x8] sm:$0xff]
      %v213 = vld [vmem:[%s1 + $0x10] sm:$0xff]
      %v214 = vld [vmem:[%s1 + $0x18] sm:$0xff]
      %v215 = vld [vmem:[%s1 + $0x20] sm:$0xff]
      %v216 = vld [vmem:[%s1 + $0x28] sm:$0xff]
      %v217 = vld [vmem:[%s1 + $0x30] sm:$0xff]
      %v218 = vld [vmem:[%s1 + $0x38] sm:$0xff]
      %v219 = vld [vmem:[%s1 + $0x40] sm:$0xff]
      %v220 = vld [vmem:[%s1 + $0x48] sm:$0xff]
      %v221 = vld [vmem:[%s1 + $0x50] sm:$0xff]
      %v222 = vld [vmem:[%s1 + $0x58] sm:$0xff]
      %v223 = vld [vmem:[%s1 + $0x60] sm:$0xff]
      %v224 = vld [vmem:[%s1 + $0x68] sm:$0xff]
      %v225 = vld [vmem:[%s1 + $0x70] sm:$0xff]
      %v226 = vld [vmem:[%s1 + $0x78] sm:$0xff]
      %v227 = vld [vmem:[%s198] sm:$0xff]
      %v228 = vld [vmem:[%s198 + $0x8] sm:$0xff]
      %v229 = vld [vmem:[%s198 + $0x10] sm:$0xff]
      %v230 = vld [vmem:[%s198 + $0x18] sm:$0xff]
      %v231 = vld [vmem:[%s198 + $0x20] sm:$0xff]
      %v232 = vld [vmem:[%s198 + $0x28] sm:$0xff]
      %v233 = vld [vmem:[%s198 + $0x30] sm:$0xff]
      %v234 = vld [vmem:[%s198 + $0x38] sm:$0xff]
      %v235 = vld [vmem:[%s198 + $0x40] sm:$0xff]
      %v236 = vld [vmem:[%s198 + $0x48] sm:$0xff]
      %v237 = vld [vmem:[%s198 + $0x50] sm:$0xff]
      %v238 = vld [vmem:[%s198 + $0x58] sm:$0xff]
      %v239 = vld [vmem:[%s198 + $0x60] sm:$0xf]
      %v240 = vld [vmem:[%s198 + $0x64] sm:$0xff]
      %v241 = vld [vmem:[%s198 + $0x6c] sm:$0xff]
      %v242 = vld [vmem:[%s198 + $0x74] sm:$0xff]
      %v243 = vld [vmem:[%s198 + $0x7c] sm:$0xff]
      %v244 = vld [vmem:[%s198 + $0x84] sm:$0xff]
      %v245 = vld [vmem:[%s198 + $0x8c] sm:$0xff]
      %v246 = vld [vmem:[%s198 + $0x94] sm:$0xff]
      %v247 = vld [vmem:[%s198 + $0x9c] sm:$0xff]
      %v248 = vld [vmem:[%s198 + $0xa4] sm:$0xff]
      %v249 = vld [vmem:[%s198 + $0xac] sm:$0xff]
      %v250 = vld [vmem:[%s198 + $0xb4] sm:$0xff]
      %v251 = vld [vmem:[%s198 + $0xbc] sm:$0xff]
      %v252 = vld [vmem:[%s198 + $0xc4] sm:$0xf]
      %v253 = vld [vmem:[%s198 + $0xc8] sm:$0xff]
      %v254 = vld [vmem:[%s198 + $0xd0] sm:$0xff]
      %v255 = vld [vmem:[%s198 + $0xd8] sm:$0xff]
      %v256 = vld [vmem:[%s198 + $0xe0] sm:$0xff]
      %v257 = vld [vmem:[%s198 + $0xe8] sm:$0xff]
      %v258 = vld [vmem:[%s198 + $0xf0] sm:$0xff]
      %v259 = vld [vmem:[%s198 + $0xf8] sm:$0xff]
      %v260 = vld [vmem:[%s198 + $0x100] sm:$0xff]
      %v261 = vld [vmem:[%s198 + $0x108] sm:$0xff]
      %v262 = vld [vmem:[%s198 + $0x110] sm:$0xff]
      %v263 = vld [vmem:[%s198 + $0x118] sm:$0xff]
      %v264 = vld [vmem:[%s198 + $0x120] sm:$0xff]
      %v265 = vld [vmem:[%s198 + $0x128] sm:$0xf]
      %v266 = vld [vmem:[%s198 + $0x12c] sm:$0xff]
      %v267 = vld [vmem:[%s198 + $0x134] sm:$0xff]
      %v268 = vld [vmem:[%s198 + $0x13c] sm:$0xff]
      %v269 = vld [vmem:[%s198 + $0x144] sm:$0xff]
      %v270 = vld [vmem:[%s198 + $0x14c] sm:$0xff]
      %v271 = vld [vmem:[%s198 + $0x154] sm:$0xff]
      %v272 = vld [vmem:[%s198 + $0x15c] sm:$0xff]
      %v273 = vld [vmem:[%s198 + $0x164] sm:$0xff]
      %v274 = vld [vmem:[%s198 + $0x16c] sm:$0xff]
      %v275 = vld [vmem:[%s198 + $0x174] sm:$0xff]
      %v276 = vld [vmem:[%s198 + $0x17c] sm:$0xff]
      %v277 = vld [vmem:[%s198 + $0x184] sm:$0xff]
      %v278 = vld [vmem:[%s198 + $0x18c] sm:$0xf]
      %v279 = vld [vmem:[%s198 + $0x190] sm:$0xff]
      %v280 = vld [vmem:[%s198 + $0x198] sm:$0xff]
      %v281 = vld [vmem:[%s198 + $0x1a0] sm:$0xff]
      %v282 = vld [vmem:[%s198 + $0x1a8] sm:$0xff]
      %v283 = vld [vmem:[%s198 + $0x1b0] sm:$0xff]
      %v284 = vld [vmem:[%s198 + $0x1b8] sm:$0xff]
      %v285 = vld [vmem:[%s198 + $0x1c0] sm:$0xff]
      %v286 = vld [vmem:[%s198 + $0x1c8] sm:$0xff]
      %v287 = vld [vmem:[%s198 + $0x1d0] sm:$0xff]
      %v288 = vld [vmem:[%s198 + $0x1d8] sm:$0xff]
      %v289 = vld [vmem:[%s198 + $0x1e0] sm:$0xff]
      %v290 = vld [vmem:[%s198 + $0x1e8] sm:$0xff]
      %v291 = vld [vmem:[%s198 + $0x1f0] sm:$0xf]
      %v292 = vld [vmem:[%s198 + $0x1f4] sm:$0xff]
      %v293 = vld [vmem:[%s198 + $0x1fc] sm:$0xff]
      %v294 = vld [vmem:[%s198 + $0x204] sm:$0xff]
      %v295 = vld [vmem:[%s198 + $0x20c] sm:$0xff]
      %v296 = vld [vmem:[%s198 + $0x214] sm:$0xff]
      %v297 = vld [vmem:[%s198 + $0x21c] sm:$0xff]
      %v298 = vld [vmem:[%s198 + $0x224] sm:$0xff]
      %v299 = vld [vmem:[%s198 + $0x22c] sm:$0xff]
      %v300 = vld [vmem:[%s198 + $0x234] sm:$0xff]
      %v301 = vld [vmem:[%s198 + $0x23c] sm:$0xff]
      %v302 = vld [vmem:[%s198 + $0x244] sm:$0xff]
      %v303 = vld [vmem:[%s198 + $0x24c] sm:$0xff]
      %v304 = vld [vmem:[%s198 + $0x254] sm:$0xf]
      %v305 = vld [vmem:[%s198 + $0x258] sm:$0xff]
      %v306 = vld [vmem:[%s198 + $0x260] sm:$0xff]
      %v307 = vld [vmem:[%s198 + $0x268] sm:$0xff]
      %v308 = vld [vmem:[%s198 + $0x270] sm:$0xff]
      %v309 = vld [vmem:[%s198 + $0x278] sm:$0xff]
      %v310 = vld [vmem:[%s198 + $0x280] sm:$0xff]
      %v311 = vld [vmem:[%s198 + $0x288] sm:$0xff]
      %v312 = vld [vmem:[%s198 + $0x290] sm:$0xff]
      %v313 = vld [vmem:[%s198 + $0x298] sm:$0xff]
      %v314 = vld [vmem:[%s198 + $0x2a0] sm:$0xff]
      %v315 = vld [vmem:[%s198 + $0x2a8] sm:$0xff]
      %v316 = vld [vmem:[%s198 + $0x2b0] sm:$0xff]
      %v317 = vld [vmem:[%s198 + $0x2b8] sm:$0xf]
      %v318 = vld [vmem:[%s198 + $0x2bc] sm:$0xff]
      %v319 = vld [vmem:[%s198 + $0x2c4] sm:$0xff]
      %v320 = vld [vmem:[%s198 + $0x2cc] sm:$0xff]
      %v321 = vld [vmem:[%s198 + $0x2d4] sm:$0xff]
      %v322 = vld [vmem:[%s198 + $0x2dc] sm:$0xff]
      %v323 = vld [vmem:[%s198 + $0x2e4] sm:$0xff]
      %v324 = vld [vmem:[%s198 + $0x2ec] sm:$0xff]
      %v325 = vld [vmem:[%s198 + $0x2f4] sm:$0xff]
      %v326 = vld [vmem:[%s198 + $0x2fc] sm:$0xff]
      %v327 = vld [vmem:[%s198 + $0x304] sm:$0xff]
      %v328 = vld [vmem:[%s198 + $0x30c] sm:$0xff]
      %v329 = vld [vmem:[%s198 + $0x314] sm:$0xff]
      %v330 = vld [vmem:[%s198 + $0x31c] sm:$0xf]
      %v331 = vld [vmem:[%s198 + $0x320] sm:$0xff]
      %v332 = vld [vmem:[%s198 + $0x328] sm:$0xff]
      %v333 = vld [vmem:[%s198 + $0x330] sm:$0xff]
      %v334 = vld [vmem:[%s198 + $0x338] sm:$0xff]
      %v335 = vld [vmem:[%s198 + $0x340] sm:$0xff]
      %v336 = vld [vmem:[%s198 + $0x348] sm:$0xff]
      %v337 = vld [vmem:[%s198 + $0x350] sm:$0xff]
      %v338 = vld [vmem:[%s198 + $0x358] sm:$0xff]
      %v339 = vld [vmem:[%s198 + $0x360] sm:$0xff]
      %v340 = vld [vmem:[%s198 + $0x368] sm:$0xff]
      %v341 = vld [vmem:[%s198 + $0x370] sm:$0xff]
      %v342 = vld [vmem:[%s198 + $0x378] sm:$0xff]
      %v343 = vld [vmem:[%s198 + $0x380] sm:$0xf]
      %v344 = vld [vmem:[%s198 + $0x384] sm:$0xff]
      %v345 = vld [vmem:[%s198 + $0x38c] sm:$0xff]
      %v346 = vld [vmem:[%s198 + $0x394] sm:$0xff]
      %v347 = vld [vmem:[%s198 + $0x39c] sm:$0xff]
      %v348 = vld [vmem:[%s198 + $0x3a4] sm:$0xff]
      %v349 = vld [vmem:[%s198 + $0x3ac] sm:$0xff]
      %v350 = vld [vmem:[%s198 + $0x3b4] sm:$0xff]
      %v351 = vld [vmem:[%s198 + $0x3bc] sm:$0xff]
      %v352 = vld [vmem:[%s198 + $0x3c4] sm:$0xff]
      %v353 = vld [vmem:[%s198 + $0x3cc] sm:$0xff]
      %v354 = vld [vmem:[%s198 + $0x3d4] sm:$0xff]
      %v355 = vld [vmem:[%s198 + $0x3dc] sm:$0xff]
      %v356 = vld [vmem:[%s198 + $0x3e4] sm:$0xf]
      %v357 = vld [vmem:[%s198 + $0x3e8] sm:$0xff]
      %v358 = vld [vmem:[%s198 + $0x3f0] sm:$0xff]
      %v359 = vld [vmem:[%s198 + $0x3f8] sm:$0xff]
      %v360 = vld [vmem:[%s198 + $0x400] sm:$0xff]
      %v361 = vld [vmem:[%s198 + $0x408] sm:$0xff]
      %v362 = vld [vmem:[%s198 + $0x410] sm:$0xff]
      %v363 = vld [vmem:[%s198 + $0x418] sm:$0xff]
      %v364 = vld [vmem:[%s198 + $0x420] sm:$0xff]
      %v365 = vld [vmem:[%s198 + $0x428] sm:$0xff]
      %v366 = vld [vmem:[%s198 + $0x430] sm:$0xff]
      %v367 = vld [vmem:[%s198 + $0x438] sm:$0xff]
      %v368 = vld [vmem:[%s198 + $0x440] sm:$0xff]
      %v369 = vld [vmem:[%s198 + $0x448] sm:$0xf]
      %v370 = vld [vmem:[%s198 + $0x44c] sm:$0xff]
      %v371 = vld [vmem:[%s198 + $0x454] sm:$0xff]
      %v372 = vld [vmem:[%s198 + $0x45c] sm:$0xff]
      %v373 = vld [vmem:[%s198 + $0x464] sm:$0xff]
      %v374 = vld [vmem:[%s198 + $0x46c] sm:$0xff]
      %v375 = vld [vmem:[%s198 + $0x474] sm:$0xff]
      %v376 = vld [vmem:[%s198 + $0x47c] sm:$0xff]
      %v377 = vld [vmem:[%s198 + $0x484] sm:$0xff]
      %v378 = vld [vmem:[%s198 + $0x48c] sm:$0xff]
      %v379 = vld [vmem:[%s198 + $0x494] sm:$0xff]
      %v380 = vld [vmem:[%s198 + $0x49c] sm:$0xff]
      %v381 = vld [vmem:[%s198 + $0x4a4] sm:$0xff]
      %v382 = vld [vmem:[%s198 + $0x4ac] sm:$0xf]
      %v383 = vld [vmem:[%s198 + $0x4b0] sm:$0xff]
      %v384 = vld [vmem:[%s198 + $0x4b8] sm:$0xff]
      %v385 = vld [vmem:[%s198 + $0x4c0] sm:$0xff]
      %v386 = vld [vmem:[%s198 + $0x4c8] sm:$0xff]
      %v387 = vld [vmem:[%s198 + $0x4d0] sm:$0xff]
      %v388 = vld [vmem:[%s198 + $0x4d8] sm:$0xff]
      %v389 = vld [vmem:[%s198 + $0x4e0] sm:$0xff]
      %v390 = vld [vmem:[%s198 + $0x4e8] sm:$0xff]
      %v391 = vld [vmem:[%s198 + $0x4f0] sm:$0xff]
      %v392 = vld [vmem:[%s198 + $0x4f8] sm:$0xff]
      %v393 = vld [vmem:[%s198 + $0x500] sm:$0xff]
      %v394 = vld [vmem:[%s198 + $0x508] sm:$0xff]
      %v395 = vld [vmem:[%s198 + $0x510] sm:$0xf]
      %v396 = vld [vmem:[%s198 + $0x514] sm:$0xff]
      %v397 = vld [vmem:[%s198 + $0x51c] sm:$0xff]
      %v398 = vld [vmem:[%s198 + $0x524] sm:$0xff]
      %v399 = vld [vmem:[%s198 + $0x52c] sm:$0xff]
      %v400 = vld [vmem:[%s198 + $0x534] sm:$0xff]
      %v401 = vld [vmem:[%s198 + $0x53c] sm:$0xff]
      %v402 = vld [vmem:[%s198 + $0x544] sm:$0xff]
      %v403 = vld [vmem:[%s198 + $0x54c] sm:$0xff]
      %v404 = vld [vmem:[%s198 + $0x554] sm:$0xff]
      %v405 = vld [vmem:[%s198 + $0x55c] sm:$0xff]
      %v406 = vld [vmem:[%s198 + $0x564] sm:$0xff]
      %v407 = vld [vmem:[%s198 + $0x56c] sm:$0xff]
      %v408 = vld [vmem:[%s198 + $0x574] sm:$0xf]
      %v409 = vld [vmem:[%s198 + $0x578] sm:$0xff]
      %v410 = vld [vmem:[%s198 + $0x580] sm:$0xff]
      %v411 = vld [vmem:[%s198 + $0x588] sm:$0xff]
      %v412 = vld [vmem:[%s198 + $0x590] sm:$0xff]
      %v413 = vld [vmem:[%s198 + $0x598] sm:$0xff]
      %v414 = vld [vmem:[%s198 + $0x5a0] sm:$0xff]
      %v415 = vld [vmem:[%s198 + $0x5a8] sm:$0xff]
      %v416 = vld [vmem:[%s198 + $0x5b0] sm:$0xff]
      %v417 = vld [vmem:[%s198 + $0x5b8] sm:$0xff]
      %v418 = vld [vmem:[%s198 + $0x5c0] sm:$0xff]
      %v419 = vld [vmem:[%s198 + $0x5c8] sm:$0xff]
      %v420 = vld [vmem:[%s198 + $0x5d0] sm:$0xff]
      %v421 = vld [vmem:[%s198 + $0x5d8] sm:$0xf]
      %v422 = vld [vmem:[%s198 + $0x5dc] sm:$0xff]
      %v423 = vld [vmem:[%s198 + $0x5e4] sm:$0xff]
      %v424 = vld [vmem:[%s198 + $0x5ec] sm:$0xff]
      %v425 = vld [vmem:[%s198 + $0x5f4] sm:$0xff]
      %v426 = vld [vmem:[%s198 + $0x5fc] sm:$0xff]
      %v427 = vld [vmem:[%s198 + $0x604] sm:$0xff]
      %v428 = vld [vmem:[%s198 + $0x60c] sm:$0xff]
      %v429 = vld [vmem:[%s198 + $0x614] sm:$0xff]
      %v430 = vld [vmem:[%s198 + $0x61c] sm:$0xff]
      %v431 = vld [vmem:[%s198 + $0x624] sm:$0xff]
      %v432 = vld [vmem:[%s198 + $0x62c] sm:$0xff]
      %v433 = vld [vmem:[%s198 + $0x634] sm:$0xff]
      %v434 = vld [vmem:[%s198 + $0x63c] sm:$0xf]
      %v435 = vld [vmem:[%s198 + $0x640] sm:$0xff]
      %v436 = vld [vmem:[%s198 + $0x648] sm:$0xff]
      %v437 = vld [vmem:[%s198 + $0x650] sm:$0xff]
      %v438 = vld [vmem:[%s198 + $0x658] sm:$0xff]
      %v439 = vld [vmem:[%s198 + $0x660] sm:$0xff]
      %v440 = vld [vmem:[%s198 + $0x668] sm:$0xff]
      %v441 = vld [vmem:[%s198 + $0x670] sm:$0xff]
      %v442 = vld [vmem:[%s198 + $0x678] sm:$0xff]
      %v443 = vld [vmem:[%s198 + $0x680] sm:$0xff]
      %v444 = vld [vmem:[%s198 + $0x688] sm:$0xff]
      %v445 = vld [vmem:[%s198 + $0x690] sm:$0xff]
      %v446 = vld [vmem:[%s198 + $0x698] sm:$0xff]
      %v447 = vld [vmem:[%s198 + $0x6a0] sm:$0xf]
      %v448 = vld [vmem:[%s198 + $0x6a4] sm:$0xff]
      %v449 = vld [vmem:[%s198 + $0x6ac] sm:$0xff]
      %v450 = vld [vmem:[%s198 + $0x6b4] sm:$0xff]
      %v451 = vld [vmem:[%s198 + $0x6bc] sm:$0xff]
      %v452 = vld [vmem:[%s198 + $0x6c4] sm:$0xff]
      %v453 = vld [vmem:[%s198 + $0x6cc] sm:$0xff]
      %v454 = vld [vmem:[%s198 + $0x6d4] sm:$0xff]
      %v455 = vld [vmem:[%s198 + $0x6dc] sm:$0xff]
      %v456 = vld [vmem:[%s198 + $0x6e4] sm:$0xff]
      %v457 = vld [vmem:[%s198 + $0x6ec] sm:$0xff]
      %v458 = vld [vmem:[%s198 + $0x6f4] sm:$0xff]
      %v459 = vld [vmem:[%s198 + $0x6fc] sm:$0xff]
      %v460 = vld [vmem:[%s198 + $0x704] sm:$0xf]
      %v461 = vld [vmem:[%s198 + $0x708] sm:$0xff]
      %v462 = vld [vmem:[%s198 + $0x710] sm:$0xff]
      %v463 = vld [vmem:[%s198 + $0x718] sm:$0xff]
      %v464 = vld [vmem:[%s198 + $0x720] sm:$0xff]
      %v465 = vld [vmem:[%s198 + $0x728] sm:$0xff]
      %v466 = vld [vmem:[%s198 + $0x730] sm:$0xff]
      %v467 = vld [vmem:[%s198 + $0x738] sm:$0xff]
      %v468 = vld [vmem:[%s198 + $0x740] sm:$0xff]
      %v469 = vld [vmem:[%s198 + $0x748] sm:$0xff]
      %v470 = vld [vmem:[%s198 + $0x750] sm:$0xff]
      %v471 = vld [vmem:[%s198 + $0x758] sm:$0xff]
      %v472 = vld [vmem:[%s198 + $0x760] sm:$0xff]
      %v473 = vld [vmem:[%s198 + $0x768] sm:$0xf]
      %v474 = vld [vmem:[%s198 + $0x76c] sm:$0xff]
      %v475 = vld [vmem:[%s198 + $0x774] sm:$0xff]
      %v476 = vld [vmem:[%s198 + $0x77c] sm:$0xff]
      %v477 = vld [vmem:[%s198 + $0x784] sm:$0xff]
      %v478 = vld [vmem:[%s198 + $0x78c] sm:$0xff]
      %v479 = vld [vmem:[%s198 + $0x794] sm:$0xff]
      %v480 = vld [vmem:[%s198 + $0x79c] sm:$0xff]
      %v481 = vld [vmem:[%s198 + $0x7a4] sm:$0xff]
      %v482 = vld [vmem:[%s198 + $0x7ac] sm:$0xff]
      %v483 = vld [vmem:[%s198 + $0x7b4] sm:$0xff]
      %v484 = vld [vmem:[%s198 + $0x7bc] sm:$0xff]
      %v485 = vld [vmem:[%s198 + $0x7c4] sm:$0xff]
      %v486 = vld [vmem:[%s198 + $0x7cc] sm:$0xf]
      %v487 = vld [vmem:[%s198 + $0x7d0] sm:$0xff]
      %v488 = vld [vmem:[%s198 + $0x7d8] sm:$0xff]
      %v489 = vld [vmem:[%s198 + $0x7e0] sm:$0xff]
      %v490 = vld [vmem:[%s198 + $0x7e8] sm:$0xff]
      %v491 = vld [vmem:[%s198 + $0x7f0] sm:$0xff]
      %v492 = vld [vmem:[%s198 + $0x7f8] sm:$0xff]
      %v493 = vld [vmem:[%s198 + $0x800] sm:$0xff]
      %v494 = vld [vmem:[%s198 + $0x808] sm:$0xff]
      %v495 = vld [vmem:[%s198 + $0x810] sm:$0xff]
      %v496 = vld [vmem:[%s198 + $0x818] sm:$0xff]
      %v497 = vld [vmem:[%s198 + $0x820] sm:$0xff]
      %v498 = vld [vmem:[%s198 + $0x828] sm:$0xff]
      %v499 = vld [vmem:[%s198 + $0x830] sm:$0xf]
      %v500 = vld [vmem:[%s198 + $0x834] sm:$0xff]
      %v501 = vld [vmem:[%s198 + $0x83c] sm:$0xff]
      %v502 = vld [vmem:[%s198 + $0x844] sm:$0xff]
      %v503 = vld [vmem:[%s198 + $0x84c] sm:$0xff]
      %v504 = vld [vmem:[%s198 + $0x854] sm:$0xff]
      %v505 = vld [vmem:[%s198 + $0x85c] sm:$0xff]
      %v506 = vld [vmem:[%s198 + $0x864] sm:$0xff]
      %v507 = vld [vmem:[%s198 + $0x86c] sm:$0xff]
      %v508 = vld [vmem:[%s198 + $0x874] sm:$0xff]
      %v509 = vld [vmem:[%s198 + $0x87c] sm:$0xff]
      %v510 = vld [vmem:[%s198 + $0x884] sm:$0xff]
      %v511 = vld [vmem:[%s198 + $0x88c] sm:$0xff]
      %v512 = vld [vmem:[%s198 + $0x894] sm:$0xf]
      %v513 = vld [vmem:[%s198 + $0x898] sm:$0xff]
      %v514 = vld [vmem:[%s198 + $0x8a0] sm:$0xff]
      %v515 = vld [vmem:[%s198 + $0x8a8] sm:$0xff]
      %v516 = vld [vmem:[%s198 + $0x8b0] sm:$0xff]
      %v517 = vld [vmem:[%s198 + $0x8b8] sm:$0xff]
      %v518 = vld [vmem:[%s198 + $0x8c0] sm:$0xff]
      %v519 = vld [vmem:[%s198 + $0x8c8] sm:$0xff]
      %v520 = vld [vmem:[%s198 + $0x8d0] sm:$0xff]
      %v521 = vld [vmem:[%s198 + $0x8d8] sm:$0xff]
      %v522 = vld [vmem:[%s198 + $0x8e0] sm:$0xff]
      %v523 = vld [vmem:[%s198 + $0x8e8] sm:$0xff]
      %v524 = vld [vmem:[%s198 + $0x8f0] sm:$0xff]
      %v525 = vld [vmem:[%s198 + $0x8f8] sm:$0xf]
      %v526 = vld [vmem:[%s198 + $0x8fc] sm:$0xff]
      %v527 = vld [vmem:[%s198 + $0x904] sm:$0xff]
      %v528 = vld [vmem:[%s198 + $0x90c] sm:$0xff]
      %v529 = vld [vmem:[%s198 + $0x914] sm:$0xff]
      %v530 = vld [vmem:[%s198 + $0x91c] sm:$0xff]
      %v531 = vld [vmem:[%s198 + $0x924] sm:$0xff]
      %v532 = vld [vmem:[%s198 + $0x92c] sm:$0xff]
      %v533 = vld [vmem:[%s198 + $0x934] sm:$0xff]
      %v534 = vld [vmem:[%s198 + $0x93c] sm:$0xff]
      %v535 = vld [vmem:[%s198 + $0x944] sm:$0xff]
      %v536 = vld [vmem:[%s198 + $0x94c] sm:$0xff]
      %v537 = vld [vmem:[%s198 + $0x954] sm:$0xff]
      %v538 = vld [vmem:[%s198 + $0x95c] sm:$0xf]
      %v539 = vld [vmem:[%s198 + $0x960] sm:$0xff]
      %v540 = vld [vmem:[%s198 + $0x968] sm:$0xff]
      %v541 = vld [vmem:[%s198 + $0x970] sm:$0xff]
      %v542 = vld [vmem:[%s198 + $0x978] sm:$0xff]
      %v543 = vld [vmem:[%s198 + $0x980] sm:$0xff]
      %v544 = vld [vmem:[%s198 + $0x988] sm:$0xff]
      %v545 = vld [vmem:[%s198 + $0x990] sm:$0xff]
      %v546 = vld [vmem:[%s198 + $0x998] sm:$0xff]
      %v547 = vld [vmem:[%s198 + $0x9a0] sm:$0xff]
      %v548 = vld [vmem:[%s198 + $0x9a8] sm:$0xff]
      %v549 = vld [vmem:[%s198 + $0x9b0] sm:$0xff]
      %v550 = vld [vmem:[%s198 + $0x9b8] sm:$0xff]
      %v551 = vld [vmem:[%s198 + $0x9c0] sm:$0xf]
      %v552 = vld [vmem:[%s198 + $0x9c4] sm:$0xff]
      %v553 = vld [vmem:[%s198 + $0x9cc] sm:$0xff]
      %v554 = vld [vmem:[%s198 + $0x9d4] sm:$0xff]
      %v555 = vld [vmem:[%s198 + $0x9dc] sm:$0xff]
      %v556 = vld [vmem:[%s198 + $0x9e4] sm:$0xff]
      %v557 = vld [vmem:[%s198 + $0x9ec] sm:$0xff]
      %v558 = vld [vmem:[%s198 + $0x9f4] sm:$0xff]
      %v559 = vld [vmem:[%s198 + $0x9fc] sm:$0xff]
      %v560 = vld [vmem:[%s198 + $0xa04] sm:$0xff]
      %v561 = vld [vmem:[%s198 + $0xa0c] sm:$0xff]
      %v562 = vld [vmem:[%s198 + $0xa14] sm:$0xff]
      %v563 = vld [vmem:[%s198 + $0xa1c] sm:$0xff]
      %v564 = vld [vmem:[%s198 + $0xa24] sm:$0xf]
      %v565 = vld [vmem:[%s198 + $0xa28] sm:$0xff]
      %v566 = vld [vmem:[%s198 + $0xa30] sm:$0xff]
      %v567 = vld [vmem:[%s198 + $0xa38] sm:$0xff]
      %v568 = vld [vmem:[%s198 + $0xa40] sm:$0xff]
      %v569 = vld [vmem:[%s198 + $0xa48] sm:$0xff]
      %v570 = vld [vmem:[%s198 + $0xa50] sm:$0xff]
      %v571 = vld [vmem:[%s198 + $0xa58] sm:$0xff]
      %v572 = vld [vmem:[%s198 + $0xa60] sm:$0xff]
      %v573 = vld [vmem:[%s198 + $0xa68] sm:$0xff]
      %v574 = vld [vmem:[%s198 + $0xa70] sm:$0xff]
      %v575 = vld [vmem:[%s198 + $0xa78] sm:$0xff]
      %v576 = vld [vmem:[%s198 + $0xa80] sm:$0xff]
      %v577 = vld [vmem:[%s198 + $0xa88] sm:$0xf]
      %v578 = vld [vmem:[%s198 + $0xa8c] sm:$0xff]
      %v579 = vld [vmem:[%s198 + $0xa94] sm:$0xff]
      %v580 = vld [vmem:[%s198 + $0xa9c] sm:$0xff]
      %v581 = vld [vmem:[%s198 + $0xaa4] sm:$0xff]
      %v582 = vld [vmem:[%s198 + $0xaac] sm:$0xff]
      %v583 = vld [vmem:[%s198 + $0xab4] sm:$0xff]
      %v584 = vld [vmem:[%s198 + $0xabc] sm:$0xff]
      %v585 = vld [vmem:[%s198 + $0xac4] sm:$0xff]
      %v586 = vld [vmem:[%s198 + $0xacc] sm:$0xff]
      %v587 = vld [vmem:[%s198 + $0xad4] sm:$0xff]
      %v588 = vld [vmem:[%s198 + $0xadc] sm:$0xff]
      %v589 = vld [vmem:[%s198 + $0xae4] sm:$0xff]
      %v590 = vld [vmem:[%s198 + $0xaec] sm:$0xf]
      %v591 = vld [vmem:[%s198 + $0xaf0] sm:$0xff]
      %v592 = vld [vmem:[%s198 + $0xaf8] sm:$0xff]
      %v593 = vld [vmem:[%s198 + $0xb00] sm:$0xff]
      %v594 = vld [vmem:[%s198 + $0xb08] sm:$0xff]
      %v595 = vld [vmem:[%s198 + $0xb10] sm:$0xff]
      %v596 = vld [vmem:[%s198 + $0xb18] sm:$0xff]
      %v597 = vld [vmem:[%s198 + $0xb20] sm:$0xff]
      %v598 = vld [vmem:[%s198 + $0xb28] sm:$0xff]
      %v599 = vld [vmem:[%s198 + $0xb30] sm:$0xff]
      %v600 = vld [vmem:[%s198 + $0xb38] sm:$0xff]
      %v601 = vld [vmem:[%s198 + $0xb40] sm:$0xff]
      %v602 = vld [vmem:[%s198 + $0xb48] sm:$0xff]
      %v603 = vld [vmem:[%s198 + $0xb50] sm:$0xf]
      %v604 = vld [vmem:[%s198 + $0xb54] sm:$0xff]
      %v605 = vld [vmem:[%s198 + $0xb5c] sm:$0xff]
      %v606 = vld [vmem:[%s198 + $0xb64] sm:$0xff]
      %v607 = vld [vmem:[%s198 + $0xb6c] sm:$0xff]
      %v608 = vld [vmem:[%s198 + $0xb74] sm:$0xff]
      %v609 = vld [vmem:[%s198 + $0xb7c] sm:$0xff]
      %v610 = vld [vmem:[%s198 + $0xb84] sm:$0xff]
      %v611 = vld [vmem:[%s198 + $0xb8c] sm:$0xff]
      %v612 = vld [vmem:[%s198 + $0xb94] sm:$0xff]
      %v613 = vld [vmem:[%s198 + $0xb9c] sm:$0xff]
      %v614 = vld [vmem:[%s198 + $0xba4] sm:$0xff]
      %v615 = vld [vmem:[%s198 + $0xbac] sm:$0xff]
      %v616 = vld [vmem:[%s198 + $0xbb4] sm:$0xf]
      %v617 = vld [vmem:[%s198 + $0xbb8] sm:$0xff]
      %v618 = vld [vmem:[%s198 + $0xbc0] sm:$0xff]
      %v619 = vld [vmem:[%s198 + $0xbc8] sm:$0xff]
      %v620 = vld [vmem:[%s198 + $0xbd0] sm:$0xff]
      %v621 = vld [vmem:[%s198 + $0xbd8] sm:$0xff]
      %v622 = vld [vmem:[%s198 + $0xbe0] sm:$0xff]
      %v623 = vld [vmem:[%s198 + $0xbe8] sm:$0xff]
      %v624 = vld [vmem:[%s198 + $0xbf0] sm:$0xff]
      %v625 = vld [vmem:[%s198 + $0xbf8] sm:$0xff]
      %v626 = vld [vmem:[%s198 + $0xc00] sm:$0xff]
      %v627 = vld [vmem:[%s198 + $0xc08] sm:$0xff]
      %v628 = vld [vmem:[%s198 + $0xc10] sm:$0xff]
      %v629 = vld [vmem:[%s198 + $0xc18] sm:$0xf]
      %v630 = vld [vmem:[%s198 + $0xc1c] sm:$0xff]
      %v631 = vld [vmem:[%s198 + $0xc24] sm:$0xff]
      %v632 = vld [vmem:[%s198 + $0xc2c] sm:$0xff]
      %v633 = vld [vmem:[%s198 + $0xc34] sm:$0xff]
      %v634 = vld [vmem:[%s198 + $0xc3c] sm:$0xff]
      %v635 = vld [vmem:[%s198 + $0xc44] sm:$0xff]
      %v636 = vld [vmem:[%s198 + $0xc4c] sm:$0xff]
      %v637 = vld [vmem:[%s198 + $0xc54] sm:$0xff]
      %v638 = vld [vmem:[%s198 + $0xc5c] sm:$0xff]
      %v639 = vld [vmem:[%s198 + $0xc64] sm:$0xff]
      %v640 = vld [vmem:[%s198 + $0xc6c] sm:$0xff]
      %v641 = vld [vmem:[%s198 + $0xc74] sm:$0xff]
      %v642 = vld [vmem:[%s198 + $0xc7c] sm:$0xf]
      %v659 = vunpack.c.l.b16 %v211
      %v660 = vunpack.c.h.b16 %v211
      %v661 = vunpack.c.l.b16 %v212
      %v662 = vunpack.c.h.b16 %v212
      %v663 = vunpack.c.l.b16 %v213
      %v664 = vunpack.c.h.b16 %v213
      %v665 = vunpack.c.l.b16 %v214
      %v666 = vunpack.c.h.b16 %v214
      %v667 = vunpack.c.l.b16 %v215
      %v668 = vunpack.c.h.b16 %v215
      %v669 = vunpack.c.l.b16 %v216
      %v670 = vunpack.c.h.b16 %v216
      %v671 = vunpack.c.l.b16 %v217
      %v672 = vunpack.c.h.b16 %v217
      %v673 = vunpack.c.l.b16 %v218
      %v674 = vunpack.c.h.b16 %v218
      %v675 = vunpack.c.l.b16 %v219
      %v676 = vunpack.c.h.b16 %v219
      %v677 = vunpack.c.l.b16 %v220
      %v678 = vunpack.c.h.b16 %v220
      %v679 = vunpack.c.l.b16 %v221
      %v680 = vunpack.c.h.b16 %v221
      %v681 = vunpack.c.l.b16 %v222
      %v682 = vunpack.c.h.b16 %v222
      %v683 = vunpack.c.l.b16 %v223
      %v684 = vunpack.c.h.b16 %v223
      %v685 = vunpack.c.l.b16 %v224
      %v686 = vunpack.c.h.b16 %v224
      %v687 = vunpack.c.l.b16 %v225
      %v688 = vunpack.c.h.b16 %v225
      %v689 = vunpack.c.l.b16 %v226
      %v690 = vunpack.c.h.b16 %v226
      %v691 = vpack.c.b16 %v661, %v659
      %v692 = vpack.c.b16 %v662, %v660
      %v693 = vpack.c.b16 %v665, %v663
      %v694 = vpack.c.b16 %v666, %v664
      %v695 = vpack.c.b16 %v669, %v667
      %v696 = vpack.c.b16 %v670, %v668
      %v697 = vpack.c.b16 %v673, %v671
      %v698 = vpack.c.b16 %v674, %v672
      %v699 = vpack.c.b16 %v677, %v675
      %v700 = vpack.c.b16 %v678, %v676
      %v701 = vpack.c.b16 %v681, %v679
      %v702 = vpack.c.b16 %v682, %v680
      %v703 = vpack.c.b16 %v685, %v683
      %v704 = vpack.c.b16 %v686, %v684
      %v705 = vpack.c.b16 %v689, %v687
      %v706 = vpack.c.b16 %v690, %v688
      %v1139 = vunpack.c.l.b16 %v227
      %v1140 = vunpack.c.h.b16 %v227
      %v1141 = vunpack.c.l.b16 %v228
      %v1142 = vunpack.c.h.b16 %v228
      %v1143 = vunpack.c.l.b16 %v229
      %v1144 = vunpack.c.h.b16 %v229
      %v1145 = vunpack.c.l.b16 %v230
      %v1146 = vunpack.c.h.b16 %v230
      %v1147 = vunpack.c.l.b16 %v231
      %v1148 = vunpack.c.h.b16 %v231
      %v1149 = vunpack.c.l.b16 %v232
      %v1150 = vunpack.c.h.b16 %v232
      %v1151 = vunpack.c.l.b16 %v233
      %v1152 = vunpack.c.h.b16 %v233
      %v1153 = vunpack.c.l.b16 %v234
      %v1154 = vunpack.c.h.b16 %v234
      %v1155 = vunpack.c.l.b16 %v235
      %v1156 = vunpack.c.h.b16 %v235
      %v1157 = vunpack.c.l.b16 %v236
      %v1158 = vunpack.c.h.b16 %v236
      %v1159 = vunpack.c.l.b16 %v237
      %v1160 = vunpack.c.h.b16 %v237
      %v1161 = vunpack.c.l.b16 %v238
      %v1162 = vunpack.c.h.b16 %v238
      %v1163 = vunpack.c.l.b16 %v239
      %v1164 = vunpack.c.l.b16 %v240
      %v1165 = vunpack.c.h.b16 %v240
      %v1166 = vunpack.c.l.b16 %v241
      %v1167 = vunpack.c.h.b16 %v241
      %v1168 = vunpack.c.l.b16 %v242
      %v1169 = vunpack.c.h.b16 %v242
      %v1170 = vunpack.c.l.b16 %v243
      %v1171 = vunpack.c.h.b16 %v243
      %v1172 = vunpack.c.l.b16 %v244
      %v1173 = vunpack.c.h.b16 %v244
      %v1174 = vunpack.c.l.b16 %v245
      %v1175 = vunpack.c.h.b16 %v245
      %v1176 = vunpack.c.l.b16 %v246
      %v1177 = vunpack.c.h.b16 %v246
      %v1178 = vunpack.c.l.b16 %v247
      %v1179 = vunpack.c.h.b16 %v247
      %v1180 = vunpack.c.l.b16 %v248
      %v1181 = vunpack.c.h.b16 %v248
      %v1182 = vunpack.c.l.b16 %v249
      %v1183 = vunpack.c.h.b16 %v249
      %v1184 = vunpack.c.l.b16 %v250
      %v1185 = vunpack.c.h.b16 %v250
      %v1186 = vunpack.c.l.b16 %v251
      %v1187 = vunpack.c.h.b16 %v251
      %v1188 = vunpack.c.l.b16 %v252
      %v1189 = vunpack.c.l.b16 %v253
      %v1190 = vunpack.c.h.b16 %v253
      %v1191 = vunpack.c.l.b16 %v254
      %v1192 = vunpack.c.h.b16 %v254
      %v1193 = vunpack.c.l.b16 %v255
      %v1194 = vunpack.c.h.b16 %v255
      %v1195 = vunpack.c.l.b16 %v256
      %v1196 = vunpack.c.h.b16 %v256
      %v1197 = vunpack.c.l.b16 %v257
      %v1198 = vunpack.c.h.b16 %v257
      %v1199 = vunpack.c.l.b16 %v258
      %v1200 = vunpack.c.h.b16 %v258
      %v1201 = vunpack.c.l.b16 %v259
      %v1202 = vunpack.c.h.b16 %v259
      %v1203 = vunpack.c.l.b16 %v260
      %v1204 = vunpack.c.h.b16 %v260
      %v1205 = vunpack.c.l.b16 %v261
      %v1206 = vunpack.c.h.b16 %v261
      %v1207 = vunpack.c.l.b16 %v262
      %v1208 = vunpack.c.h.b16 %v262
      %v1209 = vunpack.c.l.b16 %v263
      %v1210 = vunpack.c.h.b16 %v263
      %v1211 = vunpack.c.l.b16 %v264
      %v1212 = vunpack.c.h.b16 %v264
      %v1213 = vunpack.c.l.b16 %v265
      %v1214 = vunpack.c.l.b16 %v266
      %v1215 = vunpack.c.h.b16 %v266
      %v1216 = vunpack.c.l.b16 %v267
      %v1217 = vunpack.c.h.b16 %v267
      %v1218 = vunpack.c.l.b16 %v268
      %v1219 = vunpack.c.h.b16 %v268
      %v1220 = vunpack.c.l.b16 %v269
      %v1221 = vunpack.c.h.b16 %v269
      %v1222 = vunpack.c.l.b16 %v270
      %v1223 = vunpack.c.h.b16 %v270
      %v1224 = vunpack.c.l.b16 %v271
      %v1225 = vunpack.c.h.b16 %v271
      %v1226 = vunpack.c.l.b16 %v272
      %v1227 = vunpack.c.h.b16 %v272
      %v1228 = vunpack.c.l.b16 %v273
      %v1229 = vunpack.c.h.b16 %v273
      %v1230 = vunpack.c.l.b16 %v274
      %v1231 = vunpack.c.h.b16 %v274
      %v1232 = vunpack.c.l.b16 %v275
      %v1233 = vunpack.c.h.b16 %v275
      %v1234 = vunpack.c.l.b16 %v276
      %v1235 = vunpack.c.h.b16 %v276
      %v1236 = vunpack.c.l.b16 %v277
      %v1237 = vunpack.c.h.b16 %v277
      %v1238 = vunpack.c.l.b16 %v278
      %v1239 = vunpack.c.l.b16 %v279
      %v1240 = vunpack.c.h.b16 %v279
      %v1241 = vunpack.c.l.b16 %v280
      %v1242 = vunpack.c.h.b16 %v280
      %v1243 = vunpack.c.l.b16 %v281
      %v1244 = vunpack.c.h.b16 %v281
      %v1245 = vunpack.c.l.b16 %v282
      %v1246 = vunpack.c.h.b16 %v282
      %v1247 = vunpack.c.l.b16 %v283
      %v1248 = vunpack.c.h.b16 %v283
      %v1249 = vunpack.c.l.b16 %v284
      %v1250 = vunpack.c.h.b16 %v284
      %v1251 = vunpack.c.l.b16 %v285
      %v1252 = vunpack.c.h.b16 %v285
      %v1253 = vunpack.c.l.b16 %v286
      %v1254 = vunpack.c.h.b16 %v286
      %v1255 = vunpack.c.l.b16 %v287
      %v1256 = vunpack.c.h.b16 %v287
      %v1257 = vunpack.c.l.b16 %v288
      %v1258 = vunpack.c.h.b16 %v288
      %v1259 = vunpack.c.l.b16 %v289
      %v1260 = vunpack.c.h.b16 %v289
      %v1261 = vunpack.c.l.b16 %v290
      %v1262 = vunpack.c.h.b16 %v290
      %v1263 = vunpack.c.l.b16 %v291
      %v1264 = vunpack.c.l.b16 %v292
      %v1265 = vunpack.c.h.b16 %v292
      %v1266 = vunpack.c.l.b16 %v293
      %v1267 = vunpack.c.h.b16 %v293
      %v1268 = vunpack.c.l.b16 %v294
      %v1269 = vunpack.c.h.b16 %v294
      %v1270 = vunpack.c.l.b16 %v295
      %v1271 = vunpack.c.h.b16 %v295
      %v1272 = vunpack.c.l.b16 %v296
      %v1273 = vunpack.c.h.b16 %v296
      %v1274 = vunpack.c.l.b16 %v297
      %v1275 = vunpack.c.h.b16 %v297
      %v1276 = vunpack.c.l.b16 %v298
      %v1277 = vunpack.c.h.b16 %v298
      %v1278 = vunpack.c.l.b16 %v299
      %v1279 = vunpack.c.h.b16 %v299
      %v1280 = vunpack.c.l.b16 %v300
      %v1281 = vunpack.c.h.b16 %v300
      %v1282 = vunpack.c.l.b16 %v301
      %v1283 = vunpack.c.h.b16 %v301
      %v1284 = vunpack.c.l.b16 %v302
      %v1285 = vunpack.c.h.b16 %v302
      %v1286 = vunpack.c.l.b16 %v303
      %v1287 = vunpack.c.h.b16 %v303
      %v1288 = vunpack.c.l.b16 %v304
      %v1289 = vunpack.c.l.b16 %v305
      %v1290 = vunpack.c.h.b16 %v305
      %v1291 = vunpack.c.l.b16 %v306
      %v1292 = vunpack.c.h.b16 %v306
      %v1293 = vunpack.c.l.b16 %v307
      %v1294 = vunpack.c.h.b16 %v307
      %v1295 = vunpack.c.l.b16 %v308
      %v1296 = vunpack.c.h.b16 %v308
      %v1297 = vunpack.c.l.b16 %v309
      %v1298 = vunpack.c.h.b16 %v309
      %v1299 = vunpack.c.l.b16 %v310
      %v1300 = vunpack.c.h.b16 %v310
      %v1301 = vunpack.c.l.b16 %v311
      %v1302 = vunpack.c.h.b16 %v311
      %v1303 = vunpack.c.l.b16 %v312
      %v1304 = vunpack.c.h.b16 %v312
      %v1305 = vunpack.c.l.b16 %v313
      %v1306 = vunpack.c.h.b16 %v313
      %v1307 = vunpack.c.l.b16 %v314
      %v1308 = vunpack.c.h.b16 %v314
      %v1309 = vunpack.c.l.b16 %v315
      %v1310 = vunpack.c.h.b16 %v315
      %v1311 = vunpack.c.l.b16 %v316
      %v1312 = vunpack.c.h.b16 %v316
      %v1313 = vunpack.c.l.b16 %v317
      %v1314 = vunpack.c.l.b16 %v318
      %v1315 = vunpack.c.h.b16 %v318
      %v1316 = vunpack.c.l.b16 %v319
      %v1317 = vunpack.c.h.b16 %v319
      %v1318 = vunpack.c.l.b16 %v320
      %v1319 = vunpack.c.h.b16 %v320
      %v1320 = vunpack.c.l.b16 %v321
      %v1321 = vunpack.c.h.b16 %v321
      %v1322 = vunpack.c.l.b16 %v322
      %v1323 = vunpack.c.h.b16 %v322
      %v1324 = vunpack.c.l.b16 %v323
      %v1325 = vunpack.c.h.b16 %v323
      %v1326 = vunpack.c.l.b16 %v324
      %v1327 = vunpack.c.h.b16 %v324
      %v1328 = vunpack.c.l.b16 %v325
      %v1329 = vunpack.c.h.b16 %v325
      %v1330 = vunpack.c.l.b16 %v326
      %v1331 = vunpack.c.h.b16 %v326
      %v1332 = vunpack.c.l.b16 %v327
      %v1333 = vunpack.c.h.b16 %v327
      %v1334 = vunpack.c.l.b16 %v328
      %v1335 = vunpack.c.h.b16 %v328
      %v1336 = vunpack.c.l.b16 %v329
      %v1337 = vunpack.c.h.b16 %v329
      %v1338 = vunpack.c.l.b16 %v330
      %v1339 = vunpack.c.l.b16 %v331
      %v1340 = vunpack.c.h.b16 %v331
      %v1341 = vunpack.c.l.b16 %v332
      %v1342 = vunpack.c.h.b16 %v332
      %v1343 = vunpack.c.l.b16 %v333
      %v1344 = vunpack.c.h.b16 %v333
      %v1345 = vunpack.c.l.b16 %v334
      %v1346 = vunpack.c.h.b16 %v334
      %v1347 = vunpack.c.l.b16 %v335
      %v1348 = vunpack.c.h.b16 %v335
      %v1349 = vunpack.c.l.b16 %v336
      %v1350 = vunpack.c.h.b16 %v336
      %v1351 = vunpack.c.l.b16 %v337
      %v1352 = vunpack.c.h.b16 %v337
      %v1353 = vunpack.c.l.b16 %v338
      %v1354 = vunpack.c.h.b16 %v338
      %v1355 = vunpack.c.l.b16 %v339
      %v1356 = vunpack.c.h.b16 %v339
      %v1357 = vunpack.c.l.b16 %v340
      %v1358 = vunpack.c.h.b16 %v340
      %v1359 = vunpack.c.l.b16 %v341
      %v1360 = vunpack.c.h.b16 %v341
      %v1361 = vunpack.c.l.b16 %v342
      %v1362 = vunpack.c.h.b16 %v342
      %v1363 = vunpack.c.l.b16 %v343
      %v1364 = vunpack.c.l.b16 %v344
      %v1365 = vunpack.c.h.b16 %v344
      %v1366 = vunpack.c.l.b16 %v345
      %v1367 = vunpack.c.h.b16 %v345
      %v1368 = vunpack.c.l.b16 %v346
      %v1369 = vunpack.c.h.b16 %v346
      %v1370 = vunpack.c.l.b16 %v347
      %v1371 = vunpack.c.h.b16 %v347
      %v1372 = vunpack.c.l.b16 %v348
      %v1373 = vunpack.c.h.b16 %v348
      %v1374 = vunpack.c.l.b16 %v349
      %v1375 = vunpack.c.h.b16 %v349
      %v1376 = vunpack.c.l.b16 %v350
      %v1377 = vunpack.c.h.b16 %v350
      %v1378 = vunpack.c.l.b16 %v351
      %v1379 = vunpack.c.h.b16 %v351
      %v1380 = vunpack.c.l.b16 %v352
      %v1381 = vunpack.c.h.b16 %v352
      %v1382 = vunpack.c.l.b16 %v353
      %v1383 = vunpack.c.h.b16 %v353
      %v1384 = vunpack.c.l.b16 %v354
      %v1385 = vunpack.c.h.b16 %v354
      %v1386 = vunpack.c.l.b16 %v355
      %v1387 = vunpack.c.h.b16 %v355
      %v1388 = vunpack.c.l.b16 %v356
      %v1389 = vunpack.c.l.b16 %v357
      %v1390 = vunpack.c.h.b16 %v357
      %v1391 = vunpack.c.l.b16 %v358
      %v1392 = vunpack.c.h.b16 %v358
      %v1393 = vunpack.c.l.b16 %v359
      %v1394 = vunpack.c.h.b16 %v359
      %v1395 = vunpack.c.l.b16 %v360
      %v1396 = vunpack.c.h.b16 %v360
      %v1397 = vunpack.c.l.b16 %v361
      %v1398 = vunpack.c.h.b16 %v361
      %v1399 = vunpack.c.l.b16 %v362
      %v1400 = vunpack.c.h.b16 %v362
      %v1401 = vunpack.c.l.b16 %v363
      %v1402 = vunpack.c.h.b16 %v363
      %v1403 = vunpack.c.l.b16 %v364
      %v1404 = vunpack.c.h.b16 %v364
      %v1405 = vunpack.c.l.b16 %v365
      %v1406 = vunpack.c.h.b16 %v365
      %v1407 = vunpack.c.l.b16 %v366
      %v1408 = vunpack.c.h.b16 %v366
      %v1409 = vunpack.c.l.b16 %v367
      %v1410 = vunpack.c.h.b16 %v367
      %v1411 = vunpack.c.l.b16 %v368
      %v1412 = vunpack.c.h.b16 %v368
      %v1413 = vunpack.c.l.b16 %v369
      %v1414 = vunpack.c.l.b16 %v370
      %v1415 = vunpack.c.h.b16 %v370
      %v1416 = vunpack.c.l.b16 %v371
      %v1417 = vunpack.c.h.b16 %v371
      %v1418 = vunpack.c.l.b16 %v372
      %v1419 = vunpack.c.h.b16 %v372
      %v1420 = vunpack.c.l.b16 %v373
      %v1421 = vunpack.c.h.b16 %v373
      %v1422 = vunpack.c.l.b16 %v374
      %v1423 = vunpack.c.h.b16 %v374
      %v1424 = vunpack.c.l.b16 %v375
      %v1425 = vunpack.c.h.b16 %v375
      %v1426 = vunpack.c.l.b16 %v376
      %v1427 = vunpack.c.h.b16 %v376
      %v1428 = vunpack.c.l.b16 %v377
      %v1429 = vunpack.c.h.b16 %v377
      %v1430 = vunpack.c.l.b16 %v378
      %v1431 = vunpack.c.h.b16 %v378
      %v1432 = vunpack.c.l.b16 %v379
      %v1433 = vunpack.c.h.b16 %v379
      %v1434 = vunpack.c.l.b16 %v380
      %v1435 = vunpack.c.h.b16 %v380
      %v1436 = vunpack.c.l.b16 %v381
      %v1437 = vunpack.c.h.b16 %v381
      %v1438 = vunpack.c.l.b16 %v382
      %v1439 = vunpack.c.l.b16 %v383
      %v1440 = vunpack.c.h.b16 %v383
      %v1441 = vunpack.c.l.b16 %v384
      %v1442 = vunpack.c.h.b16 %v384
      %v1443 = vunpack.c.l.b16 %v385
      %v1444 = vunpack.c.h.b16 %v385
      %v1445 = vunpack.c.l.b16 %v386
      %v1446 = vunpack.c.h.b16 %v386
      %v1447 = vunpack.c.l.b16 %v387
      %v1448 = vunpack.c.h.b16 %v387
      %v1449 = vunpack.c.l.b16 %v388
      %v1450 = vunpack.c.h.b16 %v388
      %v1451 = vunpack.c.l.b16 %v389
      %v1452 = vunpack.c.h.b16 %v389
      %v1453 = vunpack.c.l.b16 %v390
      %v1454 = vunpack.c.h.b16 %v390
      %v1455 = vunpack.c.l.b16 %v391
      %v1456 = vunpack.c.h.b16 %v391
      %v1457 = vunpack.c.l.b16 %v392
      %v1458 = vunpack.c.h.b16 %v392
      %v1459 = vunpack.c.l.b16 %v393
      %v1460 = vunpack.c.h.b16 %v393
      %v1461 = vunpack.c.l.b16 %v394
      %v1462 = vunpack.c.h.b16 %v394
      %v1463 = vunpack.c.l.b16 %v395
      %v1464 = vunpack.c.l.b16 %v396
      %v1465 = vunpack.c.h.b16 %v396
      %v1466 = vunpack.c.l.b16 %v397
      %v1467 = vunpack.c.h.b16 %v397
      %v1468 = vunpack.c.l.b16 %v398
      %v1469 = vunpack.c.h.b16 %v398
      %v1470 = vunpack.c.l.b16 %v399
      %v1471 = vunpack.c.h.b16 %v399
      %v1472 = vunpack.c.l.b16 %v400
      %v1473 = vunpack.c.h.b16 %v400
      %v1474 = vunpack.c.l.b16 %v401
      %v1475 = vunpack.c.h.b16 %v401
      %v1476 = vunpack.c.l.b16 %v402
      %v1477 = vunpack.c.h.b16 %v402
      %v1478 = vunpack.c.l.b16 %v403
      %v1479 = vunpack.c.h.b16 %v403
      %v1480 = vunpack.c.l.b16 %v404
      %v1481 = vunpack.c.h.b16 %v404
      %v1482 = vunpack.c.l.b16 %v405
      %v1483 = vunpack.c.h.b16 %v405
      %v1484 = vunpack.c.l.b16 %v406
      %v1485 = vunpack.c.h.b16 %v406
      %v1486 = vunpack.c.l.b16 %v407
      %v1487 = vunpack.c.h.b16 %v407
      %v1488 = vunpack.c.l.b16 %v408
      %v1489 = vunpack.c.l.b16 %v409
      %v1490 = vunpack.c.h.b16 %v409
      %v1491 = vunpack.c.l.b16 %v410
      %v1492 = vunpack.c.h.b16 %v410
      %v1493 = vunpack.c.l.b16 %v411
      %v1494 = vunpack.c.h.b16 %v411
      %v1495 = vunpack.c.l.b16 %v412
      %v1496 = vunpack.c.h.b16 %v412
      %v1497 = vunpack.c.l.b16 %v413
      %v1498 = vunpack.c.h.b16 %v413
      %v1499 = vunpack.c.l.b16 %v414
      %v1500 = vunpack.c.h.b16 %v414
      %v1501 = vunpack.c.l.b16 %v415
      %v1502 = vunpack.c.h.b16 %v415
      %v1503 = vunpack.c.l.b16 %v416
      %v1504 = vunpack.c.h.b16 %v416
      %v1505 = vunpack.c.l.b16 %v417
      %v1506 = vunpack.c.h.b16 %v417
      %v1507 = vunpack.c.l.b16 %v418
      %v1508 = vunpack.c.h.b16 %v418
      %v1509 = vunpack.c.l.b16 %v419
      %v1510 = vunpack.c.h.b16 %v419
      %v1511 = vunpack.c.l.b16 %v420
      %v1512 = vunpack.c.h.b16 %v420
      %v1513 = vunpack.c.l.b16 %v421
      %v1514 = vunpack.c.l.b16 %v422
      %v1515 = vunpack.c.h.b16 %v422
      %v1516 = vunpack.c.l.b16 %v423
      %v1517 = vunpack.c.h.b16 %v423
      %v1518 = vunpack.c.l.b16 %v424
      %v1519 = vunpack.c.h.b16 %v424
      %v1520 = vunpack.c.l.b16 %v425
      %v1521 = vunpack.c.h.b16 %v425
      %v1522 = vunpack.c.l.b16 %v426
      %v1523 = vunpack.c.h.b16 %v426
      %v1524 = vunpack.c.l.b16 %v427
      %v1525 = vunpack.c.h.b16 %v427
      %v1526 = vunpack.c.l.b16 %v428
      %v1527 = vunpack.c.h.b16 %v428
      %v1528 = vunpack.c.l.b16 %v429
      %v1529 = vunpack.c.h.b16 %v429
      %v1530 = vunpack.c.l.b16 %v430
      %v1531 = vunpack.c.h.b16 %v430
      %v1532 = vunpack.c.l.b16 %v431
      %v1533 = vunpack.c.h.b16 %v431
      %v1534 = vunpack.c.l.b16 %v432
      %v1535 = vunpack.c.h.b16 %v432
      %v1536 = vunpack.c.l.b16 %v433
      %v1537 = vunpack.c.h.b16 %v433
      %v1538 = vunpack.c.l.b16 %v434
      %v1539 = vunpack.c.l.b16 %v435
      %v1540 = vunpack.c.h.b16 %v435
      %v1541 = vunpack.c.l.b16 %v436
      %v1542 = vunpack.c.h.b16 %v436
      %v1543 = vunpack.c.l.b16 %v437
      %v1544 = vunpack.c.h.b16 %v437
      %v1545 = vunpack.c.l.b16 %v438
      %v1546 = vunpack.c.h.b16 %v438
      %v1547 = vunpack.c.l.b16 %v439
      %v1548 = vunpack.c.h.b16 %v439
      %v1549 = vunpack.c.l.b16 %v440
      %v1550 = vunpack.c.h.b16 %v440
      %v1551 = vunpack.c.l.b16 %v441
      %v1552 = vunpack.c.h.b16 %v441
      %v1553 = vunpack.c.l.b16 %v442
      %v1554 = vunpack.c.h.b16 %v442
      %v1555 = vunpack.c.l.b16 %v443
      %v1556 = vunpack.c.h.b16 %v443
      %v1557 = vunpack.c.l.b16 %v444
      %v1558 = vunpack.c.h.b16 %v444
      %v1559 = vunpack.c.l.b16 %v445
      %v1560 = vunpack.c.h.b16 %v445
      %v1561 = vunpack.c.l.b16 %v446
      %v1562 = vunpack.c.h.b16 %v446
      %v1563 = vunpack.c.l.b16 %v447
      %v1564 = vunpack.c.l.b16 %v448
      %v1565 = vunpack.c.h.b16 %v448
      %v1566 = vunpack.c.l.b16 %v449
      %v1567 = vunpack.c.h.b16 %v449
      %v1568 = vunpack.c.l.b16 %v450
      %v1569 = vunpack.c.h.b16 %v450
      %v1570 = vunpack.c.l.b16 %v451
      %v1571 = vunpack.c.h.b16 %v451
      %v1572 = vunpack.c.l.b16 %v452
      %v1573 = vunpack.c.h.b16 %v452
      %v1574 = vunpack.c.l.b16 %v453
      %v1575 = vunpack.c.h.b16 %v453
      %v1576 = vunpack.c.l.b16 %v454
      %v1577 = vunpack.c.h.b16 %v454
      %v1578 = vunpack.c.l.b16 %v455
      %v1579 = vunpack.c.h.b16 %v455
      %v1580 = vunpack.c.l.b16 %v456
      %v1581 = vunpack.c.h.b16 %v456
      %v1582 = vunpack.c.l.b16 %v457
      %v1583 = vunpack.c.h.b16 %v457
      %v1584 = vunpack.c.l.b16 %v458
      %v1585 = vunpack.c.h.b16 %v458
      %v1586 = vunpack.c.l.b16 %v459
      %v1587 = vunpack.c.h.b16 %v459
      %v1588 = vunpack.c.l.b16 %v460
      %v1589 = vunpack.c.l.b16 %v461
      %v1590 = vunpack.c.h.b16 %v461
      %v1591 = vunpack.c.l.b16 %v462
      %v1592 = vunpack.c.h.b16 %v462
      %v1593 = vunpack.c.l.b16 %v463
      %v1594 = vunpack.c.h.b16 %v463
      %v1595 = vunpack.c.l.b16 %v464
      %v1596 = vunpack.c.h.b16 %v464
      %v1597 = vunpack.c.l.b16 %v465
      %v1598 = vunpack.c.h.b16 %v465
      %v1599 = vunpack.c.l.b16 %v466
      %v1600 = vunpack.c.h.b16 %v466
      %v1601 = vunpack.c.l.b16 %v467
      %v1602 = vunpack.c.h.b16 %v467
      %v1603 = vunpack.c.l.b16 %v468
      %v1604 = vunpack.c.h.b16 %v468
      %v1605 = vunpack.c.l.b16 %v469
      %v1606 = vunpack.c.h.b16 %v469
      %v1607 = vunpack.c.l.b16 %v470
      %v1608 = vunpack.c.h.b16 %v470
      %v1609 = vunpack.c.l.b16 %v471
      %v1610 = vunpack.c.h.b16 %v471
      %v1611 = vunpack.c.l.b16 %v472
      %v1612 = vunpack.c.h.b16 %v472
      %v1613 = vunpack.c.l.b16 %v473
      %v1614 = vunpack.c.l.b16 %v474
      %v1615 = vunpack.c.h.b16 %v474
      %v1616 = vunpack.c.l.b16 %v475
      %v1617 = vunpack.c.h.b16 %v475
      %v1618 = vunpack.c.l.b16 %v476
      %v1619 = vunpack.c.h.b16 %v476
      %v1620 = vunpack.c.l.b16 %v477
      %v1621 = vunpack.c.h.b16 %v477
      %v1622 = vunpack.c.l.b16 %v478
      %v1623 = vunpack.c.h.b16 %v478
      %v1624 = vunpack.c.l.b16 %v479
      %v1625 = vunpack.c.h.b16 %v479
      %v1626 = vunpack.c.l.b16 %v480
      %v1627 = vunpack.c.h.b16 %v480
      %v1628 = vunpack.c.l.b16 %v481
      %v1629 = vunpack.c.h.b16 %v481
      %v1630 = vunpack.c.l.b16 %v482
      %v1631 = vunpack.c.h.b16 %v482
      %v1632 = vunpack.c.l.b16 %v483
      %v1633 = vunpack.c.h.b16 %v483
      %v1634 = vunpack.c.l.b16 %v484
      %v1635 = vunpack.c.h.b16 %v484
      %v1636 = vunpack.c.l.b16 %v485
      %v1637 = vunpack.c.h.b16 %v485
      %v1638 = vunpack.c.l.b16 %v486
      %v1639 = vunpack.c.l.b16 %v487
      %v1640 = vunpack.c.h.b16 %v487
      %v1641 = vunpack.c.l.b16 %v488
      %v1642 = vunpack.c.h.b16 %v488
      %v1643 = vunpack.c.l.b16 %v489
      %v1644 = vunpack.c.h.b16 %v489
      %v1645 = vunpack.c.l.b16 %v490
      %v1646 = vunpack.c.h.b16 %v490
      %v1647 = vunpack.c.l.b16 %v491
      %v1648 = vunpack.c.h.b16 %v491
      %v1649 = vunpack.c.l.b16 %v492
      %v1650 = vunpack.c.h.b16 %v492
      %v1651 = vunpack.c.l.b16 %v493
      %v1652 = vunpack.c.h.b16 %v493
      %v1653 = vunpack.c.l.b16 %v494
      %v1654 = vunpack.c.h.b16 %v494
      %v1655 = vunpack.c.l.b16 %v495
      %v1656 = vunpack.c.h.b16 %v495
      %v1657 = vunpack.c.l.b16 %v496
      %v1658 = vunpack.c.h.b16 %v496
      %v1659 = vunpack.c.l.b16 %v497
      %v1660 = vunpack.c.h.b16 %v497
      %v1661 = vunpack.c.l.b16 %v498
      %v1662 = vunpack.c.h.b16 %v498
      %v1663 = vunpack.c.l.b16 %v499
      %v1664 = vunpack.c.l.b16 %v500
      %v1665 = vunpack.c.h.b16 %v500
      %v1666 = vunpack.c.l.b16 %v501
      %v1667 = vunpack.c.h.b16 %v501
      %v1668 = vunpack.c.l.b16 %v502
      %v1669 = vunpack.c.h.b16 %v502
      %v1670 = vunpack.c.l.b16 %v503
      %v1671 = vunpack.c.h.b16 %v503
      %v1672 = vunpack.c.l.b16 %v504
      %v1673 = vunpack.c.h.b16 %v504
      %v1674 = vunpack.c.l.b16 %v505
      %v1675 = vunpack.c.h.b16 %v505
      %v1676 = vunpack.c.l.b16 %v506
      %v1677 = vunpack.c.h.b16 %v506
      %v1678 = vunpack.c.l.b16 %v507
      %v1679 = vunpack.c.h.b16 %v507
      %v1680 = vunpack.c.l.b16 %v508
      %v1681 = vunpack.c.h.b16 %v508
      %v1682 = vunpack.c.l.b16 %v509
      %v1683 = vunpack.c.h.b16 %v509
      %v1684 = vunpack.c.l.b16 %v510
      %v1685 = vunpack.c.h.b16 %v510
      %v1686 = vunpack.c.l.b16 %v511
      %v1687 = vunpack.c.h.b16 %v511
      %v1688 = vunpack.c.l.b16 %v512
      %v1689 = vunpack.c.l.b16 %v513
      %v1690 = vunpack.c.h.b16 %v513
      %v1691 = vunpack.c.l.b16 %v514
      %v1692 = vunpack.c.h.b16 %v514
      %v1693 = vunpack.c.l.b16 %v515
      %v1694 = vunpack.c.h.b16 %v515
      %v1695 = vunpack.c.l.b16 %v516
      %v1696 = vunpack.c.h.b16 %v516
      %v1697 = vunpack.c.l.b16 %v517
      %v1698 = vunpack.c.h.b16 %v517
      %v1699 = vunpack.c.l.b16 %v518
      %v1700 = vunpack.c.h.b16 %v518
      %v1701 = vunpack.c.l.b16 %v519
      %v1702 = vunpack.c.h.b16 %v519
      %v1703 = vunpack.c.l.b16 %v520
      %v1704 = vunpack.c.h.b16 %v520
      %v1705 = vunpack.c.l.b16 %v521
      %v1706 = vunpack.c.h.b16 %v521
      %v1707 = vunpack.c.l.b16 %v522
      %v1708 = vunpack.c.h.b16 %v522
      %v1709 = vunpack.c.l.b16 %v523
      %v1710 = vunpack.c.h.b16 %v523
      %v1711 = vunpack.c.l.b16 %v524
      %v1712 = vunpack.c.h.b16 %v524
      %v1713 = vunpack.c.l.b16 %v525
      %v1714 = vunpack.c.l.b16 %v526
      %v1715 = vunpack.c.h.b16 %v526
      %v1716 = vunpack.c.l.b16 %v527
      %v1717 = vunpack.c.h.b16 %v527
      %v1718 = vunpack.c.l.b16 %v528
      %v1719 = vunpack.c.h.b16 %v528
      %v1720 = vunpack.c.l.b16 %v529
      %v1721 = vunpack.c.h.b16 %v529
      %v1722 = vunpack.c.l.b16 %v530
      %v1723 = vunpack.c.h.b16 %v530
      %v1724 = vunpack.c.l.b16 %v531
      %v1725 = vunpack.c.h.b16 %v531
      %v1726 = vunpack.c.l.b16 %v532
      %v1727 = vunpack.c.h.b16 %v532
      %v1728 = vunpack.c.l.b16 %v533
      %v1729 = vunpack.c.h.b16 %v533
      %v1730 = vunpack.c.l.b16 %v534
      %v1731 = vunpack.c.h.b16 %v534
      %v1732 = vunpack.c.l.b16 %v535
      %v1733 = vunpack.c.h.b16 %v535
      %v1734 = vunpack.c.l.b16 %v536
      %v1735 = vunpack.c.h.b16 %v536
      %v1736 = vunpack.c.l.b16 %v537
      %v1737 = vunpack.c.h.b16 %v537
      %v1738 = vunpack.c.l.b16 %v538
      %v1739 = vunpack.c.l.b16 %v539
      %v1740 = vunpack.c.h.b16 %v539
      %v1741 = vunpack.c.l.b16 %v540
      %v1742 = vunpack.c.h.b16 %v540
      %v1743 = vunpack.c.l.b16 %v541
      %v1744 = vunpack.c.h.b16 %v541
      %v1745 = vunpack.c.l.b16 %v542
      %v1746 = vunpack.c.h.b16 %v542
      %v1747 = vunpack.c.l.b16 %v543
      %v1748 = vunpack.c.h.b16 %v543
      %v1749 = vunpack.c.l.b16 %v544
      %v1750 = vunpack.c.h.b16 %v544
      %v1751 = vunpack.c.l.b16 %v545
      %v1752 = vunpack.c.h.b16 %v545
      %v1753 = vunpack.c.l.b16 %v546
      %v1754 = vunpack.c.h.b16 %v546
      %v1755 = vunpack.c.l.b16 %v547
      %v1756 = vunpack.c.h.b16 %v547
      %v1757 = vunpack.c.l.b16 %v548
      %v1758 = vunpack.c.h.b16 %v548
      %v1759 = vunpack.c.l.b16 %v549
      %v1760 = vunpack.c.h.b16 %v549
      %v1761 = vunpack.c.l.b16 %v550
      %v1762 = vunpack.c.h.b16 %v550
      %v1763 = vunpack.c.l.b16 %v551
      %v1764 = vunpack.c.l.b16 %v552
      %v1765 = vunpack.c.h.b16 %v552
      %v1766 = vunpack.c.l.b16 %v553
      %v1767 = vunpack.c.h.b16 %v553
      %v1768 = vunpack.c.l.b16 %v554
      %v1769 = vunpack.c.h.b16 %v554
      %v1770 = vunpack.c.l.b16 %v555
      %v1771 = vunpack.c.h.b16 %v555
      %v1772 = vunpack.c.l.b16 %v556
      %v1773 = vunpack.c.h.b16 %v556
      %v1774 = vunpack.c.l.b16 %v557
      %v1775 = vunpack.c.h.b16 %v557
      %v1776 = vunpack.c.l.b16 %v558
      %v1777 = vunpack.c.h.b16 %v558
      %v1778 = vunpack.c.l.b16 %v559
      %v1779 = vunpack.c.h.b16 %v559
      %v1780 = vunpack.c.l.b16 %v560
      %v1781 = vunpack.c.h.b16 %v560
      %v1782 = vunpack.c.l.b16 %v561
      %v1783 = vunpack.c.h.b16 %v561
      %v1784 = vunpack.c.l.b16 %v562
      %v1785 = vunpack.c.h.b16 %v562
      %v1786 = vunpack.c.l.b16 %v563
      %v1787 = vunpack.c.h.b16 %v563
      %v1788 = vunpack.c.l.b16 %v564
      %v1789 = vunpack.c.l.b16 %v565
      %v1790 = vunpack.c.h.b16 %v565
      %v1791 = vunpack.c.l.b16 %v566
      %v1792 = vunpack.c.h.b16 %v566
      %v1793 = vunpack.c.l.b16 %v567
      %v1794 = vunpack.c.h.b16 %v567
      %v1795 = vunpack.c.l.b16 %v568
      %v1796 = vunpack.c.h.b16 %v568
      %v1797 = vunpack.c.l.b16 %v569
      %v1798 = vunpack.c.h.b16 %v569
      %v1799 = vunpack.c.l.b16 %v570
      %v1800 = vunpack.c.h.b16 %v570
      %v1801 = vunpack.c.l.b16 %v571
      %v1802 = vunpack.c.h.b16 %v571
      %v1803 = vunpack.c.l.b16 %v572
      %v1804 = vunpack.c.h.b16 %v572
      %v1805 = vunpack.c.l.b16 %v573
      %v1806 = vunpack.c.h.b16 %v573
      %v1807 = vunpack.c.l.b16 %v574
      %v1808 = vunpack.c.h.b16 %v574
      %v1809 = vunpack.c.l.b16 %v575
      %v1810 = vunpack.c.h.b16 %v575
      %v1811 = vunpack.c.l.b16 %v576
      %v1812 = vunpack.c.h.b16 %v576
      %v1813 = vunpack.c.l.b16 %v577
      %v1814 = vunpack.c.l.b16 %v578
      %v1815 = vunpack.c.h.b16 %v578
      %v1816 = vunpack.c.l.b16 %v579
      %v1817 = vunpack.c.h.b16 %v579
      %v1818 = vunpack.c.l.b16 %v580
      %v1819 = vunpack.c.h.b16 %v580
      %v1820 = vunpack.c.l.b16 %v581
      %v1821 = vunpack.c.h.b16 %v581
      %v1822 = vunpack.c.l.b16 %v582
      %v1823 = vunpack.c.h.b16 %v582
      %v1824 = vunpack.c.l.b16 %v583
      %v1825 = vunpack.c.h.b16 %v583
      %v1826 = vunpack.c.l.b16 %v584
      %v1827 = vunpack.c.h.b16 %v584
      %v1828 = vunpack.c.l.b16 %v585
      %v1829 = vunpack.c.h.b16 %v585
      %v1830 = vunpack.c.l.b16 %v586
      %v1831 = vunpack.c.h.b16 %v586
      %v1832 = vunpack.c.l.b16 %v587
      %v1833 = vunpack.c.h.b16 %v587
      %v1834 = vunpack.c.l.b16 %v588
      %v1835 = vunpack.c.h.b16 %v588
      %v1836 = vunpack.c.l.b16 %v589
      %v1837 = vunpack.c.h.b16 %v589
      %v1838 = vunpack.c.l.b16 %v590
      %v1839 = vunpack.c.l.b16 %v591
      %v1840 = vunpack.c.h.b16 %v591
      %v1841 = vunpack.c.l.b16 %v592
      %v1842 = vunpack.c.h.b16 %v592
      %v1843 = vunpack.c.l.b16 %v593
      %v1844 = vunpack.c.h.b16 %v593
      %v1845 = vunpack.c.l.b16 %v594
      %v1846 = vunpack.c.h.b16 %v594
      %v1847 = vunpack.c.l.b16 %v595
      %v1848 = vunpack.c.h.b16 %v595
      %v1849 = vunpack.c.l.b16 %v596
      %v1850 = vunpack.c.h.b16 %v596
      %v1851 = vunpack.c.l.b16 %v597
      %v1852 = vunpack.c.h.b16 %v597
      %v1853 = vunpack.c.l.b16 %v598
      %v1854 = vunpack.c.h.b16 %v598
      %v1855 = vunpack.c.l.b16 %v599
      %v1856 = vunpack.c.h.b16 %v599
      %v1857 = vunpack.c.l.b16 %v600
      %v1858 = vunpack.c.h.b16 %v600
      %v1859 = vunpack.c.l.b16 %v601
      %v1860 = vunpack.c.h.b16 %v601
      %v1861 = vunpack.c.l.b16 %v602
      %v1862 = vunpack.c.h.b16 %v602
      %v1863 = vunpack.c.l.b16 %v603
      %v1864 = vunpack.c.l.b16 %v604
      %v1865 = vunpack.c.h.b16 %v604
      %v1866 = vunpack.c.l.b16 %v605
      %v1867 = vunpack.c.h.b16 %v605
      %v1868 = vunpack.c.l.b16 %v606
      %v1869 = vunpack.c.h.b16 %v606
      %v1870 = vunpack.c.l.b16 %v607
      %v1871 = vunpack.c.h.b16 %v607
      %v1872 = vunpack.c.l.b16 %v608
      %v1873 = vunpack.c.h.b16 %v608
      %v1874 = vunpack.c.l.b16 %v609
      %v1875 = vunpack.c.h.b16 %v609
      %v1876 = vunpack.c.l.b16 %v610
      %v1877 = vunpack.c.h.b16 %v610
      %v1878 = vunpack.c.l.b16 %v611
      %v1879 = vunpack.c.h.b16 %v611
      %v1880 = vunpack.c.l.b16 %v612
      %v1881 = vunpack.c.h.b16 %v612
      %v1882 = vunpack.c.l.b16 %v613
      %v1883 = vunpack.c.h.b16 %v613
      %v1884 = vunpack.c.l.b16 %v614
      %v1885 = vunpack.c.h.b16 %v614
      %v1886 = vunpack.c.l.b16 %v615
      %v1887 = vunpack.c.h.b16 %v615
      %v1888 = vunpack.c.l.b16 %v616
      %v1889 = vunpack.c.l.b16 %v617
      %v1890 = vunpack.c.h.b16 %v617
      %v1891 = vunpack.c.l.b16 %v618
      %v1892 = vunpack.c.h.b16 %v618
      %v1893 = vunpack.c.l.b16 %v619
      %v1894 = vunpack.c.h.b16 %v619
      %v1895 = vunpack.c.l.b16 %v620
      %v1896 = vunpack.c.h.b16 %v620
      %v1897 = vunpack.c.l.b16 %v621
      %v1898 = vunpack.c.h.b16 %v621
      %v1899 = vunpack.c.l.b16 %v622
      %v1900 = vunpack.c.h.b16 %v622
      %v1901 = vunpack.c.l.b16 %v623
      %v1902 = vunpack.c.h.b16 %v623
      %v1903 = vunpack.c.l.b16 %v624
      %v1904 = vunpack.c.h.b16 %v624
      %v1905 = vunpack.c.l.b16 %v625
      %v1906 = vunpack.c.h.b16 %v625
      %v1907 = vunpack.c.l.b16 %v626
      %v1908 = vunpack.c.h.b16 %v626
      %v1909 = vunpack.c.l.b16 %v627
      %v1910 = vunpack.c.h.b16 %v627
      %v1911 = vunpack.c.l.b16 %v628
      %v1912 = vunpack.c.h.b16 %v628
      %v1913 = vunpack.c.l.b16 %v629
      %v1914 = vunpack.c.l.b16 %v630
      %v1915 = vunpack.c.h.b16 %v630
      %v1916 = vunpack.c.l.b16 %v631
      %v1917 = vunpack.c.h.b16 %v631
      %v1918 = vunpack.c.l.b16 %v632
      %v1919 = vunpack.c.h.b16 %v632
      %v1920 = vunpack.c.l.b16 %v633
      %v1921 = vunpack.c.h.b16 %v633
      %v1922 = vunpack.c.l.b16 %v634
      %v1923 = vunpack.c.h.b16 %v634
      %v1924 = vunpack.c.l.b16 %v635
      %v1925 = vunpack.c.h.b16 %v635
      %v1926 = vunpack.c.l.b16 %v636
      %v1927 = vunpack.c.h.b16 %v636
      %v1928 = vunpack.c.l.b16 %v637
      %v1929 = vunpack.c.h.b16 %v637
      %v1930 = vunpack.c.l.b16 %v638
      %v1931 = vunpack.c.h.b16 %v638
      %v1932 = vunpack.c.l.b16 %v639
      %v1933 = vunpack.c.h.b16 %v639
      %v1934 = vunpack.c.l.b16 %v640
      %v1935 = vunpack.c.h.b16 %v640
      %v1936 = vunpack.c.l.b16 %v641
      %v1937 = vunpack.c.h.b16 %v641
      %v1938 = vunpack.c.l.b16 %v642
      %v1939 = vpack.c.b16 %v1164, %v1139
      %v1940 = vpack.c.b16 %v1165, %v1140
      %v1941 = vpack.c.b16 %v1166, %v1141
      %v1942 = vpack.c.b16 %v1167, %v1142
      %v1943 = vpack.c.b16 %v1168, %v1143
      %v1944 = vpack.c.b16 %v1169, %v1144
      %v1945 = vpack.c.b16 %v1170, %v1145
      %v1946 = vpack.c.b16 %v1171, %v1146
      %v1947 = vpack.c.b16 %v1172, %v1147
      %v1948 = vpack.c.b16 %v1173, %v1148
      %v1949 = vpack.c.b16 %v1174, %v1149
      %v1950 = vpack.c.b16 %v1175, %v1150
      %v1951 = vpack.c.b16 %v1176, %v1151
      %v1952 = vpack.c.b16 %v1177, %v1152
      %v1953 = vpack.c.b16 %v1178, %v1153
      %v1954 = vpack.c.b16 %v1179, %v1154
      %v1955 = vpack.c.b16 %v1180, %v1155
      %v1956 = vpack.c.b16 %v1181, %v1156
      %v1957 = vpack.c.b16 %v1182, %v1157
      %v1958 = vpack.c.b16 %v1183, %v1158
      %v1959 = vpack.c.b16 %v1184, %v1159
      %v1960 = vpack.c.b16 %v1185, %v1160
      %v1961 = vpack.c.b16 %v1186, %v1161
      %v1962 = vpack.c.b16 %v1187, %v1162
      %v1963 = vpack.c.b16 %v1188, %v1163
      %v1964 = vpack.c.b16 %v1214, %v1189
      %v1965 = vpack.c.b16 %v1215, %v1190
      %v1966 = vpack.c.b16 %v1216, %v1191
      %v1967 = vpack.c.b16 %v1217, %v1192
      %v1968 = vpack.c.b16 %v1218, %v1193
      %v1969 = vpack.c.b16 %v1219, %v1194
      %v1970 = vpack.c.b16 %v1220, %v1195
      %v1971 = vpack.c.b16 %v1221, %v1196
      %v1972 = vpack.c.b16 %v1222, %v1197
      %v1973 = vpack.c.b16 %v1223, %v1198
      %v1974 = vpack.c.b16 %v1224, %v1199
      %v1975 = vpack.c.b16 %v1225, %v1200
      %v1976 = vpack.c.b16 %v1226, %v1201
      %v1977 = vpack.c.b16 %v1227, %v1202
      %v1978 = vpack.c.b16 %v1228, %v1203
      %v1979 = vpack.c.b16 %v1229, %v1204
      %v1980 = vpack.c.b16 %v1230, %v1205
      %v1981 = vpack.c.b16 %v1231, %v1206
      %v1982 = vpack.c.b16 %v1232, %v1207
      %v1983 = vpack.c.b16 %v1233, %v1208
      %v1984 = vpack.c.b16 %v1234, %v1209
      %v1985 = vpack.c.b16 %v1235, %v1210
      %v1986 = vpack.c.b16 %v1236, %v1211
      %v1987 = vpack.c.b16 %v1237, %v1212
      %v1988 = vpack.c.b16 %v1238, %v1213
      %v1989 = vpack.c.b16 %v1264, %v1239
      %v1990 = vpack.c.b16 %v1265, %v1240
      %v1991 = vpack.c.b16 %v1266, %v1241
      %v1992 = vpack.c.b16 %v1267, %v1242
      %v1993 = vpack.c.b16 %v1268, %v1243
      %v1994 = vpack.c.b16 %v1269, %v1244
      %v1995 = vpack.c.b16 %v1270, %v1245
      %v1996 = vpack.c.b16 %v1271, %v1246
      %v1997 = vpack.c.b16 %v1272, %v1247
      %v1998 = vpack.c.b16 %v1273, %v1248
      %v1999 = vpack.c.b16 %v1274, %v1249
      %v2000 = vpack.c.b16 %v1275, %v1250
      %v2001 = vpack.c.b16 %v1276, %v1251
      %v2002 = vpack.c.b16 %v1277, %v1252
      %v2003 = vpack.c.b16 %v1278, %v1253
      %v2004 = vpack.c.b16 %v1279, %v1254
      %v2005 = vpack.c.b16 %v1280, %v1255
      %v2006 = vpack.c.b16 %v1281, %v1256
      %v2007 = vpack.c.b16 %v1282, %v1257
      %v2008 = vpack.c.b16 %v1283, %v1258
      %v2009 = vpack.c.b16 %v1284, %v1259
      %v2010 = vpack.c.b16 %v1285, %v1260
      %v2011 = vpack.c.b16 %v1286, %v1261
      %v2012 = vpack.c.b16 %v1287, %v1262
      %v2013 = vpack.c.b16 %v1288, %v1263
      %v2014 = vpack.c.b16 %v1314, %v1289
      %v2015 = vpack.c.b16 %v1315, %v1290
      %v2016 = vpack.c.b16 %v1316, %v1291
      %v2017 = vpack.c.b16 %v1317, %v1292
      %v2018 = vpack.c.b16 %v1318, %v1293
      %v2019 = vpack.c.b16 %v1319, %v1294
      %v2020 = vpack.c.b16 %v1320, %v1295
      %v2021 = vpack.c.b16 %v1321, %v1296
      %v2022 = vpack.c.b16 %v1322, %v1297
      %v2023 = vpack.c.b16 %v1323, %v1298
      %v2024 = vpack.c.b16 %v1324, %v1299
      %v2025 = vpack.c.b16 %v1325, %v1300
      %v2026 = vpack.c.b16 %v1326, %v1301
      %v2027 = vpack.c.b16 %v1327, %v1302
      %v2028 = vpack.c.b16 %v1328, %v1303
      %v2029 = vpack.c.b16 %v1329, %v1304
      %v2030 = vpack.c.b16 %v1330, %v1305
      %v2031 = vpack.c.b16 %v1331, %v1306
      %v2032 = vpack.c.b16 %v1332, %v1307
      %v2033 = vpack.c.b16 %v1333, %v1308
      %v2034 = vpack.c.b16 %v1334, %v1309
      %v2035 = vpack.c.b16 %v1335, %v1310
      %v2036 = vpack.c.b16 %v1336, %v1311
      %v2037 = vpack.c.b16 %v1337, %v1312
      %v2038 = vpack.c.b16 %v1338, %v1313
      %v2039 = vpack.c.b16 %v1364, %v1339
      %v2040 = vpack.c.b16 %v1365, %v1340
      %v2041 = vpack.c.b16 %v1366, %v1341
      %v2042 = vpack.c.b16 %v1367, %v1342
      %v2043 = vpack.c.b16 %v1368, %v1343
      %v2044 = vpack.c.b16 %v1369, %v1344
      %v2045 = vpack.c.b16 %v1370, %v1345
      %v2046 = vpack.c.b16 %v1371, %v1346
      %v2047 = vpack.c.b16 %v1372, %v1347
      %v2048 = vpack.c.b16 %v1373, %v1348
      %v2049 = vpack.c.b16 %v1374, %v1349
      %v2050 = vpack.c.b16 %v1375, %v1350
      %v2051 = vpack.c.b16 %v1376, %v1351
      %v2052 = vpack.c.b16 %v1377, %v1352
      %v2053 = vpack.c.b16 %v1378, %v1353
      %v2054 = vpack.c.b16 %v1379, %v1354
      %v2055 = vpack.c.b16 %v1380, %v1355
      %v2056 = vpack.c.b16 %v1381, %v1356
      %v2057 = vpack.c.b16 %v1382, %v1357
      %v2058 = vpack.c.b16 %v1383, %v1358
      %v2059 = vpack.c.b16 %v1384, %v1359
      %v2060 = vpack.c.b16 %v1385, %v1360
      %v2061 = vpack.c.b16 %v1386, %v1361
      %v2062 = vpack.c.b16 %v1387, %v1362
      %v2063 = vpack.c.b16 %v1388, %v1363
      %v2064 = vpack.c.b16 %v1414, %v1389
      %v2065 = vpack.c.b16 %v1415, %v1390
      %v2066 = vpack.c.b16 %v1416, %v1391
      %v2067 = vpack.c.b16 %v1417, %v1392
      %v2068 = vpack.c.b16 %v1418, %v1393
      %v2069 = vpack.c.b16 %v1419, %v1394
      %v2070 = vpack.c.b16 %v1420, %v1395
      %v2071 = vpack.c.b16 %v1421, %v1396
      %v2072 = vpack.c.b16 %v1422, %v1397
      %v2073 = vpack.c.b16 %v1423, %v1398
      %v2074 = vpack.c.b16 %v1424, %v1399
      %v2075 = vpack.c.b16 %v1425, %v1400
      %v2076 = vpack.c.b16 %v1426, %v1401
      %v2077 = vpack.c.b16 %v1427, %v1402
      %v2078 = vpack.c.b16 %v1428, %v1403
      %v2079 = vpack.c.b16 %v1429, %v1404
      %v2080 = vpack.c.b16 %v1430, %v1405
      %v2081 = vpack.c.b16 %v1431, %v1406
      %v2082 = vpack.c.b16 %v1432, %v1407
      %v2083 = vpack.c.b16 %v1433, %v1408
      %v2084 = vpack.c.b16 %v1434, %v1409
      %v2085 = vpack.c.b16 %v1435, %v1410
      %v2086 = vpack.c.b16 %v1436, %v1411
      %v2087 = vpack.c.b16 %v1437, %v1412
      %v2088 = vpack.c.b16 %v1438, %v1413
      %v2089 = vpack.c.b16 %v1464, %v1439
      %v2090 = vpack.c.b16 %v1465, %v1440
      %v2091 = vpack.c.b16 %v1466, %v1441
      %v2092 = vpack.c.b16 %v1467, %v1442
      %v2093 = vpack.c.b16 %v1468, %v1443
      %v2094 = vpack.c.b16 %v1469, %v1444
      %v2095 = vpack.c.b16 %v1470, %v1445
      %v2096 = vpack.c.b16 %v1471, %v1446
      %v2097 = vpack.c.b16 %v1472, %v1447
      %v2098 = vpack.c.b16 %v1473, %v1448
      %v2099 = vpack.c.b16 %v1474, %v1449
      %v2100 = vpack.c.b16 %v1475, %v1450
      %v2101 = vpack.c.b16 %v1476, %v1451
      %v2102 = vpack.c.b16 %v1477, %v1452
      %v2103 = vpack.c.b16 %v1478, %v1453
      %v2104 = vpack.c.b16 %v1479, %v1454
      %v2105 = vpack.c.b16 %v1480, %v1455
      %v2106 = vpack.c.b16 %v1481, %v1456
      %v2107 = vpack.c.b16 %v1482, %v1457
      %v2108 = vpack.c.b16 %v1483, %v1458
      %v2109 = vpack.c.b16 %v1484, %v1459
      %v2110 = vpack.c.b16 %v1485, %v1460
      %v2111 = vpack.c.b16 %v1486, %v1461
      %v2112 = vpack.c.b16 %v1487, %v1462
      %v2113 = vpack.c.b16 %v1488, %v1463
      %v2114 = vpack.c.b16 %v1514, %v1489
      %v2115 = vpack.c.b16 %v1515, %v1490
      %v2116 = vpack.c.b16 %v1516, %v1491
      %v2117 = vpack.c.b16 %v1517, %v1492
      %v2118 = vpack.c.b16 %v1518, %v1493
      %v2119 = vpack.c.b16 %v1519, %v1494
      %v2120 = vpack.c.b16 %v1520, %v1495
      %v2121 = vpack.c.b16 %v1521, %v1496
      %v2122 = vpack.c.b16 %v1522, %v1497
      %v2123 = vpack.c.b16 %v1523, %v1498
      %v2124 = vpack.c.b16 %v1524, %v1499
      %v2125 = vpack.c.b16 %v1525, %v1500
      %v2126 = vpack.c.b16 %v1526, %v1501
      %v2127 = vpack.c.b16 %v1527, %v1502
      %v2128 = vpack.c.b16 %v1528, %v1503
      %v2129 = vpack.c.b16 %v1529, %v1504
      %v2130 = vpack.c.b16 %v1530, %v1505
      %v2131 = vpack.c.b16 %v1531, %v1506
      %v2132 = vpack.c.b16 %v1532, %v1507
      %v2133 = vpack.c.b16 %v1533, %v1508
      %v2134 = vpack.c.b16 %v1534, %v1509
      %v2135 = vpack.c.b16 %v1535, %v1510
      %v2136 = vpack.c.b16 %v1536, %v1511
      %v2137 = vpack.c.b16 %v1537, %v1512
      %v2138 = vpack.c.b16 %v1538, %v1513
      %v2139 = vpack.c.b16 %v1564, %v1539
      %v2140 = vpack.c.b16 %v1565, %v1540
      %v2141 = vpack.c.b16 %v1566, %v1541
      %v2142 = vpack.c.b16 %v1567, %v1542
      %v2143 = vpack.c.b16 %v1568, %v1543
      %v2144 = vpack.c.b16 %v1569, %v1544
      %v2145 = vpack.c.b16 %v1570, %v1545
      %v2146 = vpack.c.b16 %v1571, %v1546
      %v2147 = vpack.c.b16 %v1572, %v1547
      %v2148 = vpack.c.b16 %v1573, %v1548
      %v2149 = vpack.c.b16 %v1574, %v1549
      %v2150 = vpack.c.b16 %v1575, %v1550
      %v2151 = vpack.c.b16 %v1576, %v1551
      %v2152 = vpack.c.b16 %v1577, %v1552
      %v2153 = vpack.c.b16 %v1578, %v1553
      %v2154 = vpack.c.b16 %v1579, %v1554
      %v2155 = vpack.c.b16 %v1580, %v1555
      %v2156 = vpack.c.b16 %v1581, %v1556
      %v2157 = vpack.c.b16 %v1582, %v1557
      %v2158 = vpack.c.b16 %v1583, %v1558
      %v2159 = vpack.c.b16 %v1584, %v1559
      %v2160 = vpack.c.b16 %v1585, %v1560
      %v2161 = vpack.c.b16 %v1586, %v1561
      %v2162 = vpack.c.b16 %v1587, %v1562
      %v2163 = vpack.c.b16 %v1588, %v1563
      %v2164 = vpack.c.b16 %v1614, %v1589
      %v2165 = vpack.c.b16 %v1615, %v1590
      %v2166 = vpack.c.b16 %v1616, %v1591
      %v2167 = vpack.c.b16 %v1617, %v1592
      %v2168 = vpack.c.b16 %v1618, %v1593
      %v2169 = vpack.c.b16 %v1619, %v1594
      %v2170 = vpack.c.b16 %v1620, %v1595
      %v2171 = vpack.c.b16 %v1621, %v1596
      %v2172 = vpack.c.b16 %v1622, %v1597
      %v2173 = vpack.c.b16 %v1623, %v1598
      %v2174 = vpack.c.b16 %v1624, %v1599
      %v2175 = vpack.c.b16 %v1625, %v1600
      %v2176 = vpack.c.b16 %v1626, %v1601
      %v2177 = vpack.c.b16 %v1627, %v1602
      %v2178 = vpack.c.b16 %v1628, %v1603
      %v2179 = vpack.c.b16 %v1629, %v1604
      %v2180 = vpack.c.b16 %v1630, %v1605
      %v2181 = vpack.c.b16 %v1631, %v1606
      %v2182 = vpack.c.b16 %v1632, %v1607
      %v2183 = vpack.c.b16 %v1633, %v1608
      %v2184 = vpack.c.b16 %v1634, %v1609
      %v2185 = vpack.c.b16 %v1635, %v1610
      %v2186 = vpack.c.b16 %v1636, %v1611
      %v2187 = vpack.c.b16 %v1637, %v1612
      %v2188 = vpack.c.b16 %v1638, %v1613
      %v2189 = vpack.c.b16 %v1664, %v1639
      %v2190 = vpack.c.b16 %v1665, %v1640
      %v2191 = vpack.c.b16 %v1666, %v1641
      %v2192 = vpack.c.b16 %v1667, %v1642
      %v2193 = vpack.c.b16 %v1668, %v1643
      %v2194 = vpack.c.b16 %v1669, %v1644
      %v2195 = vpack.c.b16 %v1670, %v1645
      %v2196 = vpack.c.b16 %v1671, %v1646
      %v2197 = vpack.c.b16 %v1672, %v1647
      %v2198 = vpack.c.b16 %v1673, %v1648
      %v2199 = vpack.c.b16 %v1674, %v1649
      %v2200 = vpack.c.b16 %v1675, %v1650
      %v2201 = vpack.c.b16 %v1676, %v1651
      %v2202 = vpack.c.b16 %v1677, %v1652
      %v2203 = vpack.c.b16 %v1678, %v1653
      %v2204 = vpack.c.b16 %v1679, %v1654
      %v2205 = vpack.c.b16 %v1680, %v1655
      %v2206 = vpack.c.b16 %v1681, %v1656
      %v2207 = vpack.c.b16 %v1682, %v1657
      %v2208 = vpack.c.b16 %v1683, %v1658
      %v2209 = vpack.c.b16 %v1684, %v1659
      %v2210 = vpack.c.b16 %v1685, %v1660
      %v2211 = vpack.c.b16 %v1686, %v1661
      %v2212 = vpack.c.b16 %v1687, %v1662
      %v2213 = vpack.c.b16 %v1688, %v1663
      %v2214 = vpack.c.b16 %v1714, %v1689
      %v2215 = vpack.c.b16 %v1715, %v1690
      %v2216 = vpack.c.b16 %v1716, %v1691
      %v2217 = vpack.c.b16 %v1717, %v1692
      %v2218 = vpack.c.b16 %v1718, %v1693
      %v2219 = vpack.c.b16 %v1719, %v1694
      %v2220 = vpack.c.b16 %v1720, %v1695
      %v2221 = vpack.c.b16 %v1721, %v1696
      %v2222 = vpack.c.b16 %v1722, %v1697
      %v2223 = vpack.c.b16 %v1723, %v1698
      %v2224 = vpack.c.b16 %v1724, %v1699
      %v2225 = vpack.c.b16 %v1725, %v1700
      %v2226 = vpack.c.b16 %v1726, %v1701
      %v2227 = vpack.c.b16 %v1727, %v1702
      %v2228 = vpack.c.b16 %v1728, %v1703
      %v2229 = vpack.c.b16 %v1729, %v1704
      %v2230 = vpack.c.b16 %v1730, %v1705
      %v2231 = vpack.c.b16 %v1731, %v1706
      %v2232 = vpack.c.b16 %v1732, %v1707
      %v2233 = vpack.c.b16 %v1733, %v1708
      %v2234 = vpack.c.b16 %v1734, %v1709
      %v2235 = vpack.c.b16 %v1735, %v1710
      %v2236 = vpack.c.b16 %v1736, %v1711
      %v2237 = vpack.c.b16 %v1737, %v1712
      %v2238 = vpack.c.b16 %v1738, %v1713
      %v2239 = vpack.c.b16 %v1764, %v1739
      %v2240 = vpack.c.b16 %v1765, %v1740
      %v2241 = vpack.c.b16 %v1766, %v1741
      %v2242 = vpack.c.b16 %v1767, %v1742
      %v2243 = vpack.c.b16 %v1768, %v1743
      %v2244 = vpack.c.b16 %v1769, %v1744
      %v2245 = vpack.c.b16 %v1770, %v1745
      %v2246 = vpack.c.b16 %v1771, %v1746
      %v2247 = vpack.c.b16 %v1772, %v1747
      %v2248 = vpack.c.b16 %v1773, %v1748
      %v2249 = vpack.c.b16 %v1774, %v1749
      %v2250 = vpack.c.b16 %v1775, %v1750
      %v2251 = vpack.c.b16 %v1776, %v1751
      %v2252 = vpack.c.b16 %v1777, %v1752
      %v2253 = vpack.c.b16 %v1778, %v1753
      %v2254 = vpack.c.b16 %v1779, %v1754
      %v2255 = vpack.c.b16 %v1780, %v1755
      %v2256 = vpack.c.b16 %v1781, %v1756
      %v2257 = vpack.c.b16 %v1782, %v1757
      %v2258 = vpack.c.b16 %v1783, %v1758
      %v2259 = vpack.c.b16 %v1784, %v1759
      %v2260 = vpack.c.b16 %v1785, %v1760
      %v2261 = vpack.c.b16 %v1786, %v1761
      %v2262 = vpack.c.b16 %v1787, %v1762
      %v2263 = vpack.c.b16 %v1788, %v1763
      %v2264 = vpack.c.b16 %v1814, %v1789
      %v2265 = vpack.c.b16 %v1815, %v1790
      %v2266 = vpack.c.b16 %v1816, %v1791
      %v2267 = vpack.c.b16 %v1817, %v1792
      %v2268 = vpack.c.b16 %v1818, %v1793
      %v2269 = vpack.c.b16 %v1819, %v1794
      %v2270 = vpack.c.b16 %v1820, %v1795
      %v2271 = vpack.c.b16 %v1821, %v1796
      %v2272 = vpack.c.b16 %v1822, %v1797
      %v2273 = vpack.c.b16 %v1823, %v1798
      %v2274 = vpack.c.b16 %v1824, %v1799
      %v2275 = vpack.c.b16 %v1825, %v1800
      %v2276 = vpack.c.b16 %v1826, %v1801
      %v2277 = vpack.c.b16 %v1827, %v1802
      %v2278 = vpack.c.b16 %v1828, %v1803
      %v2279 = vpack.c.b16 %v1829, %v1804
      %v2280 = vpack.c.b16 %v1830, %v1805
      %v2281 = vpack.c.b16 %v1831, %v1806
      %v2282 = vpack.c.b16 %v1832, %v1807
      %v2283 = vpack.c.b16 %v1833, %v1808
      %v2284 = vpack.c.b16 %v1834, %v1809
      %v2285 = vpack.c.b16 %v1835, %v1810
      %v2286 = vpack.c.b16 %v1836, %v1811
      %v2287 = vpack.c.b16 %v1837, %v1812
      %v2288 = vpack.c.b16 %v1838, %v1813
      %v2289 = vpack.c.b16 %v1864, %v1839
      %v2290 = vpack.c.b16 %v1865, %v1840
      %v2291 = vpack.c.b16 %v1866, %v1841
      %v2292 = vpack.c.b16 %v1867, %v1842
      %v2293 = vpack.c.b16 %v1868, %v1843
      %v2294 = vpack.c.b16 %v1869, %v1844
      %v2295 = vpack.c.b16 %v1870, %v1845
      %v2296 = vpack.c.b16 %v1871, %v1846
      %v2297 = vpack.c.b16 %v1872, %v1847
      %v2298 = vpack.c.b16 %v1873, %v1848
      %v2299 = vpack.c.b16 %v1874, %v1849
      %v2300 = vpack.c.b16 %v1875, %v1850
      %v2301 = vpack.c.b16 %v1876, %v1851
      %v2302 = vpack.c.b16 %v1877, %v1852
      %v2303 = vpack.c.b16 %v1878, %v1853
      %v2304 = vpack.c.b16 %v1879, %v1854
      %v2305 = vpack.c.b16 %v1880, %v1855
      %v2306 = vpack.c.b16 %v1881, %v1856
      %v2307 = vpack.c.b16 %v1882, %v1857
      %v2308 = vpack.c.b16 %v1883, %v1858
      %v2309 = vpack.c.b16 %v1884, %v1859
      %v2310 = vpack.c.b16 %v1885, %v1860
      %v2311 = vpack.c.b16 %v1886, %v1861
      %v2312 = vpack.c.b16 %v1887, %v1862
      %v2313 = vpack.c.b16 %v1888, %v1863
      %v2314 = vpack.c.b16 %v1914, %v1889
      %v2315 = vpack.c.b16 %v1915, %v1890
      %v2316 = vpack.c.b16 %v1916, %v1891
      %v2317 = vpack.c.b16 %v1917, %v1892
      %v2318 = vpack.c.b16 %v1918, %v1893
      %v2319 = vpack.c.b16 %v1919, %v1894
      %v2320 = vpack.c.b16 %v1920, %v1895
      %v2321 = vpack.c.b16 %v1921, %v1896
      %v2322 = vpack.c.b16 %v1922, %v1897
      %v2323 = vpack.c.b16 %v1923, %v1898
      %v2324 = vpack.c.b16 %v1924, %v1899
      %v2325 = vpack.c.b16 %v1925, %v1900
      %v2326 = vpack.c.b16 %v1926, %v1901
      %v2327 = vpack.c.b16 %v1927, %v1902
      %v2328 = vpack.c.b16 %v1928, %v1903
      %v2329 = vpack.c.b16 %v1929, %v1904
      %v2330 = vpack.c.b16 %v1930, %v1905
      %v2331 = vpack.c.b16 %v1931, %v1906
      %v2332 = vpack.c.b16 %v1932, %v1907
      %v2333 = vpack.c.b16 %v1933, %v1908
      %v2334 = vpack.c.b16 %v1934, %v1909
      %v2335 = vpack.c.b16 %v1935, %v1910
      %v2336 = vpack.c.b16 %v1936, %v1911
      %v2337 = vpack.c.b16 %v1937, %v1912
      %v2338 = vpack.c.b16 %v1938, %v1913
      %2739 = vmatprep.subr.bf16.mxu0 %v1940
      %2740 = vmatpush1.bf16.msra.mxu0 %v1939
      %2741 = vmatprep.subr.bf16.mxu0 %v1965
      %2742 = vmatpush1.bf16.msra.mxu0 %v1964
      %2743 = vmatprep.subr.bf16.mxu0 %v1990
      %2744 = vmatpush1.bf16.msra.mxu0 %v1989
      %2745 = vmatprep.subr.bf16.mxu0 %v2015
      %2746 = vmatpush1.bf16.msra.mxu0 %v2014
      %2747 = vmatprep.subr.bf16.mxu0 %v2040
      %2748 = vmatpush1.bf16.msra.mxu0 %v2039
      %2749 = vmatprep.subr.bf16.mxu0 %v2065
      %2750 = vmatpush1.bf16.msra.mxu0 %v2064
      %2751 = vmatprep.subr.bf16.mxu0 %v2090
      %2752 = vmatpush1.bf16.msra.mxu0 %v2089
      %2753 = vmatprep.subr.bf16.mxu0 %v2115
      %2754 = vmatpush1.bf16.msra.mxu0 %v2114
      %2755 = vmatprep.subr.bf16.mxu0 %v2140
      %2756 = vmatpush1.bf16.msra.mxu0 %v2139
      %2757 = vmatprep.subr.bf16.mxu0 %v2165
      %2758 = vmatpush1.bf16.msra.mxu0 %v2164
      %2759 = vmatprep.subr.bf16.mxu0 %v2190
      %2760 = vmatpush1.bf16.msra.mxu0 %v2189
      %2761 = vmatprep.subr.bf16.mxu0 %v2215
      %2762 = vmatpush1.bf16.msra.mxu0 %v2214
      %2763 = vmatprep.subr.bf16.mxu0 %v2240
      %2764 = vmatpush1.bf16.msra.mxu0 %v2239
      %2765 = vmatprep.subr.bf16.mxu0 %v2265
      %2766 = vmatpush1.bf16.msra.mxu0 %v2264
      %2767 = vmatprep.subr.bf16.mxu0 %v2290
      %2768 = vmatpush1.bf16.msra.mxu0 %v2289
      %2769 = vmatprep.subr.bf16.mxu0 %v2315
      %2770 = vmatpush1.bf16.msra.mxu0 %v2314
      %2771 = vmatprep.mubr.bf16.mxu0 %v692
      %2772 = vmatmul.mubr.bf16.gmra.mrb[0].mxu0 %v691
      %v2773 = vpop.f32.mrb[0].mxu0
      %v2774 = vadd.f32 0.0, %v2773
      %v2775 = vpop.f32.mrb[0].mxu0
      %v2776 = vadd.f32 0.0, %v2775
      %v2777 = vpop.f32.mrb[0].mxu0
      %v2778 = vadd.f32 0.0, %v2777
      %v2779 = vpop.f32.mrb[0].mxu0
      %v2780 = vadd.f32 0.0, %v2779
      %2781 = vmatprep.mubr.bf16.mxu0 %v694
      %2782 = vmatmul.mubr.bf16.gmra.mrb[0].mxu0 %v693
      %v2783 = vpop.f32.mrb[0].mxu0
      %v2784 = vadd.f32 0.0, %v2783
      %v2785 = vpop.f32.mrb[0].mxu0
      %v2786 = vadd.f32 0.0, %v2785
      %v2787 = vpop.f32.mrb[0].mxu0
      %v2788 = vadd.f32 0.0, %v2787
      %v2789 = vpop.f32.mrb[0].mxu0
      %v2790 = vadd.f32 0.0, %v2789
      %2791 = vmatprep.mubr.bf16.mxu0 %v696
      %2792 = vmatmul.mubr.bf16.gmra.mrb[0].mxu0 %v695
      %v2793 = vpop.f32.mrb[0].mxu0
      %v2794 = vadd.f32 0.0, %v2793
      %v2795 = vpop.f32.mrb[0].mxu0
      %v2796 = vadd.f32 0.0, %v2795
      %v2797 = vpop.f32.mrb[0].mxu0
      %v2798 = vadd.f32 0.0, %v2797
      %v2799 = vpop.f32.mrb[0].mxu0
      %v2800 = vadd.f32 0.0, %v2799
      %2801 = vmatprep.mubr.bf16.mxu0 %v698
      %2802 = vmatmul.mubr.bf16.gmra.mrb[0].mxu0 %v697
      %v2803 = vpop.f32.mrb[0].mxu0
      %v2804 = vadd.f32 0.0, %v2803
      %v2805 = vpop.f32.mrb[0].mxu0
      %v2806 = vadd.f32 0.0, %v2805
      %v2807 = vpop.f32.mrb[0].mxu0
      %v2808 = vadd.f32 0.0, %v2807
      %v2809 = vpop.f32.mrb[0].mxu0
      %v2810 = vadd.f32 0.0, %v2809
      %2811 = vmatprep.mubr.bf16.mxu0 %v700
      %2812 = vmatmul.mubr.bf16.gmra.mrb[0].mxu0 %v699
      %v2813 = vpop.f32.mrb[0].mxu0
      %v2814 = vadd.f32 0.0, %v2813
      %v2815 = vpop.f32.mrb[0].mxu0
      %v2816 = vadd.f32 0.0, %v2815
      %v2817 = vpop.f32.mrb[0].mxu0
      %v2818 = vadd.f32 0.0, %v2817
      %v2819 = vpop.f32.mrb[0].mxu0
      %v2820 = vadd.f32 0.0, %v2819
      %2821 = vmatprep.mubr.bf16.mxu0 %v702
      %2822 = vmatmul.mubr.bf16.gmra.mrb[0].mxu0 %v701
      %v2823 = vpop.f32.mrb[0].mxu0
      %v2824 = vadd.f32 0.0, %v2823
      %v2825 = vpop.f32.mrb[0].mxu0
      %v2826 = vadd.f32 0.0, %v2825
      %v2827 = vpop.f32.mrb[0].mxu0
      %v2828 = vadd.f32 0.0, %v2827
      %v2829 = vpop.f32.mrb[0].mxu0
      %v2830 = vadd.f32 0.0, %v2829
      %2831 = vmatprep.mubr.bf16.mxu0 %v704
      %2832 = vmatmul.mubr.bf16.gmra.mrb[0].mxu0 %v703
      %v2833 = vpop.f32.mrb[0].mxu0
      %v2834 = vadd.f32 0.0, %v2833
      %v2835 = vpop.f32.mrb[0].mxu0
      %v2836 = vadd.f32 0.0, %v2835
      %v2837 = vpop.f32.mrb[0].mxu0
      %v2838 = vadd.f32 0.0, %v2837
      %v2839 = vpop.f32.mrb[0].mxu0
      %v2840 = vadd.f32 0.0, %v2839
      %2841 = vmatprep.mubr.bf16.mxu0 %v706
      %2842 = vmatmul.mubr.bf16.gmra.mrb[0].mxu0 %v705
      %v2843 = vpop.f32.mrb[0].mxu0
      %v2844 = vadd.f32 0.0, %v2843
      %v2845 = vpop.f32.mrb[0].mxu0
      %v2846 = vadd.f32 0.0, %v2845
      %v2847 = vpop.f32.mrb[0].mxu0
      %v2848 = vadd.f32 0.0, %v2847
      %v2849 = vpop.f32.mrb[0].mxu0
      %v2850 = vadd.f32 0.0, %v2849
      %2851 = vdwg.mxu0
      %2852 = vmatprep.subr.bf16.mxu0 %v1942
      %2853 = vmatpush1.bf16.msra.mxu0 %v1941
      %2854 = vmatprep.subr.bf16.mxu0 %v1967
      %2855 = vmatpush1.bf16.msra.mxu0 %v1966
      %2856 = vmatprep.subr.bf16.mxu0 %v1992
      %2857 = vmatpush1.bf16.msra.mxu0 %v1991
      %2858 = vmatprep.subr.bf16.mxu0 %v2017
      %2859 = vmatpush1.bf16.msra.mxu0 %v2016
      %2860 = vmatprep.subr.bf16.mxu0 %v2042
      %2861 = vmatpush1.bf16.msra.mxu0 %v2041
      %2862 = vmatprep.subr.bf16.mxu0 %v2067
      %2863 = vmatpush1.bf16.msra.mxu0 %v2066
      %2864 = vmatprep.subr.bf16.mxu0 %v2092
      %2865 = vmatpush1.bf16.msra.mxu0 %v2091
      %2866 = vmatprep.subr.bf16.mxu0 %v2117
      %2867 = vmatpush1.bf16.msra.mxu0 %v2116
      %2868 = vmatprep.subr.bf16.mxu0 %v2142
      %2869 = vmatpush1.bf16.msra.mxu0 %v2141
      %2870 = vmatprep.subr.bf16.mxu0 %v2167
      %2871 = vmatpush1.bf16.msra.mxu0 %v2166
      %2872 = vmatprep.subr.bf16.mxu0 %v2192
      %2873 = vmatpush1.bf16.msra.mxu0 %v2191
      %2874 = vmatprep.subr.bf16.mxu0 %v2217
      %2875 = vmatpush1.bf16.msra.mxu0 %v2216
      %2876 = vmatprep.subr.bf16.mxu0 %v2242
      %2877 = vmatpush1.bf16.msra.mxu0 %v2241
      %2878 = vmatprep.subr.bf16.mxu0 %v2267
      %2879 = vmatpush1.bf16.msra.mxu0 %v2266
      %2880 = vmatprep.subr.bf16.mxu0 %v2292
      %2881 = vmatpush1.bf16.msra.mxu0 %v2291
      %2882 = vmatprep.subr.bf16.mxu0 %v2317
      %2883 = vmatpush1.bf16.msra.mxu0 %v2316
      %2884 = vmatprep.mubr.bf16.mxu0 %v692
      %2885 = vmatmul.mubr.bf16.gmra.mrb[0].mxu0 %v691
      %v2886 = vpop.f32.mrb[0].mxu0
      %v2887 = vadd.f32 0.0, %v2886
      %v2888 = vpop.f32.mrb[0].mxu0
      %v2889 = vadd.f32 0.0, %v2888
      %v2890 = vpop.f32.mrb[0].mxu0
      %v2891 = vadd.f32 0.0, %v2890
      %v2892 = vpop.f32.mrb[0].mxu0
      %v2893 = vadd.f32 0.0, %v2892
      %2894 = vmatprep.mubr.bf16.mxu0 %v694
      %2895 = vmatmul.mubr.bf16.gmra.mrb[0].mxu0 %v693
      %v2896 = vpop.f32.mrb[0].mxu0
      %v2897 = vadd.f32 0.0, %v2896
      %v2898 = vpop.f32.mrb[0].mxu0
      %v2899 = vadd.f32 0.0, %v2898
      %v2900 = vpop.f32.mrb[0].mxu0
      %v2901 = vadd.f32 0.0, %v2900
      %v2902 = vpop.f32.mrb[0].mxu0
      %v2903 = vadd.f32 0.0, %v2902
      %2904 = vmatprep.mubr.bf16.mxu0 %v696
      %2905 = vmatmul.mubr.bf16.gmra.mrb[0].mxu0 %v695
      %v2906 = vpop.f32.mrb[0].mxu0
      %v2907 = vadd.f32 0.0, %v2906
      %v2908 = vpop.f32.mrb[0].mxu0
      %v2909 = vadd.f32 0.0, %v2908
      %v2910 = vpop.f32.mrb[0].mxu0
      %v2911 = vadd.f32 0.0, %v2910
      %v2912 = vpop.f32.mrb[0].mxu0
      %v2913 = vadd.f32 0.0, %v2912
      %2914 = vmatprep.mubr.bf16.mxu0 %v698
      %2915 = vmatmul.mubr.bf16.gmra.mrb[0].mxu0 %v697
      %v2916 = vpop.f32.mrb[0].mxu0
      %v2917 = vadd.f32 0.0, %v2916
      %v2918 = vpop.f32.mrb[0].mxu0
      %v2919 = vadd.f32 0.0, %v2918
      %v2920 = vpop.f32.mrb[0].mxu0
      %v2921 = vadd.f32 0.0, %v2920
      %v2922 = vpop.f32.mrb[0].mxu0
      %v2923 = vadd.f32 0.0, %v2922
      %2924 = vmatprep.mubr.bf16.mxu0 %v700
      %2925 = vmatmul.mubr.bf16.gmra.mrb[0].mxu0 %v699
      %v2926 = vpop.f32.mrb[0].mxu0
      %v2927 = vadd.f32 0.0, %v2926
      %v2928 = vpop.f32.mrb[0].mxu0
      %v2929 = vadd.f32 0.0, %v2928
      %v2930 = vpop.f32.mrb[0].mxu0
      %v2931 = vadd.f32 0.0, %v2930
      %v2932 = vpop.f32.mrb[0].mxu0
      %v2933 = vadd.f32 0.0, %v2932
      %2934 = vmatprep.mubr.bf16.mxu0 %v702
      %2935 = vmatmul.mubr.bf16.gmra.mrb[0].mxu0 %v701
      %v2936 = vpop.f32.mrb[0].mxu0
      %v2937 = vadd.f32 0.0, %v2936
      %v2938 = vpop.f32.mrb[0].mxu0
      %v2939 = vadd.f32 0.0, %v2938
      %v2940 = vpop.f32.mrb[0].mxu0
      %v2941 = vadd.f32 0.0, %v2940
      %v2942 = vpop.f32.mrb[0].mxu0
      %v2943 = vadd.f32 0.0, %v2942
      %2944 = vmatprep.mubr.bf16.mxu0 %v704
      %2945 = vmatmul.mubr.bf16.gmra.mrb[0].mxu0 %v703
      %v2946 = vpop.f32.mrb[0].mxu0
      %v2947 = vadd.f32 0.0, %v2946
      %v2948 = vpop.f32.mrb[0].mxu0
      %v2949 = vadd.f32 0.0, %v2948
      %v2950 = vpop.f32.mrb[0].mxu0
      %v2951 = vadd.f32 0.0, %v2950
      %v2952 = vpop.f32.mrb[0].mxu0
      %v2953 = vadd.f32 0.0, %v2952
      %2954 = vmatprep.mubr.bf16.mxu0 %v706
      %2955 = vmatmul.mubr.bf16.gmra.mrb[0].mxu0 %v705
      %v2956 = vpop.f32.mrb[0].mxu0
      %v2957 = vadd.f32 0.0, %v2956
      %v2958 = vpop.f32.mrb[0].mxu0
      %v2959 = vadd.f32 0.0, %v2958
      %v2960 = vpop.f32.mrb[0].mxu0
      %v2961 = vadd.f32 0.0, %v2960
      %v2962 = vpop.f32.mrb[0].mxu0
      %v2963 = vadd.f32 0.0, %v2962
      %2964 = vdwg.mxu0
      %2965 = vmatprep.subr.bf16.mxu0 %v1944
      %2966 = vmatpush1.bf16.msra.mxu0 %v1943
      %2967 = vmatprep.subr.bf16.mxu0 %v1969
      %2968 = vmatpush1.bf16.msra.mxu0 %v1968
      %2969 = vmatprep.subr.bf16.mxu0 %v1994
      %2970 = vmatpush1.bf16.msra.mxu0 %v1993
      %2971 = vmatprep.subr.bf16.mxu0 %v2019
      %2972 = vmatpush1.bf16.msra.mxu0 %v2018
      %2973 = vmatprep.subr.bf16.mxu0 %v2044
      %2974 = vmatpush1.bf16.msra.mxu0 %v2043
      %2975 = vmatprep.subr.bf16.mxu0 %v2069
      %2976 = vmatpush1.bf16.msra.mxu0 %v2068
      %2977 = vmatprep.subr.bf16.mxu0 %v2094
      %2978 = vmatpush1.bf16.msra.mxu0 %v2093
      %2979 = vmatprep.subr.bf16.mxu0 %v2119
      %2980 = vmatpush1.bf16.msra.mxu0 %v2118
      %2981 = vmatprep.subr.bf16.mxu0 %v2144
      %2982 = vmatpush1.bf16.msra.mxu0 %v2143
      %2983 = vmatprep.subr.bf16.mxu0 %v2169
      %2984 = vmatpush1.bf16.msra.mxu0 %v2168
      %2985 = vmatprep.subr.bf16.mxu0 %v2194
      %2986 = vmatpush1.bf16.msra.mxu0 %v2193
      %2987 = vmatprep.subr.bf16.mxu0 %v2219
      %2988 = vmatpush1.bf16.msra.mxu0 %v2218
      %2989 = vmatprep.subr.bf16.mxu0 %v2244
      %2990 = vmatpush1.bf16.msra.mxu0 %v2243
      %2991 = vmatprep.subr.bf16.mxu0 %v2269
      %2992 = vmatpush1.bf16.msra.mxu0 %v2268
      %2993 = vmatprep.subr.bf16.mxu0 %v2294
      %2994 = vmatpush1.bf16.msra.mxu0 %v2293
      %2995 = vmatprep.subr.bf16.mxu0 %v2319
      %2996 = vmatpush1.bf16.msra.mxu0 %v2318
      %2997 = vmatprep.mubr.bf16.mxu0 %v692
      %2998 = vmatmul.mubr.bf16.gmra.mrb[0].mxu0 %v691
      %v2999 = vpop.f32.mrb[0].mxu0
      %v3000 = vadd.f32 0.0, %v2999
      %v3001 = vpop.f32.mrb[0].mxu0
      %v3002 = vadd.f32 0.0, %v3001
      %v3003 = vpop.f32.mrb[0].mxu0
      %v3004 = vadd.f32 0.0, %v3003
      %v3005 = vpop.f32.mrb[0].mxu0
      %v3006 = vadd.f32 0.0, %v3005
      %3007 = vmatprep.mubr.bf16.mxu0 %v694
      %3008 = vmatmul.mubr.bf16.gmra.mrb[0].mxu0 %v693
      %v3009 = vpop.f32.mrb[0].mxu0
      %v3010 = vadd.f32 0.0, %v3009
      %v3011 = vpop.f32.mrb[0].mxu0
      %v3012 = vadd.f32 0.0, %v3011
      %v3013 = vpop.f32.mrb[0].mxu0
      %v3014 = vadd.f32 0.0, %v3013
      %v3015 = vpop.f32.mrb[0].mxu0
      %v3016 = vadd.f32 0.0, %v3015
      %3017 = vmatprep.mubr.bf16.mxu0 %v696
      %3018 = vmatmul.mubr.bf16.gmra.mrb[0].mxu0 %v695
      %v3019 = vpop.f32.mrb[0].mxu0
      %v3020 = vadd.f32 0.0, %v3019
      %v3021 = vpop.f32.mrb[0].mxu0
      %v3022 = vadd.f32 0.0, %v3021
      %v3023 = vpop.f32.mrb[0].mxu0
      %v3024 = vadd.f32 0.0, %v3023
      %v3025 = vpop.f32.mrb[0].mxu0
      %v3026 = vadd.f32 0.0, %v3025
      %3027 = vmatprep.mubr.bf16.mxu0 %v698
      %3028 = vmatmul.mubr.bf16.gmra.mrb[0].mxu0 %v697
      %v3029 = vpop.f32.mrb[0].mxu0
      %v3030 = vadd.f32 0.0, %v3029
      %v3031 = vpop.f32.mrb[0].mxu0
      %v3032 = vadd.f32 0.0, %v3031
      %v3033 = vpop.f32.mrb[0].mxu0
      %v3034 = vadd.f32 0.0, %v3033
      %v3035 = vpop.f32.mrb[0].mxu0
      %v3036 = vadd.f32 0.0, %v3035
      %3037 = vmatprep.mubr.bf16.mxu0 %v700
      %3038 = vmatmul.mubr.bf16.gmra.mrb[0].mxu0 %v699
      %v3039 = vpop.f32.mrb[0].mxu0
      %v3040 = vadd.f32 0.0, %v3039
      %v3041 = vpop.f32.mrb[0].mxu0
      %v3042 = vadd.f32 0.0, %v3041
      %v3043 = vpop.f32.mrb[0].mxu0
      %v3044 = vadd.f32 0.0, %v3043
      %v3045 = vpop.f32.mrb[0].mxu0
      %v3046 = vadd.f32 0.0, %v3045
      %3047 = vmatprep.mubr.bf16.mxu0 %v702
      %3048 = vmatmul.mubr.bf16.gmra.mrb[0].mxu0 %v701
      %v3049 = vpop.f32.mrb[0].mxu0
      %v3050 = vadd.f32 0.0, %v3049
      %v3051 = vpop.f32.mrb[0].mxu0
      %v3052 = vadd.f32 0.0, %v3051
      %v3053 = vpop.f32.mrb[0].mxu0
      %v3054 = vadd.f32 0.0, %v3053
      %v3055 = vpop.f32.mrb[0].mxu0
      %v3056 = vadd.f32 0.0, %v3055
      %3057 = vmatprep.mubr.bf16.mxu0 %v704
      %3058 = vmatmul.mubr.bf16.gmra.mrb[0].mxu0 %v703
      %v3059 = vpop.f32.mrb[0].mxu0
      %v3060 = vadd.f32 0.0, %v3059
      %v3061 = vpop.f32.mrb[0].mxu0
      %v3062 = vadd.f32 0.0, %v3061
      %v3063 = vpop.f32.mrb[0].mxu0
      %v3064 = vadd.f32 0.0, %v3063
      %v3065 = vpop.f32.mrb[0].mxu0
      %v3066 = vadd.f32 0.0, %v3065
      %3067 = vmatprep.mubr.bf16.mxu0 %v706
      %3068 = vmatmul.mubr.bf16.gmra.mrb[0].mxu0 %v705
      %v3069 = vpop.f32.mrb[0].mxu0
      %v3070 = vadd.f32 0.0, %v3069
      %v3071 = vpop.f32.mrb[0].mxu0
      %v3072 = vadd.f32 0.0, %v3071
      %v3073 = vpop.f32.mrb[0].mxu0
      %v3074 = vadd.f32 0.0, %v3073
      %v3075 = vpop.f32.mrb[0].mxu0
      %v3076 = vadd.f32 0.0, %v3075
      %3077 = vdwg.mxu0
      %3078 = vmatprep.subr.bf16.mxu0 %v1946
      %3079 = vmatpush1.bf16.msra.mxu0 %v1945
      %3080 = vmatprep.subr.bf16.mxu0 %v1971
      %3081 = vmatpush1.bf16.msra.mxu0 %v1970
      %3082 = vmatprep.subr.bf16.mxu0 %v1996
      %3083 = vmatpush1.bf16.msra.mxu0 %v1995
      %3084 = vmatprep.subr.bf16.mxu0 %v2021
      %3085 = vmatpush1.bf16.msra.mxu0 %v2020
      %3086 = vmatprep.subr.bf16.mxu0 %v2046
      %3087 = vmatpush1.bf16.msra.mxu0 %v2045
      %3088 = vmatprep.subr.bf16.mxu0 %v2071
      %3089 = vmatpush1.bf16.msra.mxu0 %v2070
      %3090 = vmatprep.subr.bf16.mxu0 %v2096
      %3091 = vmatpush1.bf16.msra.mxu0 %v2095
      %3092 = vmatprep.subr.bf16.mxu0 %v2121
      %3093 = vmatpush1.bf16.msra.mxu0 %v2120
      %3094 = vmatprep.subr.bf16.mxu0 %v2146
      %3095 = vmatpush1.bf16.msra.mxu0 %v2145
      %3096 = vmatprep.subr.bf16.mxu0 %v2171
      %3097 = vmatpush1.bf16.msra.mxu0 %v2170
      %3098 = vmatprep.subr.bf16.mxu0 %v2196
      %3099 = vmatpush1.bf16.msra.mxu0 %v2195
      %3100 = vmatprep.subr.bf16.mxu0 %v2221
      %3101 = vmatpush1.bf16.msra.mxu0 %v2220
      %3102 = vmatprep.subr.bf16.mxu0 %v2246
      %3103 = vmatpush1.bf16.msra.mxu0 %v2245
      %3104 = vmatprep.subr.bf16.mxu0 %v2271
      %3105 = vmatpush1.bf16.msra.mxu0 %v2270
      %3106 = vmatprep.subr.bf16.mxu0 %v2296
      %3107 = vmatpush1.bf16.msra.mxu0 %v2295
      %3108 = vmatprep.subr.bf16.mxu0 %v2321
      %3109 = vmatpush1.bf16.msra.mxu0 %v2320
      %3110 = vmatprep.mubr.bf16.mxu0 %v692
      %3111 = vmatmul.mubr.bf16.gmra.mrb[0].mxu0 %v691
      %v3112 = vpop.f32.mrb[0].mxu0
      %v3113 = vadd.f32 0.0, %v3112
      %v3114 = vpop.f32.mrb[0].mxu0
      %v3115 = vadd.f32 0.0, %v3114
      %v3116 = vpop.f32.mrb[0].mxu0
      %v3117 = vadd.f32 0.0, %v3116
      %v3118 = vpop.f32.mrb[0].mxu0
      %v3119 = vadd.f32 0.0, %v3118
      %3120 = vmatprep.mubr.bf16.mxu0 %v694
      %3121 = vmatmul.mubr.bf16.gmra.mrb[0].mxu0 %v693
      %v3122 = vpop.f32.mrb[0].mxu0
      %v3123 = vadd.f32 0.0, %v3122
      %v3124 = vpop.f32.mrb[0].mxu0
      %v3125 = vadd.f32 0.0, %v3124
      %v3126 = vpop.f32.mrb[0].mxu0
      %v3127 = vadd.f32 0.0, %v3126
      %v3128 = vpop.f32.mrb[0].mxu0
      %v3129 = vadd.f32 0.0, %v3128
      %3130 = vmatprep.mubr.bf16.mxu0 %v696
      %3131 = vmatmul.mubr.bf16.gmra.mrb[0].mxu0 %v695
      %v3132 = vpop.f32.mrb[0].mxu0
      %v3133 = vadd.f32 0.0, %v3132
      %v3134 = vpop.f32.mrb[0].mxu0
      %v3135 = vadd.f32 0.0, %v3134
      %v3136 = vpop.f32.mrb[0].mxu0
      %v3137 = vadd.f32 0.0, %v3136
      %v3138 = vpop.f32.mrb[0].mxu0
      %v3139 = vadd.f32 0.0, %v3138
      %3140 = vmatprep.mubr.bf16.mxu0 %v698
      %3141 = vmatmul.mubr.bf16.gmra.mrb[0].mxu0 %v697
      %v3142 = vpop.f32.mrb[0].mxu0
      %v3143 = vadd.f32 0.0, %v3142
      %v3144 = vpop.f32.mrb[0].mxu0
      %v3145 = vadd.f32 0.0, %v3144
      %v3146 = vpop.f32.mrb[0].mxu0
      %v3147 = vadd.f32 0.0, %v3146
      %v3148 = vpop.f32.mrb[0].mxu0
      %v3149 = vadd.f32 0.0, %v3148
      %3150 = vmatprep.mubr.bf16.mxu0 %v700
      %3151 = vmatmul.mubr.bf16.gmra.mrb[0].mxu0 %v699
      %v3152 = vpop.f32.mrb[0].mxu0
      %v3153 = vadd.f32 0.0, %v3152
      %v3154 = vpop.f32.mrb[0].mxu0
      %v3155 = vadd.f32 0.0, %v3154
      %v3156 = vpop.f32.mrb[0].mxu0
      %v3157 = vadd.f32 0.0, %v3156
      %v3158 = vpop.f32.mrb[0].mxu0
      %v3159 = vadd.f32 0.0, %v3158
      %3160 = vmatprep.mubr.bf16.mxu0 %v702
      %3161 = vmatmul.mubr.bf16.gmra.mrb[0].mxu0 %v701
      %v3162 = vpop.f32.mrb[0].mxu0
      %v3163 = vadd.f32 0.0, %v3162
      %v3164 = vpop.f32.mrb[0].mxu0
      %v3165 = vadd.f32 0.0, %v3164
      %v3166 = vpop.f32.mrb[0].mxu0
      %v3167 = vadd.f32 0.0, %v3166
      %v3168 = vpop.f32.mrb[0].mxu0
      %v3169 = vadd.f32 0.0, %v3168
      %3170 = vmatprep.mubr.bf16.mxu0 %v704
      %3171 = vmatmul.mubr.bf16.gmra.mrb[0].mxu0 %v703
      %v3172 = vpop.f32.mrb[0].mxu0
      %v3173 = vadd.f32 0.0, %v3172
      %v3174 = vpop.f32.mrb[0].mxu0
      %v3175 = vadd.f32 0.0, %v3174
      %v3176 = vpop.f32.mrb[0].mxu0
      %v3177 = vadd.f32 0.0, %v3176
      %v3178 = vpop.f32.mrb[0].mxu0
      %v3179 = vadd.f32 0.0, %v3178
      %3180 = vmatprep.mubr.bf16.mxu0 %v706
      %3181 = vmatmul.mubr.bf16.gmra.mrb[0].mxu0 %v705
      %v3182 = vpop.f32.mrb[0].mxu0
      %v3183 = vadd.f32 0.0, %v3182
      %v3184 = vpop.f32.mrb[0].mxu0
      %v3185 = vadd.f32 0.0, %v3184
      %v3186 = vpop.f32.mrb[0].mxu0
      %v3187 = vadd.f32 0.0, %v3186
      %v3188 = vpop.f32.mrb[0].mxu0
      %v3189 = vadd.f32 0.0, %v3188
      %3190 = vdwg.mxu0
      %3191 = vmatprep.subr.bf16.mxu0 %v1948
      %3192 = vmatpush1.bf16.msra.mxu0 %v1947
      %3193 = vmatprep.subr.bf16.mxu0 %v1973
      %3194 = vmatpush1.bf16.msra.mxu0 %v1972
      %3195 = vmatprep.subr.bf16.mxu0 %v1998
      %3196 = vmatpush1.bf16.msra.mxu0 %v1997
      %3197 = vmatprep.subr.bf16.mxu0 %v2023
      %3198 = vmatpush1.bf16.msra.mxu0 %v2022
      %3199 = vmatprep.subr.bf16.mxu0 %v2048
      %3200 = vmatpush1.bf16.msra.mxu0 %v2047
      %3201 = vmatprep.subr.bf16.mxu0 %v2073
      %3202 = vmatpush1.bf16.msra.mxu0 %v2072
      %3203 = vmatprep.subr.bf16.mxu0 %v2098
      %3204 = vmatpush1.bf16.msra.mxu0 %v2097
      %3205 = vmatprep.subr.bf16.mxu0 %v2123
      %3206 = vmatpush1.bf16.msra.mxu0 %v2122
      %3207 = vmatprep.subr.bf16.mxu0 %v2148
      %3208 = vmatpush1.bf16.msra.mxu0 %v2147
      %3209 = vmatprep.subr.bf16.mxu0 %v2173
      %3210 = vmatpush1.bf16.msra.mxu0 %v2172
      %3211 = vmatprep.subr.bf16.mxu0 %v2198
      %3212 = vmatpush1.bf16.msra.mxu0 %v2197
      %3213 = vmatprep.subr.bf16.mxu0 %v2223
      %3214 = vmatpush1.bf16.msra.mxu0 %v2222
      %3215 = vmatprep.subr.bf16.mxu0 %v2248
      %3216 = vmatpush1.bf16.msra.mxu0 %v2247
      %3217 = vmatprep.subr.bf16.mxu0 %v2273
      %3218 = vmatpush1.bf16.msra.mxu0 %v2272
      %3219 = vmatprep.subr.bf16.mxu0 %v2298
      %3220 = vmatpush1.bf16.msra.mxu0 %v2297
      %3221 = vmatprep.subr.bf16.mxu0 %v2323
      %3222 = vmatpush1.bf16.msra.mxu0 %v2322
      %3223 = vmatprep.mubr.bf16.mxu0 %v692
      %3224 = vmatmul.mubr.bf16.gmra.mrb[0].mxu0 %v691
      %v3225 = vpop.f32.mrb[0].mxu0
      %v3226 = vadd.f32 0.0, %v3225
      %v3227 = vpop.f32.mrb[0].mxu0
      %v3228 = vadd.f32 0.0, %v3227
      %v3229 = vpop.f32.mrb[0].mxu0
      %v3230 = vadd.f32 0.0, %v3229
      %v3231 = vpop.f32.mrb[0].mxu0
      %v3232 = vadd.f32 0.0, %v3231
      %3233 = vmatprep.mubr.bf16.mxu0 %v694
      %3234 = vmatmul.mubr.bf16.gmra.mrb[0].mxu0 %v693
      %v3235 = vpop.f32.mrb[0].mxu0
      %v3236 = vadd.f32 0.0, %v3235
      %v3237 = vpop.f32.mrb[0].mxu0
      %v3238 = vadd.f32 0.0, %v3237
      %v3239 = vpop.f32.mrb[0].mxu0
      %v3240 = vadd.f32 0.0, %v3239
      %v3241 = vpop.f32.mrb[0].mxu0
      %v3242 = vadd.f32 0.0, %v3241
      %3243 = vmatprep.mubr.bf16.mxu0 %v696
      %3244 = vmatmul.mubr.bf16.gmra.mrb[0].mxu0 %v695
      %v3245 = vpop.f32.mrb[0].mxu0
      %v3246 = vadd.f32 0.0, %v3245
      %v3247 = vpop.f32.mrb[0].mxu0
      %v3248 = vadd.f32 0.0, %v3247
      %v3249 = vpop.f32.mrb[0].mxu0
      %v3250 = vadd.f32 0.0, %v3249
      %v3251 = vpop.f32.mrb[0].mxu0
      %v3252 = vadd.f32 0.0, %v3251
      %3253 = vmatprep.mubr.bf16.mxu0 %v698
      %3254 = vmatmul.mubr.bf16.gmra.mrb[0].mxu0 %v697
      %v3255 = vpop.f32.mrb[0].mxu0
      %v3256 = vadd.f32 0.0, %v3255
      %v3257 = vpop.f32.mrb[0].mxu0
      %v3258 = vadd.f32 0.0, %v3257
      %v3259 = vpop.f32.mrb[0].mxu0
      %v3260 = vadd.f32 0.0, %v3259
      %v3261 = vpop.f32.mrb[0].mxu0
      %v3262 = vadd.f32 0.0, %v3261
      %3263 = vmatprep.mubr.bf16.mxu0 %v700
      %3264 = vmatmul.mubr.bf16.gmra.mrb[0].mxu0 %v699
      %v3265 = vpop.f32.mrb[0].mxu0
      %v3266 = vadd.f32 0.0, %v3265
      %v3267 = vpop.f32.mrb[0].mxu0
      %v3268 = vadd.f32 0.0, %v3267
      %v3269 = vpop.f32.mrb[0].mxu0
      %v3270 = vadd.f32 0.0, %v3269
      %v3271 = vpop.f32.mrb[0].mxu0
      %v3272 = vadd.f32 0.0, %v3271
      %3273 = vmatprep.mubr.bf16.mxu0 %v702
      %3274 = vmatmul.mubr.bf16.gmra.mrb[0].mxu0 %v701
      %v3275 = vpop.f32.mrb[0].mxu0
      %v3276 = vadd.f32 0.0, %v3275
      %v3277 = vpop.f32.mrb[0].mxu0
      %v3278 = vadd.f32 0.0, %v3277
      %v3279 = vpop.f32.mrb[0].mxu0
      %v3280 = vadd.f32 0.0, %v3279
      %v3281 = vpop.f32.mrb[0].mxu0
      %v3282 = vadd.f32 0.0, %v3281
      %3283 = vmatprep.mubr.bf16.mxu0 %v704
      %3284 = vmatmul.mubr.bf16.gmra.mrb[0].mxu0 %v703
      %v3285 = vpop.f32.mrb[0].mxu0
      %v3286 = vadd.f32 0.0, %v3285
      %v3287 = vpop.f32.mrb[0].mxu0
      %v3288 = vadd.f32 0.0, %v3287
      %v3289 = vpop.f32.mrb[0].mxu0
      %v3290 = vadd.f32 0.0, %v3289
      %v3291 = vpop.f32.mrb[0].mxu0
      %v3292 = vadd.f32 0.0, %v3291
      %3293 = vmatprep.mubr.bf16.mxu0 %v706
      %3294 = vmatmul.mubr.bf16.gmra.mrb[0].mxu0 %v705
      %v3295 = vpop.f32.mrb[0].mxu0
      %v3296 = vadd.f32 0.0, %v3295
      %v3297 = vpop.f32.mrb[0].mxu0
      %v3298 = vadd.f32 0.0, %v3297
      %v3299 = vpop.f32.mrb[0].mxu0
      %v3300 = vadd.f32 0.0, %v3299
      %v3301 = vpop.f32.mrb[0].mxu0
      %v3302 = vadd.f32 0.0, %v3301
      %3303 = vdwg.mxu0
      %3304 = vmatprep.subr.bf16.mxu0 %v1950
      %3305 = vmatpush1.bf16.msra.mxu0 %v1949
      %3306 = vmatprep.subr.bf16.mxu0 %v1975
      %3307 = vmatpush1.bf16.msra.mxu0 %v1974
      %3308 = vmatprep.subr.bf16.mxu0 %v2000
      %3309 = vmatpush1.bf16.msra.mxu0 %v1999
      %3310 = vmatprep.subr.bf16.mxu0 %v2025
      %3311 = vmatpush1.bf16.msra.mxu0 %v2024
      %3312 = vmatprep.subr.bf16.mxu0 %v2050
      %3313 = vmatpush1.bf16.msra.mxu0 %v2049
      %3314 = vmatprep.subr.bf16.mxu0 %v2075
      %3315 = vmatpush1.bf16.msra.mxu0 %v2074
      %3316 = vmatprep.subr.bf16.mxu0 %v2100
      %3317 = vmatpush1.bf16.msra.mxu0 %v2099
      %3318 = vmatprep.subr.bf16.mxu0 %v2125
      %3319 = vmatpush1.bf16.msra.mxu0 %v2124
      %3320 = vmatprep.subr.bf16.mxu0 %v2150
      %3321 = vmatpush1.bf16.msra.mxu0 %v2149
      %3322 = vmatprep.subr.bf16.mxu0 %v2175
      %3323 = vmatpush1.bf16.msra.mxu0 %v2174
      %3324 = vmatprep.subr.bf16.mxu0 %v2200
      %3325 = vmatpush1.bf16.msra.mxu0 %v2199
      %3326 = vmatprep.subr.bf16.mxu0 %v2225
      %3327 = vmatpush1.bf16.msra.mxu0 %v2224
      %3328 = vmatprep.subr.bf16.mxu0 %v2250
      %3329 = vmatpush1.bf16.msra.mxu0 %v2249
      %3330 = vmatprep.subr.bf16.mxu0 %v2275
      %3331 = vmatpush1.bf16.msra.mxu0 %v2274
      %3332 = vmatprep.subr.bf16.mxu0 %v2300
      %3333 = vmatpush1.bf16.msra.mxu0 %v2299
      %3334 = vmatprep.subr.bf16.mxu0 %v2325
      %3335 = vmatpush1.bf16.msra.mxu0 %v2324
      %3336 = vmatprep.mubr.bf16.mxu0 %v692
      %3337 = vmatmul.mubr.bf16.gmra.mrb[0].mxu0 %v691
      %v3338 = vpop.f32.mrb[0].mxu0
      %v3339 = vadd.f32 0.0, %v3338
      %v3340 = vpop.f32.mrb[0].mxu0
      %v3341 = vadd.f32 0.0, %v3340
      %v3342 = vpop.f32.mrb[0].mxu0
      %v3343 = vadd.f32 0.0, %v3342
      %v3344 = vpop.f32.mrb[0].mxu0
      %v3345 = vadd.f32 0.0, %v3344
      %3346 = vmatprep.mubr.bf16.mxu0 %v694
      %3347 = vmatmul.mubr.bf16.gmra.mrb[0].mxu0 %v693
      %v3348 = vpop.f32.mrb[0].mxu0
      %v3349 = vadd.f32 0.0, %v3348
      %v3350 = vpop.f32.mrb[0].mxu0
      %v3351 = vadd.f32 0.0, %v3350
      %v3352 = vpop.f32.mrb[0].mxu0
      %v3353 = vadd.f32 0.0, %v3352
      %v3354 = vpop.f32.mrb[0].mxu0
      %v3355 = vadd.f32 0.0, %v3354
      %3356 = vmatprep.mubr.bf16.mxu0 %v696
      %3357 = vmatmul.mubr.bf16.gmra.mrb[0].mxu0 %v695
      %v3358 = vpop.f32.mrb[0].mxu0
      %v3359 = vadd.f32 0.0, %v3358
      %v3360 = vpop.f32.mrb[0].mxu0
      %v3361 = vadd.f32 0.0, %v3360
      %v3362 = vpop.f32.mrb[0].mxu0
      %v3363 = vadd.f32 0.0, %v3362
      %v3364 = vpop.f32.mrb[0].mxu0
      %v3365 = vadd.f32 0.0, %v3364
      %3366 = vmatprep.mubr.bf16.mxu0 %v698
      %3367 = vmatmul.mubr.bf16.gmra.mrb[0].mxu0 %v697
      %v3368 = vpop.f32.mrb[0].mxu0
      %v3369 = vadd.f32 0.0, %v3368
      %v3370 = vpop.f32.mrb[0].mxu0
      %v3371 = vadd.f32 0.0, %v3370
      %v3372 = vpop.f32.mrb[0].mxu0
      %v3373 = vadd.f32 0.0, %v3372
      %v3374 = vpop.f32.mrb[0].mxu0
      %v3375 = vadd.f32 0.0, %v3374
      %3376 = vmatprep.mubr.bf16.mxu0 %v700
      %3377 = vmatmul.mubr.bf16.gmra.mrb[0].mxu0 %v699
      %v3378 = vpop.f32.mrb[0].mxu0
      %v3379 = vadd.f32 0.0, %v3378
      %v3380 = vpop.f32.mrb[0].mxu0
      %v3381 = vadd.f32 0.0, %v3380
      %v3382 = vpop.f32.mrb[0].mxu0
      %v3383 = vadd.f32 0.0, %v3382
      %v3384 = vpop.f32.mrb[0].mxu0
      %v3385 = vadd.f32 0.0, %v3384
      %3386 = vmatprep.mubr.bf16.mxu0 %v702
      %3387 = vmatmul.mubr.bf16.gmra.mrb[0].mxu0 %v701
      %v3388 = vpop.f32.mrb[0].mxu0
      %v3389 = vadd.f32 0.0, %v3388
      %v3390 = vpop.f32.mrb[0].mxu0
      %v3391 = vadd.f32 0.0, %v3390
      %v3392 = vpop.f32.mrb[0].mxu0
      %v3393 = vadd.f32 0.0, %v3392
      %v3394 = vpop.f32.mrb[0].mxu0
      %v3395 = vadd.f32 0.0, %v3394
      %3396 = vmatprep.mubr.bf16.mxu0 %v704
      %3397 = vmatmul.mubr.bf16.gmra.mrb[0].mxu0 %v703
      %v3398 = vpop.f32.mrb[0].mxu0
      %v3399 = vadd.f32 0.0, %v3398
      %v3400 = vpop.f32.mrb[0].mxu0
      %v3401 = vadd.f32 0.0, %v3400
      %v3402 = vpop.f32.mrb[0].mxu0
      %v3403 = vadd.f32 0.0, %v3402
      %v3404 = vpop.f32.mrb[0].mxu0
      %v3405 = vadd.f32 0.0, %v3404
      %3406 = vmatprep.mubr.bf16.mxu0 %v706
      %3407 = vmatmul.mubr.bf16.gmra.mrb[0].mxu0 %v705
      %v3408 = vpop.f32.mrb[0].mxu0
      %v3409 = vadd.f32 0.0, %v3408
      %v3410 = vpop.f32.mrb[0].mxu0
      %v3411 = vadd.f32 0.0, %v3410
      %v3412 = vpop.f32.mrb[0].mxu0
      %v3413 = vadd.f32 0.0, %v3412
      %v3414 = vpop.f32.mrb[0].mxu0
      %v3415 = vadd.f32 0.0, %v3414
      %3416 = vdwg.mxu0
      %3417 = vmatprep.subr.bf16.mxu0 %v1952
      %3418 = vmatpush1.bf16.msra.mxu0 %v1951
      %3419 = vmatprep.subr.bf16.mxu0 %v1977
      %3420 = vmatpush1.bf16.msra.mxu0 %v1976
      %3421 = vmatprep.subr.bf16.mxu0 %v2002
      %3422 = vmatpush1.bf16.msra.mxu0 %v2001
      %3423 = vmatprep.subr.bf16.mxu0 %v2027
      %3424 = vmatpush1.bf16.msra.mxu0 %v2026
      %3425 = vmatprep.subr.bf16.mxu0 %v2052
      %3426 = vmatpush1.bf16.msra.mxu0 %v2051
      %3427 = vmatprep.subr.bf16.mxu0 %v2077
      %3428 = vmatpush1.bf16.msra.mxu0 %v2076
      %3429 = vmatprep.subr.bf16.mxu0 %v2102
      %3430 = vmatpush1.bf16.msra.mxu0 %v2101
      %3431 = vmatprep.subr.bf16.mxu0 %v2127
      %3432 = vmatpush1.bf16.msra.mxu0 %v2126
      %3433 = vmatprep.subr.bf16.mxu0 %v2152
      %3434 = vmatpush1.bf16.msra.mxu0 %v2151
      %3435 = vmatprep.subr.bf16.mxu0 %v2177
      %3436 = vmatpush1.bf16.msra.mxu0 %v2176
      %3437 = vmatprep.subr.bf16.mxu0 %v2202
      %3438 = vmatpush1.bf16.msra.mxu0 %v2201
      %3439 = vmatprep.subr.bf16.mxu0 %v2227
      %3440 = vmatpush1.bf16.msra.mxu0 %v2226
      %3441 = vmatprep.subr.bf16.mxu0 %v2252
      %3442 = vmatpush1.bf16.msra.mxu0 %v2251
      %3443 = vmatprep.subr.bf16.mxu0 %v2277
      %3444 = vmatpush1.bf16.msra.mxu0 %v2276
      %3445 = vmatprep.subr.bf16.mxu0 %v2302
      %3446 = vmatpush1.bf16.msra.mxu0 %v2301
      %3447 = vmatprep.subr.bf16.mxu0 %v2327
      %3448 = vmatpush1.bf16.msra.mxu0 %v2326
      %3449 = vmatprep.mubr.bf16.mxu0 %v692
      %3450 = vmatmul.mubr.bf16.gmra.mrb[0].mxu0 %v691
      %v3451 = vpop.f32.mrb[0].mxu0
      %v3452 = vadd.f32 0.0, %v3451
      %v3453 = vpop.f32.mrb[0].mxu0
      %v3454 = vadd.f32 0.0, %v3453
      %v3455 = vpop.f32.mrb[0].mxu0
      %v3456 = vadd.f32 0.0, %v3455
      %v3457 = vpop.f32.mrb[0].mxu0
      %v3458 = vadd.f32 0.0, %v3457
      %3459 = vmatprep.mubr.bf16.mxu0 %v694
      %3460 = vmatmul.mubr.bf16.gmra.mrb[0].mxu0 %v693
      %v3461 = vpop.f32.mrb[0].mxu0
      %v3462 = vadd.f32 0.0, %v3461
      %v3463 = vpop.f32.mrb[0].mxu0
      %v3464 = vadd.f32 0.0, %v3463
      %v3465 = vpop.f32.mrb[0].mxu0
      %v3466 = vadd.f32 0.0, %v3465
      %v3467 = vpop.f32.mrb[0].mxu0
      %v3468 = vadd.f32 0.0, %v3467
      %3469 = vmatprep.mubr.bf16.mxu0 %v696
      %3470 = vmatmul.mubr.bf16.gmra.mrb[0].mxu0 %v695
      %v3471 = vpop.f32.mrb[0].mxu0
      %v3472 = vadd.f32 0.0, %v3471
      %v3473 = vpop.f32.mrb[0].mxu0
      %v3474 = vadd.f32 0.0, %v3473
      %v3475 = vpop.f32.mrb[0].mxu0
      %v3476 = vadd.f32 0.0, %v3475
      %v3477 = vpop.f32.mrb[0].mxu0
      %v3478 = vadd.f32 0.0, %v3477
      %3479 = vmatprep.mubr.bf16.mxu0 %v698
      %3480 = vmatmul.mubr.bf16.gmra.mrb[0].mxu0 %v697
      %v3481 = vpop.f32.mrb[0].mxu0
      %v3482 = vadd.f32 0.0, %v3481
      %v3483 = vpop.f32.mrb[0].mxu0
      %v3484 = vadd.f32 0.0, %v3483
      %v3485 = vpop.f32.mrb[0].mxu0
      %v3486 = vadd.f32 0.0, %v3485
      %v3487 = vpop.f32.mrb[0].mxu0
      %v3488 = vadd.f32 0.0, %v3487
      %3489 = vmatprep.mubr.bf16.mxu0 %v700
      %3490 = vmatmul.mubr.bf16.gmra.mrb[0].mxu0 %v699
      %v3491 = vpop.f32.mrb[0].mxu0
      %v3492 = vadd.f32 0.0, %v3491
      %v3493 = vpop.f32.mrb[0].mxu0
      %v3494 = vadd.f32 0.0, %v3493
      %v3495 = vpop.f32.mrb[0].mxu0
      %v3496 = vadd.f32 0.0, %v3495
      %v3497 = vpop.f32.mrb[0].mxu0
      %v3498 = vadd.f32 0.0, %v3497
      %3499 = vmatprep.mubr.bf16.mxu0 %v702
      %3500 = vmatmul.mubr.bf16.gmra.mrb[0].mxu0 %v701
      %v3501 = vpop.f32.mrb[0].mxu0
      %v3502 = vadd.f32 0.0, %v3501
      %v3503 = vpop.f32.mrb[0].mxu0
      %v3504 = vadd.f32 0.0, %v3503
      %v3505 = vpop.f32.mrb[0].mxu0
      %v3506 = vadd.f32 0.0, %v3505
      %v3507 = vpop.f32.mrb[0].mxu0
      %v3508 = vadd.f32 0.0, %v3507
      %3509 = vmatprep.mubr.bf16.mxu0 %v704
      %3510 = vmatmul.mubr.bf16.gmra.mrb[0].mxu0 %v703
      %v3511 = vpop.f32.mrb[0].mxu0
      %v3512 = vadd.f32 0.0, %v3511
      %v3513 = vpop.f32.mrb[0].mxu0
      %v3514 = vadd.f32 0.0, %v3513
      %v3515 = vpop.f32.mrb[0].mxu0
      %v3516 = vadd.f32 0.0, %v3515
      %v3517 = vpop.f32.mrb[0].mxu0
      %v3518 = vadd.f32 0.0, %v3517
      %3519 = vmatprep.mubr.bf16.mxu0 %v706
      %3520 = vmatmul.mubr.bf16.gmra.mrb[0].mxu0 %v705
      %v3521 = vpop.f32.mrb[0].mxu0
      %v3522 = vadd.f32 0.0, %v3521
      %v3523 = vpop.f32.mrb[0].mxu0
      %v3524 = vadd.f32 0.0, %v3523
      %v3525 = vpop.f32.mrb[0].mxu0
      %v3526 = vadd.f32 0.0, %v3525
      %v3527 = vpop.f32.mrb[0].mxu0
      %v3528 = vadd.f32 0.0, %v3527
      %3529 = vdwg.mxu0
      %3530 = vmatprep.subr.bf16.mxu0 %v1954
      %3531 = vmatpush1.bf16.msra.mxu0 %v1953
      %3532 = vmatprep.subr.bf16.mxu0 %v1979
      %3533 = vmatpush1.bf16.msra.mxu0 %v1978
      %3534 = vmatprep.subr.bf16.mxu0 %v2004
      %3535 = vmatpush1.bf16.msra.mxu0 %v2003
      %3536 = vmatprep.subr.bf16.mxu0 %v2029
      %3537 = vmatpush1.bf16.msra.mxu0 %v2028
      %3538 = vmatprep.subr.bf16.mxu0 %v2054
      %3539 = vmatpush1.bf16.msra.mxu0 %v2053
      %3540 = vmatprep.subr.bf16.mxu0 %v2079
      %3541 = vmatpush1.bf16.msra.mxu0 %v2078
      %3542 = vmatprep.subr.bf16.mxu0 %v2104
      %3543 = vmatpush1.bf16.msra.mxu0 %v2103
      %3544 = vmatprep.subr.bf16.mxu0 %v2129
      %3545 = vmatpush1.bf16.msra.mxu0 %v2128
      %3546 = vmatprep.subr.bf16.mxu0 %v2154
      %3547 = vmatpush1.bf16.msra.mxu0 %v2153
      %3548 = vmatprep.subr.bf16.mxu0 %v2179
      %3549 = vmatpush1.bf16.msra.mxu0 %v2178
      %3550 = vmatprep.subr.bf16.mxu0 %v2204
      %3551 = vmatpush1.bf16.msra.mxu0 %v2203
      %3552 = vmatprep.subr.bf16.mxu0 %v2229
      %3553 = vmatpush1.bf16.msra.mxu0 %v2228
      %3554 = vmatprep.subr.bf16.mxu0 %v2254
      %3555 = vmatpush1.bf16.msra.mxu0 %v2253
      %3556 = vmatprep.subr.bf16.mxu0 %v2279
      %3557 = vmatpush1.bf16.msra.mxu0 %v2278
      %3558 = vmatprep.subr.bf16.mxu0 %v2304
      %3559 = vmatpush1.bf16.msra.mxu0 %v2303
      %3560 = vmatprep.subr.bf16.mxu0 %v2329
      %3561 = vmatpush1.bf16.msra.mxu0 %v2328
      %3562 = vmatprep.mubr.bf16.mxu0 %v692
      %3563 = vmatmul.mubr.bf16.gmra.mrb[0].mxu0 %v691
      %v3564 = vpop.f32.mrb[0].mxu0
      %v3565 = vadd.f32 0.0, %v3564
      %v3566 = vpop.f32.mrb[0].mxu0
      %v3567 = vadd.f32 0.0, %v3566
      %v3568 = vpop.f32.mrb[0].mxu0
      %v3569 = vadd.f32 0.0, %v3568
      %v3570 = vpop.f32.mrb[0].mxu0
      %v3571 = vadd.f32 0.0, %v3570
      %3572 = vmatprep.mubr.bf16.mxu0 %v694
      %3573 = vmatmul.mubr.bf16.gmra.mrb[0].mxu0 %v693
      %v3574 = vpop.f32.mrb[0].mxu0
      %v3575 = vadd.f32 0.0, %v3574
      %v3576 = vpop.f32.mrb[0].mxu0
      %v3577 = vadd.f32 0.0, %v3576
      %v3578 = vpop.f32.mrb[0].mxu0
      %v3579 = vadd.f32 0.0, %v3578
      %v3580 = vpop.f32.mrb[0].mxu0
      %v3581 = vadd.f32 0.0, %v3580
      %3582 = vmatprep.mubr.bf16.mxu0 %v696
      %3583 = vmatmul.mubr.bf16.gmra.mrb[0].mxu0 %v695
      %v3584 = vpop.f32.mrb[0].mxu0
      %v3585 = vadd.f32 0.0, %v3584
      %v3586 = vpop.f32.mrb[0].mxu0
      %v3587 = vadd.f32 0.0, %v3586
      %v3588 = vpop.f32.mrb[0].mxu0
      %v3589 = vadd.f32 0.0, %v3588
      %v3590 = vpop.f32.mrb[0].mxu0
      %v3591 = vadd.f32 0.0, %v3590
      %3592 = vmatprep.mubr.bf16.mxu0 %v698
      %3593 = vmatmul.mubr.bf16.gmra.mrb[0].mxu0 %v697
      %v3594 = vpop.f32.mrb[0].mxu0
      %v3595 = vadd.f32 0.0, %v3594
      %v3596 = vpop.f32.mrb[0].mxu0
      %v3597 = vadd.f32 0.0, %v3596
      %v3598 = vpop.f32.mrb[0].mxu0
      %v3599 = vadd.f32 0.0, %v3598
      %v3600 = vpop.f32.mrb[0].mxu0
      %v3601 = vadd.f32 0.0, %v3600
      %3602 = vmatprep.mubr.bf16.mxu0 %v700
      %3603 = vmatmul.mubr.bf16.gmra.mrb[0].mxu0 %v699
      %v3604 = vpop.f32.mrb[0].mxu0
      %v3605 = vadd.f32 0.0, %v3604
      %v3606 = vpop.f32.mrb[0].mxu0
      %v3607 = vadd.f32 0.0, %v3606
      %v3608 = vpop.f32.mrb[0].mxu0
      %v3609 = vadd.f32 0.0, %v3608
      %v3610 = vpop.f32.mrb[0].mxu0
      %v3611 = vadd.f32 0.0, %v3610
      %3612 = vmatprep.mubr.bf16.mxu0 %v702
      %3613 = vmatmul.mubr.bf16.gmra.mrb[0].mxu0 %v701
      %v3614 = vpop.f32.mrb[0].mxu0
      %v3615 = vadd.f32 0.0, %v3614
      %v3616 = vpop.f32.mrb[0].mxu0
      %v3617 = vadd.f32 0.0, %v3616
      %v3618 = vpop.f32.mrb[0].mxu0
      %v3619 = vadd.f32 0.0, %v3618
      %v3620 = vpop.f32.mrb[0].mxu0
      %v3621 = vadd.f32 0.0, %v3620
      %3622 = vmatprep.mubr.bf16.mxu0 %v704
      %3623 = vmatmul.mubr.bf16.gmra.mrb[0].mxu0 %v703
      %v3624 = vpop.f32.mrb[0].mxu0
      %v3625 = vadd.f32 0.0, %v3624
      %v3626 = vpop.f32.mrb[0].mxu0
      %v3627 = vadd.f32 0.0, %v3626
      %v3628 = vpop.f32.mrb[0].mxu0
      %v3629 = vadd.f32 0.0, %v3628
      %v3630 = vpop.f32.mrb[0].mxu0
      %v3631 = vadd.f32 0.0, %v3630
      %3632 = vmatprep.mubr.bf16.mxu0 %v706
      %3633 = vmatmul.mubr.bf16.gmra.mrb[0].mxu0 %v705
      %v3634 = vpop.f32.mrb[0].mxu0
      %v3635 = vadd.f32 0.0, %v3634
      %v3636 = vpop.f32.mrb[0].mxu0
      %v3637 = vadd.f32 0.0, %v3636
      %v3638 = vpop.f32.mrb[0].mxu0
      %v3639 = vadd.f32 0.0, %v3638
      %v3640 = vpop.f32.mrb[0].mxu0
      %v3641 = vadd.f32 0.0, %v3640
      %3642 = vdwg.mxu0
      %3643 = vmatprep.subr.bf16.mxu0 %v1956
      %3644 = vmatpush1.bf16.msra.mxu0 %v1955
      %3645 = vmatprep.subr.bf16.mxu0 %v1981
      %3646 = vmatpush1.bf16.msra.mxu0 %v1980
      %3647 = vmatprep.subr.bf16.mxu0 %v2006
      %3648 = vmatpush1.bf16.msra.mxu0 %v2005
      %3649 = vmatprep.subr.bf16.mxu0 %v2031
      %3650 = vmatpush1.bf16.msra.mxu0 %v2030
      %3651 = vmatprep.subr.bf16.mxu0 %v2056
      %3652 = vmatpush1.bf16.msra.mxu0 %v2055
      %3653 = vmatprep.subr.bf16.mxu0 %v2081
      %3654 = vmatpush1.bf16.msra.mxu0 %v2080
      %3655 = vmatprep.subr.bf16.mxu0 %v2106
      %3656 = vmatpush1.bf16.msra.mxu0 %v2105
      %3657 = vmatprep.subr.bf16.mxu0 %v2131
      %3658 = vmatpush1.bf16.msra.mxu0 %v2130
      %3659 = vmatprep.subr.bf16.mxu0 %v2156
      %3660 = vmatpush1.bf16.msra.mxu0 %v2155
      %3661 = vmatprep.subr.bf16.mxu0 %v2181
      %3662 = vmatpush1.bf16.msra.mxu0 %v2180
      %3663 = vmatprep.subr.bf16.mxu0 %v2206
      %3664 = vmatpush1.bf16.msra.mxu0 %v2205
      %3665 = vmatprep.subr.bf16.mxu0 %v2231
      %3666 = vmatpush1.bf16.msra.mxu0 %v2230
      %3667 = vmatprep.subr.bf16.mxu0 %v2256
      %3668 = vmatpush1.bf16.msra.mxu0 %v2255
      %3669 = vmatprep.subr.bf16.mxu0 %v2281
      %3670 = vmatpush1.bf16.msra.mxu0 %v2280
      %3671 = vmatprep.subr.bf16.mxu0 %v2306
      %3672 = vmatpush1.bf16.msra.mxu0 %v2305
      %3673 = vmatprep.subr.bf16.mxu0 %v2331
      %3674 = vmatpush1.bf16.msra.mxu0 %v2330
      %3675 = vmatprep.mubr.bf16.mxu0 %v692
      %3676 = vmatmul.mubr.bf16.gmra.mrb[0].mxu0 %v691
      %v3677 = vpop.f32.mrb[0].mxu0
      %v3678 = vadd.f32 0.0, %v3677
      %v3679 = vpop.f32.mrb[0].mxu0
      %v3680 = vadd.f32 0.0, %v3679
      %v3681 = vpop.f32.mrb[0].mxu0
      %v3682 = vadd.f32 0.0, %v3681
      %v3683 = vpop.f32.mrb[0].mxu0
      %v3684 = vadd.f32 0.0, %v3683
      %3685 = vmatprep.mubr.bf16.mxu0 %v694
      %3686 = vmatmul.mubr.bf16.gmra.mrb[0].mxu0 %v693
      %v3687 = vpop.f32.mrb[0].mxu0
      %v3688 = vadd.f32 0.0, %v3687
      %v3689 = vpop.f32.mrb[0].mxu0
      %v3690 = vadd.f32 0.0, %v3689
      %v3691 = vpop.f32.mrb[0].mxu0
      %v3692 = vadd.f32 0.0, %v3691
      %v3693 = vpop.f32.mrb[0].mxu0
      %v3694 = vadd.f32 0.0, %v3693
      %3695 = vmatprep.mubr.bf16.mxu0 %v696
      %3696 = vmatmul.mubr.bf16.gmra.mrb[0].mxu0 %v695
      %v3697 = vpop.f32.mrb[0].mxu0
      %v3698 = vadd.f32 0.0, %v3697
      %v3699 = vpop.f32.mrb[0].mxu0
      %v3700 = vadd.f32 0.0, %v3699
      %v3701 = vpop.f32.mrb[0].mxu0
      %v3702 = vadd.f32 0.0, %v3701
      %v3703 = vpop.f32.mrb[0].mxu0
      %v3704 = vadd.f32 0.0, %v3703
      %3705 = vmatprep.mubr.bf16.mxu0 %v698
      %3706 = vmatmul.mubr.bf16.gmra.mrb[0].mxu0 %v697
      %v3707 = vpop.f32.mrb[0].mxu0
      %v3708 = vadd.f32 0.0, %v3707
      %v3709 = vpop.f32.mrb[0].mxu0
      %v3710 = vadd.f32 0.0, %v3709
      %v3711 = vpop.f32.mrb[0].mxu0
      %v3712 = vadd.f32 0.0, %v3711
      %v3713 = vpop.f32.mrb[0].mxu0
      %v3714 = vadd.f32 0.0, %v3713
      %3715 = vmatprep.mubr.bf16.mxu0 %v700
      %3716 = vmatmul.mubr.bf16.gmra.mrb[0].mxu0 %v699
      %v3717 = vpop.f32.mrb[0].mxu0
      %v3718 = vadd.f32 0.0, %v3717
      %v3719 = vpop.f32.mrb[0].mxu0
      %v3720 = vadd.f32 0.0, %v3719
      %v3721 = vpop.f32.mrb[0].mxu0
      %v3722 = vadd.f32 0.0, %v3721
      %v3723 = vpop.f32.mrb[0].mxu0
      %v3724 = vadd.f32 0.0, %v3723
      %3725 = vmatprep.mubr.bf16.mxu0 %v702
      %3726 = vmatmul.mubr.bf16.gmra.mrb[0].mxu0 %v701
      %v3727 = vpop.f32.mrb[0].mxu0
      %v3728 = vadd.f32 0.0, %v3727
      %v3729 = vpop.f32.mrb[0].mxu0
      %v3730 = vadd.f32 0.0, %v3729
      %v3731 = vpop.f32.mrb[0].mxu0
      %v3732 = vadd.f32 0.0, %v3731
      %v3733 = vpop.f32.mrb[0].mxu0
      %v3734 = vadd.f32 0.0, %v3733
      %3735 = vmatprep.mubr.bf16.mxu0 %v704
      %3736 = vmatmul.mubr.bf16.gmra.mrb[0].mxu0 %v703
      %v3737 = vpop.f32.mrb[0].mxu0
      %v3738 = vadd.f32 0.0, %v3737
      %v3739 = vpop.f32.mrb[0].mxu0
      %v3740 = vadd.f32 0.0, %v3739
      %v3741 = vpop.f32.mrb[0].mxu0
      %v3742 = vadd.f32 0.0, %v3741
      %v3743 = vpop.f32.mrb[0].mxu0
      %v3744 = vadd.f32 0.0, %v3743
      %3745 = vmatprep.mubr.bf16.mxu0 %v706
      %3746 = vmatmul.mubr.bf16.gmra.mrb[0].mxu0 %v705
      %v3747 = vpop.f32.mrb[0].mxu0
      %v3748 = vadd.f32 0.0, %v3747
      %v3749 = vpop.f32.mrb[0].mxu0
      %v3750 = vadd.f32 0.0, %v3749
      %v3751 = vpop.f32.mrb[0].mxu0
      %v3752 = vadd.f32 0.0, %v3751
      %v3753 = vpop.f32.mrb[0].mxu0
      %v3754 = vadd.f32 0.0, %v3753
      %3755 = vdwg.mxu0
      %3756 = vmatprep.subr.bf16.mxu0 %v1958
      %3757 = vmatpush1.bf16.msra.mxu0 %v1957
      %3758 = vmatprep.subr.bf16.mxu0 %v1983
      %3759 = vmatpush1.bf16.msra.mxu0 %v1982
      %3760 = vmatprep.subr.bf16.mxu0 %v2008
      %3761 = vmatpush1.bf16.msra.mxu0 %v2007
      %3762 = vmatprep.subr.bf16.mxu0 %v2033
      %3763 = vmatpush1.bf16.msra.mxu0 %v2032
      %3764 = vmatprep.subr.bf16.mxu0 %v2058
      %3765 = vmatpush1.bf16.msra.mxu0 %v2057
      %3766 = vmatprep.subr.bf16.mxu0 %v2083
      %3767 = vmatpush1.bf16.msra.mxu0 %v2082
      %3768 = vmatprep.subr.bf16.mxu0 %v2108
      %3769 = vmatpush1.bf16.msra.mxu0 %v2107
      %3770 = vmatprep.subr.bf16.mxu0 %v2133
      %3771 = vmatpush1.bf16.msra.mxu0 %v2132
      %3772 = vmatprep.subr.bf16.mxu0 %v2158
      %3773 = vmatpush1.bf16.msra.mxu0 %v2157
      %3774 = vmatprep.subr.bf16.mxu0 %v2183
      %3775 = vmatpush1.bf16.msra.mxu0 %v2182
      %3776 = vmatprep.subr.bf16.mxu0 %v2208
      %3777 = vmatpush1.bf16.msra.mxu0 %v2207
      %3778 = vmatprep.subr.bf16.mxu0 %v2233
      %3779 = vmatpush1.bf16.msra.mxu0 %v2232
      %3780 = vmatprep.subr.bf16.mxu0 %v2258
      %3781 = vmatpush1.bf16.msra.mxu0 %v2257
      %3782 = vmatprep.subr.bf16.mxu0 %v2283
      %3783 = vmatpush1.bf16.msra.mxu0 %v2282
      %3784 = vmatprep.subr.bf16.mxu0 %v2308
      %3785 = vmatpush1.bf16.msra.mxu0 %v2307
      %3786 = vmatprep.subr.bf16.mxu0 %v2333
      %3787 = vmatpush1.bf16.msra.mxu0 %v2332
      %3788 = vmatprep.mubr.bf16.mxu0 %v692
      %3789 = vmatmul.mubr.bf16.gmra.mrb[0].mxu0 %v691
      %v3790 = vpop.f32.mrb[0].mxu0
      %v3791 = vadd.f32 0.0, %v3790
      %v3792 = vpop.f32.mrb[0].mxu0
      %v3793 = vadd.f32 0.0, %v3792
      %v3794 = vpop.f32.mrb[0].mxu0
      %v3795 = vadd.f32 0.0, %v3794
      %v3796 = vpop.f32.mrb[0].mxu0
      %v3797 = vadd.f32 0.0, %v3796
      %3798 = vmatprep.mubr.bf16.mxu0 %v694
      %3799 = vmatmul.mubr.bf16.gmra.mrb[0].mxu0 %v693
      %v3800 = vpop.f32.mrb[0].mxu0
      %v3801 = vadd.f32 0.0, %v3800
      %v3802 = vpop.f32.mrb[0].mxu0
      %v3803 = vadd.f32 0.0, %v3802
      %v3804 = vpop.f32.mrb[0].mxu0
      %v3805 = vadd.f32 0.0, %v3804
      %v3806 = vpop.f32.mrb[0].mxu0
      %v3807 = vadd.f32 0.0, %v3806
      %3808 = vmatprep.mubr.bf16.mxu0 %v696
      %3809 = vmatmul.mubr.bf16.gmra.mrb[0].mxu0 %v695
      %v3810 = vpop.f32.mrb[0].mxu0
      %v3811 = vadd.f32 0.0, %v3810
      %v3812 = vpop.f32.mrb[0].mxu0
      %v3813 = vadd.f32 0.0, %v3812
      %v3814 = vpop.f32.mrb[0].mxu0
      %v3815 = vadd.f32 0.0, %v3814
      %v3816 = vpop.f32.mrb[0].mxu0
      %v3817 = vadd.f32 0.0, %v3816
      %3818 = vmatprep.mubr.bf16.mxu0 %v698
      %3819 = vmatmul.mubr.bf16.gmra.mrb[0].mxu0 %v697
      %v3820 = vpop.f32.mrb[0].mxu0
      %v3821 = vadd.f32 0.0, %v3820
      %v3822 = vpop.f32.mrb[0].mxu0
      %v3823 = vadd.f32 0.0, %v3822
      %v3824 = vpop.f32.mrb[0].mxu0
      %v3825 = vadd.f32 0.0, %v3824
      %v3826 = vpop.f32.mrb[0].mxu0
      %v3827 = vadd.f32 0.0, %v3826
      %3828 = vmatprep.mubr.bf16.mxu0 %v700
      %3829 = vmatmul.mubr.bf16.gmra.mrb[0].mxu0 %v699
      %v3830 = vpop.f32.mrb[0].mxu0
      %v3831 = vadd.f32 0.0, %v3830
      %v3832 = vpop.f32.mrb[0].mxu0
      %v3833 = vadd.f32 0.0, %v3832
      %v3834 = vpop.f32.mrb[0].mxu0
      %v3835 = vadd.f32 0.0, %v3834
      %v3836 = vpop.f32.mrb[0].mxu0
      %v3837 = vadd.f32 0.0, %v3836
      %3838 = vmatprep.mubr.bf16.mxu0 %v702
      %3839 = vmatmul.mubr.bf16.gmra.mrb[0].mxu0 %v701
      %v3840 = vpop.f32.mrb[0].mxu0
      %v3841 = vadd.f32 0.0, %v3840
      %v3842 = vpop.f32.mrb[0].mxu0
      %v3843 = vadd.f32 0.0, %v3842
      %v3844 = vpop.f32.mrb[0].mxu0
      %v3845 = vadd.f32 0.0, %v3844
      %v3846 = vpop.f32.mrb[0].mxu0
      %v3847 = vadd.f32 0.0, %v3846
      %3848 = vmatprep.mubr.bf16.mxu0 %v704
      %3849 = vmatmul.mubr.bf16.gmra.mrb[0].mxu0 %v703
      %v3850 = vpop.f32.mrb[0].mxu0
      %v3851 = vadd.f32 0.0, %v3850
      %v3852 = vpop.f32.mrb[0].mxu0
      %v3853 = vadd.f32 0.0, %v3852
      %v3854 = vpop.f32.mrb[0].mxu0
      %v3855 = vadd.f32 0.0, %v3854
      %v3856 = vpop.f32.mrb[0].mxu0
      %v3857 = vadd.f32 0.0, %v3856
      %3858 = vmatprep.mubr.bf16.mxu0 %v706
      %3859 = vmatmul.mubr.bf16.gmra.mrb[0].mxu0 %v705
      %v3860 = vpop.f32.mrb[0].mxu0
      %v3861 = vadd.f32 0.0, %v3860
      %v3862 = vpop.f32.mrb[0].mxu0
      %v3863 = vadd.f32 0.0, %v3862
      %v3864 = vpop.f32.mrb[0].mxu0
      %v3865 = vadd.f32 0.0, %v3864
      %v3866 = vpop.f32.mrb[0].mxu0
      %v3867 = vadd.f32 0.0, %v3866
      %3868 = vdwg.mxu0
      %3869 = vmatprep.subr.bf16.mxu0 %v1960
      %3870 = vmatpush1.bf16.msra.mxu0 %v1959
      %3871 = vmatprep.subr.bf16.mxu0 %v1985
      %3872 = vmatpush1.bf16.msra.mxu0 %v1984
      %3873 = vmatprep.subr.bf16.mxu0 %v2010
      %3874 = vmatpush1.bf16.msra.mxu0 %v2009
      %3875 = vmatprep.subr.bf16.mxu0 %v2035
      %3876 = vmatpush1.bf16.msra.mxu0 %v2034
      %3877 = vmatprep.subr.bf16.mxu0 %v2060
      %3878 = vmatpush1.bf16.msra.mxu0 %v2059
      %3879 = vmatprep.subr.bf16.mxu0 %v2085
      %3880 = vmatpush1.bf16.msra.mxu0 %v2084
      %3881 = vmatprep.subr.bf16.mxu0 %v2110
      %3882 = vmatpush1.bf16.msra.mxu0 %v2109
      %3883 = vmatprep.subr.bf16.mxu0 %v2135
      %3884 = vmatpush1.bf16.msra.mxu0 %v2134
      %3885 = vmatprep.subr.bf16.mxu0 %v2160
      %3886 = vmatpush1.bf16.msra.mxu0 %v2159
      %3887 = vmatprep.subr.bf16.mxu0 %v2185
      %3888 = vmatpush1.bf16.msra.mxu0 %v2184
      %3889 = vmatprep.subr.bf16.mxu0 %v2210
      %3890 = vmatpush1.bf16.msra.mxu0 %v2209
      %3891 = vmatprep.subr.bf16.mxu0 %v2235
      %3892 = vmatpush1.bf16.msra.mxu0 %v2234
      %3893 = vmatprep.subr.bf16.mxu0 %v2260
      %3894 = vmatpush1.bf16.msra.mxu0 %v2259
      %3895 = vmatprep.subr.bf16.mxu0 %v2285
      %3896 = vmatpush1.bf16.msra.mxu0 %v2284
      %3897 = vmatprep.subr.bf16.mxu0 %v2310
      %3898 = vmatpush1.bf16.msra.mxu0 %v2309
      %3899 = vmatprep.subr.bf16.mxu0 %v2335
      %3900 = vmatpush1.bf16.msra.mxu0 %v2334
      %3901 = vmatprep.mubr.bf16.mxu0 %v692
      %3902 = vmatmul.mubr.bf16.gmra.mrb[0].mxu0 %v691
      %v3903 = vpop.f32.mrb[0].mxu0
      %v3904 = vadd.f32 0.0, %v3903
      %v3905 = vpop.f32.mrb[0].mxu0
      %v3906 = vadd.f32 0.0, %v3905
      %v3907 = vpop.f32.mrb[0].mxu0
      %v3908 = vadd.f32 0.0, %v3907
      %v3909 = vpop.f32.mrb[0].mxu0
      %v3910 = vadd.f32 0.0, %v3909
      %3911 = vmatprep.mubr.bf16.mxu0 %v694
      %3912 = vmatmul.mubr.bf16.gmra.mrb[0].mxu0 %v693
      %v3913 = vpop.f32.mrb[0].mxu0
      %v3914 = vadd.f32 0.0, %v3913
      %v3915 = vpop.f32.mrb[0].mxu0
      %v3916 = vadd.f32 0.0, %v3915
      %v3917 = vpop.f32.mrb[0].mxu0
      %v3918 = vadd.f32 0.0, %v3917
      %v3919 = vpop.f32.mrb[0].mxu0
      %v3920 = vadd.f32 0.0, %v3919
      %3921 = vmatprep.mubr.bf16.mxu0 %v696
      %3922 = vmatmul.mubr.bf16.gmra.mrb[0].mxu0 %v695
      %v3923 = vpop.f32.mrb[0].mxu0
      %v3924 = vadd.f32 0.0, %v3923
      %v3925 = vpop.f32.mrb[0].mxu0
      %v3926 = vadd.f32 0.0, %v3925
      %v3927 = vpop.f32.mrb[0].mxu0
      %v3928 = vadd.f32 0.0, %v3927
      %v3929 = vpop.f32.mrb[0].mxu0
      %v3930 = vadd.f32 0.0, %v3929
      %3931 = vmatprep.mubr.bf16.mxu0 %v698
      %3932 = vmatmul.mubr.bf16.gmra.mrb[0].mxu0 %v697
      %v3933 = vpop.f32.mrb[0].mxu0
      %v3934 = vadd.f32 0.0, %v3933
      %v3935 = vpop.f32.mrb[0].mxu0
      %v3936 = vadd.f32 0.0, %v3935
      %v3937 = vpop.f32.mrb[0].mxu0
      %v3938 = vadd.f32 0.0, %v3937
      %v3939 = vpop.f32.mrb[0].mxu0
      %v3940 = vadd.f32 0.0, %v3939
      %3941 = vmatprep.mubr.bf16.mxu0 %v700
      %3942 = vmatmul.mubr.bf16.gmra.mrb[0].mxu0 %v699
      %v3943 = vpop.f32.mrb[0].mxu0
      %v3944 = vadd.f32 0.0, %v3943
      %v3945 = vpop.f32.mrb[0].mxu0
      %v3946 = vadd.f32 0.0, %v3945
      %v3947 = vpop.f32.mrb[0].mxu0
      %v3948 = vadd.f32 0.0, %v3947
      %v3949 = vpop.f32.mrb[0].mxu0
      %v3950 = vadd.f32 0.0, %v3949
      %3951 = vmatprep.mubr.bf16.mxu0 %v702
      %3952 = vmatmul.mubr.bf16.gmra.mrb[0].mxu0 %v701
      %v3953 = vpop.f32.mrb[0].mxu0
      %v3954 = vadd.f32 0.0, %v3953
      %v3955 = vpop.f32.mrb[0].mxu0
      %v3956 = vadd.f32 0.0, %v3955
      %v3957 = vpop.f32.mrb[0].mxu0
      %v3958 = vadd.f32 0.0, %v3957
      %v3959 = vpop.f32.mrb[0].mxu0
      %v3960 = vadd.f32 0.0, %v3959
      %3961 = vmatprep.mubr.bf16.mxu0 %v704
      %3962 = vmatmul.mubr.bf16.gmra.mrb[0].mxu0 %v703
      %v3963 = vpop.f32.mrb[0].mxu0
      %v3964 = vadd.f32 0.0, %v3963
      %v3965 = vpop.f32.mrb[0].mxu0
      %v3966 = vadd.f32 0.0, %v3965
      %v3967 = vpop.f32.mrb[0].mxu0
      %v3968 = vadd.f32 0.0, %v3967
      %v3969 = vpop.f32.mrb[0].mxu0
      %v3970 = vadd.f32 0.0, %v3969
      %3971 = vmatprep.mubr.bf16.mxu0 %v706
      %3972 = vmatmul.mubr.bf16.gmra.mrb[0].mxu0 %v705
      %v3973 = vpop.f32.mrb[0].mxu0
      %v3974 = vadd.f32 0.0, %v3973
      %v3975 = vpop.f32.mrb[0].mxu0
      %v3976 = vadd.f32 0.0, %v3975
      %v3977 = vpop.f32.mrb[0].mxu0
      %v3978 = vadd.f32 0.0, %v3977
      %v3979 = vpop.f32.mrb[0].mxu0
      %v3980 = vadd.f32 0.0, %v3979
      %3981 = vdwg.mxu0
      %3982 = vmatprep.subr.bf16.mxu0 %v1962
      %3983 = vmatpush1.bf16.msra.mxu0 %v1961
      %3984 = vmatprep.subr.bf16.mxu0 %v1987
      %3985 = vmatpush1.bf16.msra.mxu0 %v1986
      %3986 = vmatprep.subr.bf16.mxu0 %v2012
      %3987 = vmatpush1.bf16.msra.mxu0 %v2011
      %3988 = vmatprep.subr.bf16.mxu0 %v2037
      %3989 = vmatpush1.bf16.msra.mxu0 %v2036
      %3990 = vmatprep.subr.bf16.mxu0 %v2062
      %3991 = vmatpush1.bf16.msra.mxu0 %v2061
      %3992 = vmatprep.subr.bf16.mxu0 %v2087
      %3993 = vmatpush1.bf16.msra.mxu0 %v2086
      %3994 = vmatprep.subr.bf16.mxu0 %v2112
      %3995 = vmatpush1.bf16.msra.mxu0 %v2111
      %3996 = vmatprep.subr.bf16.mxu0 %v2137
      %3997 = vmatpush1.bf16.msra.mxu0 %v2136
      %3998 = vmatprep.subr.bf16.mxu0 %v2162
      %3999 = vmatpush1.bf16.msra.mxu0 %v2161
      %4000 = vmatprep.subr.bf16.mxu0 %v2187
      %4001 = vmatpush1.bf16.msra.mxu0 %v2186
      %4002 = vmatprep.subr.bf16.mxu0 %v2212
      %4003 = vmatpush1.bf16.msra.mxu0 %v2211
      %4004 = vmatprep.subr.bf16.mxu0 %v2237
      %4005 = vmatpush1.bf16.msra.mxu0 %v2236
      %4006 = vmatprep.subr.bf16.mxu0 %v2262
      %4007 = vmatpush1.bf16.msra.mxu0 %v2261
      %4008 = vmatprep.subr.bf16.mxu0 %v2287
      %4009 = vmatpush1.bf16.msra.mxu0 %v2286
      %4010 = vmatprep.subr.bf16.mxu0 %v2312
      %4011 = vmatpush1.bf16.msra.mxu0 %v2311
      %4012 = vmatprep.subr.bf16.mxu0 %v2337
      %4013 = vmatpush1.bf16.msra.mxu0 %v2336
      %4014 = vmatprep.mubr.bf16.mxu0 %v692
      %4015 = vmatmul.mubr.bf16.gmra.mrb[0].mxu0 %v691
      %v4016 = vpop.f32.mrb[0].mxu0
      %v4017 = vadd.f32 0.0, %v4016
      %v4018 = vpop.f32.mrb[0].mxu0
      %v4019 = vadd.f32 0.0, %v4018
      %v4020 = vpop.f32.mrb[0].mxu0
      %v4021 = vadd.f32 0.0, %v4020
      %v4022 = vpop.f32.mrb[0].mxu0
      %v4023 = vadd.f32 0.0, %v4022
      %4024 = vmatprep.mubr.bf16.mxu0 %v694
      %4025 = vmatmul.mubr.bf16.gmra.mrb[0].mxu0 %v693
      %v4026 = vpop.f32.mrb[0].mxu0
      %v4027 = vadd.f32 0.0, %v4026
      %v4028 = vpop.f32.mrb[0].mxu0
      %v4029 = vadd.f32 0.0, %v4028
      %v4030 = vpop.f32.mrb[0].mxu0
      %v4031 = vadd.f32 0.0, %v4030
      %v4032 = vpop.f32.mrb[0].mxu0
      %v4033 = vadd.f32 0.0, %v4032
      %4034 = vmatprep.mubr.bf16.mxu0 %v696
      %4035 = vmatmul.mubr.bf16.gmra.mrb[0].mxu0 %v695
      %v4036 = vpop.f32.mrb[0].mxu0
      %v4037 = vadd.f32 0.0, %v4036
      %v4038 = vpop.f32.mrb[0].mxu0
      %v4039 = vadd.f32 0.0, %v4038
      %v4040 = vpop.f32.mrb[0].mxu0
      %v4041 = vadd.f32 0.0, %v4040
      %v4042 = vpop.f32.mrb[0].mxu0
      %v4043 = vadd.f32 0.0, %v4042
      %4044 = vmatprep.mubr.bf16.mxu0 %v698
      %4045 = vmatmul.mubr.bf16.gmra.mrb[0].mxu0 %v697
      %v4046 = vpop.f32.mrb[0].mxu0
      %v4047 = vadd.f32 0.0, %v4046
      %v4048 = vpop.f32.mrb[0].mxu0
      %v4049 = vadd.f32 0.0, %v4048
      %v4050 = vpop.f32.mrb[0].mxu0
      %v4051 = vadd.f32 0.0, %v4050
      %v4052 = vpop.f32.mrb[0].mxu0
      %v4053 = vadd.f32 0.0, %v4052
      %4054 = vmatprep.mubr.bf16.mxu0 %v700
      %4055 = vmatmul.mubr.bf16.gmra.mrb[0].mxu0 %v699
      %v4056 = vpop.f32.mrb[0].mxu0
      %v4057 = vadd.f32 0.0, %v4056
      %v4058 = vpop.f32.mrb[0].mxu0
      %v4059 = vadd.f32 0.0, %v4058
      %v4060 = vpop.f32.mrb[0].mxu0
      %v4061 = vadd.f32 0.0, %v4060
      %v4062 = vpop.f32.mrb[0].mxu0
      %v4063 = vadd.f32 0.0, %v4062
      %4064 = vmatprep.mubr.bf16.mxu0 %v702
      %4065 = vmatmul.mubr.bf16.gmra.mrb[0].mxu0 %v701
      %v4066 = vpop.f32.mrb[0].mxu0
      %v4067 = vadd.f32 0.0, %v4066
      %v4068 = vpop.f32.mrb[0].mxu0
      %v4069 = vadd.f32 0.0, %v4068
      %v4070 = vpop.f32.mrb[0].mxu0
      %v4071 = vadd.f32 0.0, %v4070
      %v4072 = vpop.f32.mrb[0].mxu0
      %v4073 = vadd.f32 0.0, %v4072
      %4074 = vmatprep.mubr.bf16.mxu0 %v704
      %4075 = vmatmul.mubr.bf16.gmra.mrb[0].mxu0 %v703
      %v4076 = vpop.f32.mrb[0].mxu0
      %v4077 = vadd.f32 0.0, %v4076
      %v4078 = vpop.f32.mrb[0].mxu0
      %v4079 = vadd.f32 0.0, %v4078
      %v4080 = vpop.f32.mrb[0].mxu0
      %v4081 = vadd.f32 0.0, %v4080
      %v4082 = vpop.f32.mrb[0].mxu0
      %v4083 = vadd.f32 0.0, %v4082
      %4084 = vmatprep.mubr.bf16.mxu0 %v706
      %4085 = vmatmul.mubr.bf16.gmra.mrb[0].mxu0 %v705
      %v4086 = vpop.f32.mrb[0].mxu0
      %v4087 = vadd.f32 0.0, %v4086
      %v4088 = vpop.f32.mrb[0].mxu0
      %v4089 = vadd.f32 0.0, %v4088
      %v4090 = vpop.f32.mrb[0].mxu0
      %v4091 = vadd.f32 0.0, %v4090
      %v4092 = vpop.f32.mrb[0].mxu0
      %v4093 = vadd.f32 0.0, %v4092
      %4094 = vdwg.mxu0
      %4095 = vmatprep.subr.bf16.mxu0 0
      %4096 = vmatpush1.bf16.msra.mxu0 %v1963
      %4097 = vmatprep.subr.bf16.mxu0 0
      %4098 = vmatpush1.bf16.msra.mxu0 %v1988
      %4099 = vmatprep.subr.bf16.mxu0 0
      %4100 = vmatpush1.bf16.msra.mxu0 %v2013
      %4101 = vmatprep.subr.bf16.mxu0 0
      %4102 = vmatpush1.bf16.msra.mxu0 %v2038
      %4103 = vmatprep.subr.bf16.mxu0 0
      %4104 = vmatpush1.bf16.msra.mxu0 %v2063
      %4105 = vmatprep.subr.bf16.mxu0 0
      %4106 = vmatpush1.bf16.msra.mxu0 %v2088
      %4107 = vmatprep.subr.bf16.mxu0 0
      %4108 = vmatpush1.bf16.msra.mxu0 %v2113
      %4109 = vmatprep.subr.bf16.mxu0 0
      %4110 = vmatpush1.bf16.msra.mxu0 %v2138
      %4111 = vmatprep.subr.bf16.mxu0 0
      %4112 = vmatpush1.bf16.msra.mxu0 %v2163
      %4113 = vmatprep.subr.bf16.mxu0 0
      %4114 = vmatpush1.bf16.msra.mxu0 %v2188
      %4115 = vmatprep.subr.bf16.mxu0 0
      %4116 = vmatpush1.bf16.msra.mxu0 %v2213
      %4117 = vmatprep.subr.bf16.mxu0 0
      %4118 = vmatpush1.bf16.msra.mxu0 %v2238
      %4119 = vmatprep.subr.bf16.mxu0 0
      %4120 = vmatpush1.bf16.msra.mxu0 %v2263
      %4121 = vmatprep.subr.bf16.mxu0 0
      %4122 = vmatpush1.bf16.msra.mxu0 %v2288
      %4123 = vmatprep.subr.bf16.mxu0 0
      %4124 = vmatpush1.bf16.msra.mxu0 %v2313
      %4125 = vmatprep.subr.bf16.mxu0 0
      %4126 = vmatpush1.bf16.msra.mxu0 %v2338
      %4127 = vmatprep.mubr.bf16.mxu0 %v692
      %4128 = vmatmul.mubr.bf16.gmra.mrb[0].mxu0 %v691
      %v4129 = vpop.f32.mrb[0].mxu0
      %v4130 = vadd.f32 0.0, %v4129
      %v4131 = vpop.f32.mrb[0].mxu0
      %v4132 = vpop.f32.mrb[0].mxu0
      %v4133 = vadd.f32 0.0, %v4132
      %v4134 = vpop.f32.mrb[0].mxu0
      %4135 = vmatprep.mubr.bf16.mxu0 %v694
      %4136 = vmatmul.mubr.bf16.gmra.mrb[0].mxu0 %v693
      %v4137 = vpop.f32.mrb[0].mxu0
      %v4138 = vadd.f32 0.0, %v4137
      %v4139 = vpop.f32.mrb[0].mxu0
      %v4140 = vpop.f32.mrb[0].mxu0
      %v4141 = vadd.f32 0.0, %v4140
      %v4142 = vpop.f32.mrb[0].mxu0
      %4143 = vmatprep.mubr.bf16.mxu0 %v696
      %4144 = vmatmul.mubr.bf16.gmra.mrb[0].mxu0 %v695
      %v4145 = vpop.f32.mrb[0].mxu0
      %v4146 = vadd.f32 0.0, %v4145
      %v4147 = vpop.f32.mrb[0].mxu0
      %v4148 = vpop.f32.mrb[0].mxu0
      %v4149 = vadd.f32 0.0, %v4148
      %v4150 = vpop.f32.mrb[0].mxu0
      %4151 = vmatprep.mubr.bf16.mxu0 %v698
      %4152 = vmatmul.mubr.bf16.gmra.mrb[0].mxu0 %v697
      %v4153 = vpop.f32.mrb[0].mxu0
      %v4154 = vadd.f32 0.0, %v4153
      %v4155 = vpop.f32.mrb[0].mxu0
      %v4156 = vpop.f32.mrb[0].mxu0
      %v4157 = vadd.f32 0.0, %v4156
      %v4158 = vpop.f32.mrb[0].mxu0
      %4159 = vmatprep.mubr.bf16.mxu0 %v700
      %4160 = vmatmul.mubr.bf16.gmra.mrb[0].mxu0 %v699
      %v4161 = vpop.f32.mrb[0].mxu0
      %v4162 = vadd.f32 0.0, %v4161
      %v4163 = vpop.f32.mrb[0].mxu0
      %v4164 = vpop.f32.mrb[0].mxu0
      %v4165 = vadd.f32 0.0, %v4164
      %v4166 = vpop.f32.mrb[0].mxu0
      %4167 = vmatprep.mubr.bf16.mxu0 %v702
      %4168 = vmatmul.mubr.bf16.gmra.mrb[0].mxu0 %v701
      %v4169 = vpop.f32.mrb[0].mxu0
      %v4170 = vadd.f32 0.0, %v4169
      %v4171 = vpop.f32.mrb[0].mxu0
      %v4172 = vpop.f32.mrb[0].mxu0
      %v4173 = vadd.f32 0.0, %v4172
      %v4174 = vpop.f32.mrb[0].mxu0
      %4175 = vmatprep.mubr.bf16.mxu0 %v704
      %4176 = vmatmul.mubr.bf16.gmra.mrb[0].mxu0 %v703
      %v4177 = vpop.f32.mrb[0].mxu0
      %v4178 = vadd.f32 0.0, %v4177
      %v4179 = vpop.f32.mrb[0].mxu0
      %v4180 = vpop.f32.mrb[0].mxu0
      %v4181 = vadd.f32 0.0, %v4180
      %v4182 = vpop.f32.mrb[0].mxu0
      %4183 = vmatprep.mubr.bf16.mxu0 %v706
      %4184 = vmatmul.mubr.bf16.gmra.mrb[0].mxu0 %v705
      %v4185 = vpop.f32.mrb[0].mxu0
      %v4186 = vadd.f32 0.0, %v4185
      %v4187 = vpop.f32.mrb[0].mxu0
      %v4188 = vpop.f32.mrb[0].mxu0
      %v4189 = vadd.f32 0.0, %v4188
      %v4190 = vpop.f32.mrb[0].mxu0
      %4191 = vdwg.mxu0
      %v4192 = vmax.f32 %v2774, %v2794
      %v4193 = vmax.f32 %v2776, %v2796
      %v4194 = vmax.f32 %v2887, %v2907
      %v4195 = vmax.f32 %v2889, %v2909
      %v4196 = vmax.f32 %v3000, %v3020
      %v4197 = vmax.f32 %v3002, %v3022
      %v4198 = vmax.f32 %v3113, %v3133
      %v4199 = vmax.f32 %v3115, %v3135
      %v4200 = vmax.f32 %v3226, %v3246
      %v4201 = vmax.f32 %v3228, %v3248
      %v4202 = vmax.f32 %v3339, %v3359
      %v4203 = vmax.f32 %v3341, %v3361
      %v4204 = vmax.f32 %v3452, %v3472
      %v4205 = vmax.f32 %v3454, %v3474
      %v4206 = vmax.f32 %v3565, %v3585
      %v4207 = vmax.f32 %v3567, %v3587
      %v4208 = vmax.f32 %v3678, %v3698
      %v4209 = vmax.f32 %v3680, %v3700
      %v4210 = vmax.f32 %v3791, %v3811
      %v4211 = vmax.f32 %v3793, %v3813
      %v4212 = vmax.f32 %v3904, %v3924
      %v4213 = vmax.f32 %v3906, %v3926
      %v4214 = vmax.f32 %v4017, %v4037
      %v4215 = vmax.f32 %v4019, %v4039
      %v4216 = vmax.f32 %v4130, %v4146
      %v4217 = vmax.f32 %v2778, %v2798
      %v4218 = vmax.f32 %v2780, %v2800
      %v4219 = vmax.f32 %v2891, %v2911
      %v4220 = vmax.f32 %v2893, %v2913
      %v4221 = vmax.f32 %v3004, %v3024
      %v4222 = vmax.f32 %v3006, %v3026
      %v4223 = vmax.f32 %v3117, %v3137
      %v4224 = vmax.f32 %v3119, %v3139
      %v4225 = vmax.f32 %v3230, %v3250
      %v4226 = vmax.f32 %v3232, %v3252
      %v4227 = vmax.f32 %v3343, %v3363
      %v4228 = vmax.f32 %v3345, %v3365
      %v4229 = vmax.f32 %v3456, %v3476
      %v4230 = vmax.f32 %v3458, %v3478
      %v4231 = vmax.f32 %v3569, %v3589
      %v4232 = vmax.f32 %v3571, %v3591
      %v4233 = vmax.f32 %v3682, %v3702
      %v4234 = vmax.f32 %v3684, %v3704
      %v4235 = vmax.f32 %v3795, %v3815
      %v4236 = vmax.f32 %v3797, %v3817
      %v4237 = vmax.f32 %v3908, %v3928
      %v4238 = vmax.f32 %v3910, %v3930
      %v4239 = vmax.f32 %v4021, %v4041
      %v4240 = vmax.f32 %v4023, %v4043
      %v4241 = vmax.f32 %v4133, %v4149
      %v4242 = vmax.f32 %v2784, %v2804
      %v4243 = vmax.f32 %v2786, %v2806
      %v4244 = vmax.f32 %v2897, %v2917
      %v4245 = vmax.f32 %v2899, %v2919
      %v4246 = vmax.f32 %v3010, %v3030
      %v4247 = vmax.f32 %v3012, %v3032
      %v4248 = vmax.f32 %v3123, %v3143
      %v4249 = vmax.f32 %v3125, %v3145
      %v4250 = vmax.f32 %v3236, %v3256
      %v4251 = vmax.f32 %v3238, %v3258
      %v4252 = vmax.f32 %v3349, %v3369
      %v4253 = vmax.f32 %v3351, %v3371
      %v4254 = vmax.f32 %v3462, %v3482
      %v4255 = vmax.f32 %v3464, %v3484
      %v4256 = vmax.f32 %v3575, %v3595
      %v4257 = vmax.f32 %v3577, %v3597
      %v4258 = vmax.f32 %v3688, %v3708
      %v4259 = vmax.f32 %v3690, %v3710
      %v4260 = vmax.f32 %v3801, %v3821
      %v4261 = vmax.f32 %v3803, %v3823
      %v4262 = vmax.f32 %v3914, %v3934
      %v4263 = vmax.f32 %v3916, %v3936
      %v4264 = vmax.f32 %v4027, %v4047
      %v4265 = vmax.f32 %v4029, %v4049
      %v4266 = vmax.f32 %v4138, %v4154
      %v4267 = vmax.f32 %v2788, %v2808
      %v4268 = vmax.f32 %v2790, %v2810
      %v4269 = vmax.f32 %v2901, %v2921
      %v4270 = vmax.f32 %v2903, %v2923
      %v4271 = vmax.f32 %v3014, %v3034
      %v4272 = vmax.f32 %v3016, %v3036
      %v4273 = vmax.f32 %v3127, %v3147
      %v4274 = vmax.f32 %v3129, %v3149
      %v4275 = vmax.f32 %v3240, %v3260
      %v4276 = vmax.f32 %v3242, %v3262
      %v4277 = vmax.f32 %v3353, %v3373
      %v4278 = vmax.f32 %v3355, %v3375
      %v4279 = vmax.f32 %v3466, %v3486
      %v4280 = vmax.f32 %v3468, %v3488
      %v4281 = vmax.f32 %v3579, %v3599
      %v4282 = vmax.f32 %v3581, %v3601
      %v4283 = vmax.f32 %v3692, %v3712
      %v4284 = vmax.f32 %v3694, %v3714
      %v4285 = vmax.f32 %v3805, %v3825
      %v4286 = vmax.f32 %v3807, %v3827
      %v4287 = vmax.f32 %v3918, %v3938
      %v4288 = vmax.f32 %v3920, %v3940
      %v4289 = vmax.f32 %v4031, %v4051
      %v4290 = vmax.f32 %v4033, %v4053
      %v4291 = vmax.f32 %v4141, %v4157
      %v4292 = vmax.f32 %v2814, %v2834
      %v4293 = vmax.f32 %v2816, %v2836
      %v4294 = vmax.f32 %v2927, %v2947
      %v4295 = vmax.f32 %v2929, %v2949
      %v4296 = vmax.f32 %v3040, %v3060
      %v4297 = vmax.f32 %v3042, %v3062
      %v4298 = vmax.f32 %v3153, %v3173
      %v4299 = vmax.f32 %v3155, %v3175
      %v4300 = vmax.f32 %v3266, %v3286
      %v4301 = vmax.f32 %v3268, %v3288
      %v4302 = vmax.f32 %v3379, %v3399
      %v4303 = vmax.f32 %v3381, %v3401
      %v4304 = vmax.f32 %v3492, %v3512
      %v4305 = vmax.f32 %v3494, %v3514
      %v4306 = vmax.f32 %v3605, %v3625
      %v4307 = vmax.f32 %v3607, %v3627
      %v4308 = vmax.f32 %v3718, %v3738
      %v4309 = vmax.f32 %v3720, %v3740
      %v4310 = vmax.f32 %v3831, %v3851
      %v4311 = vmax.f32 %v3833, %v3853
      %v4312 = vmax.f32 %v3944, %v3964
      %v4313 = vmax.f32 %v3946, %v3966
      %v4314 = vmax.f32 %v4057, %v4077
      %v4315 = vmax.f32 %v4059, %v4079
      %v4316 = vmax.f32 %v4162, %v4178
      %v4317 = vmax.f32 %v2818, %v2838
      %v4318 = vmax.f32 %v2820, %v2840
      %v4319 = vmax.f32 %v2931, %v2951
      %v4320 = vmax.f32 %v2933, %v2953
      %v4321 = vmax.f32 %v3044, %v3064
      %v4322 = vmax.f32 %v3046, %v3066
      %v4323 = vmax.f32 %v3157, %v3177
      %v4324 = vmax.f32 %v3159, %v3179
      %v4325 = vmax.f32 %v3270, %v3290
      %v4326 = vmax.f32 %v3272, %v3292
      %v4327 = vmax.f32 %v3383, %v3403
      %v4328 = vmax.f32 %v3385, %v3405
      %v4329 = vmax.f32 %v3496, %v3516
      %v4330 = vmax.f32 %v3498, %v3518
      %v4331 = vmax.f32 %v3609, %v3629
      %v4332 = vmax.f32 %v3611, %v3631
      %v4333 = vmax.f32 %v3722, %v3742
      %v4334 = vmax.f32 %v3724, %v3744
      %v4335 = vmax.f32 %v3835, %v3855
      %v4336 = vmax.f32 %v3837, %v3857
      %v4337 = vmax.f32 %v3948, %v3968
      %v4338 = vmax.f32 %v3950, %v3970
      %v4339 = vmax.f32 %v4061, %v4081
      %v4340 = vmax.f32 %v4063, %v4083
      %v4341 = vmax.f32 %v4165, %v4181
      %v4342 = vmax.f32 %v2824, %v2844
      %v4343 = vmax.f32 %v2826, %v2846
      %v4344 = vmax.f32 %v2937, %v2957
      %v4345 = vmax.f32 %v2939, %v2959
      %v4346 = vmax.f32 %v3050, %v3070
      %v4347 = vmax.f32 %v3052, %v3072
      %v4348 = vmax.f32 %v3163, %v3183
      %v4349 = vmax.f32 %v3165, %v3185
      %v4350 = vmax.f32 %v3276, %v3296
      %v4351 = vmax.f32 %v3278, %v3298
      %v4352 = vmax.f32 %v3389, %v3409
      %v4353 = vmax.f32 %v3391, %v3411
      %v4354 = vmax.f32 %v3502, %v3522
      %v4355 = vmax.f32 %v3504, %v3524
      %v4356 = vmax.f32 %v3615, %v3635
      %v4357 = vmax.f32 %v3617, %v3637
      %v4358 = vmax.f32 %v3728, %v3748
      %v4359 = vmax.f32 %v3730, %v3750
      %v4360 = vmax.f32 %v3841, %v3861
      %v4361 = vmax.f32 %v3843, %v3863
      %v4362 = vmax.f32 %v3954, %v3974
      %v4363 = vmax.f32 %v3956, %v3976
      %v4364 = vmax.f32 %v4067, %v4087
      %v4365 = vmax.f32 %v4069, %v4089
      %v4366 = vmax.f32 %v4170, %v4186
      %v4367 = vmax.f32 %v2828, %v2848
      %v4368 = vmax.f32 %v2830, %v2850
      %v4369 = vmax.f32 %v2941, %v2961
      %v4370 = vmax.f32 %v2943, %v2963
      %v4371 = vmax.f32 %v3054, %v3074
      %v4372 = vmax.f32 %v3056, %v3076
      %v4373 = vmax.f32 %v3167, %v3187
      %v4374 = vmax.f32 %v3169, %v3189
      %v4375 = vmax.f32 %v3280, %v3300
      %v4376 = vmax.f32 %v3282, %v3302
      %v4377 = vmax.f32 %v3393, %v3413
      %v4378 = vmax.f32 %v3395, %v3415
      %v4379 = vmax.f32 %v3506, %v3526
      %v4380 = vmax.f32 %v3508, %v3528
      %v4381 = vmax.f32 %v3619, %v3639
      %v4382 = vmax.f32 %v3621, %v3641
      %v4383 = vmax.f32 %v3732, %v3752
      %v4384 = vmax.f32 %v3734, %v3754
      %v4385 = vmax.f32 %v3845, %v3865
      %v4386 = vmax.f32 %v3847, %v3867
      %v4387 = vmax.f32 %v3958, %v3978
      %v4388 = vmax.f32 %v3960, %v3980
      %v4389 = vmax.f32 %v4071, %v4091
      %v4390 = vmax.f32 %v4073, %v4093
      %v4391 = vmax.f32 %v4173, %v4189
      %v4392 = vmax.f32 %v4192, %v4292
      %v4393 = vmax.f32 %v4193, %v4293
      %v4394 = vmax.f32 %v4194, %v4294
      %v4395 = vmax.f32 %v4195, %v4295
      %v4396 = vmax.f32 %v4196, %v4296
      %v4397 = vmax.f32 %v4197, %v4297
      %v4398 = vmax.f32 %v4198, %v4298
      %v4399 = vmax.f32 %v4199, %v4299
      %v4400 = vmax.f32 %v4200, %v4300
      %v4401 = vmax.f32 %v4201, %v4301
      %v4402 = vmax.f32 %v4202, %v4302
      %v4403 = vmax.f32 %v4203, %v4303
      %v4404 = vmax.f32 %v4204, %v4304
      %v4405 = vmax.f32 %v4205, %v4305
      %v4406 = vmax.f32 %v4206, %v4306
      %v4407 = vmax.f32 %v4207, %v4307
      %v4408 = vmax.f32 %v4208, %v4308
      %v4409 = vmax.f32 %v4209, %v4309
      %v4410 = vmax.f32 %v4210, %v4310
      %v4411 = vmax.f32 %v4211, %v4311
      %v4412 = vmax.f32 %v4212, %v4312
      %v4413 = vmax.f32 %v4213, %v4313
      %v4414 = vmax.f32 %v4214, %v4314
      %v4415 = vmax.f32 %v4215, %v4315
      %v4416 = vmax.f32 %v4216, %v4316
      %v4417 = vmax.f32 %v4217, %v4317
      %v4418 = vmax.f32 %v4218, %v4318
      %v4419 = vmax.f32 %v4219, %v4319
      %v4420 = vmax.f32 %v4220, %v4320
      %v4421 = vmax.f32 %v4221, %v4321
      %v4422 = vmax.f32 %v4222, %v4322
      %v4423 = vmax.f32 %v4223, %v4323
      %v4424 = vmax.f32 %v4224, %v4324
      %v4425 = vmax.f32 %v4225, %v4325
      %v4426 = vmax.f32 %v4226, %v4326
      %v4427 = vmax.f32 %v4227, %v4327
      %v4428 = vmax.f32 %v4228, %v4328
      %v4429 = vmax.f32 %v4229, %v4329
      %v4430 = vmax.f32 %v4230, %v4330
      %v4431 = vmax.f32 %v4231, %v4331
      %v4432 = vmax.f32 %v4232, %v4332
      %v4433 = vmax.f32 %v4233, %v4333
      %v4434 = vmax.f32 %v4234, %v4334
      %v4435 = vmax.f32 %v4235, %v4335
      %v4436 = vmax.f32 %v4236, %v4336
      %v4437 = vmax.f32 %v4237, %v4337
      %v4438 = vmax.f32 %v4238, %v4338
      %v4439 = vmax.f32 %v4239, %v4339
      %v4440 = vmax.f32 %v4240, %v4340
      %v4441 = vmax.f32 %v4241, %v4341
      %v4442 = vmax.f32 %v4242, %v4342
      %v4443 = vmax.f32 %v4243, %v4343
      %v4444 = vmax.f32 %v4244, %v4344
      %v4445 = vmax.f32 %v4245, %v4345
      %v4446 = vmax.f32 %v4246, %v4346
      %v4447 = vmax.f32 %v4247, %v4347
      %v4448 = vmax.f32 %v4248, %v4348
      %v4449 = vmax.f32 %v4249, %v4349
      %v4450 = vmax.f32 %v4250, %v4350
      %v4451 = vmax.f32 %v4251, %v4351
      %v4452 = vmax.f32 %v4252, %v4352
      %v4453 = vmax.f32 %v4253, %v4353
      %v4454 = vmax.f32 %v4254, %v4354
      %v4455 = vmax.f32 %v4255, %v4355
      %v4456 = vmax.f32 %v4256, %v4356
      %v4457 = vmax.f32 %v4257, %v4357
      %v4458 = vmax.f32 %v4258, %v4358
      %v4459 = vmax.f32 %v4259, %v4359
      %v4460 = vmax.f32 %v4260, %v4360
      %v4461 = vmax.f32 %v4261, %v4361
      %v4462 = vmax.f32 %v4262, %v4362
      %v4463 = vmax.f32 %v4263, %v4363
      %v4464 = vmax.f32 %v4264, %v4364
      %v4465 = vmax.f32 %v4265, %v4365
      %v4466 = vmax.f32 %v4266, %v4366
      %v4467 = vmax.f32 %v4267, %v4367
      %v4468 = vmax.f32 %v4268, %v4368
      %v4469 = vmax.f32 %v4269, %v4369
      %v4470 = vmax.f32 %v4270, %v4370
      %v4471 = vmax.f32 %v4271, %v4371
      %v4472 = vmax.f32 %v4272, %v4372
      %v4473 = vmax.f32 %v4273, %v4373
      %v4474 = vmax.f32 %v4274, %v4374
      %v4475 = vmax.f32 %v4275, %v4375
      %v4476 = vmax.f32 %v4276, %v4376
      %v4477 = vmax.f32 %v4277, %v4377
      %v4478 = vmax.f32 %v4278, %v4378
      %v4479 = vmax.f32 %v4279, %v4379
      %v4480 = vmax.f32 %v4280, %v4380
      %v4481 = vmax.f32 %v4281, %v4381
      %v4482 = vmax.f32 %v4282, %v4382
      %v4483 = vmax.f32 %v4283, %v4383
      %v4484 = vmax.f32 %v4284, %v4384
      %v4485 = vmax.f32 %v4285, %v4385
      %v4486 = vmax.f32 %v4286, %v4386
      %v4487 = vmax.f32 %v4287, %v4387
      %v4488 = vmax.f32 %v4288, %v4388
      %v4489 = vmax.f32 %v4289, %v4389
      %v4490 = vmax.f32 %v4290, %v4390
      %v4491 = vmax.f32 %v4291, %v4391
      %v4492 = vld [vmem:[%s2] sm:$0xff]
      %v4493 = vld [vmem:[%s2 + $0x8] sm:$0xff]
      %v4494 = vld [vmem:[%s2 + $0x10] sm:$0xff]
      %v4495 = vld [vmem:[%s2 + $0x18] sm:$0xff]
      %4497 = vset.pattern.permute.xlu0 0
      %4498 = vperm.xlu0 %4497, %v4492
      %v4499 = vpop.permute.xlu0 %4498
      %4502 = vset.pattern.permute.xlu0 0
      %4503 = vperm.xlu0 %4502, %v4493
      %v4504 = vpop.permute.xlu0 %4503
      %4507 = vset.pattern.permute.xlu0 0
      %4508 = vperm.xlu0 %4507, %v4494
      %v4509 = vpop.permute.xlu0 %4508
      %4512 = vset.pattern.permute.xlu0 0
      %4513 = vperm.xlu0 %4512, %v4495
      %v4514 = vpop.permute.xlu0 %4513
      %v4516 = vadd.f32 %v4392, %v4499
      %v4517 = vadd.f32 %v4393, %v4499
      %v4518 = vadd.f32 %v4394, %v4499
      %v4519 = vadd.f32 %v4395, %v4499
      %v4520 = vadd.f32 %v4396, %v4499
      %v4521 = vadd.f32 %v4397, %v4499
      %v4522 = vadd.f32 %v4398, %v4499
      %v4523 = vadd.f32 %v4399, %v4499
      %v4524 = vadd.f32 %v4400, %v4499
      %v4525 = vadd.f32 %v4401, %v4499
      %v4526 = vadd.f32 %v4402, %v4499
      %v4527 = vadd.f32 %v4403, %v4499
      %v4528 = vadd.f32 %v4404, %v4499
      %v4529 = vadd.f32 %v4405, %v4499
      %v4530 = vadd.f32 %v4406, %v4499
      %v4531 = vadd.f32 %v4407, %v4499
      %v4532 = vadd.f32 %v4408, %v4499
      %v4533 = vadd.f32 %v4409, %v4499
      %v4534 = vadd.f32 %v4410, %v4499
      %v4535 = vadd.f32 %v4411, %v4499
      %v4536 = vadd.f32 %v4412, %v4499
      %v4537 = vadd.f32 %v4413, %v4499
      %v4538 = vadd.f32 %v4414, %v4499
      %v4539 = vadd.f32 %v4415, %v4499
      %v4540 = vadd.f32 %v4416, %v4499
      %v4541 = vadd.f32 %v4417, %v4504
      %v4542 = vadd.f32 %v4418, %v4504
      %v4543 = vadd.f32 %v4419, %v4504
      %v4544 = vadd.f32 %v4420, %v4504
      %v4545 = vadd.f32 %v4421, %v4504
      %v4546 = vadd.f32 %v4422, %v4504
      %v4547 = vadd.f32 %v4423, %v4504
      %v4548 = vadd.f32 %v4424, %v4504
      %v4549 = vadd.f32 %v4425, %v4504
      %v4550 = vadd.f32 %v4426, %v4504
      %v4551 = vadd.f32 %v4427, %v4504
      %v4552 = vadd.f32 %v4428, %v4504
      %v4553 = vadd.f32 %v4429, %v4504
      %v4554 = vadd.f32 %v4430, %v4504
      %v4555 = vadd.f32 %v4431, %v4504
      %v4556 = vadd.f32 %v4432, %v4504
      %v4557 = vadd.f32 %v4433, %v4504
      %v4558 = vadd.f32 %v4434, %v4504
      %v4559 = vadd.f32 %v4435, %v4504
      %v4560 = vadd.f32 %v4436, %v4504
      %v4561 = vadd.f32 %v4437, %v4504
      %v4562 = vadd.f32 %v4438, %v4504
      %v4563 = vadd.f32 %v4439, %v4504
      %v4564 = vadd.f32 %v4440, %v4504
      %v4565 = vadd.f32 %v4441, %v4504
      %v4566 = vadd.f32 %v4442, %v4509
      %v4567 = vadd.f32 %v4443, %v4509
      %v4568 = vadd.f32 %v4444, %v4509
      %v4569 = vadd.f32 %v4445, %v4509
      %v4570 = vadd.f32 %v4446, %v4509
      %v4571 = vadd.f32 %v4447, %v4509
      %v4572 = vadd.f32 %v4448, %v4509
      %v4573 = vadd.f32 %v4449, %v4509
      %v4574 = vadd.f32 %v4450, %v4509
      %v4575 = vadd.f32 %v4451, %v4509
      %v4576 = vadd.f32 %v4452, %v4509
      %v4577 = vadd.f32 %v4453, %v4509
      %v4578 = vadd.f32 %v4454, %v4509
      %v4579 = vadd.f32 %v4455, %v4509
      %v4580 = vadd.f32 %v4456, %v4509
      %v4581 = vadd.f32 %v4457, %v4509
      %v4582 = vadd.f32 %v4458, %v4509
      %v4583 = vadd.f32 %v4459, %v4509
      %v4584 = vadd.f32 %v4460, %v4509
      %v4585 = vadd.f32 %v4461, %v4509
      %v4586 = vadd.f32 %v4462, %v4509
      %v4587 = vadd.f32 %v4463, %v4509
      %v4588 = vadd.f32 %v4464, %v4509
      %v4589 = vadd.f32 %v4465, %v4509
      %v4590 = vadd.f32 %v4466, %v4509
      %v4591 = vadd.f32 %v4467, %v4514
      %v4592 = vadd.f32 %v4468, %v4514
      %v4593 = vadd.f32 %v4469, %v4514
      %v4594 = vadd.f32 %v4470, %v4514
      %v4595 = vadd.f32 %v4471, %v4514
      %v4596 = vadd.f32 %v4472, %v4514
      %v4597 = vadd.f32 %v4473, %v4514
      %v4598 = vadd.f32 %v4474, %v4514
      %v4599 = vadd.f32 %v4475, %v4514
      %v4600 = vadd.f32 %v4476, %v4514
      %v4601 = vadd.f32 %v4477, %v4514
      %v4602 = vadd.f32 %v4478, %v4514
      %v4603 = vadd.f32 %v4479, %v4514
      %v4604 = vadd.f32 %v4480, %v4514
      %v4605 = vadd.f32 %v4481, %v4514
      %v4606 = vadd.f32 %v4482, %v4514
      %v4607 = vadd.f32 %v4483, %v4514
      %v4608 = vadd.f32 %v4484, %v4514
      %v4609 = vadd.f32 %v4485, %v4514
      %v4610 = vadd.f32 %v4486, %v4514
      %v4611 = vadd.f32 %v4487, %v4514
      %v4612 = vadd.f32 %v4488, %v4514
      %v4613 = vadd.f32 %v4489, %v4514
      %v4614 = vadd.f32 %v4490, %v4514
      %v4615 = vadd.f32 %v4491, %v4514
      %v4616 = vmax.f32 %v4516, 0.0
      %v4617 = vmax.f32 %v4517, 0.0
      %v4618 = vmax.f32 %v4518, 0.0
      %v4619 = vmax.f32 %v4519, 0.0
      %v4620 = vmax.f32 %v4520, 0.0
      %v4621 = vmax.f32 %v4521, 0.0
      %v4622 = vmax.f32 %v4522, 0.0
      %v4623 = vmax.f32 %v4523, 0.0
      %v4624 = vmax.f32 %v4524, 0.0
      %v4625 = vmax.f32 %v4525, 0.0
      %v4626 = vmax.f32 %v4526, 0.0
      %v4627 = vmax.f32 %v4527, 0.0
      %v4628 = vmax.f32 %v4528, 0.0
      %v4629 = vmax.f32 %v4529, 0.0
      %v4630 = vmax.f32 %v4530, 0.0
      %v4631 = vmax.f32 %v4531, 0.0
      %v4632 = vmax.f32 %v4532, 0.0
      %v4633 = vmax.f32 %v4533, 0.0
      %v4634 = vmax.f32 %v4534, 0.0
      %v4635 = vmax.f32 %v4535, 0.0
      %v4636 = vmax.f32 %v4536, 0.0
      %v4637 = vmax.f32 %v4537, 0.0
      %v4638 = vmax.f32 %v4538, 0.0
      %v4639 = vmax.f32 %v4539, 0.0
      %v4640 = vmax.f32 %v4540, 0.0
      %v4641 = vmax.f32 %v4541, 0.0
      %v4642 = vmax.f32 %v4542, 0.0
      %v4643 = vmax.f32 %v4543, 0.0
      %v4644 = vmax.f32 %v4544, 0.0
      %v4645 = vmax.f32 %v4545, 0.0
      %v4646 = vmax.f32 %v4546, 0.0
      %v4647 = vmax.f32 %v4547, 0.0
      %v4648 = vmax.f32 %v4548, 0.0
      %v4649 = vmax.f32 %v4549, 0.0
      %v4650 = vmax.f32 %v4550, 0.0
      %v4651 = vmax.f32 %v4551, 0.0
      %v4652 = vmax.f32 %v4552, 0.0
      %v4653 = vmax.f32 %v4553, 0.0
      %v4654 = vmax.f32 %v4554, 0.0
      %v4655 = vmax.f32 %v4555, 0.0
      %v4656 = vmax.f32 %v4556, 0.0
      %v4657 = vmax.f32 %v4557, 0.0
      %v4658 = vmax.f32 %v4558, 0.0
      %v4659 = vmax.f32 %v4559, 0.0
      %v4660 = vmax.f32 %v4560, 0.0
      %v4661 = vmax.f32 %v4561, 0.0
      %v4662 = vmax.f32 %v4562, 0.0
      %v4663 = vmax.f32 %v4563, 0.0
      %v4664 = vmax.f32 %v4564, 0.0
      %v4665 = vmax.f32 %v4565, 0.0
      %v4666 = vmax.f32 %v4566, 0.0
      %v4667 = vmax.f32 %v4567, 0.0
      %v4668 = vmax.f32 %v4568, 0.0
      %v4669 = vmax.f32 %v4569, 0.0
      %v4670 = vmax.f32 %v4570, 0.0
      %v4671 = vmax.f32 %v4571, 0.0
      %v4672 = vmax.f32 %v4572, 0.0
      %v4673 = vmax.f32 %v4573, 0.0
      %v4674 = vmax.f32 %v4574, 0.0
      %v4675 = vmax.f32 %v4575, 0.0
      %v4676 = vmax.f32 %v4576, 0.0
      %v4677 = vmax.f32 %v4577, 0.0
      %v4678 = vmax.f32 %v4578, 0.0
      %v4679 = vmax.f32 %v4579, 0.0
      %v4680 = vmax.f32 %v4580, 0.0
      %v4681 = vmax.f32 %v4581, 0.0
      %v4682 = vmax.f32 %v4582, 0.0
      %v4683 = vmax.f32 %v4583, 0.0
      %v4684 = vmax.f32 %v4584, 0.0
      %v4685 = vmax.f32 %v4585, 0.0
      %v4686 = vmax.f32 %v4586, 0.0
      %v4687 = vmax.f32 %v4587, 0.0
      %v4688 = vmax.f32 %v4588, 0.0
      %v4689 = vmax.f32 %v4589, 0.0
      %v4690 = vmax.f32 %v4590, 0.0
      %v4691 = vmax.f32 %v4591, 0.0
      %v4692 = vmax.f32 %v4592, 0.0
      %v4693 = vmax.f32 %v4593, 0.0
      %v4694 = vmax.f32 %v4594, 0.0
      %v4695 = vmax.f32 %v4595, 0.0
      %v4696 = vmax.f32 %v4596, 0.0
      %v4697 = vmax.f32 %v4597, 0.0
      %v4698 = vmax.f32 %v4598, 0.0
      %v4699 = vmax.f32 %v4599, 0.0
      %v4700 = vmax.f32 %v4600, 0.0
      %v4701 = vmax.f32 %v4601, 0.0
      %v4702 = vmax.f32 %v4602, 0.0
      %v4703 = vmax.f32 %v4603, 0.0
      %v4704 = vmax.f32 %v4604, 0.0
      %v4705 = vmax.f32 %v4605, 0.0
      %v4706 = vmax.f32 %v4606, 0.0
      %v4707 = vmax.f32 %v4607, 0.0
      %v4708 = vmax.f32 %v4608, 0.0
      %v4709 = vmax.f32 %v4609, 0.0
      %v4710 = vmax.f32 %v4610, 0.0
      %v4711 = vmax.f32 %v4611, 0.0
      %v4712 = vmax.f32 %v4612, 0.0
      %v4713 = vmax.f32 %v4613, 0.0
      %v4714 = vmax.f32 %v4614, 0.0
      %v4715 = vmax.f32 %v4615, 0.0
      %v4716 = vpack.c.bf16 %v4641, %v4616
      %v4717 = vpack.c.bf16 %v4642, %v4617
      %v4718 = vpack.c.bf16 %v4643, %v4618
      %v4719 = vpack.c.bf16 %v4644, %v4619
      %v4720 = vpack.c.bf16 %v4645, %v4620
      %v4721 = vpack.c.bf16 %v4646, %v4621
      %v4722 = vpack.c.bf16 %v4647, %v4622
      %v4723 = vpack.c.bf16 %v4648, %v4623
      %v4724 = vpack.c.bf16 %v4649, %v4624
      %v4725 = vpack.c.bf16 %v4650, %v4625
      %v4726 = vpack.c.bf16 %v4651, %v4626
      %v4727 = vpack.c.bf16 %v4652, %v4627
      %v4728 = vpack.c.bf16 %v4653, %v4628
      %v4729 = vpack.c.bf16 %v4654, %v4629
      %v4730 = vpack.c.bf16 %v4655, %v4630
      %v4731 = vpack.c.bf16 %v4656, %v4631
      %v4732 = vpack.c.bf16 %v4657, %v4632
      %v4733 = vpack.c.bf16 %v4658, %v4633
      %v4734 = vpack.c.bf16 %v4659, %v4634
      %v4735 = vpack.c.bf16 %v4660, %v4635
      %v4736 = vpack.c.bf16 %v4661, %v4636
      %v4737 = vpack.c.bf16 %v4662, %v4637
      %v4738 = vpack.c.bf16 %v4663, %v4638
      %v4739 = vpack.c.bf16 %v4664, %v4639
      %v4740 = vpack.c.bf16 %v4665, %v4640
      %v4741 = vpack.c.bf16 %v4691, %v4666
      %v4742 = vpack.c.bf16 %v4692, %v4667
      %v4743 = vpack.c.bf16 %v4693, %v4668
      %v4744 = vpack.c.bf16 %v4694, %v4669
      %v4745 = vpack.c.bf16 %v4695, %v4670
      %v4746 = vpack.c.bf16 %v4696, %v4671
      %v4747 = vpack.c.bf16 %v4697, %v4672
      %v4748 = vpack.c.bf16 %v4698, %v4673
      %v4749 = vpack.c.bf16 %v4699, %v4674
      %v4750 = vpack.c.bf16 %v4700, %v4675
      %v4751 = vpack.c.bf16 %v4701, %v4676
      %v4752 = vpack.c.bf16 %v4702, %v4677
      %v4753 = vpack.c.bf16 %v4703, %v4678
      %v4754 = vpack.c.bf16 %v4704, %v4679
      %v4755 = vpack.c.bf16 %v4705, %v4680
      %v4756 = vpack.c.bf16 %v4706, %v4681
      %v4757 = vpack.c.bf16 %v4707, %v4682
      %v4758 = vpack.c.bf16 %v4708, %v4683
      %v4759 = vpack.c.bf16 %v4709, %v4684
      %v4760 = vpack.c.bf16 %v4710, %v4685
      %v4761 = vpack.c.bf16 %v4711, %v4686
      %v4762 = vpack.c.bf16 %v4712, %v4687
      %v4763 = vpack.c.bf16 %v4713, %v4688
      %v4764 = vpack.c.bf16 %v4714, %v4689
      %v4765 = vpack.c.bf16 %v4715, %v4690
      %v4816 = vunpack.c.l.b16 %v4716
      %v4817 = vunpack.c.l.b16 %v4717
      %v4818 = vunpack.c.l.b16 %v4718
      %v4819 = vunpack.c.l.b16 %v4719
      %v4820 = vunpack.c.l.b16 %v4720
      %v4821 = vunpack.c.l.b16 %v4721
      %v4822 = vunpack.c.l.b16 %v4722
      %v4823 = vunpack.c.l.b16 %v4723
      %v4824 = vunpack.c.l.b16 %v4724
      %v4825 = vunpack.c.l.b16 %v4725
      %v4826 = vunpack.c.l.b16 %v4726
      %v4827 = vunpack.c.l.b16 %v4727
      %v4828 = vunpack.c.l.b16 %v4728
      %v4829 = vunpack.c.l.b16 %v4729
      %v4830 = vunpack.c.l.b16 %v4730
      %v4831 = vunpack.c.l.b16 %v4731
      %v4832 = vunpack.c.l.b16 %v4732
      %v4833 = vunpack.c.l.b16 %v4733
      %v4834 = vunpack.c.l.b16 %v4734
      %v4835 = vunpack.c.l.b16 %v4735
      %v4836 = vunpack.c.l.b16 %v4736
      %v4837 = vunpack.c.l.b16 %v4737
      %v4838 = vunpack.c.l.b16 %v4738
      %v4839 = vunpack.c.l.b16 %v4739
      %v4840 = vunpack.c.l.b16 %v4740
      %v4841 = vunpack.c.h.b16 %v4716
      %v4842 = vunpack.c.h.b16 %v4717
      %v4843 = vunpack.c.h.b16 %v4718
      %v4844 = vunpack.c.h.b16 %v4719
      %v4845 = vunpack.c.h.b16 %v4720
      %v4846 = vunpack.c.h.b16 %v4721
      %v4847 = vunpack.c.h.b16 %v4722
      %v4848 = vunpack.c.h.b16 %v4723
      %v4849 = vunpack.c.h.b16 %v4724
      %v4850 = vunpack.c.h.b16 %v4725
      %v4851 = vunpack.c.h.b16 %v4726
      %v4852 = vunpack.c.h.b16 %v4727
      %v4853 = vunpack.c.h.b16 %v4728
      %v4854 = vunpack.c.h.b16 %v4729
      %v4855 = vunpack.c.h.b16 %v4730
      %v4856 = vunpack.c.h.b16 %v4731
      %v4857 = vunpack.c.h.b16 %v4732
      %v4858 = vunpack.c.h.b16 %v4733
      %v4859 = vunpack.c.h.b16 %v4734
      %v4860 = vunpack.c.h.b16 %v4735
      %v4861 = vunpack.c.h.b16 %v4736
      %v4862 = vunpack.c.h.b16 %v4737
      %v4863 = vunpack.c.h.b16 %v4738
      %v4864 = vunpack.c.h.b16 %v4739
      %v4865 = vunpack.c.h.b16 %v4740
      %v4866 = vunpack.c.l.b16 %v4741
      %v4867 = vunpack.c.l.b16 %v4742
      %v4868 = vunpack.c.l.b16 %v4743
      %v4869 = vunpack.c.l.b16 %v4744
      %v4870 = vunpack.c.l.b16 %v4745
      %v4871 = vunpack.c.l.b16 %v4746
      %v4872 = vunpack.c.l.b16 %v4747
      %v4873 = vunpack.c.l.b16 %v4748
      %v4874 = vunpack.c.l.b16 %v4749
      %v4875 = vunpack.c.l.b16 %v4750
      %v4876 = vunpack.c.l.b16 %v4751
      %v4877 = vunpack.c.l.b16 %v4752
      %v4878 = vunpack.c.l.b16 %v4753
      %v4879 = vunpack.c.l.b16 %v4754
      %v4880 = vunpack.c.l.b16 %v4755
      %v4881 = vunpack.c.l.b16 %v4756
      %v4882 = vunpack.c.l.b16 %v4757
      %v4883 = vunpack.c.l.b16 %v4758
      %v4884 = vunpack.c.l.b16 %v4759
      %v4885 = vunpack.c.l.b16 %v4760
      %v4886 = vunpack.c.l.b16 %v4761
      %v4887 = vunpack.c.l.b16 %v4762
      %v4888 = vunpack.c.l.b16 %v4763
      %v4889 = vunpack.c.l.b16 %v4764
      %v4890 = vunpack.c.l.b16 %v4765
      %v4891 = vunpack.c.h.b16 %v4741
      %v4892 = vunpack.c.h.b16 %v4742
      %v4893 = vunpack.c.h.b16 %v4743
      %v4894 = vunpack.c.h.b16 %v4744
      %v4895 = vunpack.c.h.b16 %v4745
      %v4896 = vunpack.c.h.b16 %v4746
      %v4897 = vunpack.c.h.b16 %v4747
      %v4898 = vunpack.c.h.b16 %v4748
      %v4899 = vunpack.c.h.b16 %v4749
      %v4900 = vunpack.c.h.b16 %v4750
      %v4901 = vunpack.c.h.b16 %v4751
      %v4902 = vunpack.c.h.b16 %v4752
      %v4903 = vunpack.c.h.b16 %v4753
      %v4904 = vunpack.c.h.b16 %v4754
      %v4905 = vunpack.c.h.b16 %v4755
      %v4906 = vunpack.c.h.b16 %v4756
      %v4907 = vunpack.c.h.b16 %v4757
      %v4908 = vunpack.c.h.b16 %v4758
      %v4909 = vunpack.c.h.b16 %v4759
      %v4910 = vunpack.c.h.b16 %v4760
      %v4911 = vunpack.c.h.b16 %v4761
      %v4912 = vunpack.c.h.b16 %v4762
      %v4913 = vunpack.c.h.b16 %v4763
      %v4914 = vunpack.c.h.b16 %v4764
      %v4915 = vunpack.c.h.b16 %v4765
      %v4916 = vpack.c.b16 %v4817, %v4816
      %v4917 = vpack.c.b16 %v4819, %v4818
      %v4918 = vpack.c.b16 %v4821, %v4820
      %v4919 = vpack.c.b16 %v4823, %v4822
      %v4920 = vpack.c.b16 %v4825, %v4824
      %v4921 = vpack.c.b16 %v4827, %v4826
      %v4922 = vpack.c.b16 %v4829, %v4828
      %v4923 = vpack.c.b16 %v4831, %v4830
      %v4924 = vpack.c.b16 %v4833, %v4832
      %v4925 = vpack.c.b16 %v4835, %v4834
      %v4926 = vpack.c.b16 %v4837, %v4836
      %v4927 = vpack.c.b16 %v4839, %v4838
      %v4928 = vpack.c.b16 %v4840, %v4840
      %v4929 = vpack.c.b16 %v4842, %v4841
      %v4930 = vpack.c.b16 %v4844, %v4843
      %v4931 = vpack.c.b16 %v4846, %v4845
      %v4932 = vpack.c.b16 %v4848, %v4847
      %v4933 = vpack.c.b16 %v4850, %v4849
      %v4934 = vpack.c.b16 %v4852, %v4851
      %v4935 = vpack.c.b16 %v4854, %v4853
      %v4936 = vpack.c.b16 %v4856, %v4855
      %v4937 = vpack.c.b16 %v4858, %v4857
      %v4938 = vpack.c.b16 %v4860, %v4859
      %v4939 = vpack.c.b16 %v4862, %v4861
      %v4940 = vpack.c.b16 %v4864, %v4863
      %v4941 = vpack.c.b16 %v4865, %v4865
      %v4942 = vpack.c.b16 %v4867, %v4866
      %v4943 = vpack.c.b16 %v4869, %v4868
      %v4944 = vpack.c.b16 %v4871, %v4870
      %v4945 = vpack.c.b16 %v4873, %v4872
      %v4946 = vpack.c.b16 %v4875, %v4874
      %v4947 = vpack.c.b16 %v4877, %v4876
      %v4948 = vpack.c.b16 %v4879, %v4878
      %v4949 = vpack.c.b16 %v4881, %v4880
      %v4950 = vpack.c.b16 %v4883, %v4882
      %v4951 = vpack.c.b16 %v4885, %v4884
      %v4952 = vpack.c.b16 %v4887, %v4886
      %v4953 = vpack.c.b16 %v4889, %v4888
      %v4954 = vpack.c.b16 %v4890, %v4890
      %v4955 = vpack.c.b16 %v4892, %v4891
      %v4956 = vpack.c.b16 %v4894, %v4893
      %v4957 = vpack.c.b16 %v4896, %v4895
      %v4958 = vpack.c.b16 %v4898, %v4897
      %v4959 = vpack.c.b16 %v4900, %v4899
      %v4960 = vpack.c.b16 %v4902, %v4901
      %v4961 = vpack.c.b16 %v4904, %v4903
      %v4962 = vpack.c.b16 %v4906, %v4905
      %v4963 = vpack.c.b16 %v4908, %v4907
      %v4964 = vpack.c.b16 %v4910, %v4909
      %v4965 = vpack.c.b16 %v4912, %v4911
      %v4966 = vpack.c.b16 %v4914, %v4913
      %v4967 = vpack.c.b16 %v4915, %v4915
      %5020 = vst [vmem:[%s208] sm:$0xff] %v4916
      %5021 = vst [vmem:[%s208 + $0x8] sm:$0xff] %v4917
      %5022 = vst [vmem:[%s208 + $0x10] sm:$0xff] %v4918
      %5023 = vst [vmem:[%s208 + $0x18] sm:$0xff] %v4919
      %5024 = vst [vmem:[%s208 + $0x20] sm:$0xff] %v4920
      %5025 = vst [vmem:[%s208 + $0x28] sm:$0xff] %v4921
      %5026 = vst [vmem:[%s208 + $0x30] sm:$0xff] %v4922
      %5027 = vst [vmem:[%s208 + $0x38] sm:$0xff] %v4923
      %5028 = vst [vmem:[%s208 + $0x40] sm:$0xff] %v4924
      %5029 = vst [vmem:[%s208 + $0x48] sm:$0xff] %v4925
      %5030 = vst [vmem:[%s208 + $0x50] sm:$0xff] %v4926
      %5031 = vst [vmem:[%s208 + $0x58] sm:$0xff] %v4927
      %vm5032 = vcmask 519168
      %5033 = vst.msk [vmem:[%s208 + $0x60] sm:$0xf] %vm5032, %v4928
      %5034 = vst [vmem:[%s208 + $0x64] sm:$0xff] %v4929
      %5035 = vst [vmem:[%s208 + $0x6c] sm:$0xff] %v4930
      %5036 = vst [vmem:[%s208 + $0x74] sm:$0xff] %v4931
      %5037 = vst [vmem:[%s208 + $0x7c] sm:$0xff] %v4932
      %5038 = vst [vmem:[%s208 + $0x84] sm:$0xff] %v4933
      %5039 = vst [vmem:[%s208 + $0x8c] sm:$0xff] %v4934
      %5040 = vst [vmem:[%s208 + $0x94] sm:$0xff] %v4935
      %5041 = vst [vmem:[%s208 + $0x9c] sm:$0xff] %v4936
      %5042 = vst [vmem:[%s208 + $0xa4] sm:$0xff] %v4937
      %5043 = vst [vmem:[%s208 + $0xac] sm:$0xff] %v4938
      %5044 = vst [vmem:[%s208 + $0xb4] sm:$0xff] %v4939
      %5045 = vst [vmem:[%s208 + $0xbc] sm:$0xff] %v4940
      %5046 = vst.msk [vmem:[%s208 + $0xc4] sm:$0xf] %vm5032, %v4941
      %5047 = vst [vmem:[%s208 + $0xc8] sm:$0xff] %v4942
      %5048 = vst [vmem:[%s208 + $0xd0] sm:$0xff] %v4943
      %5049 = vst [vmem:[%s208 + $0xd8] sm:$0xff] %v4944
      %5050 = vst [vmem:[%s208 + $0xe0] sm:$0xff] %v4945
      %5051 = vst [vmem:[%s208 + $0xe8] sm:$0xff] %v4946
      %5052 = vst [vmem:[%s208 + $0xf0] sm:$0xff] %v4947
      %5053 = vst [vmem:[%s208 + $0xf8] sm:$0xff] %v4948
      %5054 = vst [vmem:[%s208 + $0x100] sm:$0xff] %v4949
      %5055 = vst [vmem:[%s208 + $0x108] sm:$0xff] %v4950
      %5056 = vst [vmem:[%s208 + $0x110] sm:$0xff] %v4951
      %5057 = vst [vmem:[%s208 + $0x118] sm:$0xff] %v4952
      %5058 = vst [vmem:[%s208 + $0x120] sm:$0xff] %v4953
      %5059 = vst.msk [vmem:[%s208 + $0x128] sm:$0xf] %vm5032, %v4954
      %5060 = vst [vmem:[%s208 + $0x12c] sm:$0xff] %v4955
      %5061 = vst [vmem:[%s208 + $0x134] sm:$0xff] %v4956
      %5062 = vst [vmem:[%s208 + $0x13c] sm:$0xff] %v4957
      %5063 = vst [vmem:[%s208 + $0x144] sm:$0xff] %v4958
      %5064 = vst [vmem:[%s208 + $0x14c] sm:$0xff] %v4959
      %5065 = vst [vmem:[%s208 + $0x154] sm:$0xff] %v4960
      %5066 = vst [vmem:[%s208 + $0x15c] sm:$0xff] %v4961
      %5067 = vst [vmem:[%s208 + $0x164] sm:$0xff] %v4962
      %5068 = vst [vmem:[%s208 + $0x16c] sm:$0xff] %v4963
      %5069 = vst [vmem:[%s208 + $0x174] sm:$0xff] %v4964
      %5070 = vst [vmem:[%s208 + $0x17c] sm:$0xff] %v4965
      %5071 = vst [vmem:[%s208 + $0x184] sm:$0xff] %v4966
      %5072 = vst.msk [vmem:[%s208 + $0x18c] sm:$0xf] %vm5032, %v4967
      %s5073 = smul.u32 25, %s19
      %p5074 = scmp.lt.s32.totalorder %s18, 1
      %s5075 = scalar_select %p5074, %s18, 1
      %p5076 = scmp.lt.s32.totalorder %s5073, 24
      %s5077 = scalar_select %p5076, %s5073, 24
      %s5078 = smul.addr %s5075, 100
      %s5079 = sadd.s32 %s5077, %s5078
      %s5080 = smul.addr %s5079, 4
      %s5081 = scalar_lea.vmem %s3, %s5080
      // Predicated region
      $region33: #{simple_cnn_forward.5} parent=31 // pred_check
        %p5082 = pneg %p116
      $region34: #{simple_cnn_forward.5} parent=31 // pred_check_branch
        %5084 = sbr.rel (%p5082) target = $region36
      $region35: #{simple_cnn_forward.5} parent=31 // pred_region
        %s5085 = smul.u32 25, %s19
      $region36: #{simple_cnn_forward.5} parent=31 // pred_fallthru
        _
    $region32: #{simple_cnn_forward.5} parent=5 // pred_fallthru
      _
    %p5086 = scmp.le.s32.totalorder 2, %s9
    // Predicated region
    $region37: #{simple_cnn_forward.5} parent=5 // pred_check
      %p5087 = pneg %p5086
    $region38: #{simple_cnn_forward.5} parent=5 // pred_check_branch
      %5089 = sbr.rel (%p5087) target = $region40
    $region39: #{simple_cnn_forward.5} parent=5 // pred_region
      %s5090 = ssub.s32 %s9, 2
      // Predicated region
      $region41: #{simple_cnn_forward.5} parent=39 // pred_check
        %p5091 = pneg %p122
      $region42: #{simple_cnn_forward.5} parent=39 // pred_check_branch
        %5093 = sbr.rel (%p5091) target = $region44
      $region43: #{simple_cnn_forward.5} parent=39 // pred_region
        %s5094 = smul.u32 25, %s21
        %p5095 = scmp.lt.s32.totalorder %s20, 1
        %s5096 = scalar_select %p5095, %s20, 1
        %p5097 = scmp.lt.s32.totalorder %s5094, 24
        %s5098 = scalar_select %p5097, %s5094, 24
        %s5099 = smul.addr %s5096, 100
        %s5100 = sadd.s32 %s5098, %s5099
        %s5101 = smul.addr %s5100, 4
        %s5102 = scalar_lea.vmem %s3, %s5101
      $region44: #{simple_cnn_forward.5} parent=39 // pred_fallthru
        _
    $region40: #{simple_cnn_forward.5} parent=5 // pred_fallthru
      _
  $region6: #{simple_cnn_forward.5} parent=0 // loop_footer
    %s13 = sadd.s32 1, %s9
  $region7: #{simple_cnn_forward.5} parent=0 // loop_footer_branch
    %8 = sbr.rel target = $region3
  $region8: #{simple_cnn_forward.5} parent=0 // loop_exit
    _

// kernel: simple_cnn_forward.6
$region0: #{simple_cnn_forward.6}
  #allocation0 [shape = 'u32[]', space=smem, size = 0x4, offset = 0x4, fixed_abs, tag = 'smem constant byte address 0x4 - core index']
  #allocation1 [shape = 'u32[144,128]{1,0:T(1,128)}', space=vmem, size = 0x12000, scoped, tag = 'internal scratch']
  %s0 = inlined_call_operand.vmem [shape: bf16[2,512,784], index: 0, kind: input, shape index: {}]
  %s1 = inlined_call_operand.vmem [shape: bf16[256,512], index: 1, kind: input, shape index: {}]
  %s2 = inlined_call_operand.vmem [shape: f32[64,1], index: 2, kind: input, shape index: {}]
  %s3 = inlined_call_operand.vmem [shape: bf16[2,64,784], index: 3, kind: output, shape index: {}]
  %s4 = sld [smem:[#allocation0]]
  $region45: #{simple_cnn_forward.6} parent=0
    _
  %s6 = ssub.s32 1, %s4
  %s7 = scalar_select 0, %s6, %s4
  loop: start=0, step=1, limit=4
  $region2: #{simple_cnn_forward.6} parent=0 // loop_pre_header
    _
  $region3: #{simple_cnn_forward.6} parent=0 // loop_header
    %s9 = sphi 0, %s13
    %p10 = scmp.ge.s32.totalorder %s9, 4
    %s16 = sphi 0, %s28
    %s17 = sphi 0, %s24
    %s18 = sphi 0, %s16
    %s19 = sphi 0, %s17
    %s20 = sphi 0, %s18
    %s21 = sphi 0, %s19
    %s33 = sphi 0, %s35
    %s36 = sphi 0, %s33
    %s37 = sphi 0, %s36
    %s53 = sphi 0, %s37
    %s57 = sphi 0, %s57
    %s59 = sphi 0, %s57
    %s60 = sphi 0, %s59
    %s74 = sphi 0, %s60
    %s78 = sphi 0, %s78
    %s80 = sphi 0, %s78
    %s81 = sphi 0, %s80
    %s95 = sphi 0, %s81
    %s103 = sphi 0, %s105
    %s106 = sphi 0, %s103
    %s107 = sphi 0, %s106
    %s123 = sphi 0, %s107
  $region4: #{simple_cnn_forward.6} parent=0 // loop_header_branch
    %12 = sbr.rel (%p10) target = $region8
  $region5: #{simple_cnn_forward.6} parent=0 // loop_body
    %s14 = ssub.s32 %s9, 1
    %s15 = ssub.s32 %s9, 2
    %s22 = sadd.s32 1, %s17
    %p23 = scmp.ge.s32.totalorder %s22, 1
    %s24 = scalar_select %p23, 0, %s22
    %s25 = sadd.s32 1, %s16
    %s26 = scalar_select %p23, %s25, %s16
    %p27 = scmp.ge.s32.totalorder %s26, 2
    %s28 = scalar_select %p27, 0, %s26
    %s29 = ssub.s32 %s16, %s28
    %s30 = ssub.s32 %s17, %s24
    %s31 = sor.u32 %s29, %s30
    %p32 = scmp.eq.s32.totalorder %s31, 0
    %s34 = sadd.s32 %s33, 1
    %s35 = scalar_select %p32, %s33, %s34
    %p38 = pneg %p32
    %p39 = scmp.eq.s32.totalorder %s9, 1
    %p40 = por %p38, %p39
    %p41 = scmp.ne.s32.totalorder %s33, %s36
    %p42 = scmp.eq.s32.totalorder %s9, 0
    %p43 = por %p41, %p42
    %p44 = scmp.ne.s32.totalorder %s33, %s36
    %p45 = scmp.eq.s32.totalorder %s14, 1
    %p46 = por %p44, %p45
    %p47 = scmp.ne.s32.totalorder %s36, %s37
    %p48 = scmp.eq.s32.totalorder %s14, 0
    %p49 = por %p47, %p48
    %p50 = scmp.ne.s32.totalorder %s36, %s37
    %p51 = scmp.eq.s32.totalorder %s15, 1
    %p52 = por %p50, %p51
    %p54 = scmp.ne.s32.totalorder %s37, %s53
    %p55 = scmp.eq.s32.totalorder %s15, 0
    %p56 = por %p54, %p55
    %s58 = sadd.s32 %s57, 1
    %p61 = scmp.eq.s32.totalorder %s9, 1
    %p62 = scmp.ne.s32.totalorder %s57, %s59
    %p63 = scmp.eq.s32.totalorder %s9, 0
    %p64 = por %p62, %p63
    %p65 = scmp.ne.s32.totalorder %s57, %s59
    %p66 = scmp.eq.s32.totalorder %s14, 1
    %p67 = por %p65, %p66
    %p68 = scmp.ne.s32.totalorder %s59, %s60
    %p69 = scmp.eq.s32.totalorder %s14, 0
    %p70 = por %p68, %p69
    %p71 = scmp.ne.s32.totalorder %s59, %s60
    %p72 = scmp.eq.s32.totalorder %s15, 1
    %p73 = por %p71, %p72
    %p75 = scmp.ne.s32.totalorder %s60, %s74
    %p76 = scmp.eq.s32.totalorder %s15, 0
    %p77 = por %p75, %p76
    %s79 = sadd.s32 %s78, 1
    %p82 = scmp.eq.s32.totalorder %s9, 1
    %p83 = scmp.ne.s32.totalorder %s78, %s80
    %p84 = scmp.eq.s32.totalorder %s9, 0
    %p85 = por %p83, %p84
    %p86 = scmp.ne.s32.totalorder %s78, %s80
    %p87 = scmp.eq.s32.totalorder %s14, 1
    %p88 = por %p86, %p87
    %p89 = scmp.ne.s32.totalorder %s80, %s81
    %p90 = scmp.eq.s32.totalorder %s14, 0
    %p91 = por %p89, %p90
    %p92 = scmp.ne.s32.totalorder %s80, %s81
    %p93 = scmp.eq.s32.totalorder %s15, 1
    %p94 = por %p92, %p93
    %p96 = scmp.ne.s32.totalorder %s81, %s95
    %p97 = scmp.eq.s32.totalorder %s15, 0
    %p98 = por %p96, %p97
    %s99 = ssub.s32 %s16, %s28
    %s100 = ssub.s32 %s17, %s24
    %s101 = sor.u32 %s99, %s100
    %p102 = scmp.eq.s32.totalorder %s101, 0
    %s104 = sadd.s32 %s103, 1
    %s105 = scalar_select %p102, %s103, %s104
    %p108 = pneg %p102
    %p109 = scmp.eq.s32.totalorder %s9, 1
    %p110 = por %p108, %p109
    %p111 = scmp.ne.s32.totalorder %s103, %s106
    %p112 = scmp.eq.s32.totalorder %s9, 0
    %p113 = por %p111, %p112
    %p114 = scmp.ne.s32.totalorder %s103, %s106
    %p115 = scmp.eq.s32.totalorder %s14, 1
    %p116 = por %p114, %p115
    %p117 = scmp.ne.s32.totalorder %s106, %s107
    %p118 = scmp.eq.s32.totalorder %s14, 0
    %p119 = por %p117, %p118
    %p120 = scmp.ne.s32.totalorder %s106, %s107
    %p121 = scmp.eq.s32.totalorder %s15, 1
    %p122 = por %p120, %p121
    %p124 = scmp.ne.s32.totalorder %s107, %s123
    %p125 = scmp.eq.s32.totalorder %s15, 0
    %p126 = por %p124, %p125
    %p127 = scmp.le.s32.totalorder 1, %s9
    %p128 = scmp.lt.s32.totalorder %s9, 3
    %p129 = pnand %p127, %p128
    %p130 = pneg %p129
    // Predicated region
    $region9: #{simple_cnn_forward.6} parent=5 // pred_check
      _
    $region10: #{simple_cnn_forward.6} parent=5 // pred_check_branch
      %132 = sbr.rel (%p129) target = $region12
    $region11: #{simple_cnn_forward.6} parent=5 // pred_region
      %s133 = ssub.s32 %s9, 1
      // Predicated region
      $region13: #{simple_cnn_forward.6} parent=11 // pred_check
        %p134 = pneg %p70
      $region14: #{simple_cnn_forward.6} parent=11 // pred_check_branch
        %136 = sbr.rel (%p134) target = $region16
      $region15: #{simple_cnn_forward.6} parent=11 // pred_region
        _
      $region16: #{simple_cnn_forward.6} parent=11 // pred_fallthru
        _
      // Predicated region
      $region17: #{simple_cnn_forward.6} parent=11 // pred_check
        %p137 = pneg %p91
      $region18: #{simple_cnn_forward.6} parent=11 // pred_check_branch
        %139 = sbr.rel (%p137) target = $region20
      $region19: #{simple_cnn_forward.6} parent=11 // pred_region
        _
      $region20: #{simple_cnn_forward.6} parent=11 // pred_fallthru
        _
    $region12: #{simple_cnn_forward.6} parent=5 // pred_fallthru
      _
    %p140 = scmp.lt.s32.totalorder %s9, 2
    // Predicated region
    $region21: #{simple_cnn_forward.6} parent=5 // pred_check
      %p141 = pneg %p140
    $region22: #{simple_cnn_forward.6} parent=5 // pred_check_branch
      %143 = sbr.rel (%p141) target = $region24
    $region23: #{simple_cnn_forward.6} parent=5 // pred_region
      // Predicated region
      $region25: #{simple_cnn_forward.6} parent=23 // pred_check
        %p144 = pneg %p43
      $region26: #{simple_cnn_forward.6} parent=23 // pred_check_branch
        %146 = sbr.rel (%p144) target = $region28
      $region27: #{simple_cnn_forward.6} parent=23 // pred_region
        %s147 = smul.u32 7, %s17
        %p148 = scmp.lt.s32.totalorder %s16, 1
        %s149 = scalar_select %p148, %s16, 1
        %p150 = scmp.lt.s32.totalorder %s147, 6
        %s151 = scalar_select %p150, %s147, 6
        %s152 = smul.addr %s149, 448
        %s153 = sadd.s32 %s151, %s152
        %s154 = smul.addr %s153, 4
        %s155 = scalar_lea.vmem %s0, %s154
        %s156 = smul.u32 7, %s17
      $region28: #{simple_cnn_forward.6} parent=23 // pred_fallthru
        _
    $region24: #{simple_cnn_forward.6} parent=5 // pred_fallthru
      _
    %p157 = scmp.le.s32.totalorder 1, %s9
    %p158 = scmp.lt.s32.totalorder %s9, 3
    %p159 = pnand %p157, %p158
    %p160 = pneg %p159
    // Predicated region
    $region29: #{simple_cnn_forward.6} parent=5 // pred_check
      _
    $region30: #{simple_cnn_forward.6} parent=5 // pred_check_branch
      %162 = sbr.rel (%p159) target = $region32
    $region31: #{simple_cnn_forward.6} parent=5 // pred_region
      %s163 = ssub.s32 %s9, 1
      %s164 = smul.u32 7, %s19
      %p165 = scmp.lt.s32.totalorder %s18, 1
      %s166 = scalar_select %p165, %s18, 1
      %p167 = scmp.lt.s32.totalorder %s164, 6
      %s168 = scalar_select %p167, %s164, 6
      %s169 = smul.addr %s166, 448
      %s170 = sadd.s32 %s168, %s169
      %s171 = smul.addr %s170, 4
      %s172 = scalar_lea.vmem %s0, %s171
      %p173 = pneg %p49
      %p174 = pneg %p46
      %p175 = pneg %p70
      %p176 = pneg %p67
      %p177 = pneg %p91
      %p178 = pneg %p88
      %p179 = pneg %p119
      %p180 = pneg %p116
      %s181 = smul.u32 7, %s19
      %p182 = scmp.lt.s32.totalorder %s18, 1
      %s183 = scalar_select %p182, %s18, 1
      %p184 = scmp.lt.s32.totalorder %s181, 6
      %s185 = scalar_select %p184, %s181, 6
      %s186 = smul.addr %s183, 56
      %s187 = sadd.s32 %s185, %s186
      %s188 = smul.addr %s187, 4
      %s189 = scalar_lea.vmem %s3, %s188
      %s190 = smul.u32 7, %s19
      %p191 = scmp.lt.s32.totalorder %s18, 1
      %s192 = scalar_select %p191, %s18, 1
      %p193 = scmp.lt.s32.totalorder %s190, 6
      %s194 = scalar_select %p193, %s190, 6
      %s195 = smul.addr %s192, 448
      %s196 = sadd.s32 %s194, %s195
      %s197 = smul.addr %s196, 4
      %s198 = scalar_lea.vmem %s0, %s197
      %s199 = smul.u32 7, %s19
      %s200 = smul.u32 7, %s19
      %p201 = scmp.lt.s32.totalorder %s18, 1
      %s202 = scalar_select %p201, %s18, 1
      %p203 = scmp.lt.s32.totalorder %s200, 6
      %s204 = scalar_select %p203, %s200, 6
      %s205 = smul.addr %s202, 56
      %s206 = sadd.s32 %s204, %s205
      %s207 = smul.addr %s206, 4
      %s208 = scalar_lea.vmem %s3, %s207
      %s209 = smul.u32 7, %s19
      %v211 = vld [vmem:[%s1] sm:$0xff]
      %v212 = vld [vmem:[%s1 + $0x8] sm:$0xff]
      %v213 = vld [vmem:[%s1 + $0x10] sm:$0xff]
      %v214 = vld [vmem:[%s1 + $0x18] sm:$0xff]
      %v215 = vld [vmem:[%s1 + $0x20] sm:$0xff]
      %v216 = vld [vmem:[%s1 + $0x28] sm:$0xff]
      %v217 = vld [vmem:[%s1 + $0x30] sm:$0xff]
      %v218 = vld [vmem:[%s1 + $0x38] sm:$0xff]
      %v219 = vld [vmem:[%s1 + $0x40] sm:$0xff]
      %v220 = vld [vmem:[%s1 + $0x48] sm:$0xff]
      %v221 = vld [vmem:[%s1 + $0x50] sm:$0xff]
      %v222 = vld [vmem:[%s1 + $0x58] sm:$0xff]
      %v223 = vld [vmem:[%s1 + $0x60] sm:$0xff]
      %v224 = vld [vmem:[%s1 + $0x68] sm:$0xff]
      %v225 = vld [vmem:[%s1 + $0x70] sm:$0xff]
      %v226 = vld [vmem:[%s1 + $0x78] sm:$0xff]
      %v227 = vld [vmem:[%s1 + $0x80] sm:$0xff]
      %v228 = vld [vmem:[%s1 + $0x88] sm:$0xff]
      %v229 = vld [vmem:[%s1 + $0x90] sm:$0xff]
      %v230 = vld [vmem:[%s1 + $0x98] sm:$0xff]
      %v231 = vld [vmem:[%s1 + $0xa0] sm:$0xff]
      %v232 = vld [vmem:[%s1 + $0xa8] sm:$0xff]
      %v233 = vld [vmem:[%s1 + $0xb0] sm:$0xff]
      %v234 = vld [vmem:[%s1 + $0xb8] sm:$0xff]
      %v235 = vld [vmem:[%s1 + $0xc0] sm:$0xff]
      %v236 = vld [vmem:[%s1 + $0xc8] sm:$0xff]
      %v237 = vld [vmem:[%s1 + $0xd0] sm:$0xff]
      %v238 = vld [vmem:[%s1 + $0xd8] sm:$0xff]
      %v239 = vld [vmem:[%s1 + $0xe0] sm:$0xff]
      %v240 = vld [vmem:[%s1 + $0xe8] sm:$0xff]
      %v241 = vld [vmem:[%s1 + $0xf0] sm:$0xff]
      %v242 = vld [vmem:[%s1 + $0xf8] sm:$0xff]
      %v243 = vld [vmem:[%s1 + $0x100] sm:$0xff]
      %v244 = vld [vmem:[%s1 + $0x108] sm:$0xff]
      %v245 = vld [vmem:[%s1 + $0x110] sm:$0xff]
      %v246 = vld [vmem:[%s1 + $0x118] sm:$0xff]
      %v247 = vld [vmem:[%s1 + $0x120] sm:$0xff]
      %v248 = vld [vmem:[%s1 + $0x128] sm:$0xff]
      %v249 = vld [vmem:[%s1 + $0x130] sm:$0xff]
      %v250 = vld [vmem:[%s1 + $0x138] sm:$0xff]
      %v251 = vld [vmem:[%s1 + $0x140] sm:$0xff]
      %v252 = vld [vmem:[%s1 + $0x148] sm:$0xff]
      %v253 = vld [vmem:[%s1 + $0x150] sm:$0xff]
      %v254 = vld [vmem:[%s1 + $0x158] sm:$0xff]
      %v255 = vld [vmem:[%s1 + $0x160] sm:$0xff]
      %v256 = vld [vmem:[%s1 + $0x168] sm:$0xff]
      %v257 = vld [vmem:[%s1 + $0x170] sm:$0xff]
      %v258 = vld [vmem:[%s1 + $0x178] sm:$0xff]
      %v259 = vld [vmem:[%s1 + $0x180] sm:$0xff]
      %v260 = vld [vmem:[%s1 + $0x188] sm:$0xff]
      %v261 = vld [vmem:[%s1 + $0x190] sm:$0xff]
      %v262 = vld [vmem:[%s1 + $0x198] sm:$0xff]
      %v263 = vld [vmem:[%s1 + $0x1a0] sm:$0xff]
      %v264 = vld [vmem:[%s1 + $0x1a8] sm:$0xff]
      %v265 = vld [vmem:[%s1 + $0x1b0] sm:$0xff]
      %v266 = vld [vmem:[%s1 + $0x1b8] sm:$0xff]
      %v267 = vld [vmem:[%s1 + $0x1c0] sm:$0xff]
      %v268 = vld [vmem:[%s1 + $0x1c8] sm:$0xff]
      %v269 = vld [vmem:[%s1 + $0x1d0] sm:$0xff]
      %v270 = vld [vmem:[%s1 + $0x1d8] sm:$0xff]
      %v271 = vld [vmem:[%s1 + $0x1e0] sm:$0xff]
      %v272 = vld [vmem:[%s1 + $0x1e8] sm:$0xff]
      %v273 = vld [vmem:[%s1 + $0x1f0] sm:$0xff]
      %v274 = vld [vmem:[%s1 + $0x1f8] sm:$0xff]
      %v275 = vld [vmem:[%s198] sm:$0xff]
      %v276 = vld [vmem:[%s198 + $0x8] sm:$0xff]
      %v277 = vld [vmem:[%s198 + $0x10] sm:$0xff]
      %v278 = vld [vmem:[%s198 + $0x18] sm:$0xf]
      %v279 = vld [vmem:[%s198 + $0x1c] sm:$0xff]
      %v280 = vld [vmem:[%s198 + $0x24] sm:$0xff]
      %v281 = vld [vmem:[%s198 + $0x2c] sm:$0xff]
      %v282 = vld [vmem:[%s198 + $0x34] sm:$0xf]
      %v283 = vld [vmem:[%s198 + $0x38] sm:$0xff]
      %v284 = vld [vmem:[%s198 + $0x40] sm:$0xff]
      %v285 = vld [vmem:[%s198 + $0x48] sm:$0xff]
      %v286 = vld [vmem:[%s198 + $0x50] sm:$0xf]
      %v287 = vld [vmem:[%s198 + $0x54] sm:$0xff]
      %v288 = vld [vmem:[%s198 + $0x5c] sm:$0xff]
      %v289 = vld [vmem:[%s198 + $0x64] sm:$0xff]
      %v290 = vld [vmem:[%s198 + $0x6c] sm:$0xf]
      %v291 = vld [vmem:[%s198 + $0x70] sm:$0xff]
      %v292 = vld [vmem:[%s198 + $0x78] sm:$0xff]
      %v293 = vld [vmem:[%s198 + $0x80] sm:$0xff]
      %v294 = vld [vmem:[%s198 + $0x88] sm:$0xf]
      %v295 = vld [vmem:[%s198 + $0x8c] sm:$0xff]
      %v296 = vld [vmem:[%s198 + $0x94] sm:$0xff]
      %v297 = vld [vmem:[%s198 + $0x9c] sm:$0xff]
      %v298 = vld [vmem:[%s198 + $0xa4] sm:$0xf]
      %v299 = vld [vmem:[%s198 + $0xa8] sm:$0xff]
      %v300 = vld [vmem:[%s198 + $0xb0] sm:$0xff]
      %v301 = vld [vmem:[%s198 + $0xb8] sm:$0xff]
      %v302 = vld [vmem:[%s198 + $0xc0] sm:$0xf]
      %v303 = vld [vmem:[%s198 + $0xc4] sm:$0xff]
      %v304 = vld [vmem:[%s198 + $0xcc] sm:$0xff]
      %v305 = vld [vmem:[%s198 + $0xd4] sm:$0xff]
      %v306 = vld [vmem:[%s198 + $0xdc] sm:$0xf]
      %v307 = vld [vmem:[%s198 + $0xe0] sm:$0xff]
      %v308 = vld [vmem:[%s198 + $0xe8] sm:$0xff]
      %v309 = vld [vmem:[%s198 + $0xf0] sm:$0xff]
      %v310 = vld [vmem:[%s198 + $0xf8] sm:$0xf]
      %v311 = vld [vmem:[%s198 + $0xfc] sm:$0xff]
      %v312 = vld [vmem:[%s198 + $0x104] sm:$0xff]
      %v313 = vld [vmem:[%s198 + $0x10c] sm:$0xff]
      %v314 = vld [vmem:[%s198 + $0x114] sm:$0xf]
      %v315 = vld [vmem:[%s198 + $0x118] sm:$0xff]
      %v316 = vld [vmem:[%s198 + $0x120] sm:$0xff]
      %v317 = vld [vmem:[%s198 + $0x128] sm:$0xff]
      %v318 = vld [vmem:[%s198 + $0x130] sm:$0xf]
      %v319 = vld [vmem:[%s198 + $0x134] sm:$0xff]
      %v320 = vld [vmem:[%s198 + $0x13c] sm:$0xff]
      %v321 = vld [vmem:[%s198 + $0x144] sm:$0xff]
      %v322 = vld [vmem:[%s198 + $0x14c] sm:$0xf]
      %v323 = vld [vmem:[%s198 + $0x150] sm:$0xff]
      %v324 = vld [vmem:[%s198 + $0x158] sm:$0xff]
      %v325 = vld [vmem:[%s198 + $0x160] sm:$0xff]
      %v326 = vld [vmem:[%s198 + $0x168] sm:$0xf]
      %v327 = vld [vmem:[%s198 + $0x16c] sm:$0xff]
      %v328 = vld [vmem:[%s198 + $0x174] sm:$0xff]
      %v329 = vld [vmem:[%s198 + $0x17c] sm:$0xff]
      %v330 = vld [vmem:[%s198 + $0x184] sm:$0xf]
      %v331 = vld [vmem:[%s198 + $0x188] sm:$0xff]
      %v332 = vld [vmem:[%s198 + $0x190] sm:$0xff]
      %v333 = vld [vmem:[%s198 + $0x198] sm:$0xff]
      %v334 = vld [vmem:[%s198 + $0x1a0] sm:$0xf]
      %v335 = vld [vmem:[%s198 + $0x1a4] sm:$0xff]
      %v336 = vld [vmem:[%s198 + $0x1ac] sm:$0xff]
      %v337 = vld [vmem:[%s198 + $0x1b4] sm:$0xff]
      %v338 = vld [vmem:[%s198 + $0x1bc] sm:$0xf]
      %v339 = vld [vmem:[%s198 + $0x1c0] sm:$0xff]
      %v340 = vld [vmem:[%s198 + $0x1c8] sm:$0xff]
      %v341 = vld [vmem:[%s198 + $0x1d0] sm:$0xff]
      %v342 = vld [vmem:[%s198 + $0x1d8] sm:$0xf]
      %v343 = vld [vmem:[%s198 + $0x1dc] sm:$0xff]
      %v344 = vld [vmem:[%s198 + $0x1e4] sm:$0xff]
      %v345 = vld [vmem:[%s198 + $0x1ec] sm:$0xff]
      %v346 = vld [vmem:[%s198 + $0x1f4] sm:$0xf]
      %v347 = vld [vmem:[%s198 + $0x1f8] sm:$0xff]
      %v348 = vld [vmem:[%s198 + $0x200] sm:$0xff]
      %v349 = vld [vmem:[%s198 + $0x208] sm:$0xff]
      %v350 = vld [vmem:[%s198 + $0x210] sm:$0xf]
      %v351 = vld [vmem:[%s198 + $0x214] sm:$0xff]
      %v352 = vld [vmem:[%s198 + $0x21c] sm:$0xff]
      %v353 = vld [vmem:[%s198 + $0x224] sm:$0xff]
      %v354 = vld [vmem:[%s198 + $0x22c] sm:$0xf]
      %v355 = vld [vmem:[%s198 + $0x230] sm:$0xff]
      %v356 = vld [vmem:[%s198 + $0x238] sm:$0xff]
      %v357 = vld [vmem:[%s198 + $0x240] sm:$0xff]
      %v358 = vld [vmem:[%s198 + $0x248] sm:$0xf]
      %v359 = vld [vmem:[%s198 + $0x24c] sm:$0xff]
      %v360 = vld [vmem:[%s198 + $0x254] sm:$0xff]
      %v361 = vld [vmem:[%s198 + $0x25c] sm:$0xff]
      %v362 = vld [vmem:[%s198 + $0x264] sm:$0xf]
      %v363 = vld [vmem:[%s198 + $0x268] sm:$0xff]
      %v364 = vld [vmem:[%s198 + $0x270] sm:$0xff]
      %v365 = vld [vmem:[%s198 + $0x278] sm:$0xff]
      %v366 = vld [vmem:[%s198 + $0x280] sm:$0xf]
      %v367 = vld [vmem:[%s198 + $0x284] sm:$0xff]
      %v368 = vld [vmem:[%s198 + $0x28c] sm:$0xff]
      %v369 = vld [vmem:[%s198 + $0x294] sm:$0xff]
      %v370 = vld [vmem:[%s198 + $0x29c] sm:$0xf]
      %v371 = vld [vmem:[%s198 + $0x2a0] sm:$0xff]
      %v372 = vld [vmem:[%s198 + $0x2a8] sm:$0xff]
      %v373 = vld [vmem:[%s198 + $0x2b0] sm:$0xff]
      %v374 = vld [vmem:[%s198 + $0x2b8] sm:$0xf]
      %v375 = vld [vmem:[%s198 + $0x2bc] sm:$0xff]
      %v376 = vld [vmem:[%s198 + $0x2c4] sm:$0xff]
      %v377 = vld [vmem:[%s198 + $0x2cc] sm:$0xff]
      %v378 = vld [vmem:[%s198 + $0x2d4] sm:$0xf]
      %v379 = vld [vmem:[%s198 + $0x2d8] sm:$0xff]
      %v380 = vld [vmem:[%s198 + $0x2e0] sm:$0xff]
      %v381 = vld [vmem:[%s198 + $0x2e8] sm:$0xff]
      %v382 = vld [vmem:[%s198 + $0x2f0] sm:$0xf]
      %v383 = vld [vmem:[%s198 + $0x2f4] sm:$0xff]
      %v384 = vld [vmem:[%s198 + $0x2fc] sm:$0xff]
      %v385 = vld [vmem:[%s198 + $0x304] sm:$0xff]
      %v386 = vld [vmem:[%s198 + $0x30c] sm:$0xf]
      %v387 = vld [vmem:[%s198 + $0x310] sm:$0xff]
      %v388 = vld [vmem:[%s198 + $0x318] sm:$0xff]
      %v389 = vld [vmem:[%s198 + $0x320] sm:$0xff]
      %v390 = vld [vmem:[%s198 + $0x328] sm:$0xf]
      %v391 = vld [vmem:[%s198 + $0x32c] sm:$0xff]
      %v392 = vld [vmem:[%s198 + $0x334] sm:$0xff]
      %v393 = vld [vmem:[%s198 + $0x33c] sm:$0xff]
      %v394 = vld [vmem:[%s198 + $0x344] sm:$0xf]
      %v395 = vld [vmem:[%s198 + $0x348] sm:$0xff]
      %v396 = vld [vmem:[%s198 + $0x350] sm:$0xff]
      %v397 = vld [vmem:[%s198 + $0x358] sm:$0xff]
      %v398 = vld [vmem:[%s198 + $0x360] sm:$0xf]
      %v399 = vld [vmem:[%s198 + $0x364] sm:$0xff]
      %v400 = vld [vmem:[%s198 + $0x36c] sm:$0xff]
      %v401 = vld [vmem:[%s198 + $0x374] sm:$0xff]
      %v402 = vld [vmem:[%s198 + $0x37c] sm:$0xf]
      %v403 = vld [vmem:[%s198 + $0x380] sm:$0xff]
      %v404 = vld [vmem:[%s198 + $0x388] sm:$0xff]
      %v405 = vld [vmem:[%s198 + $0x390] sm:$0xff]
      %v406 = vld [vmem:[%s198 + $0x398] sm:$0xf]
      %v407 = vld [vmem:[%s198 + $0x39c] sm:$0xff]
      %v408 = vld [vmem:[%s198 + $0x3a4] sm:$0xff]
      %v409 = vld [vmem:[%s198 + $0x3ac] sm:$0xff]
      %v410 = vld [vmem:[%s198 + $0x3b4] sm:$0xf]
      %v411 = vld [vmem:[%s198 + $0x3b8] sm:$0xff]
      %v412 = vld [vmem:[%s198 + $0x3c0] sm:$0xff]
      %v413 = vld [vmem:[%s198 + $0x3c8] sm:$0xff]
      %v414 = vld [vmem:[%s198 + $0x3d0] sm:$0xf]
      %v415 = vld [vmem:[%s198 + $0x3d4] sm:$0xff]
      %v416 = vld [vmem:[%s198 + $0x3dc] sm:$0xff]
      %v417 = vld [vmem:[%s198 + $0x3e4] sm:$0xff]
      %v418 = vld [vmem:[%s198 + $0x3ec] sm:$0xf]
      %v419 = vld [vmem:[%s198 + $0x3f0] sm:$0xff]
      %v420 = vld [vmem:[%s198 + $0x3f8] sm:$0xff]
      %v421 = vld [vmem:[%s198 + $0x400] sm:$0xff]
      %v422 = vld [vmem:[%s198 + $0x408] sm:$0xf]
      %v423 = vld [vmem:[%s198 + $0x40c] sm:$0xff]
      %v424 = vld [vmem:[%s198 + $0x414] sm:$0xff]
      %v425 = vld [vmem:[%s198 + $0x41c] sm:$0xff]
      %v426 = vld [vmem:[%s198 + $0x424] sm:$0xf]
      %v427 = vld [vmem:[%s198 + $0x428] sm:$0xff]
      %v428 = vld [vmem:[%s198 + $0x430] sm:$0xff]
      %v429 = vld [vmem:[%s198 + $0x438] sm:$0xff]
      %v430 = vld [vmem:[%s198 + $0x440] sm:$0xf]
      %v431 = vld [vmem:[%s198 + $0x444] sm:$0xff]
      %v432 = vld [vmem:[%s198 + $0x44c] sm:$0xff]
      %v433 = vld [vmem:[%s198 + $0x454] sm:$0xff]
      %v434 = vld [vmem:[%s198 + $0x45c] sm:$0xf]
      %v435 = vld [vmem:[%s198 + $0x460] sm:$0xff]
      %v436 = vld [vmem:[%s198 + $0x468] sm:$0xff]
      %v437 = vld [vmem:[%s198 + $0x470] sm:$0xff]
      %v438 = vld [vmem:[%s198 + $0x478] sm:$0xf]
      %v439 = vld [vmem:[%s198 + $0x47c] sm:$0xff]
      %v440 = vld [vmem:[%s198 + $0x484] sm:$0xff]
      %v441 = vld [vmem:[%s198 + $0x48c] sm:$0xff]
      %v442 = vld [vmem:[%s198 + $0x494] sm:$0xf]
      %v443 = vld [vmem:[%s198 + $0x498] sm:$0xff]
      %v444 = vld [vmem:[%s198 + $0x4a0] sm:$0xff]
      %v445 = vld [vmem:[%s198 + $0x4a8] sm:$0xff]
      %v446 = vld [vmem:[%s198 + $0x4b0] sm:$0xf]
      %v447 = vld [vmem:[%s198 + $0x4b4] sm:$0xff]
      %v448 = vld [vmem:[%s198 + $0x4bc] sm:$0xff]
      %v449 = vld [vmem:[%s198 + $0x4c4] sm:$0xff]
      %v450 = vld [vmem:[%s198 + $0x4cc] sm:$0xf]
      %v451 = vld [vmem:[%s198 + $0x4d0] sm:$0xff]
      %v452 = vld [vmem:[%s198 + $0x4d8] sm:$0xff]
      %v453 = vld [vmem:[%s198 + $0x4e0] sm:$0xff]
      %v454 = vld [vmem:[%s198 + $0x4e8] sm:$0xf]
      %v455 = vld [vmem:[%s198 + $0x4ec] sm:$0xff]
      %v456 = vld [vmem:[%s198 + $0x4f4] sm:$0xff]
      %v457 = vld [vmem:[%s198 + $0x4fc] sm:$0xff]
      %v458 = vld [vmem:[%s198 + $0x504] sm:$0xf]
      %v459 = vld [vmem:[%s198 + $0x508] sm:$0xff]
      %v460 = vld [vmem:[%s198 + $0x510] sm:$0xff]
      %v461 = vld [vmem:[%s198 + $0x518] sm:$0xff]
      %v462 = vld [vmem:[%s198 + $0x520] sm:$0xf]
      %v463 = vld [vmem:[%s198 + $0x524] sm:$0xff]
      %v464 = vld [vmem:[%s198 + $0x52c] sm:$0xff]
      %v465 = vld [vmem:[%s198 + $0x534] sm:$0xff]
      %v466 = vld [vmem:[%s198 + $0x53c] sm:$0xf]
      %v467 = vld [vmem:[%s198 + $0x540] sm:$0xff]
      %v468 = vld [vmem:[%s198 + $0x548] sm:$0xff]
      %v469 = vld [vmem:[%s198 + $0x550] sm:$0xff]
      %v470 = vld [vmem:[%s198 + $0x558] sm:$0xf]
      %v471 = vld [vmem:[%s198 + $0x55c] sm:$0xff]
      %v472 = vld [vmem:[%s198 + $0x564] sm:$0xff]
      %v473 = vld [vmem:[%s198 + $0x56c] sm:$0xff]
      %v474 = vld [vmem:[%s198 + $0x574] sm:$0xf]
      %v475 = vld [vmem:[%s198 + $0x578] sm:$0xff]
      %v476 = vld [vmem:[%s198 + $0x580] sm:$0xff]
      %v477 = vld [vmem:[%s198 + $0x588] sm:$0xff]
      %v478 = vld [vmem:[%s198 + $0x590] sm:$0xf]
      %v479 = vld [vmem:[%s198 + $0x594] sm:$0xff]
      %v480 = vld [vmem:[%s198 + $0x59c] sm:$0xff]
      %v481 = vld [vmem:[%s198 + $0x5a4] sm:$0xff]
      %v482 = vld [vmem:[%s198 + $0x5ac] sm:$0xf]
      %v483 = vld [vmem:[%s198 + $0x5b0] sm:$0xff]
      %v484 = vld [vmem:[%s198 + $0x5b8] sm:$0xff]
      %v485 = vld [vmem:[%s198 + $0x5c0] sm:$0xff]
      %v486 = vld [vmem:[%s198 + $0x5c8] sm:$0xf]
      %v487 = vld [vmem:[%s198 + $0x5cc] sm:$0xff]
      %v488 = vld [vmem:[%s198 + $0x5d4] sm:$0xff]
      %v489 = vld [vmem:[%s198 + $0x5dc] sm:$0xff]
      %v490 = vld [vmem:[%s198 + $0x5e4] sm:$0xf]
      %v491 = vld [vmem:[%s198 + $0x5e8] sm:$0xff]
      %v492 = vld [vmem:[%s198 + $0x5f0] sm:$0xff]
      %v493 = vld [vmem:[%s198 + $0x5f8] sm:$0xff]
      %v494 = vld [vmem:[%s198 + $0x600] sm:$0xf]
      %v495 = vld [vmem:[%s198 + $0x604] sm:$0xff]
      %v496 = vld [vmem:[%s198 + $0x60c] sm:$0xff]
      %v497 = vld [vmem:[%s198 + $0x614] sm:$0xff]
      %v498 = vld [vmem:[%s198 + $0x61c] sm:$0xf]
      %v499 = vld [vmem:[%s198 + $0x620] sm:$0xff]
      %v500 = vld [vmem:[%s198 + $0x628] sm:$0xff]
      %v501 = vld [vmem:[%s198 + $0x630] sm:$0xff]
      %v502 = vld [vmem:[%s198 + $0x638] sm:$0xf]
      %v503 = vld [vmem:[%s198 + $0x63c] sm:$0xff]
      %v504 = vld [vmem:[%s198 + $0x644] sm:$0xff]
      %v505 = vld [vmem:[%s198 + $0x64c] sm:$0xff]
      %v506 = vld [vmem:[%s198 + $0x654] sm:$0xf]
      %v507 = vld [vmem:[%s198 + $0x658] sm:$0xff]
      %v508 = vld [vmem:[%s198 + $0x660] sm:$0xff]
      %v509 = vld [vmem:[%s198 + $0x668] sm:$0xff]
      %v510 = vld [vmem:[%s198 + $0x670] sm:$0xf]
      %v511 = vld [vmem:[%s198 + $0x674] sm:$0xff]
      %v512 = vld [vmem:[%s198 + $0x67c] sm:$0xff]
      %v513 = vld [vmem:[%s198 + $0x684] sm:$0xff]
      %v514 = vld [vmem:[%s198 + $0x68c] sm:$0xf]
      %v515 = vld [vmem:[%s198 + $0x690] sm:$0xff]
      %v516 = vld [vmem:[%s198 + $0x698] sm:$0xff]
      %v517 = vld [vmem:[%s198 + $0x6a0] sm:$0xff]
      %v518 = vld [vmem:[%s198 + $0x6a8] sm:$0xf]
      %v519 = vld [vmem:[%s198 + $0x6ac] sm:$0xff]
      %v520 = vld [vmem:[%s198 + $0x6b4] sm:$0xff]
      %v521 = vld [vmem:[%s198 + $0x6bc] sm:$0xff]
      %v522 = vld [vmem:[%s198 + $0x6c4] sm:$0xf]
      %v523 = vld [vmem:[%s198 + $0x6c8] sm:$0xff]
      %v524 = vld [vmem:[%s198 + $0x6d0] sm:$0xff]
      %v525 = vld [vmem:[%s198 + $0x6d8] sm:$0xff]
      %v526 = vld [vmem:[%s198 + $0x6e0] sm:$0xf]
      %v527 = vld [vmem:[%s198 + $0x6e4] sm:$0xff]
      %v528 = vld [vmem:[%s198 + $0x6ec] sm:$0xff]
      %v529 = vld [vmem:[%s198 + $0x6f4] sm:$0xff]
      %v530 = vld [vmem:[%s198 + $0x6fc] sm:$0xf]
      %v595 = vunpack.c.l.b16 %v211
      %v596 = vunpack.c.h.b16 %v211
      %v597 = vunpack.c.l.b16 %v212
      %v598 = vunpack.c.h.b16 %v212
      %v599 = vunpack.c.l.b16 %v213
      %v600 = vunpack.c.h.b16 %v213
      %v601 = vunpack.c.l.b16 %v214
      %v602 = vunpack.c.h.b16 %v214
      %v603 = vunpack.c.l.b16 %v215
      %v604 = vunpack.c.h.b16 %v215
      %v605 = vunpack.c.l.b16 %v216
      %v606 = vunpack.c.h.b16 %v216
      %v607 = vunpack.c.l.b16 %v217
      %v608 = vunpack.c.h.b16 %v217
      %v609 = vunpack.c.l.b16 %v218
      %v610 = vunpack.c.h.b16 %v218
      %v611 = vunpack.c.l.b16 %v219
      %v612 = vunpack.c.h.b16 %v219
      %v613 = vunpack.c.l.b16 %v220
      %v614 = vunpack.c.h.b16 %v220
      %v615 = vunpack.c.l.b16 %v221
      %v616 = vunpack.c.h.b16 %v221
      %v617 = vunpack.c.l.b16 %v222
      %v618 = vunpack.c.h.b16 %v222
      %v619 = vunpack.c.l.b16 %v223
      %v620 = vunpack.c.h.b16 %v223
      %v621 = vunpack.c.l.b16 %v224
      %v622 = vunpack.c.h.b16 %v224
      %v623 = vunpack.c.l.b16 %v225
      %v624 = vunpack.c.h.b16 %v225
      %v625 = vunpack.c.l.b16 %v226
      %v626 = vunpack.c.h.b16 %v226
      %v627 = vunpack.c.l.b16 %v227
      %v628 = vunpack.c.h.b16 %v227
      %v629 = vunpack.c.l.b16 %v228
      %v630 = vunpack.c.h.b16 %v228
      %v631 = vunpack.c.l.b16 %v229
      %v632 = vunpack.c.h.b16 %v229
      %v633 = vunpack.c.l.b16 %v230
      %v634 = vunpack.c.h.b16 %v230
      %v635 = vunpack.c.l.b16 %v231
      %v636 = vunpack.c.h.b16 %v231
      %v637 = vunpack.c.l.b16 %v232
      %v638 = vunpack.c.h.b16 %v232
      %v639 = vunpack.c.l.b16 %v233
      %v640 = vunpack.c.h.b16 %v233
      %v641 = vunpack.c.l.b16 %v234
      %v642 = vunpack.c.h.b16 %v234
      %v643 = vunpack.c.l.b16 %v235
      %v644 = vunpack.c.h.b16 %v235
      %v645 = vunpack.c.l.b16 %v236
      %v646 = vunpack.c.h.b16 %v236
      %v647 = vunpack.c.l.b16 %v237
      %v648 = vunpack.c.h.b16 %v237
      %v649 = vunpack.c.l.b16 %v238
      %v650 = vunpack.c.h.b16 %v238
      %v651 = vunpack.c.l.b16 %v239
      %v652 = vunpack.c.h.b16 %v239
      %v653 = vunpack.c.l.b16 %v240
      %v654 = vunpack.c.h.b16 %v240
      %v655 = vunpack.c.l.b16 %v241
      %v656 = vunpack.c.h.b16 %v241
      %v657 = vunpack.c.l.b16 %v242
      %v658 = vunpack.c.h.b16 %v242
      %v659 = vunpack.c.l.b16 %v243
      %v660 = vunpack.c.h.b16 %v243
      %v661 = vunpack.c.l.b16 %v244
      %v662 = vunpack.c.h.b16 %v244
      %v663 = vunpack.c.l.b16 %v245
      %v664 = vunpack.c.h.b16 %v245
      %v665 = vunpack.c.l.b16 %v246
      %v666 = vunpack.c.h.b16 %v246
      %v667 = vunpack.c.l.b16 %v247
      %v668 = vunpack.c.h.b16 %v247
      %v669 = vunpack.c.l.b16 %v248
      %v670 = vunpack.c.h.b16 %v248
      %v671 = vunpack.c.l.b16 %v249
      %v672 = vunpack.c.h.b16 %v249
      %v673 = vunpack.c.l.b16 %v250
      %v674 = vunpack.c.h.b16 %v250
      %v675 = vunpack.c.l.b16 %v251
      %v676 = vunpack.c.h.b16 %v251
      %v677 = vunpack.c.l.b16 %v252
      %v678 = vunpack.c.h.b16 %v252
      %v679 = vunpack.c.l.b16 %v253
      %v680 = vunpack.c.h.b16 %v253
      %v681 = vunpack.c.l.b16 %v254
      %v682 = vunpack.c.h.b16 %v254
      %v683 = vunpack.c.l.b16 %v255
      %v684 = vunpack.c.h.b16 %v255
      %v685 = vunpack.c.l.b16 %v256
      %v686 = vunpack.c.h.b16 %v256
      %v687 = vunpack.c.l.b16 %v257
      %v688 = vunpack.c.h.b16 %v257
      %v689 = vunpack.c.l.b16 %v258
      %v690 = vunpack.c.h.b16 %v258
      %v691 = vunpack.c.l.b16 %v259
      %v692 = vunpack.c.h.b16 %v259
      %v693 = vunpack.c.l.b16 %v260
      %v694 = vunpack.c.h.b16 %v260
      %v695 = vunpack.c.l.b16 %v261
      %v696 = vunpack.c.h.b16 %v261
      %v697 = vunpack.c.l.b16 %v262
      %v698 = vunpack.c.h.b16 %v262
      %v699 = vunpack.c.l.b16 %v263
      %v700 = vunpack.c.h.b16 %v263
      %v701 = vunpack.c.l.b16 %v264
      %v702 = vunpack.c.h.b16 %v264
      %v703 = vunpack.c.l.b16 %v265
      %v704 = vunpack.c.h.b16 %v265
      %v705 = vunpack.c.l.b16 %v266
      %v706 = vunpack.c.h.b16 %v266
      %v707 = vunpack.c.l.b16 %v267
      %v708 = vunpack.c.h.b16 %v267
      %v709 = vunpack.c.l.b16 %v268
      %v710 = vunpack.c.h.b16 %v268
      %v711 = vunpack.c.l.b16 %v269
      %v712 = vunpack.c.h.b16 %v269
      %v713 = vunpack.c.l.b16 %v270
      %v714 = vunpack.c.h.b16 %v270
      %v715 = vunpack.c.l.b16 %v271
      %v716 = vunpack.c.h.b16 %v271
      %v717 = vunpack.c.l.b16 %v272
      %v718 = vunpack.c.h.b16 %v272
      %v719 = vunpack.c.l.b16 %v273
      %v720 = vunpack.c.h.b16 %v273
      %v721 = vunpack.c.l.b16 %v274
      %v722 = vunpack.c.h.b16 %v274
      %v723 = vpack.c.b16 %v599, %v595
      %v724 = vpack.c.b16 %v600, %v596
      %v725 = vpack.c.b16 %v601, %v597
      %v726 = vpack.c.b16 %v602, %v598
      %v727 = vpack.c.b16 %v607, %v603
      %v728 = vpack.c.b16 %v608, %v604
      %v729 = vpack.c.b16 %v609, %v605
      %v730 = vpack.c.b16 %v610, %v606
      %v731 = vpack.c.b16 %v615, %v611
      %v732 = vpack.c.b16 %v616, %v612
      %v733 = vpack.c.b16 %v617, %v613
      %v734 = vpack.c.b16 %v618, %v614
      %v735 = vpack.c.b16 %v623, %v619
      %v736 = vpack.c.b16 %v624, %v620
      %v737 = vpack.c.b16 %v625, %v621
      %v738 = vpack.c.b16 %v626, %v622
      %v739 = vpack.c.b16 %v631, %v627
      %v740 = vpack.c.b16 %v632, %v628
      %v741 = vpack.c.b16 %v633, %v629
      %v742 = vpack.c.b16 %v634, %v630
      %v743 = vpack.c.b16 %v639, %v635
      %v744 = vpack.c.b16 %v640, %v636
      %v745 = vpack.c.b16 %v641, %v637
      %v746 = vpack.c.b16 %v642, %v638
      %v747 = vpack.c.b16 %v647, %v643
      %v748 = vpack.c.b16 %v648, %v644
      %v749 = vpack.c.b16 %v649, %v645
      %v750 = vpack.c.b16 %v650, %v646
      %v751 = vpack.c.b16 %v655, %v651
      %v752 = vpack.c.b16 %v656, %v652
      %v753 = vpack.c.b16 %v657, %v653
      %v754 = vpack.c.b16 %v658, %v654
      %v755 = vpack.c.b16 %v663, %v659
      %v756 = vpack.c.b16 %v664, %v660
      %v757 = vpack.c.b16 %v665, %v661
      %v758 = vpack.c.b16 %v666, %v662
      %v759 = vpack.c.b16 %v671, %v667
      %v760 = vpack.c.b16 %v672, %v668
      %v761 = vpack.c.b16 %v673, %v669
      %v762 = vpack.c.b16 %v674, %v670
      %v763 = vpack.c.b16 %v679, %v675
      %v764 = vpack.c.b16 %v680, %v676
      %v765 = vpack.c.b16 %v681, %v677
      %v766 = vpack.c.b16 %v682, %v678
      %v767 = vpack.c.b16 %v687, %v683
      %v768 = vpack.c.b16 %v688, %v684
      %v769 = vpack.c.b16 %v689, %v685
      %v770 = vpack.c.b16 %v690, %v686
      %v771 = vpack.c.b16 %v695, %v691
      %v772 = vpack.c.b16 %v696, %v692
      %v773 = vpack.c.b16 %v697, %v693
      %v774 = vpack.c.b16 %v698, %v694
      %v775 = vpack.c.b16 %v703, %v699
      %v776 = vpack.c.b16 %v704, %v700
      %v777 = vpack.c.b16 %v705, %v701
      %v778 = vpack.c.b16 %v706, %v702
      %v779 = vpack.c.b16 %v711, %v707
      %v780 = vpack.c.b16 %v712, %v708
      %v781 = vpack.c.b16 %v713, %v709
      %v782 = vpack.c.b16 %v714, %v710
      %v783 = vpack.c.b16 %v719, %v715
      %v784 = vpack.c.b16 %v720, %v716
      %v785 = vpack.c.b16 %v721, %v717
      %v786 = vpack.c.b16 %v722, %v718
      %v1107 = vunpack.c.l.b16 %v275
      %v1108 = vunpack.c.h.b16 %v275
      %v1109 = vunpack.c.l.b16 %v276
      %v1110 = vunpack.c.h.b16 %v276
      %v1111 = vunpack.c.l.b16 %v277
      %v1112 = vunpack.c.h.b16 %v277
      %v1113 = vunpack.c.l.b16 %v278
      %v1114 = vunpack.c.l.b16 %v279
      %v1115 = vunpack.c.h.b16 %v279
      %v1116 = vunpack.c.l.b16 %v280
      %v1117 = vunpack.c.h.b16 %v280
      %v1118 = vunpack.c.l.b16 %v281
      %v1119 = vunpack.c.h.b16 %v281
      %v1120 = vunpack.c.l.b16 %v282
      %v1121 = vunpack.c.l.b16 %v283
      %v1122 = vunpack.c.h.b16 %v283
      %v1123 = vunpack.c.l.b16 %v284
      %v1124 = vunpack.c.h.b16 %v284
      %v1125 = vunpack.c.l.b16 %v285
      %v1126 = vunpack.c.h.b16 %v285
      %v1127 = vunpack.c.l.b16 %v286
      %v1128 = vunpack.c.l.b16 %v287
      %v1129 = vunpack.c.h.b16 %v287
      %v1130 = vunpack.c.l.b16 %v288
      %v1131 = vunpack.c.h.b16 %v288
      %v1132 = vunpack.c.l.b16 %v289
      %v1133 = vunpack.c.h.b16 %v289
      %v1134 = vunpack.c.l.b16 %v290
      %v1135 = vunpack.c.l.b16 %v291
      %v1136 = vunpack.c.h.b16 %v291
      %v1137 = vunpack.c.l.b16 %v292
      %v1138 = vunpack.c.h.b16 %v292
      %v1139 = vunpack.c.l.b16 %v293
      %v1140 = vunpack.c.h.b16 %v293
      %v1141 = vunpack.c.l.b16 %v294
      %v1142 = vunpack.c.l.b16 %v295
      %v1143 = vunpack.c.h.b16 %v295
      %v1144 = vunpack.c.l.b16 %v296
      %v1145 = vunpack.c.h.b16 %v296
      %v1146 = vunpack.c.l.b16 %v297
      %v1147 = vunpack.c.h.b16 %v297
      %v1148 = vunpack.c.l.b16 %v298
      %v1149 = vunpack.c.l.b16 %v299
      %v1150 = vunpack.c.h.b16 %v299
      %v1151 = vunpack.c.l.b16 %v300
      %v1152 = vunpack.c.h.b16 %v300
      %v1153 = vunpack.c.l.b16 %v301
      %v1154 = vunpack.c.h.b16 %v301
      %v1155 = vunpack.c.l.b16 %v302
      %v1156 = vunpack.c.l.b16 %v303
      %v1157 = vunpack.c.h.b16 %v303
      %v1158 = vunpack.c.l.b16 %v304
      %v1159 = vunpack.c.h.b16 %v304
      %v1160 = vunpack.c.l.b16 %v305
      %v1161 = vunpack.c.h.b16 %v305
      %v1162 = vunpack.c.l.b16 %v306
      %v1163 = vunpack.c.l.b16 %v307
      %v1164 = vunpack.c.h.b16 %v307
      %v1165 = vunpack.c.l.b16 %v308
      %v1166 = vunpack.c.h.b16 %v308
      %v1167 = vunpack.c.l.b16 %v309
      %v1168 = vunpack.c.h.b16 %v309
      %v1169 = vunpack.c.l.b16 %v310
      %v1170 = vunpack.c.l.b16 %v311
      %v1171 = vunpack.c.h.b16 %v311
      %v1172 = vunpack.c.l.b16 %v312
      %v1173 = vunpack.c.h.b16 %v312
      %v1174 = vunpack.c.l.b16 %v313
      %v1175 = vunpack.c.h.b16 %v313
      %v1176 = vunpack.c.l.b16 %v314
      %v1177 = vunpack.c.l.b16 %v315
      %v1178 = vunpack.c.h.b16 %v315
      %v1179 = vunpack.c.l.b16 %v316
      %v1180 = vunpack.c.h.b16 %v316
      %v1181 = vunpack.c.l.b16 %v317
      %v1182 = vunpack.c.h.b16 %v317
      %v1183 = vunpack.c.l.b16 %v318
      %v1184 = vunpack.c.l.b16 %v319
      %v1185 = vunpack.c.h.b16 %v319
      %v1186 = vunpack.c.l.b16 %v320
      %v1187 = vunpack.c.h.b16 %v320
      %v1188 = vunpack.c.l.b16 %v321
      %v1189 = vunpack.c.h.b16 %v321
      %v1190 = vunpack.c.l.b16 %v322
      %v1191 = vunpack.c.l.b16 %v323
      %v1192 = vunpack.c.h.b16 %v323
      %v1193 = vunpack.c.l.b16 %v324
      %v1194 = vunpack.c.h.b16 %v324
      %v1195 = vunpack.c.l.b16 %v325
      %v1196 = vunpack.c.h.b16 %v325
      %v1197 = vunpack.c.l.b16 %v326
      %v1198 = vunpack.c.l.b16 %v327
      %v1199 = vunpack.c.h.b16 %v327
      %v1200 = vunpack.c.l.b16 %v328
      %v1201 = vunpack.c.h.b16 %v328
      %v1202 = vunpack.c.l.b16 %v329
      %v1203 = vunpack.c.h.b16 %v329
      %v1204 = vunpack.c.l.b16 %v330
      %v1205 = vunpack.c.l.b16 %v331
      %v1206 = vunpack.c.h.b16 %v331
      %v1207 = vunpack.c.l.b16 %v332
      %v1208 = vunpack.c.h.b16 %v332
      %v1209 = vunpack.c.l.b16 %v333
      %v1210 = vunpack.c.h.b16 %v333
      %v1211 = vunpack.c.l.b16 %v334
      %v1212 = vunpack.c.l.b16 %v335
      %v1213 = vunpack.c.h.b16 %v335
      %v1214 = vunpack.c.l.b16 %v336
      %v1215 = vunpack.c.h.b16 %v336
      %v1216 = vunpack.c.l.b16 %v337
      %v1217 = vunpack.c.h.b16 %v337
      %v1218 = vunpack.c.l.b16 %v338
      %v1219 = vunpack.c.l.b16 %v339
      %v1220 = vunpack.c.h.b16 %v339
      %v1221 = vunpack.c.l.b16 %v340
      %v1222 = vunpack.c.h.b16 %v340
      %v1223 = vunpack.c.l.b16 %v341
      %v1224 = vunpack.c.h.b16 %v341
      %v1225 = vunpack.c.l.b16 %v342
      %v1226 = vunpack.c.l.b16 %v343
      %v1227 = vunpack.c.h.b16 %v343
      %v1228 = vunpack.c.l.b16 %v344
      %v1229 = vunpack.c.h.b16 %v344
      %v1230 = vunpack.c.l.b16 %v345
      %v1231 = vunpack.c.h.b16 %v345
      %v1232 = vunpack.c.l.b16 %v346
      %v1233 = vunpack.c.l.b16 %v347
      %v1234 = vunpack.c.h.b16 %v347
      %v1235 = vunpack.c.l.b16 %v348
      %v1236 = vunpack.c.h.b16 %v348
      %v1237 = vunpack.c.l.b16 %v349
      %v1238 = vunpack.c.h.b16 %v349
      %v1239 = vunpack.c.l.b16 %v350
      %v1240 = vunpack.c.l.b16 %v351
      %v1241 = vunpack.c.h.b16 %v351
      %v1242 = vunpack.c.l.b16 %v352
      %v1243 = vunpack.c.h.b16 %v352
      %v1244 = vunpack.c.l.b16 %v353
      %v1245 = vunpack.c.h.b16 %v353
      %v1246 = vunpack.c.l.b16 %v354
      %v1247 = vunpack.c.l.b16 %v355
      %v1248 = vunpack.c.h.b16 %v355
      %v1249 = vunpack.c.l.b16 %v356
      %v1250 = vunpack.c.h.b16 %v356
      %v1251 = vunpack.c.l.b16 %v357
      %v1252 = vunpack.c.h.b16 %v357
      %v1253 = vunpack.c.l.b16 %v358
      %v1254 = vunpack.c.l.b16 %v359
      %v1255 = vunpack.c.h.b16 %v359
      %v1256 = vunpack.c.l.b16 %v360
      %v1257 = vunpack.c.h.b16 %v360
      %v1258 = vunpack.c.l.b16 %v361
      %v1259 = vunpack.c.h.b16 %v361
      %v1260 = vunpack.c.l.b16 %v362
      %v1261 = vunpack.c.l.b16 %v363
      %v1262 = vunpack.c.h.b16 %v363
      %v1263 = vunpack.c.l.b16 %v364
      %v1264 = vunpack.c.h.b16 %v364
      %v1265 = vunpack.c.l.b16 %v365
      %v1266 = vunpack.c.h.b16 %v365
      %v1267 = vunpack.c.l.b16 %v366
      %v1268 = vunpack.c.l.b16 %v367
      %v1269 = vunpack.c.h.b16 %v367
      %v1270 = vunpack.c.l.b16 %v368
      %v1271 = vunpack.c.h.b16 %v368
      %v1272 = vunpack.c.l.b16 %v369
      %v1273 = vunpack.c.h.b16 %v369
      %v1274 = vunpack.c.l.b16 %v370
      %v1275 = vunpack.c.l.b16 %v371
      %v1276 = vunpack.c.h.b16 %v371
      %v1277 = vunpack.c.l.b16 %v372
      %v1278 = vunpack.c.h.b16 %v372
      %v1279 = vunpack.c.l.b16 %v373
      %v1280 = vunpack.c.h.b16 %v373
      %v1281 = vunpack.c.l.b16 %v374
      %v1282 = vunpack.c.l.b16 %v375
      %v1283 = vunpack.c.h.b16 %v375
      %v1284 = vunpack.c.l.b16 %v376
      %v1285 = vunpack.c.h.b16 %v376
      %v1286 = vunpack.c.l.b16 %v377
      %v1287 = vunpack.c.h.b16 %v377
      %v1288 = vunpack.c.l.b16 %v378
      %v1289 = vunpack.c.l.b16 %v379
      %v1290 = vunpack.c.h.b16 %v379
      %v1291 = vunpack.c.l.b16 %v380
      %v1292 = vunpack.c.h.b16 %v380
      %v1293 = vunpack.c.l.b16 %v381
      %v1294 = vunpack.c.h.b16 %v381
      %v1295 = vunpack.c.l.b16 %v382
      %v1296 = vunpack.c.l.b16 %v383
      %v1297 = vunpack.c.h.b16 %v383
      %v1298 = vunpack.c.l.b16 %v384
      %v1299 = vunpack.c.h.b16 %v384
      %v1300 = vunpack.c.l.b16 %v385
      %v1301 = vunpack.c.h.b16 %v385
      %v1302 = vunpack.c.l.b16 %v386
      %v1303 = vunpack.c.l.b16 %v387
      %v1304 = vunpack.c.h.b16 %v387
      %v1305 = vunpack.c.l.b16 %v388
      %v1306 = vunpack.c.h.b16 %v388
      %v1307 = vunpack.c.l.b16 %v389
      %v1308 = vunpack.c.h.b16 %v389
      %v1309 = vunpack.c.l.b16 %v390
      %v1310 = vunpack.c.l.b16 %v391
      %v1311 = vunpack.c.h.b16 %v391
      %v1312 = vunpack.c.l.b16 %v392
      %v1313 = vunpack.c.h.b16 %v392
      %v1314 = vunpack.c.l.b16 %v393
      %v1315 = vunpack.c.h.b16 %v393
      %v1316 = vunpack.c.l.b16 %v394
      %v1317 = vunpack.c.l.b16 %v395
      %v1318 = vunpack.c.h.b16 %v395
      %v1319 = vunpack.c.l.b16 %v396
      %v1320 = vunpack.c.h.b16 %v396
      %v1321 = vunpack.c.l.b16 %v397
      %v1322 = vunpack.c.h.b16 %v397
      %v1323 = vunpack.c.l.b16 %v398
      %v1324 = vunpack.c.l.b16 %v399
      %v1325 = vunpack.c.h.b16 %v399
      %v1326 = vunpack.c.l.b16 %v400
      %v1327 = vunpack.c.h.b16 %v400
      %v1328 = vunpack.c.l.b16 %v401
      %v1329 = vunpack.c.h.b16 %v401
      %v1330 = vunpack.c.l.b16 %v402
      %v1331 = vunpack.c.l.b16 %v403
      %v1332 = vunpack.c.h.b16 %v403
      %v1333 = vunpack.c.l.b16 %v404
      %v1334 = vunpack.c.h.b16 %v404
      %v1335 = vunpack.c.l.b16 %v405
      %v1336 = vunpack.c.h.b16 %v405
      %v1337 = vunpack.c.l.b16 %v406
      %v1338 = vunpack.c.l.b16 %v407
      %v1339 = vunpack.c.h.b16 %v407
      %v1340 = vunpack.c.l.b16 %v408
      %v1341 = vunpack.c.h.b16 %v408
      %v1342 = vunpack.c.l.b16 %v409
      %v1343 = vunpack.c.h.b16 %v409
      %v1344 = vunpack.c.l.b16 %v410
      %v1345 = vunpack.c.l.b16 %v411
      %v1346 = vunpack.c.h.b16 %v411
      %v1347 = vunpack.c.l.b16 %v412
      %v1348 = vunpack.c.h.b16 %v412
      %v1349 = vunpack.c.l.b16 %v413
      %v1350 = vunpack.c.h.b16 %v413
      %v1351 = vunpack.c.l.b16 %v414
      %v1352 = vunpack.c.l.b16 %v415
      %v1353 = vunpack.c.h.b16 %v415
      %v1354 = vunpack.c.l.b16 %v416
      %v1355 = vunpack.c.h.b16 %v416
      %v1356 = vunpack.c.l.b16 %v417
      %v1357 = vunpack.c.h.b16 %v417
      %v1358 = vunpack.c.l.b16 %v418
      %v1359 = vunpack.c.l.b16 %v419
      %v1360 = vunpack.c.h.b16 %v419
      %v1361 = vunpack.c.l.b16 %v420
      %v1362 = vunpack.c.h.b16 %v420
      %v1363 = vunpack.c.l.b16 %v421
      %v1364 = vunpack.c.h.b16 %v421
      %v1365 = vunpack.c.l.b16 %v422
      %v1366 = vunpack.c.l.b16 %v423
      %v1367 = vunpack.c.h.b16 %v423
      %v1368 = vunpack.c.l.b16 %v424
      %v1369 = vunpack.c.h.b16 %v424
      %v1370 = vunpack.c.l.b16 %v425
      %v1371 = vunpack.c.h.b16 %v425
      %v1372 = vunpack.c.l.b16 %v426
      %v1373 = vunpack.c.l.b16 %v427
      %v1374 = vunpack.c.h.b16 %v427
      %v1375 = vunpack.c.l.b16 %v428
      %v1376 = vunpack.c.h.b16 %v428
      %v1377 = vunpack.c.l.b16 %v429
      %v1378 = vunpack.c.h.b16 %v429
      %v1379 = vunpack.c.l.b16 %v430
      %v1380 = vunpack.c.l.b16 %v431
      %v1381 = vunpack.c.h.b16 %v431
      %v1382 = vunpack.c.l.b16 %v432
      %v1383 = vunpack.c.h.b16 %v432
      %v1384 = vunpack.c.l.b16 %v433
      %v1385 = vunpack.c.h.b16 %v433
      %v1386 = vunpack.c.l.b16 %v434
      %v1387 = vunpack.c.l.b16 %v435
      %v1388 = vunpack.c.h.b16 %v435
      %v1389 = vunpack.c.l.b16 %v436
      %v1390 = vunpack.c.h.b16 %v436
      %v1391 = vunpack.c.l.b16 %v437
      %v1392 = vunpack.c.h.b16 %v437
      %v1393 = vunpack.c.l.b16 %v438
      %v1394 = vunpack.c.l.b16 %v439
      %v1395 = vunpack.c.h.b16 %v439
      %v1396 = vunpack.c.l.b16 %v440
      %v1397 = vunpack.c.h.b16 %v440
      %v1398 = vunpack.c.l.b16 %v441
      %v1399 = vunpack.c.h.b16 %v441
      %v1400 = vunpack.c.l.b16 %v442
      %v1401 = vunpack.c.l.b16 %v443
      %v1402 = vunpack.c.h.b16 %v443
      %v1403 = vunpack.c.l.b16 %v444
      %v1404 = vunpack.c.h.b16 %v444
      %v1405 = vunpack.c.l.b16 %v445
      %v1406 = vunpack.c.h.b16 %v445
      %v1407 = vunpack.c.l.b16 %v446
      %v1408 = vunpack.c.l.b16 %v447
      %v1409 = vunpack.c.h.b16 %v447
      %v1410 = vunpack.c.l.b16 %v448
      %v1411 = vunpack.c.h.b16 %v448
      %v1412 = vunpack.c.l.b16 %v449
      %v1413 = vunpack.c.h.b16 %v449
      %v1414 = vunpack.c.l.b16 %v450
      %v1415 = vunpack.c.l.b16 %v451
      %v1416 = vunpack.c.h.b16 %v451
      %v1417 = vunpack.c.l.b16 %v452
      %v1418 = vunpack.c.h.b16 %v452
      %v1419 = vunpack.c.l.b16 %v453
      %v1420 = vunpack.c.h.b16 %v453
      %v1421 = vunpack.c.l.b16 %v454
      %v1422 = vunpack.c.l.b16 %v455
      %v1423 = vunpack.c.h.b16 %v455
      %v1424 = vunpack.c.l.b16 %v456
      %v1425 = vunpack.c.h.b16 %v456
      %v1426 = vunpack.c.l.b16 %v457
      %v1427 = vunpack.c.h.b16 %v457
      %v1428 = vunpack.c.l.b16 %v458
      %v1429 = vunpack.c.l.b16 %v459
      %v1430 = vunpack.c.h.b16 %v459
      %v1431 = vunpack.c.l.b16 %v460
      %v1432 = vunpack.c.h.b16 %v460
      %v1433 = vunpack.c.l.b16 %v461
      %v1434 = vunpack.c.h.b16 %v461
      %v1435 = vunpack.c.l.b16 %v462
      %v1436 = vunpack.c.l.b16 %v463
      %v1437 = vunpack.c.h.b16 %v463
      %v1438 = vunpack.c.l.b16 %v464
      %v1439 = vunpack.c.h.b16 %v464
      %v1440 = vunpack.c.l.b16 %v465
      %v1441 = vunpack.c.h.b16 %v465
      %v1442 = vunpack.c.l.b16 %v466
      %v1443 = vunpack.c.l.b16 %v467
      %v1444 = vunpack.c.h.b16 %v467
      %v1445 = vunpack.c.l.b16 %v468
      %v1446 = vunpack.c.h.b16 %v468
      %v1447 = vunpack.c.l.b16 %v469
      %v1448 = vunpack.c.h.b16 %v469
      %v1449 = vunpack.c.l.b16 %v470
      %v1450 = vunpack.c.l.b16 %v471
      %v1451 = vunpack.c.h.b16 %v471
      %v1452 = vunpack.c.l.b16 %v472
      %v1453 = vunpack.c.h.b16 %v472
      %v1454 = vunpack.c.l.b16 %v473
      %v1455 = vunpack.c.h.b16 %v473
      %v1456 = vunpack.c.l.b16 %v474
      %v1457 = vunpack.c.l.b16 %v475
      %v1458 = vunpack.c.h.b16 %v475
      %v1459 = vunpack.c.l.b16 %v476
      %v1460 = vunpack.c.h.b16 %v476
      %v1461 = vunpack.c.l.b16 %v477
      %v1462 = vunpack.c.h.b16 %v477
      %v1463 = vunpack.c.l.b16 %v478
      %v1464 = vunpack.c.l.b16 %v479
      %v1465 = vunpack.c.h.b16 %v479
      %v1466 = vunpack.c.l.b16 %v480
      %v1467 = vunpack.c.h.b16 %v480
      %v1468 = vunpack.c.l.b16 %v481
      %v1469 = vunpack.c.h.b16 %v481
      %v1470 = vunpack.c.l.b16 %v482
      %v1471 = vunpack.c.l.b16 %v483
      %v1472 = vunpack.c.h.b16 %v483
      %v1473 = vunpack.c.l.b16 %v484
      %v1474 = vunpack.c.h.b16 %v484
      %v1475 = vunpack.c.l.b16 %v485
      %v1476 = vunpack.c.h.b16 %v485
      %v1477 = vunpack.c.l.b16 %v486
      %v1478 = vunpack.c.l.b16 %v487
      %v1479 = vunpack.c.h.b16 %v487
      %v1480 = vunpack.c.l.b16 %v488
      %v1481 = vunpack.c.h.b16 %v488
      %v1482 = vunpack.c.l.b16 %v489
      %v1483 = vunpack.c.h.b16 %v489
      %v1484 = vunpack.c.l.b16 %v490
      %v1485 = vunpack.c.l.b16 %v491
      %v1486 = vunpack.c.h.b16 %v491
      %v1487 = vunpack.c.l.b16 %v492
      %v1488 = vunpack.c.h.b16 %v492
      %v1489 = vunpack.c.l.b16 %v493
      %v1490 = vunpack.c.h.b16 %v493
      %v1491 = vunpack.c.l.b16 %v494
      %v1492 = vunpack.c.l.b16 %v495
      %v1493 = vunpack.c.h.b16 %v495
      %v1494 = vunpack.c.l.b16 %v496
      %v1495 = vunpack.c.h.b16 %v496
      %v1496 = vunpack.c.l.b16 %v497
      %v1497 = vunpack.c.h.b16 %v497
      %v1498 = vunpack.c.l.b16 %v498
      %v1499 = vunpack.c.l.b16 %v499
      %v1500 = vunpack.c.h.b16 %v499
      %v1501 = vunpack.c.l.b16 %v500
      %v1502 = vunpack.c.h.b16 %v500
      %v1503 = vunpack.c.l.b16 %v501
      %v1504 = vunpack.c.h.b16 %v501
      %v1505 = vunpack.c.l.b16 %v502
      %v1506 = vunpack.c.l.b16 %v503
      %v1507 = vunpack.c.h.b16 %v503
      %v1508 = vunpack.c.l.b16 %v504
      %v1509 = vunpack.c.h.b16 %v504
      %v1510 = vunpack.c.l.b16 %v505
      %v1511 = vunpack.c.h.b16 %v505
      %v1512 = vunpack.c.l.b16 %v506
      %v1513 = vunpack.c.l.b16 %v507
      %v1514 = vunpack.c.h.b16 %v507
      %v1515 = vunpack.c.l.b16 %v508
      %v1516 = vunpack.c.h.b16 %v508
      %v1517 = vunpack.c.l.b16 %v509
      %v1518 = vunpack.c.h.b16 %v509
      %v1519 = vunpack.c.l.b16 %v510
      %v1520 = vunpack.c.l.b16 %v511
      %v1521 = vunpack.c.h.b16 %v511
      %v1522 = vunpack.c.l.b16 %v512
      %v1523 = vunpack.c.h.b16 %v512
      %v1524 = vunpack.c.l.b16 %v513
      %v1525 = vunpack.c.h.b16 %v513
      %v1526 = vunpack.c.l.b16 %v514
      %v1527 = vunpack.c.l.b16 %v515
      %v1528 = vunpack.c.h.b16 %v515
      %v1529 = vunpack.c.l.b16 %v516
      %v1530 = vunpack.c.h.b16 %v516
      %v1531 = vunpack.c.l.b16 %v517
      %v1532 = vunpack.c.h.b16 %v517
      %v1533 = vunpack.c.l.b16 %v518
      %v1534 = vunpack.c.l.b16 %v519
      %v1535 = vunpack.c.h.b16 %v519
      %v1536 = vunpack.c.l.b16 %v520
      %v1537 = vunpack.c.h.b16 %v520
      %v1538 = vunpack.c.l.b16 %v521
      %v1539 = vunpack.c.h.b16 %v521
      %v1540 = vunpack.c.l.b16 %v522
      %v1541 = vunpack.c.l.b16 %v523
      %v1542 = vunpack.c.h.b16 %v523
      %v1543 = vunpack.c.l.b16 %v524
      %v1544 = vunpack.c.h.b16 %v524
      %v1545 = vunpack.c.l.b16 %v525
      %v1546 = vunpack.c.h.b16 %v525
      %v1547 = vunpack.c.l.b16 %v526
      %v1548 = vunpack.c.l.b16 %v527
      %v1549 = vunpack.c.h.b16 %v527
      %v1550 = vunpack.c.l.b16 %v528
      %v1551 = vunpack.c.h.b16 %v528
      %v1552 = vunpack.c.l.b16 %v529
      %v1553 = vunpack.c.h.b16 %v529
      %v1554 = vunpack.c.l.b16 %v530
      %v1555 = vpack.c.b16 %v1114, %v1107
      %v1556 = vpack.c.b16 %v1115, %v1108
      %v1557 = vpack.c.b16 %v1116, %v1109
      %v1558 = vpack.c.b16 %v1117, %v1110
      %v1559 = vpack.c.b16 %v1118, %v1111
      %v1560 = vpack.c.b16 %v1119, %v1112
      %v1561 = vpack.c.b16 %v1120, %v1113
      %v1562 = vpack.c.b16 %v1128, %v1121
      %v1563 = vpack.c.b16 %v1129, %v1122
      %v1564 = vpack.c.b16 %v1130, %v1123
      %v1565 = vpack.c.b16 %v1131, %v1124
      %v1566 = vpack.c.b16 %v1132, %v1125
      %v1567 = vpack.c.b16 %v1133, %v1126
      %v1568 = vpack.c.b16 %v1134, %v1127
      %v1569 = vpack.c.b16 %v1142, %v1135
      %v1570 = vpack.c.b16 %v1143, %v1136
      %v1571 = vpack.c.b16 %v1144, %v1137
      %v1572 = vpack.c.b16 %v1145, %v1138
      %v1573 = vpack.c.b16 %v1146, %v1139
      %v1574 = vpack.c.b16 %v1147, %v1140
      %v1575 = vpack.c.b16 %v1148, %v1141
      %v1576 = vpack.c.b16 %v1156, %v1149
      %v1577 = vpack.c.b16 %v1157, %v1150
      %v1578 = vpack.c.b16 %v1158, %v1151
      %v1579 = vpack.c.b16 %v1159, %v1152
      %v1580 = vpack.c.b16 %v1160, %v1153
      %v1581 = vpack.c.b16 %v1161, %v1154
      %v1582 = vpack.c.b16 %v1162, %v1155
      %v1583 = vpack.c.b16 %v1170, %v1163
      %v1584 = vpack.c.b16 %v1171, %v1164
      %v1585 = vpack.c.b16 %v1172, %v1165
      %v1586 = vpack.c.b16 %v1173, %v1166
      %v1587 = vpack.c.b16 %v1174, %v1167
      %v1588 = vpack.c.b16 %v1175, %v1168
      %v1589 = vpack.c.b16 %v1176, %v1169
      %v1590 = vpack.c.b16 %v1184, %v1177
      %v1591 = vpack.c.b16 %v1185, %v1178
      %v1592 = vpack.c.b16 %v1186, %v1179
      %v1593 = vpack.c.b16 %v1187, %v1180
      %v1594 = vpack.c.b16 %v1188, %v1181
      %v1595 = vpack.c.b16 %v1189, %v1182
      %v1596 = vpack.c.b16 %v1190, %v1183
      %v1597 = vpack.c.b16 %v1198, %v1191
      %v1598 = vpack.c.b16 %v1199, %v1192
      %v1599 = vpack.c.b16 %v1200, %v1193
      %v1600 = vpack.c.b16 %v1201, %v1194
      %v1601 = vpack.c.b16 %v1202, %v1195
      %v1602 = vpack.c.b16 %v1203, %v1196
      %v1603 = vpack.c.b16 %v1204, %v1197
      %v1604 = vpack.c.b16 %v1212, %v1205
      %v1605 = vpack.c.b16 %v1213, %v1206
      %v1606 = vpack.c.b16 %v1214, %v1207
      %v1607 = vpack.c.b16 %v1215, %v1208
      %v1608 = vpack.c.b16 %v1216, %v1209
      %v1609 = vpack.c.b16 %v1217, %v1210
      %v1610 = vpack.c.b16 %v1218, %v1211
      %v1611 = vpack.c.b16 %v1226, %v1219
      %v1612 = vpack.c.b16 %v1227, %v1220
      %v1613 = vpack.c.b16 %v1228, %v1221
      %v1614 = vpack.c.b16 %v1229, %v1222
      %v1615 = vpack.c.b16 %v1230, %v1223
      %v1616 = vpack.c.b16 %v1231, %v1224
      %v1617 = vpack.c.b16 %v1232, %v1225
      %v1618 = vpack.c.b16 %v1240, %v1233
      %v1619 = vpack.c.b16 %v1241, %v1234
      %v1620 = vpack.c.b16 %v1242, %v1235
      %v1621 = vpack.c.b16 %v1243, %v1236
      %v1622 = vpack.c.b16 %v1244, %v1237
      %v1623 = vpack.c.b16 %v1245, %v1238
      %v1624 = vpack.c.b16 %v1246, %v1239
      %v1625 = vpack.c.b16 %v1254, %v1247
      %v1626 = vpack.c.b16 %v1255, %v1248
      %v1627 = vpack.c.b16 %v1256, %v1249
      %v1628 = vpack.c.b16 %v1257, %v1250
      %v1629 = vpack.c.b16 %v1258, %v1251
      %v1630 = vpack.c.b16 %v1259, %v1252
      %v1631 = vpack.c.b16 %v1260, %v1253
      %v1632 = vpack.c.b16 %v1268, %v1261
      %v1633 = vpack.c.b16 %v1269, %v1262
      %v1634 = vpack.c.b16 %v1270, %v1263
      %v1635 = vpack.c.b16 %v1271, %v1264
      %v1636 = vpack.c.b16 %v1272, %v1265
      %v1637 = vpack.c.b16 %v1273, %v1266
      %v1638 = vpack.c.b16 %v1274, %v1267
      %v1639 = vpack.c.b16 %v1282, %v1275
      %v1640 = vpack.c.b16 %v1283, %v1276
      %v1641 = vpack.c.b16 %v1284, %v1277
      %v1642 = vpack.c.b16 %v1285, %v1278
      %v1643 = vpack.c.b16 %v1286, %v1279
      %v1644 = vpack.c.b16 %v1287, %v1280
      %v1645 = vpack.c.b16 %v1288, %v1281
      %v1646 = vpack.c.b16 %v1296, %v1289
      %v1647 = vpack.c.b16 %v1297, %v1290
      %v1648 = vpack.c.b16 %v1298, %v1291
      %v1649 = vpack.c.b16 %v1299, %v1292
      %v1650 = vpack.c.b16 %v1300, %v1293
      %v1651 = vpack.c.b16 %v1301, %v1294
      %v1652 = vpack.c.b16 %v1302, %v1295
      %v1653 = vpack.c.b16 %v1310, %v1303
      %v1654 = vpack.c.b16 %v1311, %v1304
      %v1655 = vpack.c.b16 %v1312, %v1305
      %v1656 = vpack.c.b16 %v1313, %v1306
      %v1657 = vpack.c.b16 %v1314, %v1307
      %v1658 = vpack.c.b16 %v1315, %v1308
      %v1659 = vpack.c.b16 %v1316, %v1309
      %v1660 = vpack.c.b16 %v1324, %v1317
      %v1661 = vpack.c.b16 %v1325, %v1318
      %v1662 = vpack.c.b16 %v1326, %v1319
      %v1663 = vpack.c.b16 %v1327, %v1320
      %v1664 = vpack.c.b16 %v1328, %v1321
      %v1665 = vpack.c.b16 %v1329, %v1322
      %v1666 = vpack.c.b16 %v1330, %v1323
      %v1667 = vpack.c.b16 %v1338, %v1331
      %v1668 = vpack.c.b16 %v1339, %v1332
      %v1669 = vpack.c.b16 %v1340, %v1333
      %v1670 = vpack.c.b16 %v1341, %v1334
      %v1671 = vpack.c.b16 %v1342, %v1335
      %v1672 = vpack.c.b16 %v1343, %v1336
      %v1673 = vpack.c.b16 %v1344, %v1337
      %v1674 = vpack.c.b16 %v1352, %v1345
      %v1675 = vpack.c.b16 %v1353, %v1346
      %v1676 = vpack.c.b16 %v1354, %v1347
      %v1677 = vpack.c.b16 %v1355, %v1348
      %v1678 = vpack.c.b16 %v1356, %v1349
      %v1679 = vpack.c.b16 %v1357, %v1350
      %v1680 = vpack.c.b16 %v1358, %v1351
      %v1681 = vpack.c.b16 %v1366, %v1359
      %v1682 = vpack.c.b16 %v1367, %v1360
      %v1683 = vpack.c.b16 %v1368, %v1361
      %v1684 = vpack.c.b16 %v1369, %v1362
      %v1685 = vpack.c.b16 %v1370, %v1363
      %v1686 = vpack.c.b16 %v1371, %v1364
      %v1687 = vpack.c.b16 %v1372, %v1365
      %v1688 = vpack.c.b16 %v1380, %v1373
      %v1689 = vpack.c.b16 %v1381, %v1374
      %v1690 = vpack.c.b16 %v1382, %v1375
      %v1691 = vpack.c.b16 %v1383, %v1376
      %v1692 = vpack.c.b16 %v1384, %v1377
      %v1693 = vpack.c.b16 %v1385, %v1378
      %v1694 = vpack.c.b16 %v1386, %v1379
      %v1695 = vpack.c.b16 %v1394, %v1387
      %v1696 = vpack.c.b16 %v1395, %v1388
      %v1697 = vpack.c.b16 %v1396, %v1389
      %v1698 = vpack.c.b16 %v1397, %v1390
      %v1699 = vpack.c.b16 %v1398, %v1391
      %v1700 = vpack.c.b16 %v1399, %v1392
      %v1701 = vpack.c.b16 %v1400, %v1393
      %v1702 = vpack.c.b16 %v1408, %v1401
      %v1703 = vpack.c.b16 %v1409, %v1402
      %v1704 = vpack.c.b16 %v1410, %v1403
      %v1705 = vpack.c.b16 %v1411, %v1404
      %v1706 = vpack.c.b16 %v1412, %v1405
      %v1707 = vpack.c.b16 %v1413, %v1406
      %v1708 = vpack.c.b16 %v1414, %v1407
      %v1709 = vpack.c.b16 %v1422, %v1415
      %v1710 = vpack.c.b16 %v1423, %v1416
      %v1711 = vpack.c.b16 %v1424, %v1417
      %v1712 = vpack.c.b16 %v1425, %v1418
      %v1713 = vpack.c.b16 %v1426, %v1419
      %v1714 = vpack.c.b16 %v1427, %v1420
      %v1715 = vpack.c.b16 %v1428, %v1421
      %v1716 = vpack.c.b16 %v1436, %v1429
      %v1717 = vpack.c.b16 %v1437, %v1430
      %v1718 = vpack.c.b16 %v1438, %v1431
      %v1719 = vpack.c.b16 %v1439, %v1432
      %v1720 = vpack.c.b16 %v1440, %v1433
      %v1721 = vpack.c.b16 %v1441, %v1434
      %v1722 = vpack.c.b16 %v1442, %v1435
      %v1723 = vpack.c.b16 %v1450, %v1443
      %v1724 = vpack.c.b16 %v1451, %v1444
      %v1725 = vpack.c.b16 %v1452, %v1445
      %v1726 = vpack.c.b16 %v1453, %v1446
      %v1727 = vpack.c.b16 %v1454, %v1447
      %v1728 = vpack.c.b16 %v1455, %v1448
      %v1729 = vpack.c.b16 %v1456, %v1449
      %v1730 = vpack.c.b16 %v1464, %v1457
      %v1731 = vpack.c.b16 %v1465, %v1458
      %v1732 = vpack.c.b16 %v1466, %v1459
      %v1733 = vpack.c.b16 %v1467, %v1460
      %v1734 = vpack.c.b16 %v1468, %v1461
      %v1735 = vpack.c.b16 %v1469, %v1462
      %v1736 = vpack.c.b16 %v1470, %v1463
      %v1737 = vpack.c.b16 %v1478, %v1471
      %v1738 = vpack.c.b16 %v1479, %v1472
      %v1739 = vpack.c.b16 %v1480, %v1473
      %v1740 = vpack.c.b16 %v1481, %v1474
      %v1741 = vpack.c.b16 %v1482, %v1475
      %v1742 = vpack.c.b16 %v1483, %v1476
      %v1743 = vpack.c.b16 %v1484, %v1477
      %v1744 = vpack.c.b16 %v1492, %v1485
      %v1745 = vpack.c.b16 %v1493, %v1486
      %v1746 = vpack.c.b16 %v1494, %v1487
      %v1747 = vpack.c.b16 %v1495, %v1488
      %v1748 = vpack.c.b16 %v1496, %v1489
      %v1749 = vpack.c.b16 %v1497, %v1490
      %v1750 = vpack.c.b16 %v1498, %v1491
      %v1751 = vpack.c.b16 %v1506, %v1499
      %v1752 = vpack.c.b16 %v1507, %v1500
      %v1753 = vpack.c.b16 %v1508, %v1501
      %v1754 = vpack.c.b16 %v1509, %v1502
      %v1755 = vpack.c.b16 %v1510, %v1503
      %v1756 = vpack.c.b16 %v1511, %v1504
      %v1757 = vpack.c.b16 %v1512, %v1505
      %v1758 = vpack.c.b16 %v1520, %v1513
      %v1759 = vpack.c.b16 %v1521, %v1514
      %v1760 = vpack.c.b16 %v1522, %v1515
      %v1761 = vpack.c.b16 %v1523, %v1516
      %v1762 = vpack.c.b16 %v1524, %v1517
      %v1763 = vpack.c.b16 %v1525, %v1518
      %v1764 = vpack.c.b16 %v1526, %v1519
      %v1765 = vpack.c.b16 %v1534, %v1527
      %v1766 = vpack.c.b16 %v1535, %v1528
      %v1767 = vpack.c.b16 %v1536, %v1529
      %v1768 = vpack.c.b16 %v1537, %v1530
      %v1769 = vpack.c.b16 %v1538, %v1531
      %v1770 = vpack.c.b16 %v1539, %v1532
      %v1771 = vpack.c.b16 %v1540, %v1533
      %v1772 = vpack.c.b16 %v1548, %v1541
      %v1773 = vpack.c.b16 %v1549, %v1542
      %v1774 = vpack.c.b16 %v1550, %v1543
      %v1775 = vpack.c.b16 %v1551, %v1544
      %v1776 = vpack.c.b16 %v1552, %v1545
      %v1777 = vpack.c.b16 %v1553, %v1546
      %v1778 = vpack.c.b16 %v1554, %v1547
      %2003 = vmatprep.subr.bf16.mxu0 %v1556
      %2004 = vmatpush1.bf16.msra.mxu0 %v1555
      %2005 = vmatprep.subr.bf16.mxu0 %v1563
      %2006 = vmatpush1.bf16.msra.mxu0 %v1562
      %2007 = vmatprep.subr.bf16.mxu0 %v1570
      %2008 = vmatpush1.bf16.msra.mxu0 %v1569
      %2009 = vmatprep.subr.bf16.mxu0 %v1577
      %2010 = vmatpush1.bf16.msra.mxu0 %v1576
      %2011 = vmatprep.subr.bf16.mxu0 %v1584
      %2012 = vmatpush1.bf16.msra.mxu0 %v1583
      %2013 = vmatprep.subr.bf16.mxu0 %v1591
      %2014 = vmatpush1.bf16.msra.mxu0 %v1590
      %2015 = vmatprep.subr.bf16.mxu0 %v1598
      %2016 = vmatpush1.bf16.msra.mxu0 %v1597
      %2017 = vmatprep.subr.bf16.mxu0 %v1605
      %2018 = vmatpush1.bf16.msra.mxu0 %v1604
      %2019 = vmatprep.subr.bf16.mxu0 %v1612
      %2020 = vmatpush1.bf16.msra.mxu0 %v1611
      %2021 = vmatprep.subr.bf16.mxu0 %v1619
      %2022 = vmatpush1.bf16.msra.mxu0 %v1618
      %2023 = vmatprep.subr.bf16.mxu0 %v1626
      %2024 = vmatpush1.bf16.msra.mxu0 %v1625
      %2025 = vmatprep.subr.bf16.mxu0 %v1633
      %2026 = vmatpush1.bf16.msra.mxu0 %v1632
      %2027 = vmatprep.subr.bf16.mxu0 %v1640
      %2028 = vmatpush1.bf16.msra.mxu0 %v1639
      %2029 = vmatprep.subr.bf16.mxu0 %v1647
      %2030 = vmatpush1.bf16.msra.mxu0 %v1646
      %2031 = vmatprep.subr.bf16.mxu0 %v1654
      %2032 = vmatpush1.bf16.msra.mxu0 %v1653
      %2033 = vmatprep.subr.bf16.mxu0 %v1661
      %2034 = vmatpush1.bf16.msra.mxu0 %v1660
      %2035 = vmatprep.mubr.bf16.mxu0 %v724
      %2036 = vmatmul.mubr.bf16.gmra.mrb[0].mxu0 %v723
      %v2037 = vpop.f32.mrb[0].mxu0
      %v2038 = vadd.f32 0.0, %v2037
      %v2039 = vpop.f32.mrb[0].mxu0
      %v2040 = vadd.f32 0.0, %v2039
      %v2041 = vpop.f32.mrb[0].mxu0
      %v2042 = vadd.f32 0.0, %v2041
      %v2043 = vpop.f32.mrb[0].mxu0
      %v2044 = vadd.f32 0.0, %v2043
      %2045 = vmatprep.mubr.bf16.mxu0 %v728
      %2046 = vmatmul.mubr.bf16.gmra.mrb[0].mxu0 %v727
      %v2047 = vpop.f32.mrb[0].mxu0
      %v2048 = vadd.f32 0.0, %v2047
      %v2049 = vpop.f32.mrb[0].mxu0
      %v2050 = vadd.f32 0.0, %v2049
      %v2051 = vpop.f32.mrb[0].mxu0
      %v2052 = vadd.f32 0.0, %v2051
      %v2053 = vpop.f32.mrb[0].mxu0
      %v2054 = vadd.f32 0.0, %v2053
      %2055 = vmatprep.mubr.bf16.mxu0 %v732
      %2056 = vmatmul.mubr.bf16.gmra.mrb[0].mxu0 %v731
      %v2057 = vpop.f32.mrb[0].mxu0
      %v2058 = vadd.f32 0.0, %v2057
      %v2059 = vpop.f32.mrb[0].mxu0
      %v2060 = vadd.f32 0.0, %v2059
      %v2061 = vpop.f32.mrb[0].mxu0
      %v2062 = vadd.f32 0.0, %v2061
      %v2063 = vpop.f32.mrb[0].mxu0
      %v2064 = vadd.f32 0.0, %v2063
      %2065 = vmatprep.mubr.bf16.mxu0 %v736
      %2066 = vmatmul.mubr.bf16.gmra.mrb[0].mxu0 %v735
      %v2067 = vpop.f32.mrb[0].mxu0
      %v2068 = vadd.f32 0.0, %v2067
      %v2069 = vpop.f32.mrb[0].mxu0
      %v2070 = vadd.f32 0.0, %v2069
      %v2071 = vpop.f32.mrb[0].mxu0
      %v2072 = vadd.f32 0.0, %v2071
      %v2073 = vpop.f32.mrb[0].mxu0
      %v2074 = vadd.f32 0.0, %v2073
      %2075 = vmatprep.mubr.bf16.mxu0 %v740
      %2076 = vmatmul.mubr.bf16.gmra.mrb[0].mxu0 %v739
      %v2077 = vpop.f32.mrb[0].mxu0
      %v2078 = vadd.f32 0.0, %v2077
      %v2079 = vpop.f32.mrb[0].mxu0
      %v2080 = vadd.f32 0.0, %v2079
      %v2081 = vpop.f32.mrb[0].mxu0
      %v2082 = vadd.f32 0.0, %v2081
      %v2083 = vpop.f32.mrb[0].mxu0
      %v2084 = vadd.f32 0.0, %v2083
      %2085 = vmatprep.mubr.bf16.mxu0 %v744
      %2086 = vmatmul.mubr.bf16.gmra.mrb[0].mxu0 %v743
      %v2087 = vpop.f32.mrb[0].mxu0
      %v2088 = vadd.f32 0.0, %v2087
      %v2089 = vpop.f32.mrb[0].mxu0
      %v2090 = vadd.f32 0.0, %v2089
      %v2091 = vpop.f32.mrb[0].mxu0
      %v2092 = vadd.f32 0.0, %v2091
      %v2093 = vpop.f32.mrb[0].mxu0
      %v2094 = vadd.f32 0.0, %v2093
      %2095 = vmatprep.mubr.bf16.mxu0 %v748
      %2096 = vmatmul.mubr.bf16.gmra.mrb[0].mxu0 %v747
      %v2097 = vpop.f32.mrb[0].mxu0
      %v2098 = vadd.f32 0.0, %v2097
      %v2099 = vpop.f32.mrb[0].mxu0
      %v2100 = vadd.f32 0.0, %v2099
      %v2101 = vpop.f32.mrb[0].mxu0
      %v2102 = vadd.f32 0.0, %v2101
      %v2103 = vpop.f32.mrb[0].mxu0
      %v2104 = vadd.f32 0.0, %v2103
      %2105 = vmatprep.mubr.bf16.mxu0 %v752
      %2106 = vmatmul.mubr.bf16.gmra.mrb[0].mxu0 %v751
      %v2107 = vpop.f32.mrb[0].mxu0
      %v2108 = vadd.f32 0.0, %v2107
      %v2109 = vpop.f32.mrb[0].mxu0
      %v2110 = vadd.f32 0.0, %v2109
      %v2111 = vpop.f32.mrb[0].mxu0
      %v2112 = vadd.f32 0.0, %v2111
      %v2113 = vpop.f32.mrb[0].mxu0
      %v2114 = vadd.f32 0.0, %v2113
      %2115 = vmatprep.mubr.bf16.mxu0 %v756
      %2116 = vmatmul.mubr.bf16.gmra.mrb[0].mxu0 %v755
      %v2117 = vpop.f32.mrb[0].mxu0
      %v2118 = vadd.f32 0.0, %v2117
      %v2119 = vpop.f32.mrb[0].mxu0
      %v2120 = vadd.f32 0.0, %v2119
      %v2121 = vpop.f32.mrb[0].mxu0
      %v2122 = vadd.f32 0.0, %v2121
      %v2123 = vpop.f32.mrb[0].mxu0
      %v2124 = vadd.f32 0.0, %v2123
      %2125 = vmatprep.mubr.bf16.mxu0 %v760
      %2126 = vmatmul.mubr.bf16.gmra.mrb[0].mxu0 %v759
      %v2127 = vpop.f32.mrb[0].mxu0
      %v2128 = vadd.f32 0.0, %v2127
      %v2129 = vpop.f32.mrb[0].mxu0
      %v2130 = vadd.f32 0.0, %v2129
      %v2131 = vpop.f32.mrb[0].mxu0
      %v2132 = vadd.f32 0.0, %v2131
      %v2133 = vpop.f32.mrb[0].mxu0
      %v2134 = vadd.f32 0.0, %v2133
      %2135 = vmatprep.mubr.bf16.mxu0 %v764
      %2136 = vmatmul.mubr.bf16.gmra.mrb[0].mxu0 %v763
      %v2137 = vpop.f32.mrb[0].mxu0
      %v2138 = vadd.f32 0.0, %v2137
      %v2139 = vpop.f32.mrb[0].mxu0
      %v2140 = vadd.f32 0.0, %v2139
      %v2141 = vpop.f32.mrb[0].mxu0
      %v2142 = vadd.f32 0.0, %v2141
      %v2143 = vpop.f32.mrb[0].mxu0
      %v2144 = vadd.f32 0.0, %v2143
      %2145 = vmatprep.mubr.bf16.mxu0 %v768
      %2146 = vmatmul.mubr.bf16.gmra.mrb[0].mxu0 %v767
      %v2147 = vpop.f32.mrb[0].mxu0
      %v2148 = vadd.f32 0.0, %v2147
      %v2149 = vpop.f32.mrb[0].mxu0
      %v2150 = vadd.f32 0.0, %v2149
      %v2151 = vpop.f32.mrb[0].mxu0
      %v2152 = vadd.f32 0.0, %v2151
      %v2153 = vpop.f32.mrb[0].mxu0
      %v2154 = vadd.f32 0.0, %v2153
      %2155 = vmatprep.mubr.bf16.mxu0 %v772
      %2156 = vmatmul.mubr.bf16.gmra.mrb[0].mxu0 %v771
      %v2157 = vpop.f32.mrb[0].mxu0
      %v2158 = vadd.f32 0.0, %v2157
      %v2159 = vpop.f32.mrb[0].mxu0
      %v2160 = vadd.f32 0.0, %v2159
      %v2161 = vpop.f32.mrb[0].mxu0
      %v2162 = vadd.f32 0.0, %v2161
      %v2163 = vpop.f32.mrb[0].mxu0
      %v2164 = vadd.f32 0.0, %v2163
      %2165 = vmatprep.mubr.bf16.mxu0 %v776
      %2166 = vmatmul.mubr.bf16.gmra.mrb[0].mxu0 %v775
      %v2167 = vpop.f32.mrb[0].mxu0
      %v2168 = vadd.f32 0.0, %v2167
      %v2169 = vpop.f32.mrb[0].mxu0
      %v2170 = vadd.f32 0.0, %v2169
      %v2171 = vpop.f32.mrb[0].mxu0
      %v2172 = vadd.f32 0.0, %v2171
      %v2173 = vpop.f32.mrb[0].mxu0
      %v2174 = vadd.f32 0.0, %v2173
      %2175 = vmatprep.mubr.bf16.mxu0 %v780
      %2176 = vmatmul.mubr.bf16.gmra.mrb[0].mxu0 %v779
      %v2177 = vpop.f32.mrb[0].mxu0
      %v2178 = vadd.f32 0.0, %v2177
      %v2179 = vpop.f32.mrb[0].mxu0
      %v2180 = vadd.f32 0.0, %v2179
      %v2181 = vpop.f32.mrb[0].mxu0
      %v2182 = vadd.f32 0.0, %v2181
      %v2183 = vpop.f32.mrb[0].mxu0
      %v2184 = vadd.f32 0.0, %v2183
      %2185 = vmatprep.mubr.bf16.mxu0 %v784
      %2186 = vmatmul.mubr.bf16.gmra.mrb[0].mxu0 %v783
      %v2187 = vpop.f32.mrb[0].mxu0
      %v2188 = vadd.f32 0.0, %v2187
      %v2189 = vpop.f32.mrb[0].mxu0
      %v2190 = vadd.f32 0.0, %v2189
      %v2191 = vpop.f32.mrb[0].mxu0
      %v2192 = vadd.f32 0.0, %v2191
      %v2193 = vpop.f32.mrb[0].mxu0
      %v2194 = vadd.f32 0.0, %v2193
      %2195 = vdwg.mxu0
      %2196 = vmatprep.subr.bf16.mxu0 %v1668
      %2197 = vmatpush1.bf16.msra.mxu0 %v1667
      %2198 = vmatprep.subr.bf16.mxu0 %v1675
      %2199 = vmatpush1.bf16.msra.mxu0 %v1674
      %2200 = vmatprep.subr.bf16.mxu0 %v1682
      %2201 = vmatpush1.bf16.msra.mxu0 %v1681
      %2202 = vmatprep.subr.bf16.mxu0 %v1689
      %2203 = vmatpush1.bf16.msra.mxu0 %v1688
      %2204 = vmatprep.subr.bf16.mxu0 %v1696
      %2205 = vmatpush1.bf16.msra.mxu0 %v1695
      %2206 = vmatprep.subr.bf16.mxu0 %v1703
      %2207 = vmatpush1.bf16.msra.mxu0 %v1702
      %2208 = vmatprep.subr.bf16.mxu0 %v1710
      %2209 = vmatpush1.bf16.msra.mxu0 %v1709
      %2210 = vmatprep.subr.bf16.mxu0 %v1717
      %2211 = vmatpush1.bf16.msra.mxu0 %v1716
      %2212 = vmatprep.subr.bf16.mxu0 %v1724
      %2213 = vmatpush1.bf16.msra.mxu0 %v1723
      %2214 = vmatprep.subr.bf16.mxu0 %v1731
      %2215 = vmatpush1.bf16.msra.mxu0 %v1730
      %2216 = vmatprep.subr.bf16.mxu0 %v1738
      %2217 = vmatpush1.bf16.msra.mxu0 %v1737
      %2218 = vmatprep.subr.bf16.mxu0 %v1745
      %2219 = vmatpush1.bf16.msra.mxu0 %v1744
      %2220 = vmatprep.subr.bf16.mxu0 %v1752
      %2221 = vmatpush1.bf16.msra.mxu0 %v1751
      %2222 = vmatprep.subr.bf16.mxu0 %v1759
      %2223 = vmatpush1.bf16.msra.mxu0 %v1758
      %2224 = vmatprep.subr.bf16.mxu0 %v1766
      %2225 = vmatpush1.bf16.msra.mxu0 %v1765
      %2226 = vmatprep.subr.bf16.mxu0 %v1773
      %2227 = vmatpush1.bf16.msra.mxu0 %v1772
      %2228 = vmatprep.mubr.bf16.mxu0 %v726
      %2229 = vmatmul.mubr.bf16.gmra.mrb[0].mxu0 %v725
      %v2230 = vpop.f32.mrb[0].mxu0
      %v2231 = vadd.f32 %v2038, %v2230
      %v2232 = vpop.f32.mrb[0].mxu0
      %v2233 = vadd.f32 %v2040, %v2232
      %v2234 = vpop.f32.mrb[0].mxu0
      %v2235 = vadd.f32 %v2042, %v2234
      %v2236 = vpop.f32.mrb[0].mxu0
      %v2237 = vadd.f32 %v2044, %v2236
      %2238 = vmatprep.mubr.bf16.mxu0 %v730
      %2239 = vmatmul.mubr.bf16.gmra.mrb[0].mxu0 %v729
      %v2240 = vpop.f32.mrb[0].mxu0
      %v2241 = vadd.f32 %v2048, %v2240
      %v2242 = vpop.f32.mrb[0].mxu0
      %v2243 = vadd.f32 %v2050, %v2242
      %v2244 = vpop.f32.mrb[0].mxu0
      %v2245 = vadd.f32 %v2052, %v2244
      %v2246 = vpop.f32.mrb[0].mxu0
      %v2247 = vadd.f32 %v2054, %v2246
      %2248 = vmatprep.mubr.bf16.mxu0 %v734
      %2249 = vmatmul.mubr.bf16.gmra.mrb[0].mxu0 %v733
      %v2250 = vpop.f32.mrb[0].mxu0
      %v2251 = vadd.f32 %v2058, %v2250
      %v2252 = vpop.f32.mrb[0].mxu0
      %v2253 = vadd.f32 %v2060, %v2252
      %v2254 = vpop.f32.mrb[0].mxu0
      %v2255 = vadd.f32 %v2062, %v2254
      %v2256 = vpop.f32.mrb[0].mxu0
      %v2257 = vadd.f32 %v2064, %v2256
      %2258 = vmatprep.mubr.bf16.mxu0 %v738
      %2259 = vmatmul.mubr.bf16.gmra.mrb[0].mxu0 %v737
      %v2260 = vpop.f32.mrb[0].mxu0
      %v2261 = vadd.f32 %v2068, %v2260
      %v2262 = vpop.f32.mrb[0].mxu0
      %v2263 = vadd.f32 %v2070, %v2262
      %v2264 = vpop.f32.mrb[0].mxu0
      %v2265 = vadd.f32 %v2072, %v2264
      %v2266 = vpop.f32.mrb[0].mxu0
      %v2267 = vadd.f32 %v2074, %v2266
      %2268 = vmatprep.mubr.bf16.mxu0 %v742
      %2269 = vmatmul.mubr.bf16.gmra.mrb[0].mxu0 %v741
      %v2270 = vpop.f32.mrb[0].mxu0
      %v2271 = vadd.f32 %v2078, %v2270
      %v2272 = vpop.f32.mrb[0].mxu0
      %v2273 = vadd.f32 %v2080, %v2272
      %v2274 = vpop.f32.mrb[0].mxu0
      %v2275 = vadd.f32 %v2082, %v2274
      %v2276 = vpop.f32.mrb[0].mxu0
      %v2277 = vadd.f32 %v2084, %v2276
      %2278 = vmatprep.mubr.bf16.mxu0 %v746
      %2279 = vmatmul.mubr.bf16.gmra.mrb[0].mxu0 %v745
      %v2280 = vpop.f32.mrb[0].mxu0
      %v2281 = vadd.f32 %v2088, %v2280
      %v2282 = vpop.f32.mrb[0].mxu0
      %v2283 = vadd.f32 %v2090, %v2282
      %v2284 = vpop.f32.mrb[0].mxu0
      %v2285 = vadd.f32 %v2092, %v2284
      %v2286 = vpop.f32.mrb[0].mxu0
      %v2287 = vadd.f32 %v2094, %v2286
      %2288 = vmatprep.mubr.bf16.mxu0 %v750
      %2289 = vmatmul.mubr.bf16.gmra.mrb[0].mxu0 %v749
      %v2290 = vpop.f32.mrb[0].mxu0
      %v2291 = vadd.f32 %v2098, %v2290
      %v2292 = vpop.f32.mrb[0].mxu0
      %v2293 = vadd.f32 %v2100, %v2292
      %v2294 = vpop.f32.mrb[0].mxu0
      %v2295 = vadd.f32 %v2102, %v2294
      %v2296 = vpop.f32.mrb[0].mxu0
      %v2297 = vadd.f32 %v2104, %v2296
      %2298 = vmatprep.mubr.bf16.mxu0 %v754
      %2299 = vmatmul.mubr.bf16.gmra.mrb[0].mxu0 %v753
      %v2300 = vpop.f32.mrb[0].mxu0
      %v2301 = vadd.f32 %v2108, %v2300
      %v2302 = vpop.f32.mrb[0].mxu0
      %v2303 = vadd.f32 %v2110, %v2302
      %v2304 = vpop.f32.mrb[0].mxu0
      %v2305 = vadd.f32 %v2112, %v2304
      %v2306 = vpop.f32.mrb[0].mxu0
      %v2307 = vadd.f32 %v2114, %v2306
      %2308 = vmatprep.mubr.bf16.mxu0 %v758
      %2309 = vmatmul.mubr.bf16.gmra.mrb[0].mxu0 %v757
      %v2310 = vpop.f32.mrb[0].mxu0
      %v2311 = vadd.f32 %v2118, %v2310
      %v2312 = vpop.f32.mrb[0].mxu0
      %v2313 = vadd.f32 %v2120, %v2312
      %v2314 = vpop.f32.mrb[0].mxu0
      %v2315 = vadd.f32 %v2122, %v2314
      %v2316 = vpop.f32.mrb[0].mxu0
      %v2317 = vadd.f32 %v2124, %v2316
      %2318 = vmatprep.mubr.bf16.mxu0 %v762
      %2319 = vmatmul.mubr.bf16.gmra.mrb[0].mxu0 %v761
      %v2320 = vpop.f32.mrb[0].mxu0
      %v2321 = vadd.f32 %v2128, %v2320
      %v2322 = vpop.f32.mrb[0].mxu0
      %v2323 = vadd.f32 %v2130, %v2322
      %v2324 = vpop.f32.mrb[0].mxu0
      %v2325 = vadd.f32 %v2132, %v2324
      %v2326 = vpop.f32.mrb[0].mxu0
      %v2327 = vadd.f32 %v2134, %v2326
      %2328 = vmatprep.mubr.bf16.mxu0 %v766
      %2329 = vmatmul.mubr.bf16.gmra.mrb[0].mxu0 %v765
      %v2330 = vpop.f32.mrb[0].mxu0
      %v2331 = vadd.f32 %v2138, %v2330
      %v2332 = vpop.f32.mrb[0].mxu0
      %v2333 = vadd.f32 %v2140, %v2332
      %v2334 = vpop.f32.mrb[0].mxu0
      %v2335 = vadd.f32 %v2142, %v2334
      %v2336 = vpop.f32.mrb[0].mxu0
      %v2337 = vadd.f32 %v2144, %v2336
      %2338 = vmatprep.mubr.bf16.mxu0 %v770
      %2339 = vmatmul.mubr.bf16.gmra.mrb[0].mxu0 %v769
      %v2340 = vpop.f32.mrb[0].mxu0
      %v2341 = vadd.f32 %v2148, %v2340
      %v2342 = vpop.f32.mrb[0].mxu0
      %v2343 = vadd.f32 %v2150, %v2342
      %v2344 = vpop.f32.mrb[0].mxu0
      %v2345 = vadd.f32 %v2152, %v2344
      %v2346 = vpop.f32.mrb[0].mxu0
      %v2347 = vadd.f32 %v2154, %v2346
      %2348 = vmatprep.mubr.bf16.mxu0 %v774
      %2349 = vmatmul.mubr.bf16.gmra.mrb[0].mxu0 %v773
      %v2350 = vpop.f32.mrb[0].mxu0
      %v2351 = vadd.f32 %v2158, %v2350
      %v2352 = vpop.f32.mrb[0].mxu0
      %v2353 = vadd.f32 %v2160, %v2352
      %v2354 = vpop.f32.mrb[0].mxu0
      %v2355 = vadd.f32 %v2162, %v2354
      %v2356 = vpop.f32.mrb[0].mxu0
      %v2357 = vadd.f32 %v2164, %v2356
      %2358 = vmatprep.mubr.bf16.mxu0 %v778
      %2359 = vmatmul.mubr.bf16.gmra.mrb[0].mxu0 %v777
      %v2360 = vpop.f32.mrb[0].mxu0
      %v2361 = vadd.f32 %v2168, %v2360
      %v2362 = vpop.f32.mrb[0].mxu0
      %v2363 = vadd.f32 %v2170, %v2362
      %v2364 = vpop.f32.mrb[0].mxu0
      %v2365 = vadd.f32 %v2172, %v2364
      %v2366 = vpop.f32.mrb[0].mxu0
      %v2367 = vadd.f32 %v2174, %v2366
      %2368 = vmatprep.mubr.bf16.mxu0 %v782
      %2369 = vmatmul.mubr.bf16.gmra.mrb[0].mxu0 %v781
      %v2370 = vpop.f32.mrb[0].mxu0
      %v2371 = vadd.f32 %v2178, %v2370
      %v2372 = vpop.f32.mrb[0].mxu0
      %v2373 = vadd.f32 %v2180, %v2372
      %v2374 = vpop.f32.mrb[0].mxu0
      %v2375 = vadd.f32 %v2182, %v2374
      %v2376 = vpop.f32.mrb[0].mxu0
      %v2377 = vadd.f32 %v2184, %v2376
      %2378 = vmatprep.mubr.bf16.mxu0 %v786
      %2379 = vmatmul.mubr.bf16.gmra.mrb[0].mxu0 %v785
      %v2380 = vpop.f32.mrb[0].mxu0
      %v2381 = vadd.f32 %v2188, %v2380
      %v2382 = vpop.f32.mrb[0].mxu0
      %v2383 = vadd.f32 %v2190, %v2382
      %v2384 = vpop.f32.mrb[0].mxu0
      %v2385 = vadd.f32 %v2192, %v2384
      %v2386 = vpop.f32.mrb[0].mxu0
      %v2387 = vadd.f32 %v2194, %v2386
      %2388 = vdwg.mxu0
      %2389 = vmatprep.subr.bf16.mxu0 %v1558
      %2390 = vmatpush1.bf16.msra.mxu0 %v1557
      %2391 = vmatprep.subr.bf16.mxu0 %v1565
      %2392 = vmatpush1.bf16.msra.mxu0 %v1564
      %2393 = vmatprep.subr.bf16.mxu0 %v1572
      %2394 = vmatpush1.bf16.msra.mxu0 %v1571
      %2395 = vmatprep.subr.bf16.mxu0 %v1579
      %2396 = vmatpush1.bf16.msra.mxu0 %v1578
      %2397 = vmatprep.subr.bf16.mxu0 %v1586
      %2398 = vmatpush1.bf16.msra.mxu0 %v1585
      %2399 = vmatprep.subr.bf16.mxu0 %v1593
      %2400 = vmatpush1.bf16.msra.mxu0 %v1592
      %2401 = vmatprep.subr.bf16.mxu0 %v1600
      %2402 = vmatpush1.bf16.msra.mxu0 %v1599
      %2403 = vmatprep.subr.bf16.mxu0 %v1607
      %2404 = vmatpush1.bf16.msra.mxu0 %v1606
      %2405 = vmatprep.subr.bf16.mxu0 %v1614
      %2406 = vmatpush1.bf16.msra.mxu0 %v1613
      %2407 = vmatprep.subr.bf16.mxu0 %v1621
      %2408 = vmatpush1.bf16.msra.mxu0 %v1620
      %2409 = vmatprep.subr.bf16.mxu0 %v1628
      %2410 = vmatpush1.bf16.msra.mxu0 %v1627
      %2411 = vmatprep.subr.bf16.mxu0 %v1635
      %2412 = vmatpush1.bf16.msra.mxu0 %v1634
      %2413 = vmatprep.subr.bf16.mxu0 %v1642
      %2414 = vmatpush1.bf16.msra.mxu0 %v1641
      %2415 = vmatprep.subr.bf16.mxu0 %v1649
      %2416 = vmatpush1.bf16.msra.mxu0 %v1648
      %2417 = vmatprep.subr.bf16.mxu0 %v1656
      %2418 = vmatpush1.bf16.msra.mxu0 %v1655
      %2419 = vmatprep.subr.bf16.mxu0 %v1663
      %2420 = vmatpush1.bf16.msra.mxu0 %v1662
      %2421 = vmatprep.mubr.bf16.mxu0 %v724
      %2422 = vmatmul.mubr.bf16.gmra.mrb[0].mxu0 %v723
      %v2423 = vpop.f32.mrb[0].mxu0
      %v2424 = vadd.f32 0.0, %v2423
      %v2425 = vpop.f32.mrb[0].mxu0
      %v2426 = vadd.f32 0.0, %v2425
      %v2427 = vpop.f32.mrb[0].mxu0
      %v2428 = vadd.f32 0.0, %v2427
      %v2429 = vpop.f32.mrb[0].mxu0
      %v2430 = vadd.f32 0.0, %v2429
      %2431 = vmatprep.mubr.bf16.mxu0 %v728
      %2432 = vmatmul.mubr.bf16.gmra.mrb[0].mxu0 %v727
      %v2433 = vpop.f32.mrb[0].mxu0
      %v2434 = vadd.f32 0.0, %v2433
      %v2435 = vpop.f32.mrb[0].mxu0
      %v2436 = vadd.f32 0.0, %v2435
      %v2437 = vpop.f32.mrb[0].mxu0
      %v2438 = vadd.f32 0.0, %v2437
      %v2439 = vpop.f32.mrb[0].mxu0
      %v2440 = vadd.f32 0.0, %v2439
      %2441 = vmatprep.mubr.bf16.mxu0 %v732
      %2442 = vmatmul.mubr.bf16.gmra.mrb[0].mxu0 %v731
      %v2443 = vpop.f32.mrb[0].mxu0
      %v2444 = vadd.f32 0.0, %v2443
      %v2445 = vpop.f32.mrb[0].mxu0
      %v2446 = vadd.f32 0.0, %v2445
      %v2447 = vpop.f32.mrb[0].mxu0
      %v2448 = vadd.f32 0.0, %v2447
      %v2449 = vpop.f32.mrb[0].mxu0
      %v2450 = vadd.f32 0.0, %v2449
      %2451 = vmatprep.mubr.bf16.mxu0 %v736
      %2452 = vmatmul.mubr.bf16.gmra.mrb[0].mxu0 %v735
      %v2453 = vpop.f32.mrb[0].mxu0
      %v2454 = vadd.f32 0.0, %v2453
      %v2455 = vpop.f32.mrb[0].mxu0
      %v2456 = vadd.f32 0.0, %v2455
      %v2457 = vpop.f32.mrb[0].mxu0
      %v2458 = vadd.f32 0.0, %v2457
      %v2459 = vpop.f32.mrb[0].mxu0
      %v2460 = vadd.f32 0.0, %v2459
      %2461 = vmatprep.mubr.bf16.mxu0 %v740
      %2462 = vmatmul.mubr.bf16.gmra.mrb[0].mxu0 %v739
      %v2463 = vpop.f32.mrb[0].mxu0
      %v2464 = vadd.f32 0.0, %v2463
      %v2465 = vpop.f32.mrb[0].mxu0
      %v2466 = vadd.f32 0.0, %v2465
      %v2467 = vpop.f32.mrb[0].mxu0
      %v2468 = vadd.f32 0.0, %v2467
      %v2469 = vpop.f32.mrb[0].mxu0
      %v2470 = vadd.f32 0.0, %v2469
      %2471 = vmatprep.mubr.bf16.mxu0 %v744
      %2472 = vmatmul.mubr.bf16.gmra.mrb[0].mxu0 %v743
      %v2473 = vpop.f32.mrb[0].mxu0
      %v2474 = vadd.f32 0.0, %v2473
      %v2475 = vpop.f32.mrb[0].mxu0
      %v2476 = vadd.f32 0.0, %v2475
      %v2477 = vpop.f32.mrb[0].mxu0
      %v2478 = vadd.f32 0.0, %v2477
      %v2479 = vpop.f32.mrb[0].mxu0
      %v2480 = vadd.f32 0.0, %v2479
      %2481 = vmatprep.mubr.bf16.mxu0 %v748
      %2482 = vmatmul.mubr.bf16.gmra.mrb[0].mxu0 %v747
      %v2483 = vpop.f32.mrb[0].mxu0
      %v2484 = vadd.f32 0.0, %v2483
      %v2485 = vpop.f32.mrb[0].mxu0
      %v2486 = vadd.f32 0.0, %v2485
      %v2487 = vpop.f32.mrb[0].mxu0
      %v2488 = vadd.f32 0.0, %v2487
      %v2489 = vpop.f32.mrb[0].mxu0
      %v2490 = vadd.f32 0.0, %v2489
      %2491 = vmatprep.mubr.bf16.mxu0 %v752
      %2492 = vmatmul.mubr.bf16.gmra.mrb[0].mxu0 %v751
      %v2493 = vpop.f32.mrb[0].mxu0
      %v2494 = vadd.f32 0.0, %v2493
      %v2495 = vpop.f32.mrb[0].mxu0
      %v2496 = vadd.f32 0.0, %v2495
      %v2497 = vpop.f32.mrb[0].mxu0
      %v2498 = vadd.f32 0.0, %v2497
      %v2499 = vpop.f32.mrb[0].mxu0
      %v2500 = vadd.f32 0.0, %v2499
      %2501 = vmatprep.mubr.bf16.mxu0 %v756
      %2502 = vmatmul.mubr.bf16.gmra.mrb[0].mxu0 %v755
      %v2503 = vpop.f32.mrb[0].mxu0
      %v2504 = vadd.f32 0.0, %v2503
      %v2505 = vpop.f32.mrb[0].mxu0
      %v2506 = vadd.f32 0.0, %v2505
      %v2507 = vpop.f32.mrb[0].mxu0
      %v2508 = vadd.f32 0.0, %v2507
      %v2509 = vpop.f32.mrb[0].mxu0
      %v2510 = vadd.f32 0.0, %v2509
      %2511 = vmatprep.mubr.bf16.mxu0 %v760
      %2512 = vmatmul.mubr.bf16.gmra.mrb[0].mxu0 %v759
      %v2513 = vpop.f32.mrb[0].mxu0
      %v2514 = vadd.f32 0.0, %v2513
      %v2515 = vpop.f32.mrb[0].mxu0
      %v2516 = vadd.f32 0.0, %v2515
      %v2517 = vpop.f32.mrb[0].mxu0
      %v2518 = vadd.f32 0.0, %v2517
      %v2519 = vpop.f32.mrb[0].mxu0
      %v2520 = vadd.f32 0.0, %v2519
      %2521 = vmatprep.mubr.bf16.mxu0 %v764
      %2522 = vmatmul.mubr.bf16.gmra.mrb[0].mxu0 %v763
      %v2523 = vpop.f32.mrb[0].mxu0
      %v2524 = vadd.f32 0.0, %v2523
      %v2525 = vpop.f32.mrb[0].mxu0
      %v2526 = vadd.f32 0.0, %v2525
      %v2527 = vpop.f32.mrb[0].mxu0
      %v2528 = vadd.f32 0.0, %v2527
      %v2529 = vpop.f32.mrb[0].mxu0
      %v2530 = vadd.f32 0.0, %v2529
      %2531 = vmatprep.mubr.bf16.mxu0 %v768
      %2532 = vmatmul.mubr.bf16.gmra.mrb[0].mxu0 %v767
      %v2533 = vpop.f32.mrb[0].mxu0
      %v2534 = vadd.f32 0.0, %v2533
      %v2535 = vpop.f32.mrb[0].mxu0
      %v2536 = vadd.f32 0.0, %v2535
      %v2537 = vpop.f32.mrb[0].mxu0
      %v2538 = vadd.f32 0.0, %v2537
      %v2539 = vpop.f32.mrb[0].mxu0
      %v2540 = vadd.f32 0.0, %v2539
      %2541 = vmatprep.mubr.bf16.mxu0 %v772
      %2542 = vmatmul.mubr.bf16.gmra.mrb[0].mxu0 %v771
      %v2543 = vpop.f32.mrb[0].mxu0
      %v2544 = vadd.f32 0.0, %v2543
      %v2545 = vpop.f32.mrb[0].mxu0
      %v2546 = vadd.f32 0.0, %v2545
      %v2547 = vpop.f32.mrb[0].mxu0
      %v2548 = vadd.f32 0.0, %v2547
      %v2549 = vpop.f32.mrb[0].mxu0
      %v2550 = vadd.f32 0.0, %v2549
      %2551 = vmatprep.mubr.bf16.mxu0 %v776
      %2552 = vmatmul.mubr.bf16.gmra.mrb[0].mxu0 %v775
      %v2553 = vpop.f32.mrb[0].mxu0
      %v2554 = vadd.f32 0.0, %v2553
      %v2555 = vpop.f32.mrb[0].mxu0
      %v2556 = vadd.f32 0.0, %v2555
      %v2557 = vpop.f32.mrb[0].mxu0
      %v2558 = vadd.f32 0.0, %v2557
      %v2559 = vpop.f32.mrb[0].mxu0
      %v2560 = vadd.f32 0.0, %v2559
      %2561 = vmatprep.mubr.bf16.mxu0 %v780
      %2562 = vmatmul.mubr.bf16.gmra.mrb[0].mxu0 %v779
      %v2563 = vpop.f32.mrb[0].mxu0
      %v2564 = vadd.f32 0.0, %v2563
      %v2565 = vpop.f32.mrb[0].mxu0
      %v2566 = vadd.f32 0.0, %v2565
      %v2567 = vpop.f32.mrb[0].mxu0
      %v2568 = vadd.f32 0.0, %v2567
      %v2569 = vpop.f32.mrb[0].mxu0
      %v2570 = vadd.f32 0.0, %v2569
      %2571 = vmatprep.mubr.bf16.mxu0 %v784
      %2572 = vmatmul.mubr.bf16.gmra.mrb[0].mxu0 %v783
      %v2573 = vpop.f32.mrb[0].mxu0
      %v2574 = vadd.f32 0.0, %v2573
      %v2575 = vpop.f32.mrb[0].mxu0
      %v2576 = vadd.f32 0.0, %v2575
      %v2577 = vpop.f32.mrb[0].mxu0
      %v2578 = vadd.f32 0.0, %v2577
      %v2579 = vpop.f32.mrb[0].mxu0
      %v2580 = vadd.f32 0.0, %v2579
      %2581 = vdwg.mxu0
      %2582 = vmatprep.subr.bf16.mxu0 %v1670
      %2583 = vmatpush1.bf16.msra.mxu0 %v1669
      %2584 = vmatprep.subr.bf16.mxu0 %v1677
      %2585 = vmatpush1.bf16.msra.mxu0 %v1676
      %2586 = vmatprep.subr.bf16.mxu0 %v1684
      %2587 = vmatpush1.bf16.msra.mxu0 %v1683
      %2588 = vmatprep.subr.bf16.mxu0 %v1691
      %2589 = vmatpush1.bf16.msra.mxu0 %v1690
      %2590 = vmatprep.subr.bf16.mxu0 %v1698
      %2591 = vmatpush1.bf16.msra.mxu0 %v1697
      %2592 = vmatprep.subr.bf16.mxu0 %v1705
      %2593 = vmatpush1.bf16.msra.mxu0 %v1704
      %2594 = vmatprep.subr.bf16.mxu0 %v1712
      %2595 = vmatpush1.bf16.msra.mxu0 %v1711
      %2596 = vmatprep.subr.bf16.mxu0 %v1719
      %2597 = vmatpush1.bf16.msra.mxu0 %v1718
      %2598 = vmatprep.subr.bf16.mxu0 %v1726
      %2599 = vmatpush1.bf16.msra.mxu0 %v1725
      %2600 = vmatprep.subr.bf16.mxu0 %v1733
      %2601 = vmatpush1.bf16.msra.mxu0 %v1732
      %2602 = vmatprep.subr.bf16.mxu0 %v1740
      %2603 = vmatpush1.bf16.msra.mxu0 %v1739
      %2604 = vmatprep.subr.bf16.mxu0 %v1747
      %2605 = vmatpush1.bf16.msra.mxu0 %v1746
      %2606 = vmatprep.subr.bf16.mxu0 %v1754
      %2607 = vmatpush1.bf16.msra.mxu0 %v1753
      %2608 = vmatprep.subr.bf16.mxu0 %v1761
      %2609 = vmatpush1.bf16.msra.mxu0 %v1760
      %2610 = vmatprep.subr.bf16.mxu0 %v1768
      %2611 = vmatpush1.bf16.msra.mxu0 %v1767
      %2612 = vmatprep.subr.bf16.mxu0 %v1775
      %2613 = vmatpush1.bf16.msra.mxu0 %v1774
      %2614 = vmatprep.mubr.bf16.mxu0 %v726
      %2615 = vmatmul.mubr.bf16.gmra.mrb[0].mxu0 %v725
      %v2616 = vpop.f32.mrb[0].mxu0
      %v2617 = vadd.f32 %v2424, %v2616
      %v2618 = vpop.f32.mrb[0].mxu0
      %v2619 = vadd.f32 %v2426, %v2618
      %v2620 = vpop.f32.mrb[0].mxu0
      %v2621 = vadd.f32 %v2428, %v2620
      %v2622 = vpop.f32.mrb[0].mxu0
      %v2623 = vadd.f32 %v2430, %v2622
      %2624 = vmatprep.mubr.bf16.mxu0 %v730
      %2625 = vmatmul.mubr.bf16.gmra.mrb[0].mxu0 %v729
      %v2626 = vpop.f32.mrb[0].mxu0
      %v2627 = vadd.f32 %v2434, %v2626
      %v2628 = vpop.f32.mrb[0].mxu0
      %v2629 = vadd.f32 %v2436, %v2628
      %v2630 = vpop.f32.mrb[0].mxu0
      %v2631 = vadd.f32 %v2438, %v2630
      %v2632 = vpop.f32.mrb[0].mxu0
      %v2633 = vadd.f32 %v2440, %v2632
      %2634 = vmatprep.mubr.bf16.mxu0 %v734
      %2635 = vmatmul.mubr.bf16.gmra.mrb[0].mxu0 %v733
      %v2636 = vpop.f32.mrb[0].mxu0
      %v2637 = vadd.f32 %v2444, %v2636
      %v2638 = vpop.f32.mrb[0].mxu0
      %v2639 = vadd.f32 %v2446, %v2638
      %v2640 = vpop.f32.mrb[0].mxu0
      %v2641 = vadd.f32 %v2448, %v2640
      %v2642 = vpop.f32.mrb[0].mxu0
      %v2643 = vadd.f32 %v2450, %v2642
      %2644 = vmatprep.mubr.bf16.mxu0 %v738
      %2645 = vmatmul.mubr.bf16.gmra.mrb[0].mxu0 %v737
      %v2646 = vpop.f32.mrb[0].mxu0
      %v2647 = vadd.f32 %v2454, %v2646
      %v2648 = vpop.f32.mrb[0].mxu0
      %v2649 = vadd.f32 %v2456, %v2648
      %v2650 = vpop.f32.mrb[0].mxu0
      %v2651 = vadd.f32 %v2458, %v2650
      %v2652 = vpop.f32.mrb[0].mxu0
      %v2653 = vadd.f32 %v2460, %v2652
      %2654 = vmatprep.mubr.bf16.mxu0 %v742
      %2655 = vmatmul.mubr.bf16.gmra.mrb[0].mxu0 %v741
      %v2656 = vpop.f32.mrb[0].mxu0
      %v2657 = vadd.f32 %v2464, %v2656
      %v2658 = vpop.f32.mrb[0].mxu0
      %v2659 = vadd.f32 %v2466, %v2658
      %v2660 = vpop.f32.mrb[0].mxu0
      %v2661 = vadd.f32 %v2468, %v2660
      %v2662 = vpop.f32.mrb[0].mxu0
      %v2663 = vadd.f32 %v2470, %v2662
      %2664 = vmatprep.mubr.bf16.mxu0 %v746
      %2665 = vmatmul.mubr.bf16.gmra.mrb[0].mxu0 %v745
      %v2666 = vpop.f32.mrb[0].mxu0
      %v2667 = vadd.f32 %v2474, %v2666
      %v2668 = vpop.f32.mrb[0].mxu0
      %v2669 = vadd.f32 %v2476, %v2668
      %v2670 = vpop.f32.mrb[0].mxu0
      %v2671 = vadd.f32 %v2478, %v2670
      %v2672 = vpop.f32.mrb[0].mxu0
      %v2673 = vadd.f32 %v2480, %v2672
      %2674 = vmatprep.mubr.bf16.mxu0 %v750
      %2675 = vmatmul.mubr.bf16.gmra.mrb[0].mxu0 %v749
      %v2676 = vpop.f32.mrb[0].mxu0
      %v2677 = vadd.f32 %v2484, %v2676
      %v2678 = vpop.f32.mrb[0].mxu0
      %v2679 = vadd.f32 %v2486, %v2678
      %v2680 = vpop.f32.mrb[0].mxu0
      %v2681 = vadd.f32 %v2488, %v2680
      %v2682 = vpop.f32.mrb[0].mxu0
      %v2683 = vadd.f32 %v2490, %v2682
      %2684 = vmatprep.mubr.bf16.mxu0 %v754
      %2685 = vmatmul.mubr.bf16.gmra.mrb[0].mxu0 %v753
      %v2686 = vpop.f32.mrb[0].mxu0
      %v2687 = vadd.f32 %v2494, %v2686
      %v2688 = vpop.f32.mrb[0].mxu0
      %v2689 = vadd.f32 %v2496, %v2688
      %v2690 = vpop.f32.mrb[0].mxu0
      %v2691 = vadd.f32 %v2498, %v2690
      %v2692 = vpop.f32.mrb[0].mxu0
      %v2693 = vadd.f32 %v2500, %v2692
      %2694 = vmatprep.mubr.bf16.mxu0 %v758
      %2695 = vmatmul.mubr.bf16.gmra.mrb[0].mxu0 %v757
      %v2696 = vpop.f32.mrb[0].mxu0
      %v2697 = vadd.f32 %v2504, %v2696
      %v2698 = vpop.f32.mrb[0].mxu0
      %v2699 = vadd.f32 %v2506, %v2698
      %v2700 = vpop.f32.mrb[0].mxu0
      %v2701 = vadd.f32 %v2508, %v2700
      %v2702 = vpop.f32.mrb[0].mxu0
      %v2703 = vadd.f32 %v2510, %v2702
      %2704 = vmatprep.mubr.bf16.mxu0 %v762
      %2705 = vmatmul.mubr.bf16.gmra.mrb[0].mxu0 %v761
      %v2706 = vpop.f32.mrb[0].mxu0
      %v2707 = vadd.f32 %v2514, %v2706
      %v2708 = vpop.f32.mrb[0].mxu0
      %v2709 = vadd.f32 %v2516, %v2708
      %v2710 = vpop.f32.mrb[0].mxu0
      %v2711 = vadd.f32 %v2518, %v2710
      %v2712 = vpop.f32.mrb[0].mxu0
      %v2713 = vadd.f32 %v2520, %v2712
      %2714 = vmatprep.mubr.bf16.mxu0 %v766
      %2715 = vmatmul.mubr.bf16.gmra.mrb[0].mxu0 %v765
      %v2716 = vpop.f32.mrb[0].mxu0
      %v2717 = vadd.f32 %v2524, %v2716
      %v2718 = vpop.f32.mrb[0].mxu0
      %v2719 = vadd.f32 %v2526, %v2718
      %v2720 = vpop.f32.mrb[0].mxu0
      %v2721 = vadd.f32 %v2528, %v2720
      %v2722 = vpop.f32.mrb[0].mxu0
      %v2723 = vadd.f32 %v2530, %v2722
      %2724 = vmatprep.mubr.bf16.mxu0 %v770
      %2725 = vmatmul.mubr.bf16.gmra.mrb[0].mxu0 %v769
      %v2726 = vpop.f32.mrb[0].mxu0
      %v2727 = vadd.f32 %v2534, %v2726
      %v2728 = vpop.f32.mrb[0].mxu0
      %v2729 = vadd.f32 %v2536, %v2728
      %v2730 = vpop.f32.mrb[0].mxu0
      %v2731 = vadd.f32 %v2538, %v2730
      %v2732 = vpop.f32.mrb[0].mxu0
      %v2733 = vadd.f32 %v2540, %v2732
      %2734 = vmatprep.mubr.bf16.mxu0 %v774
      %2735 = vmatmul.mubr.bf16.gmra.mrb[0].mxu0 %v773
      %v2736 = vpop.f32.mrb[0].mxu0
      %v2737 = vadd.f32 %v2544, %v2736
      %v2738 = vpop.f32.mrb[0].mxu0
      %v2739 = vadd.f32 %v2546, %v2738
      %v2740 = vpop.f32.mrb[0].mxu0
      %v2741 = vadd.f32 %v2548, %v2740
      %v2742 = vpop.f32.mrb[0].mxu0
      %v2743 = vadd.f32 %v2550, %v2742
      %2744 = vmatprep.mubr.bf16.mxu0 %v778
      %2745 = vmatmul.mubr.bf16.gmra.mrb[0].mxu0 %v777
      %v2746 = vpop.f32.mrb[0].mxu0
      %v2747 = vadd.f32 %v2554, %v2746
      %v2748 = vpop.f32.mrb[0].mxu0
      %v2749 = vadd.f32 %v2556, %v2748
      %v2750 = vpop.f32.mrb[0].mxu0
      %v2751 = vadd.f32 %v2558, %v2750
      %v2752 = vpop.f32.mrb[0].mxu0
      %v2753 = vadd.f32 %v2560, %v2752
      %2754 = vmatprep.mubr.bf16.mxu0 %v782
      %2755 = vmatmul.mubr.bf16.gmra.mrb[0].mxu0 %v781
      %v2756 = vpop.f32.mrb[0].mxu0
      %v2757 = vadd.f32 %v2564, %v2756
      %v2758 = vpop.f32.mrb[0].mxu0
      %v2759 = vadd.f32 %v2566, %v2758
      %v2760 = vpop.f32.mrb[0].mxu0
      %v2761 = vadd.f32 %v2568, %v2760
      %v2762 = vpop.f32.mrb[0].mxu0
      %v2763 = vadd.f32 %v2570, %v2762
      %2764 = vmatprep.mubr.bf16.mxu0 %v786
      %2765 = vmatmul.mubr.bf16.gmra.mrb[0].mxu0 %v785
      %v2766 = vpop.f32.mrb[0].mxu0
      %v2767 = vadd.f32 %v2574, %v2766
      %v2768 = vpop.f32.mrb[0].mxu0
      %v2769 = vadd.f32 %v2576, %v2768
      %v2770 = vpop.f32.mrb[0].mxu0
      %v2771 = vadd.f32 %v2578, %v2770
      %v2772 = vpop.f32.mrb[0].mxu0
      %v2773 = vadd.f32 %v2580, %v2772
      %2774 = vdwg.mxu0
      %2775 = vmatprep.subr.bf16.mxu0 %v1560
      %2776 = vmatpush1.bf16.msra.mxu0 %v1559
      %2777 = vmatprep.subr.bf16.mxu0 %v1567
      %2778 = vmatpush1.bf16.msra.mxu0 %v1566
      %2779 = vmatprep.subr.bf16.mxu0 %v1574
      %2780 = vmatpush1.bf16.msra.mxu0 %v1573
      %2781 = vmatprep.subr.bf16.mxu0 %v1581
      %2782 = vmatpush1.bf16.msra.mxu0 %v1580
      %2783 = vmatprep.subr.bf16.mxu0 %v1588
      %2784 = vmatpush1.bf16.msra.mxu0 %v1587
      %2785 = vmatprep.subr.bf16.mxu0 %v1595
      %2786 = vmatpush1.bf16.msra.mxu0 %v1594
      %2787 = vmatprep.subr.bf16.mxu0 %v1602
      %2788 = vmatpush1.bf16.msra.mxu0 %v1601
      %2789 = vmatprep.subr.bf16.mxu0 %v1609
      %2790 = vmatpush1.bf16.msra.mxu0 %v1608
      %2791 = vmatprep.subr.bf16.mxu0 %v1616
      %2792 = vmatpush1.bf16.msra.mxu0 %v1615
      %2793 = vmatprep.subr.bf16.mxu0 %v1623
      %2794 = vmatpush1.bf16.msra.mxu0 %v1622
      %2795 = vmatprep.subr.bf16.mxu0 %v1630
      %2796 = vmatpush1.bf16.msra.mxu0 %v1629
      %2797 = vmatprep.subr.bf16.mxu0 %v1637
      %2798 = vmatpush1.bf16.msra.mxu0 %v1636
      %2799 = vmatprep.subr.bf16.mxu0 %v1644
      %2800 = vmatpush1.bf16.msra.mxu0 %v1643
      %2801 = vmatprep.subr.bf16.mxu0 %v1651
      %2802 = vmatpush1.bf16.msra.mxu0 %v1650
      %2803 = vmatprep.subr.bf16.mxu0 %v1658
      %2804 = vmatpush1.bf16.msra.mxu0 %v1657
      %2805 = vmatprep.subr.bf16.mxu0 %v1665
      %2806 = vmatpush1.bf16.msra.mxu0 %v1664
      %2807 = vmatprep.mubr.bf16.mxu0 %v724
      %2808 = vmatmul.mubr.bf16.gmra.mrb[0].mxu0 %v723
      %v2809 = vpop.f32.mrb[0].mxu0
      %v2810 = vadd.f32 0.0, %v2809
      %v2811 = vpop.f32.mrb[0].mxu0
      %v2812 = vadd.f32 0.0, %v2811
      %v2813 = vpop.f32.mrb[0].mxu0
      %v2814 = vadd.f32 0.0, %v2813
      %v2815 = vpop.f32.mrb[0].mxu0
      %v2816 = vadd.f32 0.0, %v2815
      %2817 = vmatprep.mubr.bf16.mxu0 %v728
      %2818 = vmatmul.mubr.bf16.gmra.mrb[0].mxu0 %v727
      %v2819 = vpop.f32.mrb[0].mxu0
      %v2820 = vadd.f32 0.0, %v2819
      %v2821 = vpop.f32.mrb[0].mxu0
      %v2822 = vadd.f32 0.0, %v2821
      %v2823 = vpop.f32.mrb[0].mxu0
      %v2824 = vadd.f32 0.0, %v2823
      %v2825 = vpop.f32.mrb[0].mxu0
      %v2826 = vadd.f32 0.0, %v2825
      %2827 = vmatprep.mubr.bf16.mxu0 %v732
      %2828 = vmatmul.mubr.bf16.gmra.mrb[0].mxu0 %v731
      %v2829 = vpop.f32.mrb[0].mxu0
      %v2830 = vadd.f32 0.0, %v2829
      %v2831 = vpop.f32.mrb[0].mxu0
      %v2832 = vadd.f32 0.0, %v2831
      %v2833 = vpop.f32.mrb[0].mxu0
      %v2834 = vadd.f32 0.0, %v2833
      %v2835 = vpop.f32.mrb[0].mxu0
      %v2836 = vadd.f32 0.0, %v2835
      %2837 = vmatprep.mubr.bf16.mxu0 %v736
      %2838 = vmatmul.mubr.bf16.gmra.mrb[0].mxu0 %v735
      %v2839 = vpop.f32.mrb[0].mxu0
      %v2840 = vadd.f32 0.0, %v2839
      %v2841 = vpop.f32.mrb[0].mxu0
      %v2842 = vadd.f32 0.0, %v2841
      %v2843 = vpop.f32.mrb[0].mxu0
      %v2844 = vadd.f32 0.0, %v2843
      %v2845 = vpop.f32.mrb[0].mxu0
      %v2846 = vadd.f32 0.0, %v2845
      %2847 = vmatprep.mubr.bf16.mxu0 %v740
      %2848 = vmatmul.mubr.bf16.gmra.mrb[0].mxu0 %v739
      %v2849 = vpop.f32.mrb[0].mxu0
      %v2850 = vadd.f32 0.0, %v2849
      %v2851 = vpop.f32.mrb[0].mxu0
      %v2852 = vadd.f32 0.0, %v2851
      %v2853 = vpop.f32.mrb[0].mxu0
      %v2854 = vadd.f32 0.0, %v2853
      %v2855 = vpop.f32.mrb[0].mxu0
      %v2856 = vadd.f32 0.0, %v2855
      %2857 = vmatprep.mubr.bf16.mxu0 %v744
      %2858 = vmatmul.mubr.bf16.gmra.mrb[0].mxu0 %v743
      %v2859 = vpop.f32.mrb[0].mxu0
      %v2860 = vadd.f32 0.0, %v2859
      %v2861 = vpop.f32.mrb[0].mxu0
      %v2862 = vadd.f32 0.0, %v2861
      %v2863 = vpop.f32.mrb[0].mxu0
      %v2864 = vadd.f32 0.0, %v2863
      %v2865 = vpop.f32.mrb[0].mxu0
      %v2866 = vadd.f32 0.0, %v2865
      %2867 = vmatprep.mubr.bf16.mxu0 %v748
      %2868 = vmatmul.mubr.bf16.gmra.mrb[0].mxu0 %v747
      %v2869 = vpop.f32.mrb[0].mxu0
      %v2870 = vadd.f32 0.0, %v2869
      %v2871 = vpop.f32.mrb[0].mxu0
      %v2872 = vadd.f32 0.0, %v2871
      %v2873 = vpop.f32.mrb[0].mxu0
      %v2874 = vadd.f32 0.0, %v2873
      %v2875 = vpop.f32.mrb[0].mxu0
      %v2876 = vadd.f32 0.0, %v2875
      %2877 = vmatprep.mubr.bf16.mxu0 %v752
      %2878 = vmatmul.mubr.bf16.gmra.mrb[0].mxu0 %v751
      %v2879 = vpop.f32.mrb[0].mxu0
      %v2880 = vadd.f32 0.0, %v2879
      %v2881 = vpop.f32.mrb[0].mxu0
      %v2882 = vadd.f32 0.0, %v2881
      %v2883 = vpop.f32.mrb[0].mxu0
      %v2884 = vadd.f32 0.0, %v2883
      %v2885 = vpop.f32.mrb[0].mxu0
      %v2886 = vadd.f32 0.0, %v2885
      %2887 = vmatprep.mubr.bf16.mxu0 %v756
      %2888 = vmatmul.mubr.bf16.gmra.mrb[0].mxu0 %v755
      %v2889 = vpop.f32.mrb[0].mxu0
      %v2890 = vadd.f32 0.0, %v2889
      %v2891 = vpop.f32.mrb[0].mxu0
      %v2892 = vadd.f32 0.0, %v2891
      %v2893 = vpop.f32.mrb[0].mxu0
      %v2894 = vadd.f32 0.0, %v2893
      %v2895 = vpop.f32.mrb[0].mxu0
      %v2896 = vadd.f32 0.0, %v2895
      %2897 = vmatprep.mubr.bf16.mxu0 %v760
      %2898 = vmatmul.mubr.bf16.gmra.mrb[0].mxu0 %v759
      %v2899 = vpop.f32.mrb[0].mxu0
      %v2900 = vadd.f32 0.0, %v2899
      %v2901 = vpop.f32.mrb[0].mxu0
      %v2902 = vadd.f32 0.0, %v2901
      %v2903 = vpop.f32.mrb[0].mxu0
      %v2904 = vadd.f32 0.0, %v2903
      %v2905 = vpop.f32.mrb[0].mxu0
      %v2906 = vadd.f32 0.0, %v2905
      %2907 = vmatprep.mubr.bf16.mxu0 %v764
      %2908 = vmatmul.mubr.bf16.gmra.mrb[0].mxu0 %v763
      %v2909 = vpop.f32.mrb[0].mxu0
      %v2910 = vadd.f32 0.0, %v2909
      %v2911 = vpop.f32.mrb[0].mxu0
      %v2912 = vadd.f32 0.0, %v2911
      %v2913 = vpop.f32.mrb[0].mxu0
      %v2914 = vadd.f32 0.0, %v2913
      %v2915 = vpop.f32.mrb[0].mxu0
      %v2916 = vadd.f32 0.0, %v2915
      %2917 = vmatprep.mubr.bf16.mxu0 %v768
      %2918 = vmatmul.mubr.bf16.gmra.mrb[0].mxu0 %v767
      %v2919 = vpop.f32.mrb[0].mxu0
      %v2920 = vadd.f32 0.0, %v2919
      %v2921 = vpop.f32.mrb[0].mxu0
      %v2922 = vadd.f32 0.0, %v2921
      %v2923 = vpop.f32.mrb[0].mxu0
      %v2924 = vadd.f32 0.0, %v2923
      %v2925 = vpop.f32.mrb[0].mxu0
      %v2926 = vadd.f32 0.0, %v2925
      %2927 = vmatprep.mubr.bf16.mxu0 %v772
      %2928 = vmatmul.mubr.bf16.gmra.mrb[0].mxu0 %v771
      %v2929 = vpop.f32.mrb[0].mxu0
      %v2930 = vadd.f32 0.0, %v2929
      %v2931 = vpop.f32.mrb[0].mxu0
      %v2932 = vadd.f32 0.0, %v2931
      %v2933 = vpop.f32.mrb[0].mxu0
      %v2934 = vadd.f32 0.0, %v2933
      %v2935 = vpop.f32.mrb[0].mxu0
      %v2936 = vadd.f32 0.0, %v2935
      %2937 = vmatprep.mubr.bf16.mxu0 %v776
      %2938 = vmatmul.mubr.bf16.gmra.mrb[0].mxu0 %v775
      %v2939 = vpop.f32.mrb[0].mxu0
      %v2940 = vadd.f32 0.0, %v2939
      %v2941 = vpop.f32.mrb[0].mxu0
      %v2942 = vadd.f32 0.0, %v2941
      %v2943 = vpop.f32.mrb[0].mxu0
      %v2944 = vadd.f32 0.0, %v2943
      %v2945 = vpop.f32.mrb[0].mxu0
      %v2946 = vadd.f32 0.0, %v2945
      %2947 = vmatprep.mubr.bf16.mxu0 %v780
      %2948 = vmatmul.mubr.bf16.gmra.mrb[0].mxu0 %v779
      %v2949 = vpop.f32.mrb[0].mxu0
      %v2950 = vadd.f32 0.0, %v2949
      %v2951 = vpop.f32.mrb[0].mxu0
      %v2952 = vadd.f32 0.0, %v2951
      %v2953 = vpop.f32.mrb[0].mxu0
      %v2954 = vadd.f32 0.0, %v2953
      %v2955 = vpop.f32.mrb[0].mxu0
      %v2956 = vadd.f32 0.0, %v2955
      %2957 = vmatprep.mubr.bf16.mxu0 %v784
      %2958 = vmatmul.mubr.bf16.gmra.mrb[0].mxu0 %v783
      %v2959 = vpop.f32.mrb[0].mxu0
      %v2960 = vadd.f32 0.0, %v2959
      %v2961 = vpop.f32.mrb[0].mxu0
      %v2962 = vadd.f32 0.0, %v2961
      %v2963 = vpop.f32.mrb[0].mxu0
      %v2964 = vadd.f32 0.0, %v2963
      %v2965 = vpop.f32.mrb[0].mxu0
      %v2966 = vadd.f32 0.0, %v2965
      %2967 = vdwg.mxu0
      %2968 = vmatprep.subr.bf16.mxu0 %v1672
      %2969 = vmatpush1.bf16.msra.mxu0 %v1671
      %2970 = vmatprep.subr.bf16.mxu0 %v1679
      %2971 = vmatpush1.bf16.msra.mxu0 %v1678
      %2972 = vmatprep.subr.bf16.mxu0 %v1686
      %2973 = vmatpush1.bf16.msra.mxu0 %v1685
      %2974 = vmatprep.subr.bf16.mxu0 %v1693
      %2975 = vmatpush1.bf16.msra.mxu0 %v1692
      %2976 = vmatprep.subr.bf16.mxu0 %v1700
      %2977 = vmatpush1.bf16.msra.mxu0 %v1699
      %2978 = vmatprep.subr.bf16.mxu0 %v1707
      %2979 = vmatpush1.bf16.msra.mxu0 %v1706
      %2980 = vmatprep.subr.bf16.mxu0 %v1714
      %2981 = vmatpush1.bf16.msra.mxu0 %v1713
      %2982 = vmatprep.subr.bf16.mxu0 %v1721
      %2983 = vmatpush1.bf16.msra.mxu0 %v1720
      %2984 = vmatprep.subr.bf16.mxu0 %v1728
      %2985 = vmatpush1.bf16.msra.mxu0 %v1727
      %2986 = vmatprep.subr.bf16.mxu0 %v1735
      %2987 = vmatpush1.bf16.msra.mxu0 %v1734
      %2988 = vmatprep.subr.bf16.mxu0 %v1742
      %2989 = vmatpush1.bf16.msra.mxu0 %v1741
      %2990 = vmatprep.subr.bf16.mxu0 %v1749
      %2991 = vmatpush1.bf16.msra.mxu0 %v1748
      %2992 = vmatprep.subr.bf16.mxu0 %v1756
      %2993 = vmatpush1.bf16.msra.mxu0 %v1755
      %2994 = vmatprep.subr.bf16.mxu0 %v1763
      %2995 = vmatpush1.bf16.msra.mxu0 %v1762
      %2996 = vmatprep.subr.bf16.mxu0 %v1770
      %2997 = vmatpush1.bf16.msra.mxu0 %v1769
      %2998 = vmatprep.subr.bf16.mxu0 %v1777
      %2999 = vmatpush1.bf16.msra.mxu0 %v1776
      %3000 = vmatprep.mubr.bf16.mxu0 %v726
      %3001 = vmatmul.mubr.bf16.gmra.mrb[0].mxu0 %v725
      %v3002 = vpop.f32.mrb[0].mxu0
      %v3003 = vadd.f32 %v2810, %v3002
      %v3004 = vpop.f32.mrb[0].mxu0
      %v3005 = vadd.f32 %v2812, %v3004
      %v3006 = vpop.f32.mrb[0].mxu0
      %v3007 = vadd.f32 %v2814, %v3006
      %v3008 = vpop.f32.mrb[0].mxu0
      %v3009 = vadd.f32 %v2816, %v3008
      %3010 = vmatprep.mubr.bf16.mxu0 %v730
      %3011 = vmatmul.mubr.bf16.gmra.mrb[0].mxu0 %v729
      %v3012 = vpop.f32.mrb[0].mxu0
      %v3013 = vadd.f32 %v2820, %v3012
      %v3014 = vpop.f32.mrb[0].mxu0
      %v3015 = vadd.f32 %v2822, %v3014
      %v3016 = vpop.f32.mrb[0].mxu0
      %v3017 = vadd.f32 %v2824, %v3016
      %v3018 = vpop.f32.mrb[0].mxu0
      %v3019 = vadd.f32 %v2826, %v3018
      %3020 = vmatprep.mubr.bf16.mxu0 %v734
      %3021 = vmatmul.mubr.bf16.gmra.mrb[0].mxu0 %v733
      %v3022 = vpop.f32.mrb[0].mxu0
      %v3023 = vadd.f32 %v2830, %v3022
      %v3024 = vpop.f32.mrb[0].mxu0
      %v3025 = vadd.f32 %v2832, %v3024
      %v3026 = vpop.f32.mrb[0].mxu0
      %v3027 = vadd.f32 %v2834, %v3026
      %v3028 = vpop.f32.mrb[0].mxu0
      %v3029 = vadd.f32 %v2836, %v3028
      %3030 = vmatprep.mubr.bf16.mxu0 %v738
      %3031 = vmatmul.mubr.bf16.gmra.mrb[0].mxu0 %v737
      %v3032 = vpop.f32.mrb[0].mxu0
      %v3033 = vadd.f32 %v2840, %v3032
      %v3034 = vpop.f32.mrb[0].mxu0
      %v3035 = vadd.f32 %v2842, %v3034
      %v3036 = vpop.f32.mrb[0].mxu0
      %v3037 = vadd.f32 %v2844, %v3036
      %v3038 = vpop.f32.mrb[0].mxu0
      %v3039 = vadd.f32 %v2846, %v3038
      %3040 = vmatprep.mubr.bf16.mxu0 %v742
      %3041 = vmatmul.mubr.bf16.gmra.mrb[0].mxu0 %v741
      %v3042 = vpop.f32.mrb[0].mxu0
      %v3043 = vadd.f32 %v2850, %v3042
      %v3044 = vpop.f32.mrb[0].mxu0
      %v3045 = vadd.f32 %v2852, %v3044
      %v3046 = vpop.f32.mrb[0].mxu0
      %v3047 = vadd.f32 %v2854, %v3046
      %v3048 = vpop.f32.mrb[0].mxu0
      %v3049 = vadd.f32 %v2856, %v3048
      %3050 = vmatprep.mubr.bf16.mxu0 %v746
      %3051 = vmatmul.mubr.bf16.gmra.mrb[0].mxu0 %v745
      %v3052 = vpop.f32.mrb[0].mxu0
      %v3053 = vadd.f32 %v2860, %v3052
      %v3054 = vpop.f32.mrb[0].mxu0
      %v3055 = vadd.f32 %v2862, %v3054
      %v3056 = vpop.f32.mrb[0].mxu0
      %v3057 = vadd.f32 %v2864, %v3056
      %v3058 = vpop.f32.mrb[0].mxu0
      %v3059 = vadd.f32 %v2866, %v3058
      %3060 = vmatprep.mubr.bf16.mxu0 %v750
      %3061 = vmatmul.mubr.bf16.gmra.mrb[0].mxu0 %v749
      %v3062 = vpop.f32.mrb[0].mxu0
      %v3063 = vadd.f32 %v2870, %v3062
      %v3064 = vpop.f32.mrb[0].mxu0
      %v3065 = vadd.f32 %v2872, %v3064
      %v3066 = vpop.f32.mrb[0].mxu0
      %v3067 = vadd.f32 %v2874, %v3066
      %v3068 = vpop.f32.mrb[0].mxu0
      %v3069 = vadd.f32 %v2876, %v3068
      %3070 = vmatprep.mubr.bf16.mxu0 %v754
      %3071 = vmatmul.mubr.bf16.gmra.mrb[0].mxu0 %v753
      %v3072 = vpop.f32.mrb[0].mxu0
      %v3073 = vadd.f32 %v2880, %v3072
      %v3074 = vpop.f32.mrb[0].mxu0
      %v3075 = vadd.f32 %v2882, %v3074
      %v3076 = vpop.f32.mrb[0].mxu0
      %v3077 = vadd.f32 %v2884, %v3076
      %v3078 = vpop.f32.mrb[0].mxu0
      %v3079 = vadd.f32 %v2886, %v3078
      %3080 = vmatprep.mubr.bf16.mxu0 %v758
      %3081 = vmatmul.mubr.bf16.gmra.mrb[0].mxu0 %v757
      %v3082 = vpop.f32.mrb[0].mxu0
      %v3083 = vadd.f32 %v2890, %v3082
      %v3084 = vpop.f32.mrb[0].mxu0
      %v3085 = vadd.f32 %v2892, %v3084
      %v3086 = vpop.f32.mrb[0].mxu0
      %v3087 = vadd.f32 %v2894, %v3086
      %v3088 = vpop.f32.mrb[0].mxu0
      %v3089 = vadd.f32 %v2896, %v3088
      %3090 = vmatprep.mubr.bf16.mxu0 %v762
      %3091 = vmatmul.mubr.bf16.gmra.mrb[0].mxu0 %v761
      %v3092 = vpop.f32.mrb[0].mxu0
      %v3093 = vadd.f32 %v2900, %v3092
      %v3094 = vpop.f32.mrb[0].mxu0
      %v3095 = vadd.f32 %v2902, %v3094
      %v3096 = vpop.f32.mrb[0].mxu0
      %v3097 = vadd.f32 %v2904, %v3096
      %v3098 = vpop.f32.mrb[0].mxu0
      %v3099 = vadd.f32 %v2906, %v3098
      %3100 = vmatprep.mubr.bf16.mxu0 %v766
      %3101 = vmatmul.mubr.bf16.gmra.mrb[0].mxu0 %v765
      %v3102 = vpop.f32.mrb[0].mxu0
      %v3103 = vadd.f32 %v2910, %v3102
      %v3104 = vpop.f32.mrb[0].mxu0
      %v3105 = vadd.f32 %v2912, %v3104
      %v3106 = vpop.f32.mrb[0].mxu0
      %v3107 = vadd.f32 %v2914, %v3106
      %v3108 = vpop.f32.mrb[0].mxu0
      %v3109 = vadd.f32 %v2916, %v3108
      %3110 = vmatprep.mubr.bf16.mxu0 %v770
      %3111 = vmatmul.mubr.bf16.gmra.mrb[0].mxu0 %v769
      %v3112 = vpop.f32.mrb[0].mxu0
      %v3113 = vadd.f32 %v2920, %v3112
      %v3114 = vpop.f32.mrb[0].mxu0
      %v3115 = vadd.f32 %v2922, %v3114
      %v3116 = vpop.f32.mrb[0].mxu0
      %v3117 = vadd.f32 %v2924, %v3116
      %v3118 = vpop.f32.mrb[0].mxu0
      %v3119 = vadd.f32 %v2926, %v3118
      %3120 = vmatprep.mubr.bf16.mxu0 %v774
      %3121 = vmatmul.mubr.bf16.gmra.mrb[0].mxu0 %v773
      %v3122 = vpop.f32.mrb[0].mxu0
      %v3123 = vadd.f32 %v2930, %v3122
      %v3124 = vpop.f32.mrb[0].mxu0
      %v3125 = vadd.f32 %v2932, %v3124
      %v3126 = vpop.f32.mrb[0].mxu0
      %v3127 = vadd.f32 %v2934, %v3126
      %v3128 = vpop.f32.mrb[0].mxu0
      %v3129 = vadd.f32 %v2936, %v3128
      %3130 = vmatprep.mubr.bf16.mxu0 %v778
      %3131 = vmatmul.mubr.bf16.gmra.mrb[0].mxu0 %v777
      %v3132 = vpop.f32.mrb[0].mxu0
      %v3133 = vadd.f32 %v2940, %v3132
      %v3134 = vpop.f32.mrb[0].mxu0
      %v3135 = vadd.f32 %v2942, %v3134
      %v3136 = vpop.f32.mrb[0].mxu0
      %v3137 = vadd.f32 %v2944, %v3136
      %v3138 = vpop.f32.mrb[0].mxu0
      %v3139 = vadd.f32 %v2946, %v3138
      %3140 = vmatprep.mubr.bf16.mxu0 %v782
      %3141 = vmatmul.mubr.bf16.gmra.mrb[0].mxu0 %v781
      %v3142 = vpop.f32.mrb[0].mxu0
      %v3143 = vadd.f32 %v2950, %v3142
      %v3144 = vpop.f32.mrb[0].mxu0
      %v3145 = vadd.f32 %v2952, %v3144
      %v3146 = vpop.f32.mrb[0].mxu0
      %v3147 = vadd.f32 %v2954, %v3146
      %v3148 = vpop.f32.mrb[0].mxu0
      %v3149 = vadd.f32 %v2956, %v3148
      %3150 = vmatprep.mubr.bf16.mxu0 %v786
      %3151 = vmatmul.mubr.bf16.gmra.mrb[0].mxu0 %v785
      %v3152 = vpop.f32.mrb[0].mxu0
      %v3153 = vadd.f32 %v2960, %v3152
      %v3154 = vpop.f32.mrb[0].mxu0
      %v3155 = vadd.f32 %v2962, %v3154
      %v3156 = vpop.f32.mrb[0].mxu0
      %v3157 = vadd.f32 %v2964, %v3156
      %v3158 = vpop.f32.mrb[0].mxu0
      %v3159 = vadd.f32 %v2966, %v3158
      %3160 = vdwg.mxu0
      %3161 = vmatprep.subr.bf16.mxu0 0
      %3162 = vmatpush1.bf16.msra.mxu0 %v1561
      %3163 = vmatprep.subr.bf16.mxu0 0
      %3164 = vmatpush1.bf16.msra.mxu0 %v1568
      %3165 = vmatprep.subr.bf16.mxu0 0
      %3166 = vmatpush1.bf16.msra.mxu0 %v1575
      %3167 = vmatprep.subr.bf16.mxu0 0
      %3168 = vmatpush1.bf16.msra.mxu0 %v1582
      %3169 = vmatprep.subr.bf16.mxu0 0
      %3170 = vmatpush1.bf16.msra.mxu0 %v1589
      %3171 = vmatprep.subr.bf16.mxu0 0
      %3172 = vmatpush1.bf16.msra.mxu0 %v1596
      %3173 = vmatprep.subr.bf16.mxu0 0
      %3174 = vmatpush1.bf16.msra.mxu0 %v1603
      %3175 = vmatprep.subr.bf16.mxu0 0
      %3176 = vmatpush1.bf16.msra.mxu0 %v1610
      %3177 = vmatprep.subr.bf16.mxu0 0
      %3178 = vmatpush1.bf16.msra.mxu0 %v1617
      %3179 = vmatprep.subr.bf16.mxu0 0
      %3180 = vmatpush1.bf16.msra.mxu0 %v1624
      %3181 = vmatprep.subr.bf16.mxu0 0
      %3182 = vmatpush1.bf16.msra.mxu0 %v1631
      %3183 = vmatprep.subr.bf16.mxu0 0
      %3184 = vmatpush1.bf16.msra.mxu0 %v1638
      %3185 = vmatprep.subr.bf16.mxu0 0
      %3186 = vmatpush1.bf16.msra.mxu0 %v1645
      %3187 = vmatprep.subr.bf16.mxu0 0
      %3188 = vmatpush1.bf16.msra.mxu0 %v1652
      %3189 = vmatprep.subr.bf16.mxu0 0
      %3190 = vmatpush1.bf16.msra.mxu0 %v1659
      %3191 = vmatprep.subr.bf16.mxu0 0
      %3192 = vmatpush1.bf16.msra.mxu0 %v1666
      %3193 = vmatprep.mubr.bf16.mxu0 %v724
      %3194 = vmatmul.mubr.bf16.gmra.mrb[0].mxu0 %v723
      %v3195 = vpop.f32.mrb[0].mxu0
      %v3196 = vadd.f32 0.0, %v3195
      %v3197 = vpop.f32.mrb[0].mxu0
      %v3198 = vpop.f32.mrb[0].mxu0
      %v3199 = vadd.f32 0.0, %v3198
      %v3200 = vpop.f32.mrb[0].mxu0
      %3201 = vmatprep.mubr.bf16.mxu0 %v728
      %3202 = vmatmul.mubr.bf16.gmra.mrb[0].mxu0 %v727
      %v3203 = vpop.f32.mrb[0].mxu0
      %v3204 = vadd.f32 0.0, %v3203
      %v3205 = vpop.f32.mrb[0].mxu0
      %v3206 = vpop.f32.mrb[0].mxu0
      %v3207 = vadd.f32 0.0, %v3206
      %v3208 = vpop.f32.mrb[0].mxu0
      %3209 = vmatprep.mubr.bf16.mxu0 %v732
      %3210 = vmatmul.mubr.bf16.gmra.mrb[0].mxu0 %v731
      %v3211 = vpop.f32.mrb[0].mxu0
      %v3212 = vadd.f32 0.0, %v3211
      %v3213 = vpop.f32.mrb[0].mxu0
      %v3214 = vpop.f32.mrb[0].mxu0
      %v3215 = vadd.f32 0.0, %v3214
      %v3216 = vpop.f32.mrb[0].mxu0
      %3217 = vmatprep.mubr.bf16.mxu0 %v736
      %3218 = vmatmul.mubr.bf16.gmra.mrb[0].mxu0 %v735
      %v3219 = vpop.f32.mrb[0].mxu0
      %v3220 = vadd.f32 0.0, %v3219
      %v3221 = vpop.f32.mrb[0].mxu0
      %v3222 = vpop.f32.mrb[0].mxu0
      %v3223 = vadd.f32 0.0, %v3222
      %v3224 = vpop.f32.mrb[0].mxu0
      %3225 = vmatprep.mubr.bf16.mxu0 %v740
      %3226 = vmatmul.mubr.bf16.gmra.mrb[0].mxu0 %v739
      %v3227 = vpop.f32.mrb[0].mxu0
      %v3228 = vadd.f32 0.0, %v3227
      %v3229 = vpop.f32.mrb[0].mxu0
      %v3230 = vpop.f32.mrb[0].mxu0
      %v3231 = vadd.f32 0.0, %v3230
      %v3232 = vpop.f32.mrb[0].mxu0
      %3233 = vmatprep.mubr.bf16.mxu0 %v744
      %3234 = vmatmul.mubr.bf16.gmra.mrb[0].mxu0 %v743
      %v3235 = vpop.f32.mrb[0].mxu0
      %v3236 = vadd.f32 0.0, %v3235
      %v3237 = vpop.f32.mrb[0].mxu0
      %v3238 = vpop.f32.mrb[0].mxu0
      %v3239 = vadd.f32 0.0, %v3238
      %v3240 = vpop.f32.mrb[0].mxu0
      %3241 = vmatprep.mubr.bf16.mxu0 %v748
      %3242 = vmatmul.mubr.bf16.gmra.mrb[0].mxu0 %v747
      %v3243 = vpop.f32.mrb[0].mxu0
      %v3244 = vadd.f32 0.0, %v3243
      %v3245 = vpop.f32.mrb[0].mxu0
      %v3246 = vpop.f32.mrb[0].mxu0
      %v3247 = vadd.f32 0.0, %v3246
      %v3248 = vpop.f32.mrb[0].mxu0
      %3249 = vmatprep.mubr.bf16.mxu0 %v752
      %3250 = vmatmul.mubr.bf16.gmra.mrb[0].mxu0 %v751
      %v3251 = vpop.f32.mrb[0].mxu0
      %v3252 = vadd.f32 0.0, %v3251
      %v3253 = vpop.f32.mrb[0].mxu0
      %v3254 = vpop.f32.mrb[0].mxu0
      %v3255 = vadd.f32 0.0, %v3254
      %v3256 = vpop.f32.mrb[0].mxu0
      %3257 = vmatprep.mubr.bf16.mxu0 %v756
      %3258 = vmatmul.mubr.bf16.gmra.mrb[0].mxu0 %v755
      %v3259 = vpop.f32.mrb[0].mxu0
      %v3260 = vadd.f32 0.0, %v3259
      %v3261 = vpop.f32.mrb[0].mxu0
      %v3262 = vpop.f32.mrb[0].mxu0
      %v3263 = vadd.f32 0.0, %v3262
      %v3264 = vpop.f32.mrb[0].mxu0
      %3265 = vmatprep.mubr.bf16.mxu0 %v760
      %3266 = vmatmul.mubr.bf16.gmra.mrb[0].mxu0 %v759
      %v3267 = vpop.f32.mrb[0].mxu0
      %v3268 = vadd.f32 0.0, %v3267
      %v3269 = vpop.f32.mrb[0].mxu0
      %v3270 = vpop.f32.mrb[0].mxu0
      %v3271 = vadd.f32 0.0, %v3270
      %v3272 = vpop.f32.mrb[0].mxu0
      %3273 = vmatprep.mubr.bf16.mxu0 %v764
      %3274 = vmatmul.mubr.bf16.gmra.mrb[0].mxu0 %v763
      %v3275 = vpop.f32.mrb[0].mxu0
      %v3276 = vadd.f32 0.0, %v3275
      %v3277 = vpop.f32.mrb[0].mxu0
      %v3278 = vpop.f32.mrb[0].mxu0
      %v3279 = vadd.f32 0.0, %v3278
      %v3280 = vpop.f32.mrb[0].mxu0
      %3281 = vmatprep.mubr.bf16.mxu0 %v768
      %3282 = vmatmul.mubr.bf16.gmra.mrb[0].mxu0 %v767
      %v3283 = vpop.f32.mrb[0].mxu0
      %v3284 = vadd.f32 0.0, %v3283
      %v3285 = vpop.f32.mrb[0].mxu0
      %v3286 = vpop.f32.mrb[0].mxu0
      %v3287 = vadd.f32 0.0, %v3286
      %v3288 = vpop.f32.mrb[0].mxu0
      %3289 = vmatprep.mubr.bf16.mxu0 %v772
      %3290 = vmatmul.mubr.bf16.gmra.mrb[0].mxu0 %v771
      %v3291 = vpop.f32.mrb[0].mxu0
      %v3292 = vadd.f32 0.0, %v3291
      %v3293 = vpop.f32.mrb[0].mxu0
      %v3294 = vpop.f32.mrb[0].mxu0
      %v3295 = vadd.f32 0.0, %v3294
      %v3296 = vpop.f32.mrb[0].mxu0
      %3297 = vmatprep.mubr.bf16.mxu0 %v776
      %3298 = vmatmul.mubr.bf16.gmra.mrb[0].mxu0 %v775
      %v3299 = vpop.f32.mrb[0].mxu0
      %v3300 = vadd.f32 0.0, %v3299
      %v3301 = vpop.f32.mrb[0].mxu0
      %v3302 = vpop.f32.mrb[0].mxu0
      %v3303 = vadd.f32 0.0, %v3302
      %v3304 = vpop.f32.mrb[0].mxu0
      %3305 = vmatprep.mubr.bf16.mxu0 %v780
      %3306 = vmatmul.mubr.bf16.gmra.mrb[0].mxu0 %v779
      %v3307 = vpop.f32.mrb[0].mxu0
      %v3308 = vadd.f32 0.0, %v3307
      %v3309 = vpop.f32.mrb[0].mxu0
      %v3310 = vpop.f32.mrb[0].mxu0
      %v3311 = vadd.f32 0.0, %v3310
      %v3312 = vpop.f32.mrb[0].mxu0
      %3313 = vmatprep.mubr.bf16.mxu0 %v784
      %3314 = vmatmul.mubr.bf16.gmra.mrb[0].mxu0 %v783
      %v3315 = vpop.f32.mrb[0].mxu0
      %v3316 = vadd.f32 0.0, %v3315
      %v3317 = vpop.f32.mrb[0].mxu0
      %v3318 = vpop.f32.mrb[0].mxu0
      %v3319 = vadd.f32 0.0, %v3318
      %v3320 = vpop.f32.mrb[0].mxu0
      %3321 = vdwg.mxu0
      %3322 = vmatprep.subr.bf16.mxu0 0
      %3323 = vmatpush1.bf16.msra.mxu0 %v1673
      %3324 = vmatprep.subr.bf16.mxu0 0
      %3325 = vmatpush1.bf16.msra.mxu0 %v1680
      %3326 = vmatprep.subr.bf16.mxu0 0
      %3327 = vmatpush1.bf16.msra.mxu0 %v1687
      %3328 = vmatprep.subr.bf16.mxu0 0
      %3329 = vmatpush1.bf16.msra.mxu0 %v1694
      %3330 = vmatprep.subr.bf16.mxu0 0
      %3331 = vmatpush1.bf16.msra.mxu0 %v1701
      %3332 = vmatprep.subr.bf16.mxu0 0
      %3333 = vmatpush1.bf16.msra.mxu0 %v1708
      %3334 = vmatprep.subr.bf16.mxu0 0
      %3335 = vmatpush1.bf16.msra.mxu0 %v1715
      %3336 = vmatprep.subr.bf16.mxu0 0
      %3337 = vmatpush1.bf16.msra.mxu0 %v1722
      %3338 = vmatprep.subr.bf16.mxu0 0
      %3339 = vmatpush1.bf16.msra.mxu0 %v1729
      %3340 = vmatprep.subr.bf16.mxu0 0
      %3341 = vmatpush1.bf16.msra.mxu0 %v1736
      %3342 = vmatprep.subr.bf16.mxu0 0
      %3343 = vmatpush1.bf16.msra.mxu0 %v1743
      %3344 = vmatprep.subr.bf16.mxu0 0
      %3345 = vmatpush1.bf16.msra.mxu0 %v1750
      %3346 = vmatprep.subr.bf16.mxu0 0
      %3347 = vmatpush1.bf16.msra.mxu0 %v1757
      %3348 = vmatprep.subr.bf16.mxu0 0
      %3349 = vmatpush1.bf16.msra.mxu0 %v1764
      %3350 = vmatprep.subr.bf16.mxu0 0
      %3351 = vmatpush1.bf16.msra.mxu0 %v1771
      %3352 = vmatprep.subr.bf16.mxu0 0
      %3353 = vmatpush1.bf16.msra.mxu0 %v1778
      %3354 = vmatprep.mubr.bf16.mxu0 %v726
      %3355 = vmatmul.mubr.bf16.gmra.mrb[0].mxu0 %v725
      %v3356 = vpop.f32.mrb[0].mxu0
      %v3357 = vadd.f32 %v3196, %v3356
      %v3358 = vpop.f32.mrb[0].mxu0
      %v3359 = vpop.f32.mrb[0].mxu0
      %v3360 = vadd.f32 %v3199, %v3359
      %v3361 = vpop.f32.mrb[0].mxu0
      %3362 = vmatprep.mubr.bf16.mxu0 %v730
      %3363 = vmatmul.mubr.bf16.gmra.mrb[0].mxu0 %v729
      %v3364 = vpop.f32.mrb[0].mxu0
      %v3365 = vadd.f32 %v3204, %v3364
      %v3366 = vpop.f32.mrb[0].mxu0
      %v3367 = vpop.f32.mrb[0].mxu0
      %v3368 = vadd.f32 %v3207, %v3367
      %v3369 = vpop.f32.mrb[0].mxu0
      %3370 = vmatprep.mubr.bf16.mxu0 %v734
      %3371 = vmatmul.mubr.bf16.gmra.mrb[0].mxu0 %v733
      %v3372 = vpop.f32.mrb[0].mxu0
      %v3373 = vadd.f32 %v3212, %v3372
      %v3374 = vpop.f32.mrb[0].mxu0
      %v3375 = vpop.f32.mrb[0].mxu0
      %v3376 = vadd.f32 %v3215, %v3375
      %v3377 = vpop.f32.mrb[0].mxu0
      %3378 = vmatprep.mubr.bf16.mxu0 %v738
      %3379 = vmatmul.mubr.bf16.gmra.mrb[0].mxu0 %v737
      %v3380 = vpop.f32.mrb[0].mxu0
      %v3381 = vadd.f32 %v3220, %v3380
      %v3382 = vpop.f32.mrb[0].mxu0
      %v3383 = vpop.f32.mrb[0].mxu0
      %v3384 = vadd.f32 %v3223, %v3383
      %v3385 = vpop.f32.mrb[0].mxu0
      %3386 = vmatprep.mubr.bf16.mxu0 %v742
      %3387 = vmatmul.mubr.bf16.gmra.mrb[0].mxu0 %v741
      %v3388 = vpop.f32.mrb[0].mxu0
      %v3389 = vadd.f32 %v3228, %v3388
      %v3390 = vpop.f32.mrb[0].mxu0
      %v3391 = vpop.f32.mrb[0].mxu0
      %v3392 = vadd.f32 %v3231, %v3391
      %v3393 = vpop.f32.mrb[0].mxu0
      %3394 = vmatprep.mubr.bf16.mxu0 %v746
      %3395 = vmatmul.mubr.bf16.gmra.mrb[0].mxu0 %v745
      %v3396 = vpop.f32.mrb[0].mxu0
      %v3397 = vadd.f32 %v3236, %v3396
      %v3398 = vpop.f32.mrb[0].mxu0
      %v3399 = vpop.f32.mrb[0].mxu0
      %v3400 = vadd.f32 %v3239, %v3399
      %v3401 = vpop.f32.mrb[0].mxu0
      %3402 = vmatprep.mubr.bf16.mxu0 %v750
      %3403 = vmatmul.mubr.bf16.gmra.mrb[0].mxu0 %v749
      %v3404 = vpop.f32.mrb[0].mxu0
      %v3405 = vadd.f32 %v3244, %v3404
      %v3406 = vpop.f32.mrb[0].mxu0
      %v3407 = vpop.f32.mrb[0].mxu0
      %v3408 = vadd.f32 %v3247, %v3407
      %v3409 = vpop.f32.mrb[0].mxu0
      %3410 = vmatprep.mubr.bf16.mxu0 %v754
      %3411 = vmatmul.mubr.bf16.gmra.mrb[0].mxu0 %v753
      %v3412 = vpop.f32.mrb[0].mxu0
      %v3413 = vadd.f32 %v3252, %v3412
      %v3414 = vpop.f32.mrb[0].mxu0
      %v3415 = vpop.f32.mrb[0].mxu0
      %v3416 = vadd.f32 %v3255, %v3415
      %v3417 = vpop.f32.mrb[0].mxu0
      %3418 = vmatprep.mubr.bf16.mxu0 %v758
      %3419 = vmatmul.mubr.bf16.gmra.mrb[0].mxu0 %v757
      %v3420 = vpop.f32.mrb[0].mxu0
      %v3421 = vadd.f32 %v3260, %v3420
      %v3422 = vpop.f32.mrb[0].mxu0
      %v3423 = vpop.f32.mrb[0].mxu0
      %v3424 = vadd.f32 %v3263, %v3423
      %v3425 = vpop.f32.mrb[0].mxu0
      %3426 = vmatprep.mubr.bf16.mxu0 %v762
      %3427 = vmatmul.mubr.bf16.gmra.mrb[0].mxu0 %v761
      %v3428 = vpop.f32.mrb[0].mxu0
      %v3429 = vadd.f32 %v3268, %v3428
      %v3430 = vpop.f32.mrb[0].mxu0
      %v3431 = vpop.f32.mrb[0].mxu0
      %v3432 = vadd.f32 %v3271, %v3431
      %v3433 = vpop.f32.mrb[0].mxu0
      %3434 = vmatprep.mubr.bf16.mxu0 %v766
      %3435 = vmatmul.mubr.bf16.gmra.mrb[0].mxu0 %v765
      %v3436 = vpop.f32.mrb[0].mxu0
      %v3437 = vadd.f32 %v3276, %v3436
      %v3438 = vpop.f32.mrb[0].mxu0
      %v3439 = vpop.f32.mrb[0].mxu0
      %v3440 = vadd.f32 %v3279, %v3439
      %v3441 = vpop.f32.mrb[0].mxu0
      %3442 = vmatprep.mubr.bf16.mxu0 %v770
      %3443 = vmatmul.mubr.bf16.gmra.mrb[0].mxu0 %v769
      %v3444 = vpop.f32.mrb[0].mxu0
      %v3445 = vadd.f32 %v3284, %v3444
      %v3446 = vpop.f32.mrb[0].mxu0
      %v3447 = vpop.f32.mrb[0].mxu0
      %v3448 = vadd.f32 %v3287, %v3447
      %v3449 = vpop.f32.mrb[0].mxu0
      %3450 = vmatprep.mubr.bf16.mxu0 %v774
      %3451 = vmatmul.mubr.bf16.gmra.mrb[0].mxu0 %v773
      %v3452 = vpop.f32.mrb[0].mxu0
      %v3453 = vadd.f32 %v3292, %v3452
      %v3454 = vpop.f32.mrb[0].mxu0
      %v3455 = vpop.f32.mrb[0].mxu0
      %v3456 = vadd.f32 %v3295, %v3455
      %v3457 = vpop.f32.mrb[0].mxu0
      %3458 = vmatprep.mubr.bf16.mxu0 %v778
      %3459 = vmatmul.mubr.bf16.gmra.mrb[0].mxu0 %v777
      %v3460 = vpop.f32.mrb[0].mxu0
      %v3461 = vadd.f32 %v3300, %v3460
      %v3462 = vpop.f32.mrb[0].mxu0
      %v3463 = vpop.f32.mrb[0].mxu0
      %v3464 = vadd.f32 %v3303, %v3463
      %v3465 = vpop.f32.mrb[0].mxu0
      %3466 = vmatprep.mubr.bf16.mxu0 %v782
      %3467 = vmatmul.mubr.bf16.gmra.mrb[0].mxu0 %v781
      %v3468 = vpop.f32.mrb[0].mxu0
      %v3469 = vadd.f32 %v3308, %v3468
      %v3470 = vpop.f32.mrb[0].mxu0
      %v3471 = vpop.f32.mrb[0].mxu0
      %v3472 = vadd.f32 %v3311, %v3471
      %v3473 = vpop.f32.mrb[0].mxu0
      %3474 = vmatprep.mubr.bf16.mxu0 %v786
      %3475 = vmatmul.mubr.bf16.gmra.mrb[0].mxu0 %v785
      %v3476 = vpop.f32.mrb[0].mxu0
      %v3477 = vadd.f32 %v3316, %v3476
      %v3478 = vpop.f32.mrb[0].mxu0
      %v3479 = vpop.f32.mrb[0].mxu0
      %v3480 = vadd.f32 %v3319, %v3479
      %v3481 = vpop.f32.mrb[0].mxu0
      %3482 = vdwg.mxu0
      %v3483 = vmax.f32 %v2231, %v2271
      %v3484 = vmax.f32 %v2233, %v2273
      %v3485 = vmax.f32 %v2617, %v2657
      %v3486 = vmax.f32 %v2619, %v2659
      %v3487 = vmax.f32 %v3003, %v3043
      %v3488 = vmax.f32 %v3005, %v3045
      %v3489 = vmax.f32 %v3357, %v3389
      %v3490 = vmax.f32 %v2235, %v2275
      %v3491 = vmax.f32 %v2237, %v2277
      %v3492 = vmax.f32 %v2621, %v2661
      %v3493 = vmax.f32 %v2623, %v2663
      %v3494 = vmax.f32 %v3007, %v3047
      %v3495 = vmax.f32 %v3009, %v3049
      %v3496 = vmax.f32 %v3360, %v3392
      %v3497 = vmax.f32 %v2241, %v2281
      %v3498 = vmax.f32 %v2243, %v2283
      %v3499 = vmax.f32 %v2627, %v2667
      %v3500 = vmax.f32 %v2629, %v2669
      %v3501 = vmax.f32 %v3013, %v3053
      %v3502 = vmax.f32 %v3015, %v3055
      %v3503 = vmax.f32 %v3365, %v3397
      %v3504 = vmax.f32 %v2245, %v2285
      %v3505 = vmax.f32 %v2247, %v2287
      %v3506 = vmax.f32 %v2631, %v2671
      %v3507 = vmax.f32 %v2633, %v2673
      %v3508 = vmax.f32 %v3017, %v3057
      %v3509 = vmax.f32 %v3019, %v3059
      %v3510 = vmax.f32 %v3368, %v3400
      %v3511 = vmax.f32 %v2251, %v2291
      %v3512 = vmax.f32 %v2253, %v2293
      %v3513 = vmax.f32 %v2637, %v2677
      %v3514 = vmax.f32 %v2639, %v2679
      %v3515 = vmax.f32 %v3023, %v3063
      %v3516 = vmax.f32 %v3025, %v3065
      %v3517 = vmax.f32 %v3373, %v3405
      %v3518 = vmax.f32 %v2255, %v2295
      %v3519 = vmax.f32 %v2257, %v2297
      %v3520 = vmax.f32 %v2641, %v2681
      %v3521 = vmax.f32 %v2643, %v2683
      %v3522 = vmax.f32 %v3027, %v3067
      %v3523 = vmax.f32 %v3029, %v3069
      %v3524 = vmax.f32 %v3376, %v3408
      %v3525 = vmax.f32 %v2261, %v2301
      %v3526 = vmax.f32 %v2263, %v2303
      %v3527 = vmax.f32 %v2647, %v2687
      %v3528 = vmax.f32 %v2649, %v2689
      %v3529 = vmax.f32 %v3033, %v3073
      %v3530 = vmax.f32 %v3035, %v3075
      %v3531 = vmax.f32 %v3381, %v3413
      %v3532 = vmax.f32 %v2265, %v2305
      %v3533 = vmax.f32 %v2267, %v2307
      %v3534 = vmax.f32 %v2651, %v2691
      %v3535 = vmax.f32 %v2653, %v2693
      %v3536 = vmax.f32 %v3037, %v3077
      %v3537 = vmax.f32 %v3039, %v3079
      %v3538 = vmax.f32 %v3384, %v3416
      %v3539 = vmax.f32 %v2311, %v2351
      %v3540 = vmax.f32 %v2313, %v2353
      %v3541 = vmax.f32 %v2697, %v2737
      %v3542 = vmax.f32 %v2699, %v2739
      %v3543 = vmax.f32 %v3083, %v3123
      %v3544 = vmax.f32 %v3085, %v3125
      %v3545 = vmax.f32 %v3421, %v3453
      %v3546 = vmax.f32 %v2315, %v2355
      %v3547 = vmax.f32 %v2317, %v2357
      %v3548 = vmax.f32 %v2701, %v2741
      %v3549 = vmax.f32 %v2703, %v2743
      %v3550 = vmax.f32 %v3087, %v3127
      %v3551 = vmax.f32 %v3089, %v3129
      %v3552 = vmax.f32 %v3424, %v3456
      %v3553 = vmax.f32 %v2321, %v2361
      %v3554 = vmax.f32 %v2323, %v2363
      %v3555 = vmax.f32 %v2707, %v2747
      %v3556 = vmax.f32 %v2709, %v2749
      %v3557 = vmax.f32 %v3093, %v3133
      %v3558 = vmax.f32 %v3095, %v3135
      %v3559 = vmax.f32 %v3429, %v3461
      %v3560 = vmax.f32 %v2325, %v2365
      %v3561 = vmax.f32 %v2327, %v2367
      %v3562 = vmax.f32 %v2711, %v2751
      %v3563 = vmax.f32 %v2713, %v2753
      %v3564 = vmax.f32 %v3097, %v3137
      %v3565 = vmax.f32 %v3099, %v3139
      %v3566 = vmax.f32 %v3432, %v3464
      %v3567 = vmax.f32 %v2331, %v2371
      %v3568 = vmax.f32 %v2333, %v2373
      %v3569 = vmax.f32 %v2717, %v2757
      %v3570 = vmax.f32 %v2719, %v2759
      %v3571 = vmax.f32 %v3103, %v3143
      %v3572 = vmax.f32 %v3105, %v3145
      %v3573 = vmax.f32 %v3437, %v3469
      %v3574 = vmax.f32 %v2335, %v2375
      %v3575 = vmax.f32 %v2337, %v2377
      %v3576 = vmax.f32 %v2721, %v2761
      %v3577 = vmax.f32 %v2723, %v2763
      %v3578 = vmax.f32 %v3107, %v3147
      %v3579 = vmax.f32 %v3109, %v3149
      %v3580 = vmax.f32 %v3440, %v3472
      %v3581 = vmax.f32 %v2341, %v2381
      %v3582 = vmax.f32 %v2343, %v2383
      %v3583 = vmax.f32 %v2727, %v2767
      %v3584 = vmax.f32 %v2729, %v2769
      %v3585 = vmax.f32 %v3113, %v3153
      %v3586 = vmax.f32 %v3115, %v3155
      %v3587 = vmax.f32 %v3445, %v3477
      %v3588 = vmax.f32 %v2345, %v2385
      %v3589 = vmax.f32 %v2347, %v2387
      %v3590 = vmax.f32 %v2731, %v2771
      %v3591 = vmax.f32 %v2733, %v2773
      %v3592 = vmax.f32 %v3117, %v3157
      %v3593 = vmax.f32 %v3119, %v3159
      %v3594 = vmax.f32 %v3448, %v3480
      %v3595 = vmax.f32 %v3483, %v3539
      %v3596 = vmax.f32 %v3484, %v3540
      %v3597 = vmax.f32 %v3485, %v3541
      %v3598 = vmax.f32 %v3486, %v3542
      %v3599 = vmax.f32 %v3487, %v3543
      %v3600 = vmax.f32 %v3488, %v3544
      %v3601 = vmax.f32 %v3489, %v3545
      %v3602 = vmax.f32 %v3490, %v3546
      %v3603 = vmax.f32 %v3491, %v3547
      %v3604 = vmax.f32 %v3492, %v3548
      %v3605 = vmax.f32 %v3493, %v3549
      %v3606 = vmax.f32 %v3494, %v3550
      %v3607 = vmax.f32 %v3495, %v3551
      %v3608 = vmax.f32 %v3496, %v3552
      %v3609 = vmax.f32 %v3497, %v3553
      %v3610 = vmax.f32 %v3498, %v3554
      %v3611 = vmax.f32 %v3499, %v3555
      %v3612 = vmax.f32 %v3500, %v3556
      %v3613 = vmax.f32 %v3501, %v3557
      %v3614 = vmax.f32 %v3502, %v3558
      %v3615 = vmax.f32 %v3503, %v3559
      %v3616 = vmax.f32 %v3504, %v3560
      %v3617 = vmax.f32 %v3505, %v3561
      %v3618 = vmax.f32 %v3506, %v3562
      %v3619 = vmax.f32 %v3507, %v3563
      %v3620 = vmax.f32 %v3508, %v3564
      %v3621 = vmax.f32 %v3509, %v3565
      %v3622 = vmax.f32 %v3510, %v3566
      %v3623 = vmax.f32 %v3511, %v3567
      %v3624 = vmax.f32 %v3512, %v3568
      %v3625 = vmax.f32 %v3513, %v3569
      %v3626 = vmax.f32 %v3514, %v3570
      %v3627 = vmax.f32 %v3515, %v3571
      %v3628 = vmax.f32 %v3516, %v3572
      %v3629 = vmax.f32 %v3517, %v3573
      %v3630 = vmax.f32 %v3518, %v3574
      %v3631 = vmax.f32 %v3519, %v3575
      %v3632 = vmax.f32 %v3520, %v3576
      %v3633 = vmax.f32 %v3521, %v3577
      %v3634 = vmax.f32 %v3522, %v3578
      %v3635 = vmax.f32 %v3523, %v3579
      %v3636 = vmax.f32 %v3524, %v3580
      %v3637 = vmax.f32 %v3525, %v3581
      %v3638 = vmax.f32 %v3526, %v3582
      %v3639 = vmax.f32 %v3527, %v3583
      %v3640 = vmax.f32 %v3528, %v3584
      %v3641 = vmax.f32 %v3529, %v3585
      %v3642 = vmax.f32 %v3530, %v3586
      %v3643 = vmax.f32 %v3531, %v3587
      %v3644 = vmax.f32 %v3532, %v3588
      %v3645 = vmax.f32 %v3533, %v3589
      %v3646 = vmax.f32 %v3534, %v3590
      %v3647 = vmax.f32 %v3535, %v3591
      %v3648 = vmax.f32 %v3536, %v3592
      %v3649 = vmax.f32 %v3537, %v3593
      %v3650 = vmax.f32 %v3538, %v3594
      %v3651 = vld [vmem:[%s2] sm:$0xff]
      %v3652 = vld [vmem:[%s2 + $0x8] sm:$0xff]
      %v3653 = vld [vmem:[%s2 + $0x10] sm:$0xff]
      %v3654 = vld [vmem:[%s2 + $0x18] sm:$0xff]
      %v3655 = vld [vmem:[%s2 + $0x20] sm:$0xff]
      %v3656 = vld [vmem:[%s2 + $0x28] sm:$0xff]
      %v3657 = vld [vmem:[%s2 + $0x30] sm:$0xff]
      %v3658 = vld [vmem:[%s2 + $0x38] sm:$0xff]
      %3660 = vset.pattern.permute.xlu0 0
      %3661 = vperm.xlu0 %3660, %v3651
      %v3662 = vpop.permute.xlu0 %3661
      %3665 = vset.pattern.permute.xlu0 0
      %3666 = vperm.xlu0 %3665, %v3652
      %v3667 = vpop.permute.xlu0 %3666
      %3670 = vset.pattern.permute.xlu0 0
      %3671 = vperm.xlu0 %3670, %v3653
      %v3672 = vpop.permute.xlu0 %3671
      %3675 = vset.pattern.permute.xlu0 0
      %3676 = vperm.xlu0 %3675, %v3654
      %v3677 = vpop.permute.xlu0 %3676
      %3680 = vset.pattern.permute.xlu0 0
      %3681 = vperm.xlu0 %3680, %v3655
      %v3682 = vpop.permute.xlu0 %3681
      %3685 = vset.pattern.permute.xlu0 0
      %3686 = vperm.xlu0 %3685, %v3656
      %v3687 = vpop.permute.xlu0 %3686
      %3690 = vset.pattern.permute.xlu0 0
      %3691 = vperm.xlu0 %3690, %v3657
      %v3692 = vpop.permute.xlu0 %3691
      %3695 = vset.pattern.permute.xlu0 0
      %3696 = vperm.xlu0 %3695, %v3658
      %v3697 = vpop.permute.xlu0 %3696
      %v3699 = vadd.f32 %v3595, %v3662
      %v3700 = vadd.f32 %v3596, %v3662
      %v3701 = vadd.f32 %v3597, %v3662
      %v3702 = vadd.f32 %v3598, %v3662
      %v3703 = vadd.f32 %v3599, %v3662
      %v3704 = vadd.f32 %v3600, %v3662
      %v3705 = vadd.f32 %v3601, %v3662
      %v3706 = vadd.f32 %v3602, %v3667
      %v3707 = vadd.f32 %v3603, %v3667
      %v3708 = vadd.f32 %v3604, %v3667
      %v3709 = vadd.f32 %v3605, %v3667
      %v3710 = vadd.f32 %v3606, %v3667
      %v3711 = vadd.f32 %v3607, %v3667
      %v3712 = vadd.f32 %v3608, %v3667
      %v3713 = vadd.f32 %v3609, %v3672
      %v3714 = vadd.f32 %v3610, %v3672
      %v3715 = vadd.f32 %v3611, %v3672
      %v3716 = vadd.f32 %v3612, %v3672
      %v3717 = vadd.f32 %v3613, %v3672
      %v3718 = vadd.f32 %v3614, %v3672
      %v3719 = vadd.f32 %v3615, %v3672
      %v3720 = vadd.f32 %v3616, %v3677
      %v3721 = vadd.f32 %v3617, %v3677
      %v3722 = vadd.f32 %v3618, %v3677
      %v3723 = vadd.f32 %v3619, %v3677
      %v3724 = vadd.f32 %v3620, %v3677
      %v3725 = vadd.f32 %v3621, %v3677
      %v3726 = vadd.f32 %v3622, %v3677
      %v3727 = vadd.f32 %v3623, %v3682
      %v3728 = vadd.f32 %v3624, %v3682
      %v3729 = vadd.f32 %v3625, %v3682
      %v3730 = vadd.f32 %v3626, %v3682
      %v3731 = vadd.f32 %v3627, %v3682
      %v3732 = vadd.f32 %v3628, %v3682
      %v3733 = vadd.f32 %v3629, %v3682
      %v3734 = vadd.f32 %v3630, %v3687
      %v3735 = vadd.f32 %v3631, %v3687
      %v3736 = vadd.f32 %v3632, %v3687
      %v3737 = vadd.f32 %v3633, %v3687
      %v3738 = vadd.f32 %v3634, %v3687
      %v3739 = vadd.f32 %v3635, %v3687
      %v3740 = vadd.f32 %v3636, %v3687
      %v3741 = vadd.f32 %v3637, %v3692
      %v3742 = vadd.f32 %v3638, %v3692
      %v3743 = vadd.f32 %v3639, %v3692
      %v3744 = vadd.f32 %v3640, %v3692
      %v3745 = vadd.f32 %v3641, %v3692
      %v3746 = vadd.f32 %v3642, %v3692
      %v3747 = vadd.f32 %v3643, %v3692
      %v3748 = vadd.f32 %v3644, %v3697
      %v3749 = vadd.f32 %v3645, %v3697
      %v3750 = vadd.f32 %v3646, %v3697
      %v3751 = vadd.f32 %v3647, %v3697
      %v3752 = vadd.f32 %v3648, %v3697
      %v3753 = vadd.f32 %v3649, %v3697
      %v3754 = vadd.f32 %v3650, %v3697
      %v3755 = vmax.f32 %v3699, 0.0
      %v3756 = vmax.f32 %v3700, 0.0
      %v3757 = vmax.f32 %v3701, 0.0
      %v3758 = vmax.f32 %v3702, 0.0
      %v3759 = vmax.f32 %v3703, 0.0
      %v3760 = vmax.f32 %v3704, 0.0
      %v3761 = vmax.f32 %v3705, 0.0
      %v3762 = vmax.f32 %v3706, 0.0
      %v3763 = vmax.f32 %v3707, 0.0
      %v3764 = vmax.f32 %v3708, 0.0
      %v3765 = vmax.f32 %v3709, 0.0
      %v3766 = vmax.f32 %v3710, 0.0
      %v3767 = vmax.f32 %v3711, 0.0
      %v3768 = vmax.f32 %v3712, 0.0
      %v3769 = vmax.f32 %v3713, 0.0
      %v3770 = vmax.f32 %v3714, 0.0
      %v3771 = vmax.f32 %v3715, 0.0
      %v3772 = vmax.f32 %v3716, 0.0
      %v3773 = vmax.f32 %v3717, 0.0
      %v3774 = vmax.f32 %v3718, 0.0
      %v3775 = vmax.f32 %v3719, 0.0
      %v3776 = vmax.f32 %v3720, 0.0
      %v3777 = vmax.f32 %v3721, 0.0
      %v3778 = vmax.f32 %v3722, 0.0
      %v3779 = vmax.f32 %v3723, 0.0
      %v3780 = vmax.f32 %v3724, 0.0
      %v3781 = vmax.f32 %v3725, 0.0
      %v3782 = vmax.f32 %v3726, 0.0
      %v3783 = vmax.f32 %v3727, 0.0
      %v3784 = vmax.f32 %v3728, 0.0
      %v3785 = vmax.f32 %v3729, 0.0
      %v3786 = vmax.f32 %v3730, 0.0
      %v3787 = vmax.f32 %v3731, 0.0
      %v3788 = vmax.f32 %v3732, 0.0
      %v3789 = vmax.f32 %v3733, 0.0
      %v3790 = vmax.f32 %v3734, 0.0
      %v3791 = vmax.f32 %v3735, 0.0
      %v3792 = vmax.f32 %v3736, 0.0
      %v3793 = vmax.f32 %v3737, 0.0
      %v3794 = vmax.f32 %v3738, 0.0
      %v3795 = vmax.f32 %v3739, 0.0
      %v3796 = vmax.f32 %v3740, 0.0
      %v3797 = vmax.f32 %v3741, 0.0
      %v3798 = vmax.f32 %v3742, 0.0
      %v3799 = vmax.f32 %v3743, 0.0
      %v3800 = vmax.f32 %v3744, 0.0
      %v3801 = vmax.f32 %v3745, 0.0
      %v3802 = vmax.f32 %v3746, 0.0
      %v3803 = vmax.f32 %v3747, 0.0
      %v3804 = vmax.f32 %v3748, 0.0
      %v3805 = vmax.f32 %v3749, 0.0
      %v3806 = vmax.f32 %v3750, 0.0
      %v3807 = vmax.f32 %v3751, 0.0
      %v3808 = vmax.f32 %v3752, 0.0
      %v3809 = vmax.f32 %v3753, 0.0
      %v3810 = vmax.f32 %v3754, 0.0
      %v3811 = vpack.c.bf16 %v3762, %v3755
      %v3812 = vpack.c.bf16 %v3763, %v3756
      %v3813 = vpack.c.bf16 %v3764, %v3757
      %v3814 = vpack.c.bf16 %v3765, %v3758
      %v3815 = vpack.c.bf16 %v3766, %v3759
      %v3816 = vpack.c.bf16 %v3767, %v3760
      %v3817 = vpack.c.bf16 %v3768, %v3761
      %v3818 = vpack.c.bf16 %v3776, %v3769
      %v3819 = vpack.c.bf16 %v3777, %v3770
      %v3820 = vpack.c.bf16 %v3778, %v3771
      %v3821 = vpack.c.bf16 %v3779, %v3772
      %v3822 = vpack.c.bf16 %v3780, %v3773
      %v3823 = vpack.c.bf16 %v3781, %v3774
      %v3824 = vpack.c.bf16 %v3782, %v3775
      %v3825 = vpack.c.bf16 %v3790, %v3783
      %v3826 = vpack.c.bf16 %v3791, %v3784
      %v3827 = vpack.c.bf16 %v3792, %v3785
      %v3828 = vpack.c.bf16 %v3793, %v3786
      %v3829 = vpack.c.bf16 %v3794, %v3787
      %v3830 = vpack.c.bf16 %v3795, %v3788
      %v3831 = vpack.c.bf16 %v3796, %v3789
      %v3832 = vpack.c.bf16 %v3804, %v3797
      %v3833 = vpack.c.bf16 %v3805, %v3798
      %v3834 = vpack.c.bf16 %v3806, %v3799
      %v3835 = vpack.c.bf16 %v3807, %v3800
      %v3836 = vpack.c.bf16 %v3808, %v3801
      %v3837 = vpack.c.bf16 %v3809, %v3802
      %v3838 = vpack.c.bf16 %v3810, %v3803
      %v3867 = vunpack.c.l.b16 %v3811
      %v3868 = vunpack.c.l.b16 %v3812
      %v3869 = vunpack.c.l.b16 %v3813
      %v3870 = vunpack.c.l.b16 %v3814
      %v3871 = vunpack.c.l.b16 %v3815
      %v3872 = vunpack.c.l.b16 %v3816
      %v3873 = vunpack.c.l.b16 %v3817
      %v3874 = vunpack.c.h.b16 %v3811
      %v3875 = vunpack.c.h.b16 %v3812
      %v3876 = vunpack.c.h.b16 %v3813
      %v3877 = vunpack.c.h.b16 %v3814
      %v3878 = vunpack.c.h.b16 %v3815
      %v3879 = vunpack.c.h.b16 %v3816
      %v3880 = vunpack.c.h.b16 %v3817
      %v3881 = vunpack.c.l.b16 %v3818
      %v3882 = vunpack.c.l.b16 %v3819
      %v3883 = vunpack.c.l.b16 %v3820
      %v3884 = vunpack.c.l.b16 %v3821
      %v3885 = vunpack.c.l.b16 %v3822
      %v3886 = vunpack.c.l.b16 %v3823
      %v3887 = vunpack.c.l.b16 %v3824
      %v3888 = vunpack.c.h.b16 %v3818
      %v3889 = vunpack.c.h.b16 %v3819
      %v3890 = vunpack.c.h.b16 %v3820
      %v3891 = vunpack.c.h.b16 %v3821
      %v3892 = vunpack.c.h.b16 %v3822
      %v3893 = vunpack.c.h.b16 %v3823
      %v3894 = vunpack.c.h.b16 %v3824
      %v3895 = vunpack.c.l.b16 %v3825
      %v3896 = vunpack.c.l.b16 %v3826
      %v3897 = vunpack.c.l.b16 %v3827
      %v3898 = vunpack.c.l.b16 %v3828
      %v3899 = vunpack.c.l.b16 %v3829
      %v3900 = vunpack.c.l.b16 %v3830
      %v3901 = vunpack.c.l.b16 %v3831
      %v3902 = vunpack.c.h.b16 %v3825
      %v3903 = vunpack.c.h.b16 %v3826
      %v3904 = vunpack.c.h.b16 %v3827
      %v3905 = vunpack.c.h.b16 %v3828
      %v3906 = vunpack.c.h.b16 %v3829
      %v3907 = vunpack.c.h.b16 %v3830
      %v3908 = vunpack.c.h.b16 %v3831
      %v3909 = vunpack.c.l.b16 %v3832
      %v3910 = vunpack.c.l.b16 %v3833
      %v3911 = vunpack.c.l.b16 %v3834
      %v3912 = vunpack.c.l.b16 %v3835
      %v3913 = vunpack.c.l.b16 %v3836
      %v3914 = vunpack.c.l.b16 %v3837
      %v3915 = vunpack.c.l.b16 %v3838
      %v3916 = vunpack.c.h.b16 %v3832
      %v3917 = vunpack.c.h.b16 %v3833
      %v3918 = vunpack.c.h.b16 %v3834
      %v3919 = vunpack.c.h.b16 %v3835
      %v3920 = vunpack.c.h.b16 %v3836
      %v3921 = vunpack.c.h.b16 %v3837
      %v3922 = vunpack.c.h.b16 %v3838
      %v3923 = vpack.c.b16 %v3868, %v3867
      %v3924 = vpack.c.b16 %v3870, %v3869
      %v3925 = vpack.c.b16 %v3872, %v3871
      %v3926 = vpack.c.b16 %v3873, %v3873
      %v3927 = vpack.c.b16 %v3875, %v3874
      %v3928 = vpack.c.b16 %v3877, %v3876
      %v3929 = vpack.c.b16 %v3879, %v3878
      %v3930 = vpack.c.b16 %v3880, %v3880
      %v3931 = vpack.c.b16 %v3882, %v3881
      %v3932 = vpack.c.b16 %v3884, %v3883
      %v3933 = vpack.c.b16 %v3886, %v3885
      %v3934 = vpack.c.b16 %v3887, %v3887
      %v3935 = vpack.c.b16 %v3889, %v3888
      %v3936 = vpack.c.b16 %v3891, %v3890
      %v3937 = vpack.c.b16 %v3893, %v3892
      %v3938 = vpack.c.b16 %v3894, %v3894
      %v3939 = vpack.c.b16 %v3896, %v3895
      %v3940 = vpack.c.b16 %v3898, %v3897
      %v3941 = vpack.c.b16 %v3900, %v3899
      %v3942 = vpack.c.b16 %v3901, %v3901
      %v3943 = vpack.c.b16 %v3903, %v3902
      %v3944 = vpack.c.b16 %v3905, %v3904
      %v3945 = vpack.c.b16 %v3907, %v3906
      %v3946 = vpack.c.b16 %v3908, %v3908
      %v3947 = vpack.c.b16 %v3910, %v3909
      %v3948 = vpack.c.b16 %v3912, %v3911
      %v3949 = vpack.c.b16 %v3914, %v3913
      %v3950 = vpack.c.b16 %v3915, %v3915
      %v3951 = vpack.c.b16 %v3917, %v3916
      %v3952 = vpack.c.b16 %v3919, %v3918
      %v3953 = vpack.c.b16 %v3921, %v3920
      %v3954 = vpack.c.b16 %v3922, %v3922
      %3987 = vst [vmem:[%s208] sm:$0xff] %v3923
      %3988 = vst [vmem:[%s208 + $0x8] sm:$0xff] %v3924
      %3989 = vst [vmem:[%s208 + $0x10] sm:$0xff] %v3925
      %vm3990 = vcmask 125952
      %3991 = vst.msk [vmem:[%s208 + $0x18] sm:$0xf] %vm3990, %v3926
      %3992 = vst [vmem:[%s208 + $0x1c] sm:$0xff] %v3927
      %3993 = vst [vmem:[%s208 + $0x24] sm:$0xff] %v3928
      %3994 = vst [vmem:[%s208 + $0x2c] sm:$0xff] %v3929
      %3995 = vst.msk [vmem:[%s208 + $0x34] sm:$0xf] %vm3990, %v3930
      %3996 = vst [vmem:[%s208 + $0x38] sm:$0xff] %v3931
      %3997 = vst [vmem:[%s208 + $0x40] sm:$0xff] %v3932
      %3998 = vst [vmem:[%s208 + $0x48] sm:$0xff] %v3933
      %3999 = vst.msk [vmem:[%s208 + $0x50] sm:$0xf] %vm3990, %v3934
      %4000 = vst [vmem:[%s208 + $0x54] sm:$0xff] %v3935
      %4001 = vst [vmem:[%s208 + $0x5c] sm:$0xff] %v3936
      %4002 = vst [vmem:[%s208 + $0x64] sm:$0xff] %v3937
      %4003 = vst.msk [vmem:[%s208 + $0x6c] sm:$0xf] %vm3990, %v3938
      %4004 = vst [vmem:[%s208 + $0x70] sm:$0xff] %v3939
      %4005 = vst [vmem:[%s208 + $0x78] sm:$0xff] %v3940
      %4006 = vst [vmem:[%s208 + $0x80] sm:$0xff] %v3941
      %4007 = vst.msk [vmem:[%s208 + $0x88] sm:$0xf] %vm3990, %v3942
      %4008 = vst [vmem:[%s208 + $0x8c] sm:$0xff] %v3943
      %4009 = vst [vmem:[%s208 + $0x94] sm:$0xff] %v3944
      %4010 = vst [vmem:[%s208 + $0x9c] sm:$0xff] %v3945
      %4011 = vst.msk [vmem:[%s208 + $0xa4] sm:$0xf] %vm3990, %v3946
      %4012 = vst [vmem:[%s208 + $0xa8] sm:$0xff] %v3947
      %4013 = vst [vmem:[%s208 + $0xb0] sm:$0xff] %v3948
      %4014 = vst [vmem:[%s208 + $0xb8] sm:$0xff] %v3949
      %4015 = vst.msk [vmem:[%s208 + $0xc0] sm:$0xf] %vm3990, %v3950
      %4016 = vst [vmem:[%s208 + $0xc4] sm:$0xff] %v3951
      %4017 = vst [vmem:[%s208 + $0xcc] sm:$0xff] %v3952
      %4018 = vst [vmem:[%s208 + $0xd4] sm:$0xff] %v3953
      %4019 = vst.msk [vmem:[%s208 + $0xdc] sm:$0xf] %vm3990, %v3954
      %s4020 = smul.u32 7, %s19
      %p4021 = scmp.lt.s32.totalorder %s18, 1
      %s4022 = scalar_select %p4021, %s18, 1
      %p4023 = scmp.lt.s32.totalorder %s4020, 6
      %s4024 = scalar_select %p4023, %s4020, 6
      %s4025 = smul.addr %s4022, 56
      %s4026 = sadd.s32 %s4024, %s4025
      %s4027 = smul.addr %s4026, 4
      %s4028 = scalar_lea.vmem %s3, %s4027
      // Predicated region
      $region33: #{simple_cnn_forward.6} parent=31 // pred_check
        %p4029 = pneg %p116
      $region34: #{simple_cnn_forward.6} parent=31 // pred_check_branch
        %4031 = sbr.rel (%p4029) target = $region36
      $region35: #{simple_cnn_forward.6} parent=31 // pred_region
        %s4032 = smul.u32 7, %s19
      $region36: #{simple_cnn_forward.6} parent=31 // pred_fallthru
        _
    $region32: #{simple_cnn_forward.6} parent=5 // pred_fallthru
      _
    %p4033 = scmp.le.s32.totalorder 2, %s9
    // Predicated region
    $region37: #{simple_cnn_forward.6} parent=5 // pred_check
      %p4034 = pneg %p4033
    $region38: #{simple_cnn_forward.6} parent=5 // pred_check_branch
      %4036 = sbr.rel (%p4034) target = $region40
    $region39: #{simple_cnn_forward.6} parent=5 // pred_region
      %s4037 = ssub.s32 %s9, 2
      // Predicated region
      $region41: #{simple_cnn_forward.6} parent=39 // pred_check
        %p4038 = pneg %p122
      $region42: #{simple_cnn_forward.6} parent=39 // pred_check_branch
        %4040 = sbr.rel (%p4038) target = $region44
      $region43: #{simple_cnn_forward.6} parent=39 // pred_region
        %s4041 = smul.u32 7, %s21
        %p4042 = scmp.lt.s32.totalorder %s20, 1
        %s4043 = scalar_select %p4042, %s20, 1
        %p4044 = scmp.lt.s32.totalorder %s4041, 6
        %s4045 = scalar_select %p4044, %s4041, 6
        %s4046 = smul.addr %s4043, 56
        %s4047 = sadd.s32 %s4045, %s4046
        %s4048 = smul.addr %s4047, 4
        %s4049 = scalar_lea.vmem %s3, %s4048
      $region44: #{simple_cnn_forward.6} parent=39 // pred_fallthru
        _
    $region40: #{simple_cnn_forward.6} parent=5 // pred_fallthru
      _
  $region6: #{simple_cnn_forward.6} parent=0 // loop_footer
    %s13 = sadd.s32 1, %s9
  $region7: #{simple_cnn_forward.6} parent=0 // loop_footer_branch
    %8 = sbr.rel target = $region3
  $region8: #{simple_cnn_forward.6} parent=0 // loop_exit
    _

// kernel: simple_cnn_forward.7
$region0: #{simple_cnn_forward.7}
  #allocation0 [shape = 'u32[]', space=smem, size = 0x4, offset = 0x4, fixed_abs, tag = 'smem constant byte address 0x4 - core index']
  #allocation1 [shape = 'u32[144,128]{1,0:T(1,128)}', space=vmem, size = 0x12000, scoped, tag = 'internal scratch']
  #allocation2 [shape = 'f32[2,128]{1,0:T(2,128)}', space=vmem, size = 0x400, scoped, tag = 'scratch operand']
  %s0 = inlined_call_operand.vmem [shape: bf16[2,50176], index: 0, kind: input, shape index: {}]
  %s1 = inlined_call_operand.vmem [shape: bf16[50176,128], index: 1, kind: input, shape index: {}]
  %s2 = inlined_call_operand.vmem [shape: f32[1,128], index: 2, kind: input, shape index: {}]
  %s3 = inlined_call_operand.vmem [shape: f32[128,2], index: 3, kind: input, shape index: {}]
  %s4 = inlined_call_operand.vmem [shape: f32[1,2], index: 4, kind: input, shape index: {}]
  %s5 = inlined_call_operand.hbm [shape: f32[2,2], index: 5, kind: output, shape index: {}]
  %s6 = sld [smem:[#allocation0]]
  $region61: #{simple_cnn_forward.7} parent=0
    _
  %s8 = ssub.s32 1, %s6
  %s9 = scalar_select 0, %s8, %s6
  $region1: #{simple_cnn_forward.7} parent=0
    #allocation3 [shape = 'u8[1024]{0}', space=vmem, size = 0x400, scoped, tag = 'output window, operand 0, single buffered']
    #allocation4 [shape = 's32[2]{0}', space=sflag, size = 0x8, scoped, tag = 'scoped memory for simple_cnn_forward.7']
    %10 = vsyncpa [#allocation4], 0
    loop: start=0, step=1, limit=30
    $region2: #{simple_cnn_forward.7} parent=1 // loop_pre_header
      _
    $region3: #{simple_cnn_forward.7} parent=1 // loop_header
      %s12 = sphi 0, %s16
      %p13 = scmp.ge.s32.totalorder %s12, 30
      %s22 = sphi 0, %s24
      %s25 = sphi 0, %s22
      %s26 = sphi 0, %s25
      %s42 = sphi 0, %s26
      %s48 = sphi 0, %s50
      %s51 = sphi 0, %s48
      %s52 = sphi 0, %s51
      %s68 = sphi 0, %s52
      %s72 = sphi 0, %s72
      %s74 = sphi 0, %s72
      %s75 = sphi 0, %s74
      %s89 = sphi 0, %s75
      %s93 = sphi 0, %s93
      %s95 = sphi 0, %s93
      %s96 = sphi 0, %s95
      %s110 = sphi 0, %s96
      %s114 = sphi 0, %s114
      %s116 = sphi 0, %s114
      %s117 = sphi 0, %s116
      %s131 = sphi 0, %s117
      %s135 = sphi 0, %s135
      %s137 = sphi 0, %s135
      %s138 = sphi 0, %s137
      %s152 = sphi 0, %s138
    $region4: #{simple_cnn_forward.7} parent=1 // loop_header_branch
      %15 = sbr.rel (%p13) target = $region8
    $region5: #{simple_cnn_forward.7} parent=1 // loop_body
      %s17 = ssub.s32 %s12, 1
      %s18 = ssub.s32 %s12, 2
      %s19 = sadd.s32 %s12, 1
      %s20 = ssub.s32 %s12, %s19
      %p21 = scmp.eq.s32.totalorder %s20, 0
      %s23 = sadd.s32 %s22, 1
      %s24 = scalar_select %p21, %s22, %s23
      %p27 = pneg %p21
      %p28 = scmp.eq.s32.totalorder %s12, 27
      %p29 = por %p27, %p28
      %p30 = scmp.ne.s32.totalorder %s22, %s25
      %p31 = scmp.eq.s32.totalorder %s12, 0
      %p32 = por %p30, %p31
      %p33 = scmp.ne.s32.totalorder %s22, %s25
      %p34 = scmp.eq.s32.totalorder %s17, 27
      %p35 = por %p33, %p34
      %p36 = scmp.ne.s32.totalorder %s25, %s26
      %p37 = scmp.eq.s32.totalorder %s17, 0
      %p38 = por %p36, %p37
      %p39 = scmp.ne.s32.totalorder %s25, %s26
      %p40 = scmp.eq.s32.totalorder %s18, 27
      %p41 = por %p39, %p40
      %p43 = scmp.ne.s32.totalorder %s26, %s42
      %p44 = scmp.eq.s32.totalorder %s18, 0
      %p45 = por %p43, %p44
      %s46 = ssub.s32 %s12, %s19
      %p47 = scmp.eq.s32.totalorder %s46, 0
      %s49 = sadd.s32 %s48, 1
      %s50 = scalar_select %p47, %s48, %s49
      %p53 = pneg %p47
      %p54 = scmp.eq.s32.totalorder %s12, 27
      %p55 = por %p53, %p54
      %p56 = scmp.ne.s32.totalorder %s48, %s51
      %p57 = scmp.eq.s32.totalorder %s12, 0
      %p58 = por %p56, %p57
      %p59 = scmp.ne.s32.totalorder %s48, %s51
      %p60 = scmp.eq.s32.totalorder %s17, 27
      %p61 = por %p59, %p60
      %p62 = scmp.ne.s32.totalorder %s51, %s52
      %p63 = scmp.eq.s32.totalorder %s17, 0
      %p64 = por %p62, %p63
      %p65 = scmp.ne.s32.totalorder %s51, %s52
      %p66 = scmp.eq.s32.totalorder %s18, 27
      %p67 = por %p65, %p66
      %p69 = scmp.ne.s32.totalorder %s52, %s68
      %p70 = scmp.eq.s32.totalorder %s18, 0
      %p71 = por %p69, %p70
      %s73 = sadd.s32 %s72, 1
      %p76 = scmp.eq.s32.totalorder %s12, 27
      %p77 = scmp.ne.s32.totalorder %s72, %s74
      %p78 = scmp.eq.s32.totalorder %s12, 0
      %p79 = por %p77, %p78
      %p80 = scmp.ne.s32.totalorder %s72, %s74
      %p81 = scmp.eq.s32.totalorder %s17, 27
      %p82 = por %p80, %p81
      %p83 = scmp.ne.s32.totalorder %s74, %s75
      %p84 = scmp.eq.s32.totalorder %s17, 0
      %p85 = por %p83, %p84
      %p86 = scmp.ne.s32.totalorder %s74, %s75
      %p87 = scmp.eq.s32.totalorder %s18, 27
      %p88 = por %p86, %p87
      %p90 = scmp.ne.s32.totalorder %s75, %s89
      %p91 = scmp.eq.s32.totalorder %s18, 0
      %p92 = por %p90, %p91
      %s94 = sadd.s32 %s93, 1
      %p97 = scmp.eq.s32.totalorder %s12, 27
      %p98 = scmp.ne.s32.totalorder %s93, %s95
      %p99 = scmp.eq.s32.totalorder %s12, 0
      %p100 = por %p98, %p99
      %p101 = scmp.ne.s32.totalorder %s93, %s95
      %p102 = scmp.eq.s32.totalorder %s17, 27
      %p103 = por %p101, %p102
      %p104 = scmp.ne.s32.totalorder %s95, %s96
      %p105 = scmp.eq.s32.totalorder %s17, 0
      %p106 = por %p104, %p105
      %p107 = scmp.ne.s32.totalorder %s95, %s96
      %p108 = scmp.eq.s32.totalorder %s18, 27
      %p109 = por %p107, %p108
      %p111 = scmp.ne.s32.totalorder %s96, %s110
      %p112 = scmp.eq.s32.totalorder %s18, 0
      %p113 = por %p111, %p112
      %s115 = sadd.s32 %s114, 1
      %p118 = scmp.eq.s32.totalorder %s12, 27
      %p119 = scmp.ne.s32.totalorder %s114, %s116
      %p120 = scmp.eq.s32.totalorder %s12, 0
      %p121 = por %p119, %p120
      %p122 = scmp.ne.s32.totalorder %s114, %s116
      %p123 = scmp.eq.s32.totalorder %s17, 27
      %p124 = por %p122, %p123
      %p125 = scmp.ne.s32.totalorder %s116, %s117
      %p126 = scmp.eq.s32.totalorder %s17, 0
      %p127 = por %p125, %p126
      %p128 = scmp.ne.s32.totalorder %s116, %s117
      %p129 = scmp.eq.s32.totalorder %s18, 27
      %p130 = por %p128, %p129
      %p132 = scmp.ne.s32.totalorder %s117, %s131
      %p133 = scmp.eq.s32.totalorder %s18, 0
      %p134 = por %p132, %p133
      %s136 = sadd.s32 %s135, 1
      %p139 = scmp.eq.s32.totalorder %s12, 27
      %p140 = scmp.ne.s32.totalorder %s135, %s137
      %p141 = scmp.eq.s32.totalorder %s12, 0
      %p142 = por %p140, %p141
      %p143 = scmp.ne.s32.totalorder %s135, %s137
      %p144 = scmp.eq.s32.totalorder %s17, 27
      %p145 = por %p143, %p144
      %p146 = scmp.ne.s32.totalorder %s137, %s138
      %p147 = scmp.eq.s32.totalorder %s17, 0
      %p148 = por %p146, %p147
      %p149 = scmp.ne.s32.totalorder %s137, %s138
      %p150 = scmp.eq.s32.totalorder %s18, 27
      %p151 = por %p149, %p150
      %p153 = scmp.ne.s32.totalorder %s138, %s152
      %p154 = scmp.eq.s32.totalorder %s18, 0
      %p155 = por %p153, %p154
      %p156 = scmp.le.s32.totalorder 1, %s12
      %p157 = scmp.lt.s32.totalorder %s12, 29
      %p158 = pnand %p156, %p157
      %p159 = pneg %p158
      // Predicated region
      $region9: #{simple_cnn_forward.7} parent=5 // pred_check
        _
      $region10: #{simple_cnn_forward.7} parent=5 // pred_check_branch
        %161 = sbr.rel (%p158) target = $region12
      $region11: #{simple_cnn_forward.7} parent=5 // pred_region
        %s162 = ssub.s32 %s12, 1
        // Predicated region
        $region13: #{simple_cnn_forward.7} parent=11 // pred_check
          %p163 = pneg %p85
        $region14: #{simple_cnn_forward.7} parent=11 // pred_check_branch
          %165 = sbr.rel (%p163) target = $region16
        $region15: #{simple_cnn_forward.7} parent=11 // pred_region
          _
        $region16: #{simple_cnn_forward.7} parent=11 // pred_fallthru
          _
        // Predicated region
        $region17: #{simple_cnn_forward.7} parent=11 // pred_check
          %p166 = pneg %p106
        $region18: #{simple_cnn_forward.7} parent=11 // pred_check_branch
          %168 = sbr.rel (%p166) target = $region20
        $region19: #{simple_cnn_forward.7} parent=11 // pred_region
          _
        $region20: #{simple_cnn_forward.7} parent=11 // pred_fallthru
          _
        // Predicated region
        $region21: #{simple_cnn_forward.7} parent=11 // pred_check
          %p169 = pneg %p127
        $region22: #{simple_cnn_forward.7} parent=11 // pred_check_branch
          %171 = sbr.rel (%p169) target = $region24
        $region23: #{simple_cnn_forward.7} parent=11 // pred_region
          _
        $region24: #{simple_cnn_forward.7} parent=11 // pred_fallthru
          _
      $region12: #{simple_cnn_forward.7} parent=5 // pred_fallthru
        _
      %p172 = scmp.lt.s32.totalorder %s12, 28
      // Predicated region
      $region25: #{simple_cnn_forward.7} parent=5 // pred_check
        %p173 = pneg %p172
      $region26: #{simple_cnn_forward.7} parent=5 // pred_check_branch
        %175 = sbr.rel (%p173) target = $region28
      $region27: #{simple_cnn_forward.7} parent=5 // pred_region
        // Predicated region
        $region29: #{simple_cnn_forward.7} parent=27 // pred_check
          %p176 = pneg %p32
        $region30: #{simple_cnn_forward.7} parent=27 // pred_check_branch
          %178 = sbr.rel (%p176) target = $region32
        $region31: #{simple_cnn_forward.7} parent=27 // pred_region
          %s179 = smul.u32 14, %s12
          %p180 = scmp.lt.s32.totalorder %s179, 391
          %s181 = scalar_select %p180, %s179, 391
          %s182 = scalar_lea.vmem %s0, %s181
          %s183 = smul.u32 14, %s12
        $region32: #{simple_cnn_forward.7} parent=27 // pred_fallthru
          _
        // Predicated region
        $region33: #{simple_cnn_forward.7} parent=27 // pred_check
          %p184 = pneg %p58
        $region34: #{simple_cnn_forward.7} parent=27 // pred_check_branch
          %186 = sbr.rel (%p184) target = $region36
        $region35: #{simple_cnn_forward.7} parent=27 // pred_region
          %s187 = smul.u32 224, %s12
          %p188 = scmp.lt.s32.totalorder %s187, 6271
          %s189 = scalar_select %p188, %s187, 6271
          %s190 = smul.addr %s189, 4
          %s191 = scalar_lea.vmem %s1, %s190
          %s192 = smul.u32 224, %s12
        $region36: #{simple_cnn_forward.7} parent=27 // pred_fallthru
          _
      $region28: #{simple_cnn_forward.7} parent=5 // pred_fallthru
        _
      %p193 = scmp.le.s32.totalorder 1, %s12
      %p194 = scmp.lt.s32.totalorder %s12, 29
      %p195 = pnand %p193, %p194
      %p196 = pneg %p195
      // Predicated region
      $region37: #{simple_cnn_forward.7} parent=5 // pred_check
        _
      $region38: #{simple_cnn_forward.7} parent=5 // pred_check_branch
        %198 = sbr.rel (%p195) target = $region40
      $region39: #{simple_cnn_forward.7} parent=5 // pred_region
        %s199 = ssub.s32 %s12, 1
        %s200 = smul.u32 14, %s17
        %p201 = scmp.lt.s32.totalorder %s200, 391
        %s202 = scalar_select %p201, %s200, 391
        %s203 = scalar_lea.vmem %s0, %s202
        %p204 = pneg %p38
        %p205 = pneg %p35
        %s206 = smul.u32 224, %s17
        %p207 = scmp.lt.s32.totalorder %s206, 6271
        %s208 = scalar_select %p207, %s206, 6271
        %s209 = smul.addr %s208, 4
        %s210 = scalar_lea.vmem %s1, %s209
        %p211 = pneg %p64
        %p212 = pneg %p61
        %p213 = pneg %p85
        %p214 = pneg %p82
        %p215 = pneg %p106
        %p216 = pneg %p103
        %p217 = pneg %p127
        %p218 = pneg %p124
        %p219 = pneg %p148
        %p220 = pneg %p145
        %s221 = smul.u32 14, %s17
        %p222 = scmp.lt.s32.totalorder %s221, 391
        %s223 = scalar_select %p222, %s221, 391
        %s224 = scalar_lea.vmem %s0, %s223
        %s225 = smul.u32 14, %s17
        %s226 = smul.u32 224, %s17
        %p227 = scmp.lt.s32.totalorder %s226, 6271
        %s228 = scalar_select %p227, %s226, 6271
        %s229 = smul.addr %s228, 4
        %s230 = scalar_lea.vmem %s1, %s229
        %s231 = smul.u32 224, %s17
        %p233 = scmp.eq.s32.totalorder %s17, 0
        // Predicated region
        $region41: #{simple_cnn_forward.7} parent=39 // pred_check
          %p234 = pneg %p233
        $region42: #{simple_cnn_forward.7} parent=39 // pred_check_branch
          %236 = sbr.rel (%p234) target = $region44
        $region43: #{simple_cnn_forward.7} parent=39 // pred_region
          %237 = vst [vmem:[#allocation2] sm:$0x3] 0.0
        $region44: #{simple_cnn_forward.7} parent=39 // pred_fallthru
          _
        %v238 = vld [vmem:[#allocation2] sm:$0x3]
        %v239 = vld [vmem:[%s224] sm:$0xff]
        %v240 = vld [vmem:[%s224 + $0x8] sm:$0x3f]
        %v241 = vld [vmem:[%s230] sm:$0xf]
        %v242 = vld [vmem:[%s230 + $0x4] sm:$0xf]
        %v243 = vld [vmem:[%s230 + $0x8] sm:$0xf]
        %v244 = vld [vmem:[%s230 + $0xc] sm:$0xf]
        %v245 = vld [vmem:[%s230 + $0x10] sm:$0xf]
        %v246 = vld [vmem:[%s230 + $0x14] sm:$0xf]
        %v247 = vld [vmem:[%s230 + $0x18] sm:$0xf]
        %v248 = vld [vmem:[%s230 + $0x1c] sm:$0xf]
        %v249 = vld [vmem:[%s230 + $0x20] sm:$0xf]
        %v250 = vld [vmem:[%s230 + $0x24] sm:$0xf]
        %v251 = vld [vmem:[%s230 + $0x28] sm:$0xf]
        %v252 = vld [vmem:[%s230 + $0x2c] sm:$0xf]
        %v253 = vld [vmem:[%s230 + $0x30] sm:$0xf]
        %v254 = vld [vmem:[%s230 + $0x34] sm:$0xf]
        %v255 = vld [vmem:[%s230 + $0x38] sm:$0xf]
        %v256 = vld [vmem:[%s230 + $0x3c] sm:$0xf]
        %v257 = vld [vmem:[%s230 + $0x40] sm:$0xf]
        %v258 = vld [vmem:[%s230 + $0x44] sm:$0xf]
        %v259 = vld [vmem:[%s230 + $0x48] sm:$0xf]
        %v260 = vld [vmem:[%s230 + $0x4c] sm:$0xf]
        %v261 = vld [vmem:[%s230 + $0x50] sm:$0xf]
        %v262 = vld [vmem:[%s230 + $0x54] sm:$0xf]
        %v263 = vld [vmem:[%s230 + $0x58] sm:$0xf]
        %v264 = vld [vmem:[%s230 + $0x5c] sm:$0xf]
        %v265 = vld [vmem:[%s230 + $0x60] sm:$0xf]
        %v266 = vld [vmem:[%s230 + $0x64] sm:$0xf]
        %v267 = vld [vmem:[%s230 + $0x68] sm:$0xf]
        %v268 = vld [vmem:[%s230 + $0x6c] sm:$0xf]
        %v269 = vld [vmem:[%s230 + $0x70] sm:$0xf]
        %v270 = vld [vmem:[%s230 + $0x74] sm:$0xf]
        %v271 = vld [vmem:[%s230 + $0x78] sm:$0xf]
        %v272 = vld [vmem:[%s230 + $0x7c] sm:$0xf]
        %v273 = vld [vmem:[%s230 + $0x80] sm:$0xf]
        %v274 = vld [vmem:[%s230 + $0x84] sm:$0xf]
        %v275 = vld [vmem:[%s230 + $0x88] sm:$0xf]
        %v276 = vld [vmem:[%s230 + $0x8c] sm:$0xf]
        %v277 = vld [vmem:[%s230 + $0x90] sm:$0xf]
        %v278 = vld [vmem:[%s230 + $0x94] sm:$0xf]
        %v279 = vld [vmem:[%s230 + $0x98] sm:$0xf]
        %v280 = vld [vmem:[%s230 + $0x9c] sm:$0xf]
        %v281 = vld [vmem:[%s230 + $0xa0] sm:$0xf]
        %v282 = vld [vmem:[%s230 + $0xa4] sm:$0xf]
        %v283 = vld [vmem:[%s230 + $0xa8] sm:$0xf]
        %v284 = vld [vmem:[%s230 + $0xac] sm:$0xf]
        %v285 = vld [vmem:[%s230 + $0xb0] sm:$0xf]
        %v286 = vld [vmem:[%s230 + $0xb4] sm:$0xf]
        %v287 = vld [vmem:[%s230 + $0xb8] sm:$0xf]
        %v288 = vld [vmem:[%s230 + $0xbc] sm:$0xf]
        %v289 = vld [vmem:[%s230 + $0xc0] sm:$0xf]
        %v290 = vld [vmem:[%s230 + $0xc4] sm:$0xf]
        %v291 = vld [vmem:[%s230 + $0xc8] sm:$0xf]
        %v292 = vld [vmem:[%s230 + $0xcc] sm:$0xf]
        %v293 = vld [vmem:[%s230 + $0xd0] sm:$0xf]
        %v294 = vld [vmem:[%s230 + $0xd4] sm:$0xf]
        %v295 = vld [vmem:[%s230 + $0xd8] sm:$0xf]
        %v296 = vld [vmem:[%s230 + $0xdc] sm:$0xf]
        %v297 = vld [vmem:[%s230 + $0xe0] sm:$0xf]
        %v298 = vld [vmem:[%s230 + $0xe4] sm:$0xf]
        %v299 = vld [vmem:[%s230 + $0xe8] sm:$0xf]
        %v300 = vld [vmem:[%s230 + $0xec] sm:$0xf]
        %v301 = vld [vmem:[%s230 + $0xf0] sm:$0xf]
        %v302 = vld [vmem:[%s230 + $0xf4] sm:$0xf]
        %v303 = vld [vmem:[%s230 + $0xf8] sm:$0xf]
        %v304 = vld [vmem:[%s230 + $0xfc] sm:$0xf]
        %v305 = vld [vmem:[%s230 + $0x100] sm:$0xf]
        %v306 = vld [vmem:[%s230 + $0x104] sm:$0xf]
        %v307 = vld [vmem:[%s230 + $0x108] sm:$0xf]
        %v308 = vld [vmem:[%s230 + $0x10c] sm:$0xf]
        %v309 = vld [vmem:[%s230 + $0x110] sm:$0xf]
        %v310 = vld [vmem:[%s230 + $0x114] sm:$0xf]
        %v311 = vld [vmem:[%s230 + $0x118] sm:$0xf]
        %v312 = vld [vmem:[%s230 + $0x11c] sm:$0xf]
        %v313 = vld [vmem:[%s230 + $0x120] sm:$0xf]
        %v314 = vld [vmem:[%s230 + $0x124] sm:$0xf]
        %v315 = vld [vmem:[%s230 + $0x128] sm:$0xf]
        %v316 = vld [vmem:[%s230 + $0x12c] sm:$0xf]
        %v317 = vld [vmem:[%s230 + $0x130] sm:$0xf]
        %v318 = vld [vmem:[%s230 + $0x134] sm:$0xf]
        %v319 = vld [vmem:[%s230 + $0x138] sm:$0xf]
        %v320 = vld [vmem:[%s230 + $0x13c] sm:$0xf]
        %v321 = vld [vmem:[%s230 + $0x140] sm:$0xf]
        %v322 = vld [vmem:[%s230 + $0x144] sm:$0xf]
        %v323 = vld [vmem:[%s230 + $0x148] sm:$0xf]
        %v324 = vld [vmem:[%s230 + $0x14c] sm:$0xf]
        %v325 = vld [vmem:[%s230 + $0x150] sm:$0xf]
        %v326 = vld [vmem:[%s230 + $0x154] sm:$0xf]
        %v327 = vld [vmem:[%s230 + $0x158] sm:$0xf]
        %v328 = vld [vmem:[%s230 + $0x15c] sm:$0xf]
        %v329 = vld [vmem:[%s230 + $0x160] sm:$0xf]
        %v330 = vld [vmem:[%s230 + $0x164] sm:$0xf]
        %v331 = vld [vmem:[%s230 + $0x168] sm:$0xf]
        %v332 = vld [vmem:[%s230 + $0x16c] sm:$0xf]
        %v333 = vld [vmem:[%s230 + $0x170] sm:$0xf]
        %v334 = vld [vmem:[%s230 + $0x174] sm:$0xf]
        %v335 = vld [vmem:[%s230 + $0x178] sm:$0xf]
        %v336 = vld [vmem:[%s230 + $0x17c] sm:$0xf]
        %v337 = vld [vmem:[%s230 + $0x180] sm:$0xf]
        %v338 = vld [vmem:[%s230 + $0x184] sm:$0xf]
        %v339 = vld [vmem:[%s230 + $0x188] sm:$0xf]
        %v340 = vld [vmem:[%s230 + $0x18c] sm:$0xf]
        %v341 = vld [vmem:[%s230 + $0x190] sm:$0xf]
        %v342 = vld [vmem:[%s230 + $0x194] sm:$0xf]
        %v343 = vld [vmem:[%s230 + $0x198] sm:$0xf]
        %v344 = vld [vmem:[%s230 + $0x19c] sm:$0xf]
        %v345 = vld [vmem:[%s230 + $0x1a0] sm:$0xf]
        %v346 = vld [vmem:[%s230 + $0x1a4] sm:$0xf]
        %v347 = vld [vmem:[%s230 + $0x1a8] sm:$0xf]
        %v348 = vld [vmem:[%s230 + $0x1ac] sm:$0xf]
        %v349 = vld [vmem:[%s230 + $0x1b0] sm:$0xf]
        %v350 = vld [vmem:[%s230 + $0x1b4] sm:$0xf]
        %v351 = vld [vmem:[%s230 + $0x1b8] sm:$0xf]
        %v352 = vld [vmem:[%s230 + $0x1bc] sm:$0xf]
        %v353 = vld [vmem:[%s230 + $0x1c0] sm:$0xf]
        %v354 = vld [vmem:[%s230 + $0x1c4] sm:$0xf]
        %v355 = vld [vmem:[%s230 + $0x1c8] sm:$0xf]
        %v356 = vld [vmem:[%s230 + $0x1cc] sm:$0xf]
        %v357 = vld [vmem:[%s230 + $0x1d0] sm:$0xf]
        %v358 = vld [vmem:[%s230 + $0x1d4] sm:$0xf]
        %v359 = vld [vmem:[%s230 + $0x1d8] sm:$0xf]
        %v360 = vld [vmem:[%s230 + $0x1dc] sm:$0xf]
        %v361 = vld [vmem:[%s230 + $0x1e0] sm:$0xf]
        %v362 = vld [vmem:[%s230 + $0x1e4] sm:$0xf]
        %v363 = vld [vmem:[%s230 + $0x1e8] sm:$0xf]
        %v364 = vld [vmem:[%s230 + $0x1ec] sm:$0xf]
        %v365 = vld [vmem:[%s230 + $0x1f0] sm:$0xf]
        %v366 = vld [vmem:[%s230 + $0x1f4] sm:$0xf]
        %v367 = vld [vmem:[%s230 + $0x1f8] sm:$0xf]
        %v368 = vld [vmem:[%s230 + $0x1fc] sm:$0xf]
        %v369 = vld [vmem:[%s230 + $0x200] sm:$0xf]
        %v370 = vld [vmem:[%s230 + $0x204] sm:$0xf]
        %v371 = vld [vmem:[%s230 + $0x208] sm:$0xf]
        %v372 = vld [vmem:[%s230 + $0x20c] sm:$0xf]
        %v373 = vld [vmem:[%s230 + $0x210] sm:$0xf]
        %v374 = vld [vmem:[%s230 + $0x214] sm:$0xf]
        %v375 = vld [vmem:[%s230 + $0x218] sm:$0xf]
        %v376 = vld [vmem:[%s230 + $0x21c] sm:$0xf]
        %v377 = vld [vmem:[%s230 + $0x220] sm:$0xf]
        %v378 = vld [vmem:[%s230 + $0x224] sm:$0xf]
        %v379 = vld [vmem:[%s230 + $0x228] sm:$0xf]
        %v380 = vld [vmem:[%s230 + $0x22c] sm:$0xf]
        %v381 = vld [vmem:[%s230 + $0x230] sm:$0xf]
        %v382 = vld [vmem:[%s230 + $0x234] sm:$0xf]
        %v383 = vld [vmem:[%s230 + $0x238] sm:$0xf]
        %v384 = vld [vmem:[%s230 + $0x23c] sm:$0xf]
        %v385 = vld [vmem:[%s230 + $0x240] sm:$0xf]
        %v386 = vld [vmem:[%s230 + $0x244] sm:$0xf]
        %v387 = vld [vmem:[%s230 + $0x248] sm:$0xf]
        %v388 = vld [vmem:[%s230 + $0x24c] sm:$0xf]
        %v389 = vld [vmem:[%s230 + $0x250] sm:$0xf]
        %v390 = vld [vmem:[%s230 + $0x254] sm:$0xf]
        %v391 = vld [vmem:[%s230 + $0x258] sm:$0xf]
        %v392 = vld [vmem:[%s230 + $0x25c] sm:$0xf]
        %v393 = vld [vmem:[%s230 + $0x260] sm:$0xf]
        %v394 = vld [vmem:[%s230 + $0x264] sm:$0xf]
        %v395 = vld [vmem:[%s230 + $0x268] sm:$0xf]
        %v396 = vld [vmem:[%s230 + $0x26c] sm:$0xf]
        %v397 = vld [vmem:[%s230 + $0x270] sm:$0xf]
        %v398 = vld [vmem:[%s230 + $0x274] sm:$0xf]
        %v399 = vld [vmem:[%s230 + $0x278] sm:$0xf]
        %v400 = vld [vmem:[%s230 + $0x27c] sm:$0xf]
        %v401 = vld [vmem:[%s230 + $0x280] sm:$0xf]
        %v402 = vld [vmem:[%s230 + $0x284] sm:$0xf]
        %v403 = vld [vmem:[%s230 + $0x288] sm:$0xf]
        %v404 = vld [vmem:[%s230 + $0x28c] sm:$0xf]
        %v405 = vld [vmem:[%s230 + $0x290] sm:$0xf]
        %v406 = vld [vmem:[%s230 + $0x294] sm:$0xf]
        %v407 = vld [vmem:[%s230 + $0x298] sm:$0xf]
        %v408 = vld [vmem:[%s230 + $0x29c] sm:$0xf]
        %v409 = vld [vmem:[%s230 + $0x2a0] sm:$0xf]
        %v410 = vld [vmem:[%s230 + $0x2a4] sm:$0xf]
        %v411 = vld [vmem:[%s230 + $0x2a8] sm:$0xf]
        %v412 = vld [vmem:[%s230 + $0x2ac] sm:$0xf]
        %v413 = vld [vmem:[%s230 + $0x2b0] sm:$0xf]
        %v414 = vld [vmem:[%s230 + $0x2b4] sm:$0xf]
        %v415 = vld [vmem:[%s230 + $0x2b8] sm:$0xf]
        %v416 = vld [vmem:[%s230 + $0x2bc] sm:$0xf]
        %v417 = vld [vmem:[%s230 + $0x2c0] sm:$0xf]
        %v418 = vld [vmem:[%s230 + $0x2c4] sm:$0xf]
        %v419 = vld [vmem:[%s230 + $0x2c8] sm:$0xf]
        %v420 = vld [vmem:[%s230 + $0x2cc] sm:$0xf]
        %v421 = vld [vmem:[%s230 + $0x2d0] sm:$0xf]
        %v422 = vld [vmem:[%s230 + $0x2d4] sm:$0xf]
        %v423 = vld [vmem:[%s230 + $0x2d8] sm:$0xf]
        %v424 = vld [vmem:[%s230 + $0x2dc] sm:$0xf]
        %v425 = vld [vmem:[%s230 + $0x2e0] sm:$0xf]
        %v426 = vld [vmem:[%s230 + $0x2e4] sm:$0xf]
        %v427 = vld [vmem:[%s230 + $0x2e8] sm:$0xf]
        %v428 = vld [vmem:[%s230 + $0x2ec] sm:$0xf]
        %v429 = vld [vmem:[%s230 + $0x2f0] sm:$0xf]
        %v430 = vld [vmem:[%s230 + $0x2f4] sm:$0xf]
        %v431 = vld [vmem:[%s230 + $0x2f8] sm:$0xf]
        %v432 = vld [vmem:[%s230 + $0x2fc] sm:$0xf]
        %v433 = vld [vmem:[%s230 + $0x300] sm:$0xf]
        %v434 = vld [vmem:[%s230 + $0x304] sm:$0xf]
        %v435 = vld [vmem:[%s230 + $0x308] sm:$0xf]
        %v436 = vld [vmem:[%s230 + $0x30c] sm:$0xf]
        %v437 = vld [vmem:[%s230 + $0x310] sm:$0xf]
        %v438 = vld [vmem:[%s230 + $0x314] sm:$0xf]
        %v439 = vld [vmem:[%s230 + $0x318] sm:$0xf]
        %v440 = vld [vmem:[%s230 + $0x31c] sm:$0xf]
        %v441 = vld [vmem:[%s230 + $0x320] sm:$0xf]
        %v442 = vld [vmem:[%s230 + $0x324] sm:$0xf]
        %v443 = vld [vmem:[%s230 + $0x328] sm:$0xf]
        %v444 = vld [vmem:[%s230 + $0x32c] sm:$0xf]
        %v445 = vld [vmem:[%s230 + $0x330] sm:$0xf]
        %v446 = vld [vmem:[%s230 + $0x334] sm:$0xf]
        %v447 = vld [vmem:[%s230 + $0x338] sm:$0xf]
        %v448 = vld [vmem:[%s230 + $0x33c] sm:$0xf]
        %v449 = vld [vmem:[%s230 + $0x340] sm:$0xf]
        %v450 = vld [vmem:[%s230 + $0x344] sm:$0xf]
        %v451 = vld [vmem:[%s230 + $0x348] sm:$0xf]
        %v452 = vld [vmem:[%s230 + $0x34c] sm:$0xf]
        %v453 = vld [vmem:[%s230 + $0x350] sm:$0xf]
        %v454 = vld [vmem:[%s230 + $0x354] sm:$0xf]
        %v455 = vld [vmem:[%s230 + $0x358] sm:$0xf]
        %v456 = vld [vmem:[%s230 + $0x35c] sm:$0xf]
        %v457 = vld [vmem:[%s230 + $0x360] sm:$0xf]
        %v458 = vld [vmem:[%s230 + $0x364] sm:$0xf]
        %v459 = vld [vmem:[%s230 + $0x368] sm:$0xf]
        %v460 = vld [vmem:[%s230 + $0x36c] sm:$0xf]
        %v461 = vld [vmem:[%s230 + $0x370] sm:$0xf]
        %v462 = vld [vmem:[%s230 + $0x374] sm:$0xf]
        %v463 = vld [vmem:[%s230 + $0x378] sm:$0xf]
        %v464 = vld [vmem:[%s230 + $0x37c] sm:$0xf]
        %v467 = vcombine.high %v239, %v239
        %v469 = vunpack.c.l.s4 1966171168
        %v470 = vunpack.c.0.s8 %v469
        %v471 = vlaneseq
        %v472 = vshrl.u32 %v471, 7
        %v473 = vsub.s32 %v470, %v472
        %v474 = vrot.slane %v239, %v473
        %v476 = vunpack.c.l.s4 1966171168
        %v477 = vunpack.c.0.s8 %v476
        %v478 = vlaneseq
        %v479 = vshrl.u32 %v478, 7
        %v480 = vsub.s32 %v477, %v479
        %v481 = vrot.slane %v467, %v480
        %v482 = vcombine.high %v474, %v474
        %v483 = vcombine.high %v481, %v481
        %v485 = vunpack.c.l.s4 1966171168
        %v486 = vunpack.c.0.s8 %v485
        %v487 = vlaneseq
        %v488 = vshrl.u32 %v487, 7
        %v489 = vsub.s32 %v486, %v488
        %v490 = vrot.slane %v474, %v489
        %v492 = vunpack.c.l.s4 1966171168
        %v493 = vunpack.c.0.s8 %v492
        %v494 = vlaneseq
        %v495 = vshrl.u32 %v494, 7
        %v496 = vsub.s32 %v493, %v495
        %v497 = vrot.slane %v481, %v496
        %v499 = vunpack.c.l.s4 1966171168
        %v500 = vunpack.c.0.s8 %v499
        %v501 = vlaneseq
        %v502 = vshrl.u32 %v501, 7
        %v503 = vsub.s32 %v500, %v502
        %v504 = vrot.slane %v482, %v503
        %v506 = vunpack.c.l.s4 1966171168
        %v507 = vunpack.c.0.s8 %v506
        %v508 = vlaneseq
        %v509 = vshrl.u32 %v508, 7
        %v510 = vsub.s32 %v507, %v509
        %v511 = vrot.slane %v483, %v510
        %v512 = vcombine.high %v490, %v490
        %v513 = vcombine.high %v497, %v497
        %v514 = vcombine.high %v504, %v504
        %v515 = vcombine.high %v511, %v511
        %v516 = vcombine.high %v240, %v240
        %v518 = vunpack.c.l.s4 1966171168
        %v519 = vunpack.c.0.s8 %v518
        %v520 = vlaneseq
        %v521 = vshrl.u32 %v520, 7
        %v522 = vsub.s32 %v519, %v521
        %v523 = vrot.slane %v240, %v522
        %v525 = vunpack.c.l.s4 1966171168
        %v526 = vunpack.c.0.s8 %v525
        %v527 = vlaneseq
        %v528 = vshrl.u32 %v527, 7
        %v529 = vsub.s32 %v526, %v528
        %v530 = vrot.slane %v516, %v529
        %v531 = vcombine.high %v523, %v523
        %v532 = vcombine.high %v530, %v530
        %v534 = vunpack.c.l.s4 1966171168
        %v535 = vunpack.c.0.s8 %v534
        %v536 = vlaneseq
        %v537 = vshrl.u32 %v536, 7
        %v538 = vsub.s32 %v535, %v537
        %v539 = vrot.slane %v523, %v538
        %v541 = vunpack.c.l.s4 1966171168
        %v542 = vunpack.c.0.s8 %v541
        %v543 = vlaneseq
        %v544 = vshrl.u32 %v543, 7
        %v545 = vsub.s32 %v542, %v544
        %v546 = vrot.slane %v530, %v545
        %v548 = vunpack.c.l.s4 1966171168
        %v549 = vunpack.c.0.s8 %v548
        %v550 = vlaneseq
        %v551 = vshrl.u32 %v550, 7
        %v552 = vsub.s32 %v549, %v551
        %v553 = vrot.slane %v531, %v552
        %v555 = vunpack.c.l.s4 1966171168
        %v556 = vunpack.c.0.s8 %v555
        %v557 = vlaneseq
        %v558 = vshrl.u32 %v557, 7
        %v559 = vsub.s32 %v556, %v558
        %v560 = vrot.slane %v532, %v559
        %v561 = vcombine.high %v539, %v539
        %v562 = vcombine.high %v553, %v553
        %v801 = vunpack.c.l.b16 %v241
        %v802 = vunpack.c.l.b16 %v242
        %v803 = vunpack.c.l.b16 %v243
        %v804 = vunpack.c.l.b16 %v244
        %v805 = vunpack.c.l.b16 %v245
        %v806 = vunpack.c.l.b16 %v246
        %v807 = vunpack.c.l.b16 %v247
        %v808 = vunpack.c.l.b16 %v248
        %v809 = vunpack.c.l.b16 %v249
        %v810 = vunpack.c.l.b16 %v250
        %v811 = vunpack.c.l.b16 %v251
        %v812 = vunpack.c.l.b16 %v252
        %v813 = vunpack.c.l.b16 %v253
        %v814 = vunpack.c.l.b16 %v254
        %v815 = vunpack.c.l.b16 %v255
        %v816 = vunpack.c.l.b16 %v256
        %v817 = vunpack.c.l.b16 %v257
        %v818 = vunpack.c.l.b16 %v258
        %v819 = vunpack.c.l.b16 %v259
        %v820 = vunpack.c.l.b16 %v260
        %v821 = vunpack.c.l.b16 %v261
        %v822 = vunpack.c.l.b16 %v262
        %v823 = vunpack.c.l.b16 %v263
        %v824 = vunpack.c.l.b16 %v264
        %v825 = vunpack.c.l.b16 %v265
        %v826 = vunpack.c.l.b16 %v266
        %v827 = vunpack.c.l.b16 %v267
        %v828 = vunpack.c.l.b16 %v268
        %v829 = vunpack.c.l.b16 %v269
        %v830 = vunpack.c.l.b16 %v270
        %v831 = vunpack.c.l.b16 %v271
        %v832 = vunpack.c.l.b16 %v272
        %v833 = vunpack.c.l.b16 %v273
        %v834 = vunpack.c.l.b16 %v274
        %v835 = vunpack.c.l.b16 %v275
        %v836 = vunpack.c.l.b16 %v276
        %v837 = vunpack.c.l.b16 %v277
        %v838 = vunpack.c.l.b16 %v278
        %v839 = vunpack.c.l.b16 %v279
        %v840 = vunpack.c.l.b16 %v280
        %v841 = vunpack.c.l.b16 %v281
        %v842 = vunpack.c.l.b16 %v282
        %v843 = vunpack.c.l.b16 %v283
        %v844 = vunpack.c.l.b16 %v284
        %v845 = vunpack.c.l.b16 %v285
        %v846 = vunpack.c.l.b16 %v286
        %v847 = vunpack.c.l.b16 %v287
        %v848 = vunpack.c.l.b16 %v288
        %v849 = vunpack.c.l.b16 %v289
        %v850 = vunpack.c.l.b16 %v290
        %v851 = vunpack.c.l.b16 %v291
        %v852 = vunpack.c.l.b16 %v292
        %v853 = vunpack.c.l.b16 %v293
        %v854 = vunpack.c.l.b16 %v294
        %v855 = vunpack.c.l.b16 %v295
        %v856 = vunpack.c.l.b16 %v296
        %v857 = vunpack.c.l.b16 %v297
        %v858 = vunpack.c.l.b16 %v298
        %v859 = vunpack.c.l.b16 %v299
        %v860 = vunpack.c.l.b16 %v300
        %v861 = vunpack.c.l.b16 %v301
        %v862 = vunpack.c.l.b16 %v302
        %v863 = vunpack.c.l.b16 %v303
        %v864 = vunpack.c.l.b16 %v304
        %v865 = vunpack.c.l.b16 %v305
        %v866 = vunpack.c.l.b16 %v306
        %v867 = vunpack.c.l.b16 %v307
        %v868 = vunpack.c.l.b16 %v308
        %v869 = vunpack.c.l.b16 %v309
        %v870 = vunpack.c.l.b16 %v310
        %v871 = vunpack.c.l.b16 %v311
        %v872 = vunpack.c.l.b16 %v312
        %v873 = vunpack.c.l.b16 %v313
        %v874 = vunpack.c.l.b16 %v314
        %v875 = vunpack.c.l.b16 %v315
        %v876 = vunpack.c.l.b16 %v316
        %v877 = vunpack.c.l.b16 %v317
        %v878 = vunpack.c.l.b16 %v318
        %v879 = vunpack.c.l.b16 %v319
        %v880 = vunpack.c.l.b16 %v320
        %v881 = vunpack.c.l.b16 %v321
        %v882 = vunpack.c.l.b16 %v322
        %v883 = vunpack.c.l.b16 %v323
        %v884 = vunpack.c.l.b16 %v324
        %v885 = vunpack.c.l.b16 %v325
        %v886 = vunpack.c.l.b16 %v326
        %v887 = vunpack.c.l.b16 %v327
        %v888 = vunpack.c.l.b16 %v328
        %v889 = vunpack.c.l.b16 %v329
        %v890 = vunpack.c.l.b16 %v330
        %v891 = vunpack.c.l.b16 %v331
        %v892 = vunpack.c.l.b16 %v332
        %v893 = vunpack.c.l.b16 %v333
        %v894 = vunpack.c.l.b16 %v334
        %v895 = vunpack.c.l.b16 %v335
        %v896 = vunpack.c.l.b16 %v336
        %v897 = vunpack.c.l.b16 %v337
        %v898 = vunpack.c.l.b16 %v338
        %v899 = vunpack.c.l.b16 %v339
        %v900 = vunpack.c.l.b16 %v340
        %v901 = vunpack.c.l.b16 %v341
        %v902 = vunpack.c.l.b16 %v342
        %v903 = vunpack.c.l.b16 %v343
        %v904 = vunpack.c.l.b16 %v344
        %v905 = vunpack.c.l.b16 %v345
        %v906 = vunpack.c.l.b16 %v346
        %v907 = vunpack.c.l.b16 %v347
        %v908 = vunpack.c.l.b16 %v348
        %v909 = vunpack.c.l.b16 %v349
        %v910 = vunpack.c.l.b16 %v350
        %v911 = vunpack.c.l.b16 %v351
        %v912 = vunpack.c.l.b16 %v352
        %v913 = vunpack.c.l.b16 %v353
        %v914 = vunpack.c.l.b16 %v354
        %v915 = vunpack.c.l.b16 %v355
        %v916 = vunpack.c.l.b16 %v356
        %v917 = vunpack.c.l.b16 %v357
        %v918 = vunpack.c.l.b16 %v358
        %v919 = vunpack.c.l.b16 %v359
        %v920 = vunpack.c.l.b16 %v360
        %v921 = vunpack.c.l.b16 %v361
        %v922 = vunpack.c.l.b16 %v362
        %v923 = vunpack.c.l.b16 %v363
        %v924 = vunpack.c.l.b16 %v364
        %v925 = vunpack.c.l.b16 %v365
        %v926 = vunpack.c.l.b16 %v366
        %v927 = vunpack.c.l.b16 %v367
        %v928 = vunpack.c.l.b16 %v368
        %v929 = vunpack.c.l.b16 %v369
        %v930 = vunpack.c.l.b16 %v370
        %v931 = vunpack.c.l.b16 %v371
        %v932 = vunpack.c.l.b16 %v372
        %v933 = vunpack.c.l.b16 %v373
        %v934 = vunpack.c.l.b16 %v374
        %v935 = vunpack.c.l.b16 %v375
        %v936 = vunpack.c.l.b16 %v376
        %v937 = vunpack.c.l.b16 %v377
        %v938 = vunpack.c.l.b16 %v378
        %v939 = vunpack.c.l.b16 %v379
        %v940 = vunpack.c.l.b16 %v380
        %v941 = vunpack.c.l.b16 %v381
        %v942 = vunpack.c.l.b16 %v382
        %v943 = vunpack.c.l.b16 %v383
        %v944 = vunpack.c.l.b16 %v384
        %v945 = vunpack.c.l.b16 %v385
        %v946 = vunpack.c.l.b16 %v386
        %v947 = vunpack.c.l.b16 %v387
        %v948 = vunpack.c.l.b16 %v388
        %v949 = vunpack.c.l.b16 %v389
        %v950 = vunpack.c.l.b16 %v390
        %v951 = vunpack.c.l.b16 %v391
        %v952 = vunpack.c.l.b16 %v392
        %v953 = vunpack.c.l.b16 %v393
        %v954 = vunpack.c.l.b16 %v394
        %v955 = vunpack.c.l.b16 %v395
        %v956 = vunpack.c.l.b16 %v396
        %v957 = vunpack.c.l.b16 %v397
        %v958 = vunpack.c.l.b16 %v398
        %v959 = vunpack.c.l.b16 %v399
        %v960 = vunpack.c.l.b16 %v400
        %v961 = vunpack.c.l.b16 %v401
        %v962 = vunpack.c.l.b16 %v402
        %v963 = vunpack.c.l.b16 %v403
        %v964 = vunpack.c.l.b16 %v404
        %v965 = vunpack.c.l.b16 %v405
        %v966 = vunpack.c.l.b16 %v406
        %v967 = vunpack.c.l.b16 %v407
        %v968 = vunpack.c.l.b16 %v408
        %v969 = vunpack.c.l.b16 %v409
        %v970 = vunpack.c.l.b16 %v410
        %v971 = vunpack.c.l.b16 %v411
        %v972 = vunpack.c.l.b16 %v412
        %v973 = vunpack.c.l.b16 %v413
        %v974 = vunpack.c.l.b16 %v414
        %v975 = vunpack.c.l.b16 %v415
        %v976 = vunpack.c.l.b16 %v416
        %v977 = vunpack.c.l.b16 %v417
        %v978 = vunpack.c.l.b16 %v418
        %v979 = vunpack.c.l.b16 %v419
        %v980 = vunpack.c.l.b16 %v420
        %v981 = vunpack.c.l.b16 %v421
        %v982 = vunpack.c.l.b16 %v422
        %v983 = vunpack.c.l.b16 %v423
        %v984 = vunpack.c.l.b16 %v424
        %v985 = vunpack.c.l.b16 %v425
        %v986 = vunpack.c.l.b16 %v426
        %v987 = vunpack.c.l.b16 %v427
        %v988 = vunpack.c.l.b16 %v428
        %v989 = vunpack.c.l.b16 %v429
        %v990 = vunpack.c.l.b16 %v430
        %v991 = vunpack.c.l.b16 %v431
        %v992 = vunpack.c.l.b16 %v432
        %v993 = vunpack.c.l.b16 %v433
        %v994 = vunpack.c.l.b16 %v434
        %v995 = vunpack.c.l.b16 %v435
        %v996 = vunpack.c.l.b16 %v436
        %v997 = vunpack.c.l.b16 %v437
        %v998 = vunpack.c.l.b16 %v438
        %v999 = vunpack.c.l.b16 %v439
        %v1000 = vunpack.c.l.b16 %v440
        %v1001 = vunpack.c.l.b16 %v441
        %v1002 = vunpack.c.l.b16 %v442
        %v1003 = vunpack.c.l.b16 %v443
        %v1004 = vunpack.c.l.b16 %v444
        %v1005 = vunpack.c.l.b16 %v445
        %v1006 = vunpack.c.l.b16 %v446
        %v1007 = vunpack.c.l.b16 %v447
        %v1008 = vunpack.c.l.b16 %v448
        %v1009 = vunpack.c.l.b16 %v449
        %v1010 = vunpack.c.l.b16 %v450
        %v1011 = vunpack.c.l.b16 %v451
        %v1012 = vunpack.c.l.b16 %v452
        %v1013 = vunpack.c.l.b16 %v453
        %v1014 = vunpack.c.l.b16 %v454
        %v1015 = vunpack.c.l.b16 %v455
        %v1016 = vunpack.c.l.b16 %v456
        %v1017 = vunpack.c.l.b16 %v457
        %v1018 = vunpack.c.l.b16 %v458
        %v1019 = vunpack.c.l.b16 %v459
        %v1020 = vunpack.c.l.b16 %v460
        %v1021 = vunpack.c.l.b16 %v461
        %v1022 = vunpack.c.l.b16 %v462
        %v1023 = vunpack.c.l.b16 %v463
        %v1024 = vunpack.c.l.b16 %v464
        %v1025 = vpack.c.b16 %v802, %v801
        %v1026 = vpack.c.b16 %v804, %v803
        %v1027 = vpack.c.b16 %v806, %v805
        %v1028 = vpack.c.b16 %v808, %v807
        %v1029 = vpack.c.b16 %v810, %v809
        %v1030 = vpack.c.b16 %v812, %v811
        %v1031 = vpack.c.b16 %v814, %v813
        %v1032 = vpack.c.b16 %v816, %v815
        %v1033 = vpack.c.b16 %v818, %v817
        %v1034 = vpack.c.b16 %v820, %v819
        %v1035 = vpack.c.b16 %v822, %v821
        %v1036 = vpack.c.b16 %v824, %v823
        %v1037 = vpack.c.b16 %v826, %v825
        %v1038 = vpack.c.b16 %v828, %v827
        %v1039 = vpack.c.b16 %v830, %v829
        %v1040 = vpack.c.b16 %v832, %v831
        %v1041 = vpack.c.b16 %v834, %v833
        %v1042 = vpack.c.b16 %v836, %v835
        %v1043 = vpack.c.b16 %v838, %v837
        %v1044 = vpack.c.b16 %v840, %v839
        %v1045 = vpack.c.b16 %v842, %v841
        %v1046 = vpack.c.b16 %v844, %v843
        %v1047 = vpack.c.b16 %v846, %v845
        %v1048 = vpack.c.b16 %v848, %v847
        %v1049 = vpack.c.b16 %v850, %v849
        %v1050 = vpack.c.b16 %v852, %v851
        %v1051 = vpack.c.b16 %v854, %v853
        %v1052 = vpack.c.b16 %v856, %v855
        %v1053 = vpack.c.b16 %v858, %v857
        %v1054 = vpack.c.b16 %v860, %v859
        %v1055 = vpack.c.b16 %v862, %v861
        %v1056 = vpack.c.b16 %v864, %v863
        %v1057 = vpack.c.b16 %v866, %v865
        %v1058 = vpack.c.b16 %v868, %v867
        %v1059 = vpack.c.b16 %v870, %v869
        %v1060 = vpack.c.b16 %v872, %v871
        %v1061 = vpack.c.b16 %v874, %v873
        %v1062 = vpack.c.b16 %v876, %v875
        %v1063 = vpack.c.b16 %v878, %v877
        %v1064 = vpack.c.b16 %v880, %v879
        %v1065 = vpack.c.b16 %v882, %v881
        %v1066 = vpack.c.b16 %v884, %v883
        %v1067 = vpack.c.b16 %v886, %v885
        %v1068 = vpack.c.b16 %v888, %v887
        %v1069 = vpack.c.b16 %v890, %v889
        %v1070 = vpack.c.b16 %v892, %v891
        %v1071 = vpack.c.b16 %v894, %v893
        %v1072 = vpack.c.b16 %v896, %v895
        %v1073 = vpack.c.b16 %v898, %v897
        %v1074 = vpack.c.b16 %v900, %v899
        %v1075 = vpack.c.b16 %v902, %v901
        %v1076 = vpack.c.b16 %v904, %v903
        %v1077 = vpack.c.b16 %v906, %v905
        %v1078 = vpack.c.b16 %v908, %v907
        %v1079 = vpack.c.b16 %v910, %v909
        %v1080 = vpack.c.b16 %v912, %v911
        %v1081 = vpack.c.b16 %v914, %v913
        %v1082 = vpack.c.b16 %v916, %v915
        %v1083 = vpack.c.b16 %v918, %v917
        %v1084 = vpack.c.b16 %v920, %v919
        %v1085 = vpack.c.b16 %v922, %v921
        %v1086 = vpack.c.b16 %v924, %v923
        %v1087 = vpack.c.b16 %v926, %v925
        %v1088 = vpack.c.b16 %v928, %v927
        %v1089 = vpack.c.b16 %v930, %v929
        %v1090 = vpack.c.b16 %v932, %v931
        %v1091 = vpack.c.b16 %v934, %v933
        %v1092 = vpack.c.b16 %v936, %v935
        %v1093 = vpack.c.b16 %v938, %v937
        %v1094 = vpack.c.b16 %v940, %v939
        %v1095 = vpack.c.b16 %v942, %v941
        %v1096 = vpack.c.b16 %v944, %v943
        %v1097 = vpack.c.b16 %v946, %v945
        %v1098 = vpack.c.b16 %v948, %v947
        %v1099 = vpack.c.b16 %v950, %v949
        %v1100 = vpack.c.b16 %v952, %v951
        %v1101 = vpack.c.b16 %v954, %v953
        %v1102 = vpack.c.b16 %v956, %v955
        %v1103 = vpack.c.b16 %v958, %v957
        %v1104 = vpack.c.b16 %v960, %v959
        %v1105 = vpack.c.b16 %v962, %v961
        %v1106 = vpack.c.b16 %v964, %v963
        %v1107 = vpack.c.b16 %v966, %v965
        %v1108 = vpack.c.b16 %v968, %v967
        %v1109 = vpack.c.b16 %v970, %v969
        %v1110 = vpack.c.b16 %v972, %v971
        %v1111 = vpack.c.b16 %v974, %v973
        %v1112 = vpack.c.b16 %v976, %v975
        %v1113 = vpack.c.b16 %v978, %v977
        %v1114 = vpack.c.b16 %v980, %v979
        %v1115 = vpack.c.b16 %v982, %v981
        %v1116 = vpack.c.b16 %v984, %v983
        %v1117 = vpack.c.b16 %v986, %v985
        %v1118 = vpack.c.b16 %v988, %v987
        %v1119 = vpack.c.b16 %v990, %v989
        %v1120 = vpack.c.b16 %v992, %v991
        %v1121 = vpack.c.b16 %v994, %v993
        %v1122 = vpack.c.b16 %v996, %v995
        %v1123 = vpack.c.b16 %v998, %v997
        %v1124 = vpack.c.b16 %v1000, %v999
        %v1125 = vpack.c.b16 %v1002, %v1001
        %v1126 = vpack.c.b16 %v1004, %v1003
        %v1127 = vpack.c.b16 %v1006, %v1005
        %v1128 = vpack.c.b16 %v1008, %v1007
        %v1129 = vpack.c.b16 %v1010, %v1009
        %v1130 = vpack.c.b16 %v1012, %v1011
        %v1131 = vpack.c.b16 %v1014, %v1013
        %v1132 = vpack.c.b16 %v1016, %v1015
        %v1133 = vpack.c.b16 %v1018, %v1017
        %v1134 = vpack.c.b16 %v1020, %v1019
        %v1135 = vpack.c.b16 %v1022, %v1021
        %v1136 = vpack.c.b16 %v1024, %v1023
        %1249 = vmatprep.subr.bf16.mxu0 0
        %1250 = vmatpush1.bf16.msra.mxu0 %v1025
        %1251 = vmatprep.subr.bf16.mxu0 0
        %1252 = vmatpush1.bf16.msra.mxu0 %v1026
        %1253 = vmatprep.subr.bf16.mxu0 0
        %1254 = vmatpush1.bf16.msra.mxu0 %v1027
        %1255 = vmatprep.subr.bf16.mxu0 0
        %1256 = vmatpush1.bf16.msra.mxu0 %v1028
        %1257 = vmatprep.subr.bf16.mxu0 0
        %1258 = vmatpush1.bf16.msra.mxu0 %v1029
        %1259 = vmatprep.subr.bf16.mxu0 0
        %1260 = vmatpush1.bf16.msra.mxu0 %v1030
        %1261 = vmatprep.subr.bf16.mxu0 0
        %1262 = vmatpush1.bf16.msra.mxu0 %v1031
        %1263 = vmatprep.subr.bf16.mxu0 0
        %1264 = vmatpush1.bf16.msra.mxu0 %v1032
        %1265 = vmatprep.subr.bf16.mxu0 0
        %1266 = vmatpush1.bf16.msra.mxu0 %v1033
        %1267 = vmatprep.subr.bf16.mxu0 0
        %1268 = vmatpush1.bf16.msra.mxu0 %v1034
        %1269 = vmatprep.subr.bf16.mxu0 0
        %1270 = vmatpush1.bf16.msra.mxu0 %v1035
        %1271 = vmatprep.subr.bf16.mxu0 0
        %1272 = vmatpush1.bf16.msra.mxu0 %v1036
        %1273 = vmatprep.subr.bf16.mxu0 0
        %1274 = vmatpush1.bf16.msra.mxu0 %v1037
        %1275 = vmatprep.subr.bf16.mxu0 0
        %1276 = vmatpush1.bf16.msra.mxu0 %v1038
        %1277 = vmatprep.subr.bf16.mxu0 0
        %1278 = vmatpush1.bf16.msra.mxu0 %v1039
        %1279 = vmatprep.subr.bf16.mxu0 0
        %1280 = vmatpush1.bf16.msra.mxu0 %v1040
        %1281 = vmatprep.mubr.bf16.mxu0 %v504
        %1282 = vmatmul.mubr.bf16.gmra.mrb[0].mxu0 %v490
        %v1283 = vpop.f32.mrb[0].mxu0
        %v1284 = vadd.f32 0.0, %v1283
        %v1285 = vpop.f32.mrb[0].mxu0
        %v1286 = vpop.f32.mrb[0].mxu0
        %v1287 = vpop.f32.mrb[0].mxu0
        %1288 = vdwg.mxu0
        %1289 = vmatprep.subr.bf16.mxu0 0
        %1290 = vmatpush1.bf16.msra.mxu0 %v1041
        %1291 = vmatprep.subr.bf16.mxu0 0
        %1292 = vmatpush1.bf16.msra.mxu0 %v1042
        %1293 = vmatprep.subr.bf16.mxu0 0
        %1294 = vmatpush1.bf16.msra.mxu0 %v1043
        %1295 = vmatprep.subr.bf16.mxu0 0
        %1296 = vmatpush1.bf16.msra.mxu0 %v1044
        %1297 = vmatprep.subr.bf16.mxu0 0
        %1298 = vmatpush1.bf16.msra.mxu0 %v1045
        %1299 = vmatprep.subr.bf16.mxu0 0
        %1300 = vmatpush1.bf16.msra.mxu0 %v1046
        %1301 = vmatprep.subr.bf16.mxu0 0
        %1302 = vmatpush1.bf16.msra.mxu0 %v1047
        %1303 = vmatprep.subr.bf16.mxu0 0
        %1304 = vmatpush1.bf16.msra.mxu0 %v1048
        %1305 = vmatprep.subr.bf16.mxu0 0
        %1306 = vmatpush1.bf16.msra.mxu0 %v1049
        %1307 = vmatprep.subr.bf16.mxu0 0
        %1308 = vmatpush1.bf16.msra.mxu0 %v1050
        %1309 = vmatprep.subr.bf16.mxu0 0
        %1310 = vmatpush1.bf16.msra.mxu0 %v1051
        %1311 = vmatprep.subr.bf16.mxu0 0
        %1312 = vmatpush1.bf16.msra.mxu0 %v1052
        %1313 = vmatprep.subr.bf16.mxu0 0
        %1314 = vmatpush1.bf16.msra.mxu0 %v1053
        %1315 = vmatprep.subr.bf16.mxu0 0
        %1316 = vmatpush1.bf16.msra.mxu0 %v1054
        %1317 = vmatprep.subr.bf16.mxu0 0
        %1318 = vmatpush1.bf16.msra.mxu0 %v1055
        %1319 = vmatprep.subr.bf16.mxu0 0
        %1320 = vmatpush1.bf16.msra.mxu0 %v1056
        %1321 = vmatprep.mubr.bf16.mxu0 %v514
        %1322 = vmatmul.mubr.bf16.gmra.mrb[0].mxu0 %v512
        %v1323 = vpop.f32.mrb[0].mxu0
        %v1324 = vadd.f32 %v1284, %v1323
        %v1325 = vpop.f32.mrb[0].mxu0
        %v1326 = vpop.f32.mrb[0].mxu0
        %v1327 = vpop.f32.mrb[0].mxu0
        %1328 = vdwg.mxu0
        %1329 = vmatprep.subr.bf16.mxu0 0
        %1330 = vmatpush1.bf16.msra.mxu0 %v1057
        %1331 = vmatprep.subr.bf16.mxu0 0
        %1332 = vmatpush1.bf16.msra.mxu0 %v1058
        %1333 = vmatprep.subr.bf16.mxu0 0
        %1334 = vmatpush1.bf16.msra.mxu0 %v1059
        %1335 = vmatprep.subr.bf16.mxu0 0
        %1336 = vmatpush1.bf16.msra.mxu0 %v1060
        %1337 = vmatprep.subr.bf16.mxu0 0
        %1338 = vmatpush1.bf16.msra.mxu0 %v1061
        %1339 = vmatprep.subr.bf16.mxu0 0
        %1340 = vmatpush1.bf16.msra.mxu0 %v1062
        %1341 = vmatprep.subr.bf16.mxu0 0
        %1342 = vmatpush1.bf16.msra.mxu0 %v1063
        %1343 = vmatprep.subr.bf16.mxu0 0
        %1344 = vmatpush1.bf16.msra.mxu0 %v1064
        %1345 = vmatprep.subr.bf16.mxu0 0
        %1346 = vmatpush1.bf16.msra.mxu0 %v1065
        %1347 = vmatprep.subr.bf16.mxu0 0
        %1348 = vmatpush1.bf16.msra.mxu0 %v1066
        %1349 = vmatprep.subr.bf16.mxu0 0
        %1350 = vmatpush1.bf16.msra.mxu0 %v1067
        %1351 = vmatprep.subr.bf16.mxu0 0
        %1352 = vmatpush1.bf16.msra.mxu0 %v1068
        %1353 = vmatprep.subr.bf16.mxu0 0
        %1354 = vmatpush1.bf16.msra.mxu0 %v1069
        %1355 = vmatprep.subr.bf16.mxu0 0
        %1356 = vmatpush1.bf16.msra.mxu0 %v1070
        %1357 = vmatprep.subr.bf16.mxu0 0
        %1358 = vmatpush1.bf16.msra.mxu0 %v1071
        %1359 = vmatprep.subr.bf16.mxu0 0
        %1360 = vmatpush1.bf16.msra.mxu0 %v1072
        %1361 = vmatprep.mubr.bf16.mxu0 %v511
        %1362 = vmatmul.mubr.bf16.gmra.mrb[0].mxu0 %v497
        %v1363 = vpop.f32.mrb[0].mxu0
        %v1364 = vadd.f32 %v1324, %v1363
        %v1365 = vpop.f32.mrb[0].mxu0
        %v1366 = vpop.f32.mrb[0].mxu0
        %v1367 = vpop.f32.mrb[0].mxu0
        %1368 = vdwg.mxu0
        %1369 = vmatprep.subr.bf16.mxu0 0
        %1370 = vmatpush1.bf16.msra.mxu0 %v1073
        %1371 = vmatprep.subr.bf16.mxu0 0
        %1372 = vmatpush1.bf16.msra.mxu0 %v1074
        %1373 = vmatprep.subr.bf16.mxu0 0
        %1374 = vmatpush1.bf16.msra.mxu0 %v1075
        %1375 = vmatprep.subr.bf16.mxu0 0
        %1376 = vmatpush1.bf16.msra.mxu0 %v1076
        %1377 = vmatprep.subr.bf16.mxu0 0
        %1378 = vmatpush1.bf16.msra.mxu0 %v1077
        %1379 = vmatprep.subr.bf16.mxu0 0
        %1380 = vmatpush1.bf16.msra.mxu0 %v1078
        %1381 = vmatprep.subr.bf16.mxu0 0
        %1382 = vmatpush1.bf16.msra.mxu0 %v1079
        %1383 = vmatprep.subr.bf16.mxu0 0
        %1384 = vmatpush1.bf16.msra.mxu0 %v1080
        %1385 = vmatprep.subr.bf16.mxu0 0
        %1386 = vmatpush1.bf16.msra.mxu0 %v1081
        %1387 = vmatprep.subr.bf16.mxu0 0
        %1388 = vmatpush1.bf16.msra.mxu0 %v1082
        %1389 = vmatprep.subr.bf16.mxu0 0
        %1390 = vmatpush1.bf16.msra.mxu0 %v1083
        %1391 = vmatprep.subr.bf16.mxu0 0
        %1392 = vmatpush1.bf16.msra.mxu0 %v1084
        %1393 = vmatprep.subr.bf16.mxu0 0
        %1394 = vmatpush1.bf16.msra.mxu0 %v1085
        %1395 = vmatprep.subr.bf16.mxu0 0
        %1396 = vmatpush1.bf16.msra.mxu0 %v1086
        %1397 = vmatprep.subr.bf16.mxu0 0
        %1398 = vmatpush1.bf16.msra.mxu0 %v1087
        %1399 = vmatprep.subr.bf16.mxu0 0
        %1400 = vmatpush1.bf16.msra.mxu0 %v1088
        %1401 = vmatprep.mubr.bf16.mxu0 %v515
        %1402 = vmatmul.mubr.bf16.gmra.mrb[0].mxu0 %v513
        %v1403 = vpop.f32.mrb[0].mxu0
        %v1404 = vadd.f32 %v1364, %v1403
        %v1405 = vpop.f32.mrb[0].mxu0
        %v1406 = vpop.f32.mrb[0].mxu0
        %v1407 = vpop.f32.mrb[0].mxu0
        %1408 = vdwg.mxu0
        %1409 = vmatprep.subr.bf16.mxu0 0
        %1410 = vmatpush1.bf16.msra.mxu0 %v1089
        %1411 = vmatprep.subr.bf16.mxu0 0
        %1412 = vmatpush1.bf16.msra.mxu0 %v1090
        %1413 = vmatprep.subr.bf16.mxu0 0
        %1414 = vmatpush1.bf16.msra.mxu0 %v1091
        %1415 = vmatprep.subr.bf16.mxu0 0
        %1416 = vmatpush1.bf16.msra.mxu0 %v1092
        %1417 = vmatprep.subr.bf16.mxu0 0
        %1418 = vmatpush1.bf16.msra.mxu0 %v1093
        %1419 = vmatprep.subr.bf16.mxu0 0
        %1420 = vmatpush1.bf16.msra.mxu0 %v1094
        %1421 = vmatprep.subr.bf16.mxu0 0
        %1422 = vmatpush1.bf16.msra.mxu0 %v1095
        %1423 = vmatprep.subr.bf16.mxu0 0
        %1424 = vmatpush1.bf16.msra.mxu0 %v1096
        %1425 = vmatprep.subr.bf16.mxu0 0
        %1426 = vmatpush1.bf16.msra.mxu0 %v1097
        %1427 = vmatprep.subr.bf16.mxu0 0
        %1428 = vmatpush1.bf16.msra.mxu0 %v1098
        %1429 = vmatprep.subr.bf16.mxu0 0
        %1430 = vmatpush1.bf16.msra.mxu0 %v1099
        %1431 = vmatprep.subr.bf16.mxu0 0
        %1432 = vmatpush1.bf16.msra.mxu0 %v1100
        %1433 = vmatprep.subr.bf16.mxu0 0
        %1434 = vmatpush1.bf16.msra.mxu0 %v1101
        %1435 = vmatprep.subr.bf16.mxu0 0
        %1436 = vmatpush1.bf16.msra.mxu0 %v1102
        %1437 = vmatprep.subr.bf16.mxu0 0
        %1438 = vmatpush1.bf16.msra.mxu0 %v1103
        %1439 = vmatprep.subr.bf16.mxu0 0
        %1440 = vmatpush1.bf16.msra.mxu0 %v1104
        %1441 = vmatprep.mubr.bf16.mxu0 %v553
        %1442 = vmatmul.mubr.bf16.gmra.mrb[0].mxu0 %v539
        %v1443 = vpop.f32.mrb[0].mxu0
        %v1444 = vadd.f32 %v1404, %v1443
        %v1445 = vpop.f32.mrb[0].mxu0
        %v1446 = vpop.f32.mrb[0].mxu0
        %v1447 = vpop.f32.mrb[0].mxu0
        %1448 = vdwg.mxu0
        %1449 = vmatprep.subr.bf16.mxu0 0
        %1450 = vmatpush1.bf16.msra.mxu0 %v1105
        %1451 = vmatprep.subr.bf16.mxu0 0
        %1452 = vmatpush1.bf16.msra.mxu0 %v1106
        %1453 = vmatprep.subr.bf16.mxu0 0
        %1454 = vmatpush1.bf16.msra.mxu0 %v1107
        %1455 = vmatprep.subr.bf16.mxu0 0
        %1456 = vmatpush1.bf16.msra.mxu0 %v1108
        %1457 = vmatprep.subr.bf16.mxu0 0
        %1458 = vmatpush1.bf16.msra.mxu0 %v1109
        %1459 = vmatprep.subr.bf16.mxu0 0
        %1460 = vmatpush1.bf16.msra.mxu0 %v1110
        %1461 = vmatprep.subr.bf16.mxu0 0
        %1462 = vmatpush1.bf16.msra.mxu0 %v1111
        %1463 = vmatprep.subr.bf16.mxu0 0
        %1464 = vmatpush1.bf16.msra.mxu0 %v1112
        %1465 = vmatprep.subr.bf16.mxu0 0
        %1466 = vmatpush1.bf16.msra.mxu0 %v1113
        %1467 = vmatprep.subr.bf16.mxu0 0
        %1468 = vmatpush1.bf16.msra.mxu0 %v1114
        %1469 = vmatprep.subr.bf16.mxu0 0
        %1470 = vmatpush1.bf16.msra.mxu0 %v1115
        %1471 = vmatprep.subr.bf16.mxu0 0
        %1472 = vmatpush1.bf16.msra.mxu0 %v1116
        %1473 = vmatprep.subr.bf16.mxu0 0
        %1474 = vmatpush1.bf16.msra.mxu0 %v1117
        %1475 = vmatprep.subr.bf16.mxu0 0
        %1476 = vmatpush1.bf16.msra.mxu0 %v1118
        %1477 = vmatprep.subr.bf16.mxu0 0
        %1478 = vmatpush1.bf16.msra.mxu0 %v1119
        %1479 = vmatprep.subr.bf16.mxu0 0
        %1480 = vmatpush1.bf16.msra.mxu0 %v1120
        %1481 = vmatprep.mubr.bf16.mxu0 %v562
        %1482 = vmatmul.mubr.bf16.gmra.mrb[0].mxu0 %v561
        %v1483 = vpop.f32.mrb[0].mxu0
        %v1484 = vadd.f32 %v1444, %v1483
        %v1485 = vpop.f32.mrb[0].mxu0
        %v1486 = vpop.f32.mrb[0].mxu0
        %v1487 = vpop.f32.mrb[0].mxu0
        %1488 = vdwg.mxu0
        %1489 = vmatprep.subr.bf16.mxu0 0
        %1490 = vmatpush1.bf16.msra.mxu0 %v1121
        %1491 = vmatprep.subr.bf16.mxu0 0
        %1492 = vmatpush1.bf16.msra.mxu0 %v1122
        %1493 = vmatprep.subr.bf16.mxu0 0
        %1494 = vmatpush1.bf16.msra.mxu0 %v1123
        %1495 = vmatprep.subr.bf16.mxu0 0
        %1496 = vmatpush1.bf16.msra.mxu0 %v1124
        %1497 = vmatprep.subr.bf16.mxu0 0
        %1498 = vmatpush1.bf16.msra.mxu0 %v1125
        %1499 = vmatprep.subr.bf16.mxu0 0
        %1500 = vmatpush1.bf16.msra.mxu0 %v1126
        %1501 = vmatprep.subr.bf16.mxu0 0
        %1502 = vmatpush1.bf16.msra.mxu0 %v1127
        %1503 = vmatprep.subr.bf16.mxu0 0
        %1504 = vmatpush1.bf16.msra.mxu0 %v1128
        %1505 = vmatprep.subr.bf16.mxu0 0
        %1506 = vmatpush1.bf16.msra.mxu0 %v1129
        %1507 = vmatprep.subr.bf16.mxu0 0
        %1508 = vmatpush1.bf16.msra.mxu0 %v1130
        %1509 = vmatprep.subr.bf16.mxu0 0
        %1510 = vmatpush1.bf16.msra.mxu0 %v1131
        %1511 = vmatprep.subr.bf16.mxu0 0
        %1512 = vmatpush1.bf16.msra.mxu0 %v1132
        %1513 = vmatprep.subr.bf16.mxu0 0
        %1514 = vmatpush1.bf16.msra.mxu0 %v1133
        %1515 = vmatprep.subr.bf16.mxu0 0
        %1516 = vmatpush1.bf16.msra.mxu0 %v1134
        %1517 = vmatprep.subr.bf16.mxu0 0
        %1518 = vmatpush1.bf16.msra.mxu0 %v1135
        %1519 = vmatprep.subr.bf16.mxu0 0
        %1520 = vmatpush1.bf16.msra.mxu0 %v1136
        %1521 = vmatprep.mubr.bf16.mxu0 %v560
        %1522 = vmatmul.mubr.bf16.gmra.mrb[0].mxu0 %v546
        %v1523 = vpop.f32.mrb[0].mxu0
        %v1524 = vadd.f32 %v1484, %v1523
        %v1525 = vpop.f32.mrb[0].mxu0
        %v1526 = vpop.f32.mrb[0].mxu0
        %v1527 = vpop.f32.mrb[0].mxu0
        %1528 = vdwg.mxu0
        %v1529 = vadd.f32 %v238, %v1524
        %1530 = vst [vmem:[#allocation2] sm:$0x3] %v1529
        %p1531 = scmp.eq.s32.totalorder %s17, 27
        // Predicated region
        $region45: #{simple_cnn_forward.7} parent=39 // pred_check
          %p1532 = pneg %p1531
        $region46: #{simple_cnn_forward.7} parent=39 // pred_check_branch
          %1534 = sbr.rel (%p1532) target = $region48
        $region47: #{simple_cnn_forward.7} parent=39 // pred_region
          %v1535 = vld [vmem:[#allocation2] sm:$0x3]
          %v1536 = vld [vmem:[%s2] sm:$0x1]
          %v1538 = vlaneseq
          %v1539 = vshrl.u32 %v1538, 7
          %v1540 = vsub.s32 0, %v1539
          %v1541 = vrot.slane %v1536, %v1540
          %v1543 = vadd.f32 %v1535, %v1541
          %v1544 = vmax.f32 %v1543, 0.0
          %v1545 = vld [vmem:[%s3] sm:$0xff]
          %v1546 = vld [vmem:[%s3 + $0x8] sm:$0xff]
          %v1547 = vld [vmem:[%s3 + $0x10] sm:$0xff]
          %v1548 = vld [vmem:[%s3 + $0x18] sm:$0xff]
          %v1549 = vld [vmem:[%s3 + $0x20] sm:$0xff]
          %v1550 = vld [vmem:[%s3 + $0x28] sm:$0xff]
          %v1551 = vld [vmem:[%s3 + $0x30] sm:$0xff]
          %v1552 = vld [vmem:[%s3 + $0x38] sm:$0xff]
          %v1553 = vld [vmem:[%s3 + $0x40] sm:$0xff]
          %v1554 = vld [vmem:[%s3 + $0x48] sm:$0xff]
          %v1555 = vld [vmem:[%s3 + $0x50] sm:$0xff]
          %v1556 = vld [vmem:[%s3 + $0x58] sm:$0xff]
          %v1557 = vld [vmem:[%s3 + $0x60] sm:$0xff]
          %v1558 = vld [vmem:[%s3 + $0x68] sm:$0xff]
          %v1559 = vld [vmem:[%s3 + $0x70] sm:$0xff]
          %v1560 = vld [vmem:[%s3 + $0x78] sm:$0xff]
          %v1561 = vld [vmem:[%s4] sm:$0x1]
          %v1563 = vlaneseq
          %v1564 = vshrl.u32 %v1563, 7
          %v1565 = vsub.s32 0, %v1564
          %v1566 = vrot.slane %v1561, %v1565
          %1568 = vmatprep.subr.mxu0 0.0
          %1569 = vmatpush1.msra.mxu0 %v1545
          %1570 = vmatprep.subr.mxu0 0.0
          %1571 = vmatpush1.msra.mxu0 %v1546
          %1572 = vmatprep.subr.mxu0 0.0
          %1573 = vmatpush1.msra.mxu0 %v1547
          %1574 = vmatprep.subr.mxu0 0.0
          %1575 = vmatpush1.msra.mxu0 %v1548
          %1576 = vmatprep.subr.mxu0 0.0
          %1577 = vmatpush1.msra.mxu0 %v1549
          %1578 = vmatprep.subr.mxu0 0.0
          %1579 = vmatpush1.msra.mxu0 %v1550
          %1580 = vmatprep.subr.mxu0 0.0
          %1581 = vmatpush1.msra.mxu0 %v1551
          %1582 = vmatprep.subr.mxu0 0.0
          %1583 = vmatpush1.msra.mxu0 %v1552
          %1584 = vmatprep.subr.mxu0 0.0
          %1585 = vmatpush1.msra.mxu0 %v1553
          %1586 = vmatprep.subr.mxu0 0.0
          %1587 = vmatpush1.msra.mxu0 %v1554
          %1588 = vmatprep.subr.mxu0 0.0
          %1589 = vmatpush1.msra.mxu0 %v1555
          %1590 = vmatprep.subr.mxu0 0.0
          %1591 = vmatpush1.msra.mxu0 %v1556
          %1592 = vmatprep.subr.mxu0 0.0
          %1593 = vmatpush1.msra.mxu0 %v1557
          %1594 = vmatprep.subr.mxu0 0.0
          %1595 = vmatpush1.msra.mxu0 %v1558
          %1596 = vmatprep.subr.mxu0 0.0
          %1597 = vmatpush1.msra.mxu0 %v1559
          %1598 = vmatprep.subr.mxu0 0.0
          %1599 = vmatpush1.msra.mxu0 %v1560
          %1600 = vmatprep.subr.mxu0 0.0
          %1601 = vmatpush1.msra.mxu0 0.0
          %1602 = vmatprep.subr.mxu0 0.0
          %1603 = vmatpush1.msra.mxu0 0.0
          %1604 = vmatprep.subr.mxu0 0.0
          %1605 = vmatpush1.msra.mxu0 0.0
          %1606 = vmatprep.subr.mxu0 0.0
          %1607 = vmatpush1.msra.mxu0 0.0
          %1608 = vmatprep.subr.mxu0 0.0
          %1609 = vmatpush1.msra.mxu0 0.0
          %1610 = vmatprep.subr.mxu0 0.0
          %1611 = vmatpush1.msra.mxu0 0.0
          %1612 = vmatprep.subr.mxu0 0.0
          %1613 = vmatpush1.msra.mxu0 0.0
          %1614 = vmatprep.subr.mxu0 0.0
          %1615 = vmatpush1.msra.mxu0 0.0
          %1616 = vmatprep.subr.mxu0 0.0
          %1617 = vmatpush1.msra.mxu0 0.0
          %1618 = vmatprep.subr.mxu0 0.0
          %1619 = vmatpush1.msra.mxu0 0.0
          %1620 = vmatprep.subr.mxu0 0.0
          %1621 = vmatpush1.msra.mxu0 0.0
          %1622 = vmatprep.subr.mxu0 0.0
          %1623 = vmatpush1.msra.mxu0 0.0
          %1624 = vmatprep.subr.mxu0 0.0
          %1625 = vmatpush1.msra.mxu0 0.0
          %1626 = vmatprep.subr.mxu0 0.0
          %1627 = vmatpush1.msra.mxu0 0.0
          %1628 = vmatprep.subr.mxu0 0.0
          %1629 = vmatpush1.msra.mxu0 0.0
          %1630 = vmatprep.subr.mxu0 0.0
          %1631 = vmatpush1.msra.mxu0 0.0
          %1632 = vmatprep.mubr.f32.mxu0 0.0
          %1633 = vmatmul.mubr.f32.gmra.mrb[0].mxu0 %v1544
          %v1634 = vpop.f32.mrb[0].mxu0
          %v1635 = vadd.f32 %v1566, %v1634
          %v1636 = vpop.f32.mrb[0].mxu0
          %1637 = vdwg.mxu0
          %vm1638 = vcmask 9216
          %1639 = vst.msk [vmem:[#allocation3] sm:$0x3] %vm1638, %v1635
        $region48: #{simple_cnn_forward.7} parent=39 // pred_fallthru
          _
        // Predicated region
        $region49: #{simple_cnn_forward.7} parent=39 // pred_check
          %p1640 = pneg %p145
        $region50: #{simple_cnn_forward.7} parent=39 // pred_check_branch
          %1642 = sbr.rel (%p1640) target = $region52
        $region51: #{simple_cnn_forward.7} parent=39 // pred_region
          %s1644 = ssub.s32 32, 32
          %1645 = vsyncadd [#allocation4], %s1644
          %s1647 = sshll.u32 [#allocation3], 4
          %s1648 = int_to_ptr.vmem [resolvable:$true] %s1647
          %1650 = dma.vmem_to_hbm [thread:$0]  %s1648, 32, %s5, [#allocation4]
        $region52: #{simple_cnn_forward.7} parent=39 // pred_fallthru
          _
        // Predicated region
        $region53: #{simple_cnn_forward.7} parent=39 // pred_check
          %p1651 = pneg %p145
        $region54: #{simple_cnn_forward.7} parent=39 // pred_check_branch
          %1653 = sbr.rel (%p1651) target = $region56
        $region55: #{simple_cnn_forward.7} parent=39 // pred_region
          %1654 = dma.done [#allocation4], 32
        $region56: #{simple_cnn_forward.7} parent=39 // pred_fallthru
          _
      $region40: #{simple_cnn_forward.7} parent=5 // pred_fallthru
        _
      %p1655 = scmp.le.s32.totalorder 2, %s12
      // Predicated region
      $region57: #{simple_cnn_forward.7} parent=5 // pred_check
        %p1656 = pneg %p1655
      $region58: #{simple_cnn_forward.7} parent=5 // pred_check_branch
        %1658 = sbr.rel (%p1656) target = $region60
      $region59: #{simple_cnn_forward.7} parent=5 // pred_region
        %s1659 = ssub.s32 %s12, 2
      $region60: #{simple_cnn_forward.7} parent=5 // pred_fallthru
        _
    $region6: #{simple_cnn_forward.7} parent=1 // loop_footer
      %s16 = sadd.s32 1, %s12
    $region7: #{simple_cnn_forward.7} parent=1 // loop_footer_branch
      %11 = sbr.rel target = $region3
    $region8: #{simple_cnn_forward.7} parent=1 // loop_exit
      _
    %1660 = vsyncpa [#allocation4], 1
    %s1661 = scalar_lea.sflag [#allocation4], 1
    %1662 = vsyncpa %s1661, 1

</llo_original>
